<compile_context>
chip_gen: v5e
topology: v5e:2x2
jax: 0.10.0
libtpu: 0.0.40
codegen_flags: <defaults>
</compile_context>

<pallas_src>
import functools

import jax
import jax.numpy as jnp
from jax.experimental import pallas as pl
from jax.experimental.pallas import tpu as pltpu


# --------------------------------- fused kernel ----------------------------------- #

def _inception_resnet_b_kernel(
    x_ref,                         # (1, H*W, Cin)             f32
    w1a_ref, b1a_ref,              # (Cin, C1a) bf16, (1, C1a) f32
    w1b_ref, b1b_ref,              # (KH, C1a, C1b) bf16, (1, C1b) f32
    w1c_ref, b1c_ref,              # (KW, C1b, C1c) bf16, (1, C1c) f32
    w2_ref, b2_ref,                # (Cin, C2) bf16, (1, C2) f32
    wfc1_ref, wfc2_ref, bfc_ref,   # (C1c, Cout), (C2, Cout) bf16, (1, Cout) f32
    o_ref,                         # (1, H*W, Cout)            f32
    a_buf,                         # VMEM (H+4, W+4, C1a) f32  (conv1b padded input)
    b_buf,                         # VMEM (H,   W+6, C1b) f32  (conv1c padded input)
    *, H, W,
):
    C1a = w1a_ref.shape[1]
    C1b = w1b_ref.shape[2]
    KH = w1b_ref.shape[0]
    KW = w1c_ref.shape[0]

    x2d = x_ref[0]                                # (H*W, Cin), f32 residual
    x_bf = x2d.astype(jnp.bfloat16)

    # ---- conv1a: 1x1, padding=1.  The padded border of its output is just the bias,
    #      so only the H*W real pixels hit the MXU.  a_buf holds conv1b's zero-padded
    #      input: [zero ring (conv1b pad)] [bias ring (conv1a pad)] [x @ W1a + b1a].
    y1a = jnp.dot(x_bf, w1a_ref[...],
                  preferred_element_type=jnp.float32) + b1a_ref[...]
    a_buf[...] = jnp.zeros_like(a_buf)
    a_buf[1:H + 3, 1:W + 3, :] = jnp.broadcast_to(
        b1a_ref[...].reshape(1, 1, C1a), (H + 2, W + 2, C1a))
    a_buf[2:H + 2, 2:W + 2, :] = y1a.reshape(H, W, C1a)

    # ---- conv1b: (KH,1) kernel, padding=1 -> KH shifted K=C1a matmuls, f32 accum.
    Hb = H + 5 - KH                               # = H - 2 for KH = 7
    Wb = W + 4
    Mb = Hb * Wb
    y1b = b1b_ref[...]                            # (1, C1b); broadcasts over rows
    for kh in range(KH):
        patch = a_buf[kh:kh + Hb, :, :].reshape(Mb, C1a).astype(jnp.bfloat16)
        y1b = y1b + jnp.dot(patch, w1b_ref[kh],
                            preferred_element_type=jnp.float32)

    # ---- conv1c: (1,KW) kernel, padding=1 -> KW shifted K=C1b matmuls, f32 accum.
    b_buf[...] = jnp.zeros_like(b_buf)
    b_buf[1:Hb + 1, 1:Wb + 1, :] = y1b.reshape(Hb, Wb, C1b)
    Hc = Hb + 2                                   # = H for KH = 7
    Wc = Wb + 3 - KW                              # = W for KW = 7
    Mc = Hc * Wc
    y1c = b1c_ref[...]
    for kw in range(KW):
        patch = b_buf[:, kw:kw + Wc, :].reshape(Mc, C1b).astype(jnp.bfloat16)
        y1c = y1c + jnp.dot(patch, w1c_ref[kw],
                            preferred_element_type=jnp.float32)

    # ---- conv2: plain 1x1.
    y2 = jnp.dot(x_bf, w2_ref[...],
                 preferred_element_type=jnp.float32) + b2_ref[...]

    # ---- fcconv over the virtual concat([branch1, conv2]) + bias + residual + ReLU.
    y = (jnp.dot(y1c.astype(jnp.bfloat16), wfc1_ref[...],
                 preferred_element_type=jnp.float32)
         + jnp.dot(y2.astype(jnp.bfloat16), wfc2_ref[...],
                   preferred_element_type=jnp.float32)
         + bfc_ref[...])
    o_ref[0] = jnp.maximum(y + x2d, 0.0)


# ------------------------------ parameter repacking -------------------------------- #

def _prep_params(params):
    bf16, f32 = jnp.bfloat16, jnp.float32
    c1a, cin = params["conv1a_w"].shape[:2]
    c1b = params["conv1b_w"].shape[0]
    c1c = params["conv1c_w"].shape[0]
    c2 = params["conv2_w"].shape[0]
    cout = params["fcconv_w"].shape[0]
    wfc = params["fcconv_w"].reshape(cout, c1c + c2).T           # (384, 1024)
    return dict(
        w1a=params["conv1a_w"].reshape(c1a, cin).T.astype(bf16),                       # (Cin, 128)
        b1a=params["conv1a_b"].reshape(1, c1a).astype(f32),
        w1b=jnp.transpose(params["conv1b_w"][:, :, :, 0], (2, 1, 0)).astype(bf16),     # (7, 128, 160)
        b1b=params["conv1b_b"].reshape(1, c1b).astype(f32),
        w1c=jnp.transpose(params["conv1c_w"][:, :, 0, :], (2, 1, 0)).astype(bf16),     # (7, 160, 192)
        b1c=params["conv1c_b"].reshape(1, c1c).astype(f32),
        w2=params["conv2_w"].reshape(c2, cin).T.astype(bf16),                          # (Cin, 192)
        b2=params["conv2_b"].reshape(1, c2).astype(f32),
        wfc1=wfc[:c1c].astype(bf16),                                                   # (192, 1024)
        wfc2=wfc[c1c:].astype(bf16),                                                   # (192, 1024)
        bfc=params["fcconv_b"].reshape(1, cout).astype(f32),
    )


# ------------------------------------ forward -------------------------------------- #

def inception_resnet_b_forward(x_nchw, params):
    """Exact forward of the PyTorch InceptionResnetB module (input/output NCHW)."""
    p = _prep_params(params)
    x = jnp.transpose(x_nchw, (0, 2, 3, 1)).astype(jnp.float32)   # -> NHWC
    N, H, W, Cin = x.shape
    C1a, C1b, C1c = p["w1a"].shape[1], p["w1b"].shape[2], p["w1c"].shape[2]
    C2, Cout = p["w2"].shape[1], p["bfc"].shape[1]
    KH, KW = p["w1b"].shape[0], p["w1c"].shape[0]
    assert KH == 7 and KW == 7 and Cout == Cin and H >= 3

    M = H * W
    Hb, Wb = H + 5 - KH, W + 4
    x_flat = x.reshape(N, M, Cin)

    def img_map(b):
        return (b, 0, 0)

    def _pinned(a):      # whole array resident; same block for every grid step
        if a.ndim == 2:
            return pl.BlockSpec(a.shape, lambda b: (0, 0))
        return pl.BlockSpec(a.shape, lambda b: (0, 0, 0))

    flops = 2 * N * (M * Cin * C1a + KH * Hb * Wb * C1a * C1b
                     + KW * M * C1b * C1c + M * Cin * C2
                     + M * (C1c + C2) * Cout)
    w_bytes = sum(int(p[k].size) * p[k].dtype.itemsize for k in p)
    bytes_accessed = int(x_flat.size) * 4 + N * M * Cout * 4 + w_bytes

    kernel = functools.partial(_inception_resnet_b_kernel, H=H, W=W)
    out = pl.pallas_call(
        kernel,
        out_shape=jax.ShapeDtypeStruct((N, M, Cout), jnp.float32),
        grid=(N,),
        in_specs=[
            pl.BlockSpec((1, M, Cin), img_map),
            _pinned(p["w1a"]), _pinned(p["b1a"]),
            _pinned(p["w1b"]), _pinned(p["b1b"]),
            _pinned(p["w1c"]), _pinned(p["b1c"]),
            _pinned(p["w2"]), _pinned(p["b2"]),
            _pinned(p["wfc1"]), _pinned(p["wfc2"]), _pinned(p["bfc"]),
        ],
        out_specs=pl.BlockSpec((1, M, Cout), img_map),
        scratch_shapes=[
            pltpu.VMEM((H + 4, W + 4, C1a), jnp.float32),     # conv1b padded input
            pltpu.VMEM((Hb + 2, Wb + 2, C1b), jnp.float32),   # conv1c padded input
        ],
        compiler_params=pltpu.CompilerParams(
            dimension_semantics=("parallel",)),
        cost_estimate=pl.CostEstimate(
            flops=flops, transcendentals=0, bytes_accessed=bytes_accessed),
    )(x_flat, p["w1a"], p["b1a"], p["w1b"], p["b1b"], p["w1c"], p["b1c"],
      p["w2"], p["b2"], p["wfc1"], p["wfc2"], p["bfc"])

    out = out.reshape(N, H, W, Cout)
    return jnp.transpose(out, (0, 3, 1, 2))                   # -> NCHW


# -------------------------- pure-JAX reference (for checking) ---------------------- #

def _ref_conv(x, w, b, pad):
    out = jax.lax.conv_general_dilated(
        x, w, window_strides=(1, 1),
        padding=[(pad[0], pad[0]), (pad[1], pad[1])],
        dimension_numbers=("NCHW", "OIHW", "NCHW"),
    )
    return out + b.reshape(1, -1, 1, 1)


def _ref_forward(x, p):
    b1 = _ref_conv(x, p["conv1a_w"], p["conv1a_b"], (1, 1))
    b1 = _ref_conv(b1, p["conv1b_w"], p["conv1b_b"], (1, 1))
    b1 = _ref_conv(b1, p["conv1c_w"], p["conv1c_b"], (1, 1))
    b2 = _ref_conv(x, p["conv2_w"], p["conv2_b"], (0, 0))
    cat = jnp.concatenate([b1, b2], axis=1)
    y = _ref_conv(cat, p["fcconv_w"], p["fcconv_b"], (0, 0))
    return jnp.maximum(y + x, 0.0)


# -------------------------------------- main ---------------------------------------- #

if __name__ == "__main__":
    key = jax.random.PRNGKey(0)
    ks = jax.random.split(key, 11)

    def w_init(k, shape, scale):
        return jax.random.normal(k, shape, jnp.float32) * scale

    params = {
        "conv1a_w": w_init(ks[0], (128, 1024, 1, 1), 0.03),
        "conv1a_b": w_init(ks[1], (128,), 0.01),
        "conv1b_w": w_init(ks[2], (160, 128, 7, 1), 0.03),
        "conv1b_b": w_init(ks[3], (160,), 0.01),
        "conv1c_w": w_init(ks[4], (192, 160, 1, 7), 0.03),
        "conv1c_b": w_init(ks[5], (192,), 0.01),
        "conv2_w": w_init(ks[6], (192, 1024, 1, 1), 0.03),
        "conv2_b": w_init(ks[7], (192,), 0.01),
        "fcconv_w": w_init(ks[8], (1024, 384, 1, 1), 0.03),
        "fcconv_b": w_init(ks[9], (1024,), 0.01),
    }

    # Input channels are fixed at 1024 by the module; keep batch/spatial small.
    x = jax.random.normal(ks[10], (2, 1024, 6, 6), jnp.float32)

    fwd = jax.jit(functools.partial(inception_resnet_b_forward, params=params))
    out = jax.block_until_ready(fwd(x))

    ref = jax.block_until_ready(_ref_forward(x, params))
    assert out.shape == ref.shape == (2, 1024, 6, 6)
    max_diff = float(jnp.max(jnp.abs(out - ref)))
    # bf16 matmuls with f32 accumulation: expected max abs error ~1e-2 at these scales.
    assert max_diff < 1e-1, f"mismatch vs reference: max_diff={max_diff}"

    print("KERNEL_OK")
</pallas_src>

<mosaic_0001>
module attributes {stable_mosaic.version = 11 : i64} {
  func.func @_inception_resnet_b_kernel(%arg0: i32, %arg1: memref<1x36x1024xf32, #tpu.memory_space<vmem>>, %arg2: memref<1024x128xbf16, #tpu.memory_space<vmem>>, %arg3: memref<1x128xf32, #tpu.memory_space<vmem>>, %arg4: memref<7x128x160xbf16, #tpu.memory_space<vmem>>, %arg5: memref<1x160xf32, #tpu.memory_space<vmem>>, %arg6: memref<7x160x192xbf16, #tpu.memory_space<vmem>>, %arg7: memref<1x192xf32, #tpu.memory_space<vmem>>, %arg8: memref<1024x192xbf16, #tpu.memory_space<vmem>>, %arg9: memref<1x192xf32, #tpu.memory_space<vmem>>, %arg10: memref<192x1024xbf16, #tpu.memory_space<vmem>>, %arg11: memref<192x1024xbf16, #tpu.memory_space<vmem>>, %arg12: memref<1x1024xf32, #tpu.memory_space<vmem>>, %arg13: memref<1x36x1024xf32, #tpu.memory_space<vmem>>, %arg14: memref<10x10x128xf32, #tpu.memory_space<vmem>>, %arg15: memref<6x12x160xf32, #tpu.memory_space<vmem>>) attributes {dimension_semantics = [#tpu.dimension_semantics<parallel>], iteration_bounds = array<i64: 2>, scalar_prefetch = 0 : i64, scratch_operands = 2 : i64, tpu.core_type = #tpu.core_type<tc>, window_params = [{transform_indices = @transform_0, window_bounds = array<i64: 1, 36, 1024>}, {pipeline_mode = #tpu.pipeline_mode<synchronous>, transform_indices = @transform_1, window_bounds = array<i64: 1024, 128>}, {pipeline_mode = #tpu.pipeline_mode<synchronous>, transform_indices = @transform_2, window_bounds = array<i64: 1, 128>}, {pipeline_mode = #tpu.pipeline_mode<synchronous>, transform_indices = @transform_3, window_bounds = array<i64: 7, 128, 160>}, {pipeline_mode = #tpu.pipeline_mode<synchronous>, transform_indices = @transform_4, window_bounds = array<i64: 1, 160>}, {pipeline_mode = #tpu.pipeline_mode<synchronous>, transform_indices = @transform_5, window_bounds = array<i64: 7, 160, 192>}, {pipeline_mode = #tpu.pipeline_mode<synchronous>, transform_indices = @transform_6, window_bounds = array<i64: 1, 192>}, {pipeline_mode = #tpu.pipeline_mode<synchronous>, transform_indices = @transform_7, window_bounds = array<i64: 1024, 192>}, {pipeline_mode = #tpu.pipeline_mode<synchronous>, transform_indices = @transform_8, window_bounds = array<i64: 1, 192>}, {pipeline_mode = #tpu.pipeline_mode<synchronous>, transform_indices = @transform_9, window_bounds = array<i64: 192, 1024>}, {pipeline_mode = #tpu.pipeline_mode<synchronous>, transform_indices = @transform_10, window_bounds = array<i64: 192, 1024>}, {pipeline_mode = #tpu.pipeline_mode<synchronous>, transform_indices = @transform_11, window_bounds = array<i64: 1, 1024>}, {transform_indices = @transform_12, window_bounds = array<i64: 1, 36, 1024>}]} {
    %c0 = arith.constant 0 : index
    %c0_0 = arith.constant 0 : index
    %c0_1 = arith.constant 0 : index
    %0 = vector.load %arg1[%c0, %c0_0, %c0_1] : memref<1x36x1024xf32, #tpu.memory_space<vmem>>, vector<1x36x1024xf32>
    %1 = vector.shape_cast %0 : vector<1x36x1024xf32> to vector<36x1024xf32>
    %2 = arith.truncf %1 : vector<36x1024xf32> to vector<36x1024xbf16>
    %c0_2 = arith.constant 0 : index
    %c0_3 = arith.constant 0 : index
    %3 = vector.load %arg2[%c0_2, %c0_3] : memref<1024x128xbf16, #tpu.memory_space<vmem>>, vector<1024x128xbf16>
    %cst = arith.constant dense<0.000000e+00> : vector<36x128xf32>
    %4 = tpu.matmul %2, %3, %cst {dimension_numbers = #tpu.dot_dimension_numbers<[1], [0], [0], [1], [0, 0, 1, 1], [], []>} : vector<36x1024xbf16>, vector<1024x128xbf16>, vector<36x128xf32> -> vector<36x128xf32>
    %c0_4 = arith.constant 0 : index
    %c0_5 = arith.constant 0 : index
    %5 = vector.load %arg3[%c0_4, %c0_5] : memref<1x128xf32, #tpu.memory_space<vmem>>, vector<1x128xf32>
    %6 = vector.broadcast %5 : vector<1x128xf32> to vector<36x128xf32>
    %7 = arith.addf %4, %6 : vector<36x128xf32>
    %cst_6 = arith.constant 0.000000e+00 : f32
    %8 = vector.broadcast %cst_6 : f32 to vector<10x10x128xf32>
    %c0_7 = arith.constant 0 : index
    %c0_8 = arith.constant 0 : index
    %c0_9 = arith.constant 0 : index
    %9 = vector.load %arg14[%c0_7, %c0_8, %c0_9] : memref<10x10x128xf32, #tpu.memory_space<vmem>>, vector<10x10x128xf32>
    tpu.vector_store %arg14[%c0_7, %c0_8, %c0_9], %8 {strides = array<i32>} : memref<10x10x128xf32, #tpu.memory_space<vmem>>, vector<10x10x128xf32>,
    %c0_10 = arith.constant 0 : index
    %c0_11 = arith.constant 0 : index
    %10 = vector.load %arg3[%c0_10, %c0_11] : memref<1x128xf32, #tpu.memory_space<vmem>>, vector<1x128xf32>
    %11 = vector.shape_cast %10 : vector<1x128xf32> to vector<1x1x128xf32>
    %12 = vector.shape_cast %11 : vector<1x1x128xf32> to vector<1x1x128xf32>
    %13 = vector.broadcast %12 : vector<1x1x128xf32> to vector<8x8x128xf32>
    %c1 = arith.constant 1 : index
    %c1_12 = arith.constant 1 : index
    %c0_13 = arith.constant 0 : index
    %14 = vector.load %arg14[%c1, %c1_12, %c0_13] : memref<10x10x128xf32, #tpu.memory_space<vmem>>, vector<8x8x128xf32>
    tpu.vector_store %arg14[%c1, %c1_12, %c0_13], %13 {strides = array<i32>} : memref<10x10x128xf32, #tpu.memory_space<vmem>>, vector<8x8x128xf32>,
    %15 = vector.shape_cast %7 : vector<36x128xf32> to vector<6x6x128xf32>
    %c2 = arith.constant 2 : index
    %c2_14 = arith.constant 2 : index
    %c0_15 = arith.constant 0 : index
    %16 = vector.load %arg14[%c2, %c2_14, %c0_15] : memref<10x10x128xf32, #tpu.memory_space<vmem>>, vector<6x6x128xf32>
    tpu.vector_store %arg14[%c2, %c2_14, %c0_15], %15 {strides = array<i32>} : memref<10x10x128xf32, #tpu.memory_space<vmem>>, vector<6x6x128xf32>,
    %c0_16 = arith.constant 0 : index
    %c0_17 = arith.constant 0 : index
    %17 = vector.load %arg5[%c0_16, %c0_17] : memref<1x160xf32, #tpu.memory_space<vmem>>, vector<1x160xf32>
    %c0_18 = arith.constant 0 : index
    %c0_19 = arith.constant 0 : index
    %c0_20 = arith.constant 0 : index
    %18 = vector.load %arg14[%c0_18, %c0_19, %c0_20] : memref<10x10x128xf32, #tpu.memory_space<vmem>>, vector<4x10x128xf32>
    %19 = vector.shape_cast %18 : vector<4x10x128xf32> to vector<40x128xf32>
    %20 = arith.truncf %19 : vector<40x128xf32> to vector<40x128xbf16>
    %c0_21 = arith.constant 0 : index
    %c0_22 = arith.constant 0 : index
    %c0_23 = arith.constant 0 : index
    %21 = vector.load %arg4[%c0_21, %c0_22, %c0_23] : memref<7x128x160xbf16, #tpu.memory_space<vmem>>, vector<1x128x160xbf16>
    %22 = vector.shape_cast %21 : vector<1x128x160xbf16> to vector<128x160xbf16>
    %cst_24 = arith.constant dense<0.000000e+00> : vector<40x160xf32>
    %23 = tpu.matmul %20, %22, %cst_24 {dimension_numbers = #tpu.dot_dimension_numbers<[1], [0], [0], [1], [0, 0, 1, 1], [], []>} : vector<40x128xbf16>, vector<128x160xbf16>, vector<40x160xf32> -> vector<40x160xf32>
    %24 = vector.broadcast %17 : vector<1x160xf32> to vector<40x160xf32>
    %25 = arith.addf %24, %23 : vector<40x160xf32>
    %c1_25 = arith.constant 1 : index
    %c0_26 = arith.constant 0 : index
    %c0_27 = arith.constant 0 : index
    %26 = vector.load %arg14[%c1_25, %c0_26, %c0_27] : memref<10x10x128xf32, #tpu.memory_space<vmem>>, vector<4x10x128xf32>
    %27 = vector.shape_cast %26 : vector<4x10x128xf32> to vector<40x128xf32>
    %28 = arith.truncf %27 : vector<40x128xf32> to vector<40x128xbf16>
    %c1_28 = arith.constant 1 : index
    %c0_29 = arith.constant 0 : index
    %c0_30 = arith.constant 0 : index
    %29 = vector.load %arg4[%c1_28, %c0_29, %c0_30] : memref<7x128x160xbf16, #tpu.memory_space<vmem>>, vector<1x128x160xbf16>
    %30 = vector.shape_cast %29 : vector<1x128x160xbf16> to vector<128x160xbf16>
    %cst_31 = arith.constant dense<0.000000e+00> : vector<40x160xf32>
    %31 = tpu.matmul %28, %30, %cst_31 {dimension_numbers = #tpu.dot_dimension_numbers<[1], [0], [0], [1], [0, 0, 1, 1], [], []>} : vector<40x128xbf16>, vector<128x160xbf16>, vector<40x160xf32> -> vector<40x160xf32>
    %32 = arith.addf %25, %31 : vector<40x160xf32>
    %c2_32 = arith.constant 2 : index
    %c0_33 = arith.constant 0 : index
    %c0_34 = arith.constant 0 : index
    %33 = vector.load %arg14[%c2_32, %c0_33, %c0_34] : memref<10x10x128xf32, #tpu.memory_space<vmem>>, vector<4x10x128xf32>
    %34 = vector.shape_cast %33 : vector<4x10x128xf32> to vector<40x128xf32>
    %35 = arith.truncf %34 : vector<40x128xf32> to vector<40x128xbf16>
    %c2_35 = arith.constant 2 : index
    %c0_36 = arith.constant 0 : index
    %c0_37 = arith.constant 0 : index
    %36 = vector.load %arg4[%c2_35, %c0_36, %c0_37] : memref<7x128x160xbf16, #tpu.memory_space<vmem>>, vector<1x128x160xbf16>
    %37 = vector.shape_cast %36 : vector<1x128x160xbf16> to vector<128x160xbf16>
    %cst_38 = arith.constant dense<0.000000e+00> : vector<40x160xf32>
    %38 = tpu.matmul %35, %37, %cst_38 {dimension_numbers = #tpu.dot_dimension_numbers<[1], [0], [0], [1], [0, 0, 1, 1], [], []>} : vector<40x128xbf16>, vector<128x160xbf16>, vector<40x160xf32> -> vector<40x160xf32>
    %39 = arith.addf %32, %38 : vector<40x160xf32>
    %c3 = arith.constant 3 : index
    %c0_39 = arith.constant 0 : index
    %c0_40 = arith.constant 0 : index
    %40 = vector.load %arg14[%c3, %c0_39, %c0_40] : memref<10x10x128xf32, #tpu.memory_space<vmem>>, vector<4x10x128xf32>
    %41 = vector.shape_cast %40 : vector<4x10x128xf32> to vector<40x128xf32>
    %42 = arith.truncf %41 : vector<40x128xf32> to vector<40x128xbf16>
    %c3_41 = arith.constant 3 : index
    %c0_42 = arith.constant 0 : index
    %c0_43 = arith.constant 0 : index
    %43 = vector.load %arg4[%c3_41, %c0_42, %c0_43] : memref<7x128x160xbf16, #tpu.memory_space<vmem>>, vector<1x128x160xbf16>
    %44 = vector.shape_cast %43 : vector<1x128x160xbf16> to vector<128x160xbf16>
    %cst_44 = arith.constant dense<0.000000e+00> : vector<40x160xf32>
    %45 = tpu.matmul %42, %44, %cst_44 {dimension_numbers = #tpu.dot_dimension_numbers<[1], [0], [0], [1], [0, 0, 1, 1], [], []>} : vector<40x128xbf16>, vector<128x160xbf16>, vector<40x160xf32> -> vector<40x160xf32>
    %46 = arith.addf %39, %45 : vector<40x160xf32>
    %c4 = arith.constant 4 : index
    %c0_45 = arith.constant 0 : index
    %c0_46 = arith.constant 0 : index
    %47 = vector.load %arg14[%c4, %c0_45, %c0_46] : memref<10x10x128xf32, #tpu.memory_space<vmem>>, vector<4x10x128xf32>
    %48 = vector.shape_cast %47 : vector<4x10x128xf32> to vector<40x128xf32>
    %49 = arith.truncf %48 : vector<40x128xf32> to vector<40x128xbf16>
    %c4_47 = arith.constant 4 : index
    %c0_48 = arith.constant 0 : index
    %c0_49 = arith.constant 0 : index
    %50 = vector.load %arg4[%c4_47, %c0_48, %c0_49] : memref<7x128x160xbf16, #tpu.memory_space<vmem>>, vector<1x128x160xbf16>
    %51 = vector.shape_cast %50 : vector<1x128x160xbf16> to vector<128x160xbf16>
    %cst_50 = arith.constant dense<0.000000e+00> : vector<40x160xf32>
    %52 = tpu.matmul %49, %51, %cst_50 {dimension_numbers = #tpu.dot_dimension_numbers<[1], [0], [0], [1], [0, 0, 1, 1], [], []>} : vector<40x128xbf16>, vector<128x160xbf16>, vector<40x160xf32> -> vector<40x160xf32>
    %53 = arith.addf %46, %52 : vector<40x160xf32>
    %c5 = arith.constant 5 : index
    %c0_51 = arith.constant 0 : index
    %c0_52 = arith.constant 0 : index
    %54 = vector.load %arg14[%c5, %c0_51, %c0_52] : memref<10x10x128xf32, #tpu.memory_space<vmem>>, vector<4x10x128xf32>
    %55 = vector.shape_cast %54 : vector<4x10x128xf32> to vector<40x128xf32>
    %56 = arith.truncf %55 : vector<40x128xf32> to vector<40x128xbf16>
    %c5_53 = arith.constant 5 : index
    %c0_54 = arith.constant 0 : index
    %c0_55 = arith.constant 0 : index
    %57 = vector.load %arg4[%c5_53, %c0_54, %c0_55] : memref<7x128x160xbf16, #tpu.memory_space<vmem>>, vector<1x128x160xbf16>
    %58 = vector.shape_cast %57 : vector<1x128x160xbf16> to vector<128x160xbf16>
    %cst_56 = arith.constant dense<0.000000e+00> : vector<40x160xf32>
    %59 = tpu.matmul %56, %58, %cst_56 {dimension_numbers = #tpu.dot_dimension_numbers<[1], [0], [0], [1], [0, 0, 1, 1], [], []>} : vector<40x128xbf16>, vector<128x160xbf16>, vector<40x160xf32> -> vector<40x160xf32>
    %60 = arith.addf %53, %59 : vector<40x160xf32>
    %c6 = arith.constant 6 : index
    %c0_57 = arith.constant 0 : index
    %c0_58 = arith.constant 0 : index
    %61 = vector.load %arg14[%c6, %c0_57, %c0_58] : memref<10x10x128xf32, #tpu.memory_space<vmem>>, vector<4x10x128xf32>
    %62 = vector.shape_cast %61 : vector<4x10x128xf32> to vector<40x128xf32>
    %63 = arith.truncf %62 : vector<40x128xf32> to vector<40x128xbf16>
    %c6_59 = arith.constant 6 : index
    %c0_60 = arith.constant 0 : index
    %c0_61 = arith.constant 0 : index
    %64 = vector.load %arg4[%c6_59, %c0_60, %c0_61] : memref<7x128x160xbf16, #tpu.memory_space<vmem>>, vector<1x128x160xbf16>
    %65 = vector.shape_cast %64 : vector<1x128x160xbf16> to vector<128x160xbf16>
    %cst_62 = arith.constant dense<0.000000e+00> : vector<40x160xf32>
    %66 = tpu.matmul %63, %65, %cst_62 {dimension_numbers = #tpu.dot_dimension_numbers<[1], [0], [0], [1], [0, 0, 1, 1], [], []>} : vector<40x128xbf16>, vector<128x160xbf16>, vector<40x160xf32> -> vector<40x160xf32>
    %67 = arith.addf %60, %66 : vector<40x160xf32>
    %cst_63 = arith.constant 0.000000e+00 : f32
    %68 = vector.broadcast %cst_63 : f32 to vector<6x12x160xf32>
    %c0_64 = arith.constant 0 : index
    %c0_65 = arith.constant 0 : index
    %c0_66 = arith.constant 0 : index
    %69 = vector.load %arg15[%c0_64, %c0_65, %c0_66] : memref<6x12x160xf32, #tpu.memory_space<vmem>>, vector<6x12x160xf32>
    tpu.vector_store %arg15[%c0_64, %c0_65, %c0_66], %68 {strides = array<i32>} : memref<6x12x160xf32, #tpu.memory_space<vmem>>, vector<6x12x160xf32>,
    %70 = vector.shape_cast %67 : vector<40x160xf32> to vector<4x10x160xf32>
    %c1_67 = arith.constant 1 : index
    %c1_68 = arith.constant 1 : index
    %c0_69 = arith.constant 0 : index
    %71 = vector.load %arg15[%c1_67, %c1_68, %c0_69] : memref<6x12x160xf32, #tpu.memory_space<vmem>>, vector<4x10x160xf32>
    tpu.vector_store %arg15[%c1_67, %c1_68, %c0_69], %70 {strides = array<i32>} : memref<6x12x160xf32, #tpu.memory_space<vmem>>, vector<4x10x160xf32>,
    %c0_70 = arith.constant 0 : index
    %c0_71 = arith.constant 0 : index
    %72 = vector.load %arg7[%c0_70, %c0_71] : memref<1x192xf32, #tpu.memory_space<vmem>>, vector<1x192xf32>
    %c0_72 = arith.constant 0 : index
    %c0_73 = arith.constant 0 : index
    %c0_74 = arith.constant 0 : index
    %73 = vector.load %arg15[%c0_72, %c0_73, %c0_74] : memref<6x12x160xf32, #tpu.memory_space<vmem>>, vector<6x6x160xf32>
    %74 = vector.shape_cast %73 : vector<6x6x160xf32> to vector<36x160xf32>
    %75 = arith.truncf %74 : vector<36x160xf32> to vector<36x160xbf16>
    %c0_75 = arith.constant 0 : index
    %c0_76 = arith.constant 0 : index
    %c0_77 = arith.constant 0 : index
    %76 = vector.load %arg6[%c0_75, %c0_76, %c0_77] : memref<7x160x192xbf16, #tpu.memory_space<vmem>>, vector<1x160x192xbf16>
    %77 = vector.shape_cast %76 : vector<1x160x192xbf16> to vector<160x192xbf16>
    %cst_78 = arith.constant dense<0.000000e+00> : vector<36x192xf32>
    %78 = tpu.matmul %75, %77, %cst_78 {dimension_numbers = #tpu.dot_dimension_numbers<[1], [0], [0], [1], [0, 0, 1, 1], [], []>} : vector<36x160xbf16>, vector<160x192xbf16>, vector<36x192xf32> -> vector<36x192xf32>
    %79 = vector.broadcast %72 : vector<1x192xf32> to vector<36x192xf32>
    %80 = arith.addf %79, %78 : vector<36x192xf32>
    %c0_79 = arith.constant 0 : index
    %c1_80 = arith.constant 1 : index
    %c0_81 = arith.constant 0 : index
    %81 = vector.load %arg15[%c0_79, %c1_80, %c0_81] : memref<6x12x160xf32, #tpu.memory_space<vmem>>, vector<6x6x160xf32>
    %82 = vector.shape_cast %81 : vector<6x6x160xf32> to vector<36x160xf32>
    %83 = arith.truncf %82 : vector<36x160xf32> to vector<36x160xbf16>
    %c1_82 = arith.constant 1 : index
    %c0_83 = arith.constant 0 : index
    %c0_84 = arith.constant 0 : index
    %84 = vector.load %arg6[%c1_82, %c0_83, %c0_84] : memref<7x160x192xbf16, #tpu.memory_space<vmem>>, vector<1x160x192xbf16>
    %85 = vector.shape_cast %84 : vector<1x160x192xbf16> to vector<160x192xbf16>
    %cst_85 = arith.constant dense<0.000000e+00> : vector<36x192xf32>
    %86 = tpu.matmul %83, %85, %cst_85 {dimension_numbers = #tpu.dot_dimension_numbers<[1], [0], [0], [1], [0, 0, 1, 1], [], []>} : vector<36x160xbf16>, vector<160x192xbf16>, vector<36x192xf32> -> vector<36x192xf32>
    %87 = arith.addf %80, %86 : vector<36x192xf32>
    %c0_86 = arith.constant 0 : index
    %c2_87 = arith.constant 2 : index
    %c0_88 = arith.constant 0 : index
    %88 = vector.load %arg15[%c0_86, %c2_87, %c0_88] : memref<6x12x160xf32, #tpu.memory_space<vmem>>, vector<6x6x160xf32>
    %89 = vector.shape_cast %88 : vector<6x6x160xf32> to vector<36x160xf32>
    %90 = arith.truncf %89 : vector<36x160xf32> to vector<36x160xbf16>
    %c2_89 = arith.constant 2 : index
    %c0_90 = arith.constant 0 : index
    %c0_91 = arith.constant 0 : index
    %91 = vector.load %arg6[%c2_89, %c0_90, %c0_91] : memref<7x160x192xbf16, #tpu.memory_space<vmem>>, vector<1x160x192xbf16>
    %92 = vector.shape_cast %91 : vector<1x160x192xbf16> to vector<160x192xbf16>
    %cst_92 = arith.constant dense<0.000000e+00> : vector<36x192xf32>
    %93 = tpu.matmul %90, %92, %cst_92 {dimension_numbers = #tpu.dot_dimension_numbers<[1], [0], [0], [1], [0, 0, 1, 1], [], []>} : vector<36x160xbf16>, vector<160x192xbf16>, vector<36x192xf32> -> vector<36x192xf32>
    %94 = arith.addf %87, %93 : vector<36x192xf32>
    %c0_93 = arith.constant 0 : index
    %c3_94 = arith.constant 3 : index
    %c0_95 = arith.constant 0 : index
    %95 = vector.load %arg15[%c0_93, %c3_94, %c0_95] : memref<6x12x160xf32, #tpu.memory_space<vmem>>, vector<6x6x160xf32>
    %96 = vector.shape_cast %95 : vector<6x6x160xf32> to vector<36x160xf32>
    %97 = arith.truncf %96 : vector<36x160xf32> to vector<36x160xbf16>
    %c3_96 = arith.constant 3 : index
    %c0_97 = arith.constant 0 : index
    %c0_98 = arith.constant 0 : index
    %98 = vector.load %arg6[%c3_96, %c0_97, %c0_98] : memref<7x160x192xbf16, #tpu.memory_space<vmem>>, vector<1x160x192xbf16>
    %99 = vector.shape_cast %98 : vector<1x160x192xbf16> to vector<160x192xbf16>
    %cst_99 = arith.constant dense<0.000000e+00> : vector<36x192xf32>
    %100 = tpu.matmul %97, %99, %cst_99 {dimension_numbers = #tpu.dot_dimension_numbers<[1], [0], [0], [1], [0, 0, 1, 1], [], []>} : vector<36x160xbf16>, vector<160x192xbf16>, vector<36x192xf32> -> vector<36x192xf32>
    %101 = arith.addf %94, %100 : vector<36x192xf32>
    %c0_100 = arith.constant 0 : index
    %c4_101 = arith.constant 4 : index
    %c0_102 = arith.constant 0 : index
    %102 = vector.load %arg15[%c0_100, %c4_101, %c0_102] : memref<6x12x160xf32, #tpu.memory_space<vmem>>, vector<6x6x160xf32>
    %103 = vector.shape_cast %102 : vector<6x6x160xf32> to vector<36x160xf32>
    %104 = arith.truncf %103 : vector<36x160xf32> to vector<36x160xbf16>
    %c4_103 = arith.constant 4 : index
    %c0_104 = arith.constant 0 : index
    %c0_105 = arith.constant 0 : index
    %105 = vector.load %arg6[%c4_103, %c0_104, %c0_105] : memref<7x160x192xbf16, #tpu.memory_space<vmem>>, vector<1x160x192xbf16>
    %106 = vector.shape_cast %105 : vector<1x160x192xbf16> to vector<160x192xbf16>
    %cst_106 = arith.constant dense<0.000000e+00> : vector<36x192xf32>
    %107 = tpu.matmul %104, %106, %cst_106 {dimension_numbers = #tpu.dot_dimension_numbers<[1], [0], [0], [1], [0, 0, 1, 1], [], []>} : vector<36x160xbf16>, vector<160x192xbf16>, vector<36x192xf32> -> vector<36x192xf32>
    %108 = arith.addf %101, %107 : vector<36x192xf32>
    %c0_107 = arith.constant 0 : index
    %c5_108 = arith.constant 5 : index
    %c0_109 = arith.constant 0 : index
    %109 = vector.load %arg15[%c0_107, %c5_108, %c0_109] : memref<6x12x160xf32, #tpu.memory_space<vmem>>, vector<6x6x160xf32>
    %110 = vector.shape_cast %109 : vector<6x6x160xf32> to vector<36x160xf32>
    %111 = arith.truncf %110 : vector<36x160xf32> to vector<36x160xbf16>
    %c5_110 = arith.constant 5 : index
    %c0_111 = arith.constant 0 : index
    %c0_112 = arith.constant 0 : index
    %112 = vector.load %arg6[%c5_110, %c0_111, %c0_112] : memref<7x160x192xbf16, #tpu.memory_space<vmem>>, vector<1x160x192xbf16>
    %113 = vector.shape_cast %112 : vector<1x160x192xbf16> to vector<160x192xbf16>
    %cst_113 = arith.constant dense<0.000000e+00> : vector<36x192xf32>
    %114 = tpu.matmul %111, %113, %cst_113 {dimension_numbers = #tpu.dot_dimension_numbers<[1], [0], [0], [1], [0, 0, 1, 1], [], []>} : vector<36x160xbf16>, vector<160x192xbf16>, vector<36x192xf32> -> vector<36x192xf32>
    %115 = arith.addf %108, %114 : vector<36x192xf32>
    %c0_114 = arith.constant 0 : index
    %c6_115 = arith.constant 6 : index
    %c0_116 = arith.constant 0 : index
    %116 = vector.load %arg15[%c0_114, %c6_115, %c0_116] : memref<6x12x160xf32, #tpu.memory_space<vmem>>, vector<6x6x160xf32>
    %117 = vector.shape_cast %116 : vector<6x6x160xf32> to vector<36x160xf32>
    %118 = arith.truncf %117 : vector<36x160xf32> to vector<36x160xbf16>
    %c6_117 = arith.constant 6 : index
    %c0_118 = arith.constant 0 : index
    %c0_119 = arith.constant 0 : index
    %119 = vector.load %arg6[%c6_117, %c0_118, %c0_119] : memref<7x160x192xbf16, #tpu.memory_space<vmem>>, vector<1x160x192xbf16>
    %120 = vector.shape_cast %119 : vector<1x160x192xbf16> to vector<160x192xbf16>
    %cst_120 = arith.constant dense<0.000000e+00> : vector<36x192xf32>
    %121 = tpu.matmul %118, %120, %cst_120 {dimension_numbers = #tpu.dot_dimension_numbers<[1], [0], [0], [1], [0, 0, 1, 1], [], []>} : vector<36x160xbf16>, vector<160x192xbf16>, vector<36x192xf32> -> vector<36x192xf32>
    %122 = arith.addf %115, %121 : vector<36x192xf32>
    %c0_121 = arith.constant 0 : index
    %c0_122 = arith.constant 0 : index
    %123 = vector.load %arg8[%c0_121, %c0_122] : memref<1024x192xbf16, #tpu.memory_space<vmem>>, vector<1024x192xbf16>
    %cst_123 = arith.constant dense<0.000000e+00> : vector<36x192xf32>
    %124 = tpu.matmul %2, %123, %cst_123 {dimension_numbers = #tpu.dot_dimension_numbers<[1], [0], [0], [1], [0, 0, 1, 1], [], []>} : vector<36x1024xbf16>, vector<1024x192xbf16>, vector<36x192xf32> -> vector<36x192xf32>
    %c0_124 = arith.constant 0 : index
    %c0_125 = arith.constant 0 : index
    %125 = vector.load %arg9[%c0_124, %c0_125] : memref<1x192xf32, #tpu.memory_space<vmem>>, vector<1x192xf32>
    %126 = vector.broadcast %125 : vector<1x192xf32> to vector<36x192xf32>
    %127 = arith.addf %124, %126 : vector<36x192xf32>
    %128 = arith.truncf %122 : vector<36x192xf32> to vector<36x192xbf16>
    %c0_126 = arith.constant 0 : index
    %c0_127 = arith.constant 0 : index
    %129 = vector.load %arg10[%c0_126, %c0_127] : memref<192x1024xbf16, #tpu.memory_space<vmem>>, vector<192x1024xbf16>
    %cst_128 = arith.constant dense<0.000000e+00> : vector<36x1024xf32>
    %130 = tpu.matmul %128, %129, %cst_128 {dimension_numbers = #tpu.dot_dimension_numbers<[1], [0], [0], [1], [0, 0, 1, 1], [], []>} : vector<36x192xbf16>, vector<192x1024xbf16>, vector<36x1024xf32> -> vector<36x1024xf32>
    %131 = arith.truncf %127 : vector<36x192xf32> to vector<36x192xbf16>
    %c0_129 = arith.constant 0 : index
    %c0_130 = arith.constant 0 : index
    %132 = vector.load %arg11[%c0_129, %c0_130] : memref<192x1024xbf16, #tpu.memory_space<vmem>>, vector<192x1024xbf16>
    %cst_131 = arith.constant dense<0.000000e+00> : vector<36x1024xf32>
    %133 = tpu.matmul %131, %132, %cst_131 {dimension_numbers = #tpu.dot_dimension_numbers<[1], [0], [0], [1], [0, 0, 1, 1], [], []>} : vector<36x192xbf16>, vector<192x1024xbf16>, vector<36x1024xf32> -> vector<36x1024xf32>
    %134 = arith.addf %130, %133 : vector<36x1024xf32>
    %c0_132 = arith.constant 0 : index
    %c0_133 = arith.constant 0 : index
    %135 = vector.load %arg12[%c0_132, %c0_133] : memref<1x1024xf32, #tpu.memory_space<vmem>>, vector<1x1024xf32>
    %136 = vector.broadcast %135 : vector<1x1024xf32> to vector<36x1024xf32>
    %137 = arith.addf %134, %136 : vector<36x1024xf32>
    %138 = arith.addf %137, %1 : vector<36x1024xf32>
    %cst_134 = arith.constant 0.000000e+00 : f32
    %139 = vector.broadcast %cst_134 : f32 to vector<36x1024xf32>
    %140 = arith.maximumf %138, %139 : vector<36x1024xf32>
    %c0_135 = arith.constant 0 : index
    %c0_136 = arith.constant 0 : index
    %c0_137 = arith.constant 0 : index
    %141 = vector.load %arg13[%c0_135, %c0_136, %c0_137] : memref<1x36x1024xf32, #tpu.memory_space<vmem>>, vector<1x36x1024xf32>
    %142 = vector.shape_cast %141 : vector<1x36x1024xf32> to vector<36x1024xf32>
    %143 = vector.shape_cast %140 : vector<36x1024xf32> to vector<1x36x1024xf32>
    tpu.vector_store %arg13[%c0_135, %c0_136, %c0_137], %143 {strides = array<i32>} : memref<1x36x1024xf32, #tpu.memory_space<vmem>>, vector<1x36x1024xf32>,
    return
  }
  func.func @transform_0(%arg0: i32) -> (i32, i32, i32) {
    %c0_i32 = arith.constant 0 : i32
    %c0_i32_0 = arith.constant 0 : i32
    %c0_i32_1 = arith.constant 0 : i32
    return %arg0, %c0_i32, %c0_i32_0 : i32, i32, i32
  }
  func.func @transform_1(%arg0: i32) -> (i32, i32) {
    %c0_i32 = arith.constant 0 : i32
    %c0_i32_0 = arith.constant 0 : i32
    %c0_i32_1 = arith.constant 0 : i32
    return %c0_i32, %c0_i32_0 : i32, i32
  }
  func.func @transform_2(%arg0: i32) -> (i32, i32) {
    %c0_i32 = arith.constant 0 : i32
    %c0_i32_0 = arith.constant 0 : i32
    %c0_i32_1 = arith.constant 0 : i32
    return %c0_i32, %c0_i32_0 : i32, i32
  }
  func.func @transform_3(%arg0: i32) -> (i32, i32, i32) {
    %c0_i32 = arith.constant 0 : i32
    %c0_i32_0 = arith.constant 0 : i32
    %c0_i32_1 = arith.constant 0 : i32
    %c0_i32_2 = arith.constant 0 : i32
    return %c0_i32, %c0_i32_0, %c0_i32_1 : i32, i32, i32
  }
  func.func @transform_4(%arg0: i32) -> (i32, i32) {
    %c0_i32 = arith.constant 0 : i32
    %c0_i32_0 = arith.constant 0 : i32
    %c0_i32_1 = arith.constant 0 : i32
    return %c0_i32, %c0_i32_0 : i32, i32
  }
  func.func @transform_5(%arg0: i32) -> (i32, i32, i32) {
    %c0_i32 = arith.constant 0 : i32
    %c0_i32_0 = arith.constant 0 : i32
    %c0_i32_1 = arith.constant 0 : i32
    %c0_i32_2 = arith.constant 0 : i32
    return %c0_i32, %c0_i32_0, %c0_i32_1 : i32, i32, i32
  }
  func.func @transform_6(%arg0: i32) -> (i32, i32) {
    %c0_i32 = arith.constant 0 : i32
    %c0_i32_0 = arith.constant 0 : i32
    %c0_i32_1 = arith.constant 0 : i32
    return %c0_i32, %c0_i32_0 : i32, i32
  }
  func.func @transform_7(%arg0: i32) -> (i32, i32) {
    %c0_i32 = arith.constant 0 : i32
    %c0_i32_0 = arith.constant 0 : i32
    %c0_i32_1 = arith.constant 0 : i32
    return %c0_i32, %c0_i32_0 : i32, i32
  }
  func.func @transform_8(%arg0: i32) -> (i32, i32) {
    %c0_i32 = arith.constant 0 : i32
    %c0_i32_0 = arith.constant 0 : i32
    %c0_i32_1 = arith.constant 0 : i32
    return %c0_i32, %c0_i32_0 : i32, i32
  }
  func.func @transform_9(%arg0: i32) -> (i32, i32) {
    %c0_i32 = arith.constant 0 : i32
    %c0_i32_0 = arith.constant 0 : i32
    %c0_i32_1 = arith.constant 0 : i32
    return %c0_i32, %c0_i32_0 : i32, i32
  }
  func.func @transform_10(%arg0: i32) -> (i32, i32) {
    %c0_i32 = arith.constant 0 : i32
    %c0_i32_0 = arith.constant 0 : i32
    %c0_i32_1 = arith.constant 0 : i32
    return %c0_i32, %c0_i32_0 : i32, i32
  }
  func.func @transform_11(%arg0: i32) -> (i32, i32) {
    %c0_i32 = arith.constant 0 : i32
    %c0_i32_0 = arith.constant 0 : i32
    %c0_i32_1 = arith.constant 0 : i32
    return %c0_i32, %c0_i32_0 : i32, i32
  }
  func.func @transform_12(%arg0: i32) -> (i32, i32, i32) {
    %c0_i32 = arith.constant 0 : i32
    %c0_i32_0 = arith.constant 0 : i32
    %c0_i32_1 = arith.constant 0 : i32
    return %arg0, %c0_i32, %c0_i32_0 : i32, i32, i32
  }
}

</mosaic_0001>

<llo_original>
// kernel: inception_resnet_b_forward.1
$region0: #{inception_resnet_b_forward.1}
  #allocation0 [shape = 'u32[]', space=smem, size = 0x4, offset = 0x4, fixed_abs, tag = 'smem constant byte address 0x4 - core index']
  #allocation1 [shape = 'u32[72,128]{1,0:T(1,128)}', space=vmem, size = 0x9000, scoped, tag = 'internal scratch']
  #allocation2 [shape = 'f32[10,10,128]{2,1,0:T(8,128)}', space=vmem, size = 0x14000, scoped, tag = 'scratch operand']
  #allocation3 [shape = 'f32[6,12,160]{2,1,0:T(8,128)}', space=vmem, size = 0x18000, scoped, tag = 'scratch operand']
  %s0 = inlined_call_operand.vmem [shape: f32[2,36,1024], index: 0, kind: input, shape index: {}]
  %s1 = inlined_call_operand.hbm [shape: bf16[1024,128], index: 1, kind: input, shape index: {}]
  %s2 = inlined_call_operand.vmem [shape: f32[1,128], index: 2, kind: input, shape index: {}]
  %s3 = inlined_call_operand.hbm [shape: bf16[7,128,160], index: 3, kind: input, shape index: {}]
  %s4 = inlined_call_operand.vmem [shape: f32[1,160], index: 4, kind: input, shape index: {}]
  %s5 = inlined_call_operand.vmem [shape: bf16[7,160,192], index: 5, kind: input, shape index: {}]
  %s6 = inlined_call_operand.vmem [shape: f32[1,192], index: 6, kind: input, shape index: {}]
  %s7 = inlined_call_operand.hbm [shape: bf16[1024,192], index: 7, kind: input, shape index: {}]
  %s8 = inlined_call_operand.vmem [shape: f32[1,192], index: 8, kind: input, shape index: {}]
  %s9 = inlined_call_operand.hbm [shape: bf16[192,1024], index: 9, kind: input, shape index: {}]
  %s10 = inlined_call_operand.hbm [shape: bf16[192,1024], index: 10, kind: input, shape index: {}]
  %s11 = inlined_call_operand.vmem [shape: f32[1,1024], index: 11, kind: input, shape index: {}]
  %s12 = inlined_call_operand.vmem [shape: f32[2,36,1024], index: 12, kind: output, shape index: {}]
  %s13 = sld [smem:[#allocation0]]
  $region101: #{inception_resnet_b_forward.1} parent=0
    _
  %s15 = ssub.s32 1, %s13
  %s16 = scalar_select 0, %s15, %s13
  $region1: #{inception_resnet_b_forward.1} parent=0
    #allocation4 [shape = 'u8[262144]{0}', space=vmem, size = 0x40000, scoped, tag = 'input window, operand 1, single buffered']
    #allocation5 [shape = 's32[2]{0}', space=sflag, size = 0x8, scoped, tag = 'scoped memory for inception_resnet_b_forward.1']
    #allocation6 [shape = 'u8[458752]{0}', space=vmem, size = 0x70000, scoped, tag = 'input window, operand 3, single buffered']
    #allocation7 [shape = 's32[1]{0}', space=sflag, size = 0x4, scoped, tag = 'scoped memory for inception_resnet_b_forward.1']
    #allocation8 [shape = 'u8[524288]{0}', space=vmem, size = 0x80000, scoped, tag = 'input window, operand 7, single buffered']
    #allocation9 [shape = 'u8[393216]{0}', space=vmem, size = 0x60000, scoped, tag = 'input window, operand 9, single buffered']
    #allocation10 [shape = 's32[1]{0}', space=sflag, size = 0x4, scoped, tag = 'scoped memory for inception_resnet_b_forward.1']
    #allocation11 [shape = 'u8[393216]{0}', space=vmem, size = 0x60000, scoped, tag = 'input window, operand 10, single buffered']
    %17 = vsyncpa [#allocation5], 0
    %18 = vsyncpa [#allocation7], 0
    %19 = vsyncpa [#allocation10], 0
    loop: start=0, step=1, limit=4
    $region2: #{inception_resnet_b_forward.1} parent=1 // loop_pre_header
      _
    $region3: #{inception_resnet_b_forward.1} parent=1 // loop_header
      %s21 = sphi 0, %s25
      %p22 = scmp.ge.s32.totalorder %s21, 4
      %s31 = sphi 0, %s33
      %s34 = sphi 0, %s31
      %s35 = sphi 0, %s34
      %s51 = sphi 0, %s35
      %s55 = sphi 0, %s55
      %s57 = sphi 0, %s55
      %s58 = sphi 0, %s57
      %s72 = sphi 0, %s58
      %s76 = sphi 0, %s76
      %s78 = sphi 0, %s76
      %s79 = sphi 0, %s78
      %s93 = sphi 0, %s79
      %s97 = sphi 0, %s97
      %s99 = sphi 0, %s97
      %s100 = sphi 0, %s99
      %s114 = sphi 0, %s100
      %s118 = sphi 0, %s118
      %s120 = sphi 0, %s118
      %s121 = sphi 0, %s120
      %s135 = sphi 0, %s121
      %s139 = sphi 0, %s139
      %s141 = sphi 0, %s139
      %s142 = sphi 0, %s141
      %s156 = sphi 0, %s142
      %s160 = sphi 0, %s160
      %s162 = sphi 0, %s160
      %s163 = sphi 0, %s162
      %s177 = sphi 0, %s163
      %s181 = sphi 0, %s181
      %s183 = sphi 0, %s181
      %s184 = sphi 0, %s183
      %s198 = sphi 0, %s184
      %s202 = sphi 0, %s202
      %s204 = sphi 0, %s202
      %s205 = sphi 0, %s204
      %s219 = sphi 0, %s205
      %s223 = sphi 0, %s223
      %s225 = sphi 0, %s223
      %s226 = sphi 0, %s225
      %s240 = sphi 0, %s226
      %s244 = sphi 0, %s244
      %s246 = sphi 0, %s244
      %s247 = sphi 0, %s246
      %s261 = sphi 0, %s247
      %s265 = sphi 0, %s265
      %s267 = sphi 0, %s265
      %s268 = sphi 0, %s267
      %s282 = sphi 0, %s268
      %s288 = sphi 0, %s290
      %s291 = sphi 0, %s288
      %s292 = sphi 0, %s291
      %s308 = sphi 0, %s292
    $region4: #{inception_resnet_b_forward.1} parent=1 // loop_header_branch
      %24 = sbr.rel (%p22) target = $region8
    $region5: #{inception_resnet_b_forward.1} parent=1 // loop_body
      %s26 = ssub.s32 %s21, 1
      %s27 = ssub.s32 %s21, 2
      %s28 = sadd.s32 %s21, 1
      %s29 = ssub.s32 %s21, %s28
      %p30 = scmp.eq.s32.totalorder %s29, 0
      %s32 = sadd.s32 %s31, 1
      %s33 = scalar_select %p30, %s31, %s32
      %p36 = pneg %p30
      %p37 = scmp.eq.s32.totalorder %s21, 1
      %p38 = por %p36, %p37
      %p39 = scmp.ne.s32.totalorder %s31, %s34
      %p40 = scmp.eq.s32.totalorder %s21, 0
      %p41 = por %p39, %p40
      %p42 = scmp.ne.s32.totalorder %s31, %s34
      %p43 = scmp.eq.s32.totalorder %s26, 1
      %p44 = por %p42, %p43
      %p45 = scmp.ne.s32.totalorder %s34, %s35
      %p46 = scmp.eq.s32.totalorder %s26, 0
      %p47 = por %p45, %p46
      %p48 = scmp.ne.s32.totalorder %s34, %s35
      %p49 = scmp.eq.s32.totalorder %s27, 1
      %p50 = por %p48, %p49
      %p52 = scmp.ne.s32.totalorder %s35, %s51
      %p53 = scmp.eq.s32.totalorder %s27, 0
      %p54 = por %p52, %p53
      %s56 = sadd.s32 %s55, 1
      %p59 = scmp.eq.s32.totalorder %s21, 1
      %p60 = scmp.ne.s32.totalorder %s55, %s57
      %p61 = scmp.eq.s32.totalorder %s21, 0
      %p62 = por %p60, %p61
      %p63 = scmp.ne.s32.totalorder %s55, %s57
      %p64 = scmp.eq.s32.totalorder %s26, 1
      %p65 = por %p63, %p64
      %p66 = scmp.ne.s32.totalorder %s57, %s58
      %p67 = scmp.eq.s32.totalorder %s26, 0
      %p68 = por %p66, %p67
      %p69 = scmp.ne.s32.totalorder %s57, %s58
      %p70 = scmp.eq.s32.totalorder %s27, 1
      %p71 = por %p69, %p70
      %p73 = scmp.ne.s32.totalorder %s58, %s72
      %p74 = scmp.eq.s32.totalorder %s27, 0
      %p75 = por %p73, %p74
      %s77 = sadd.s32 %s76, 1
      %p80 = scmp.eq.s32.totalorder %s21, 1
      %p81 = scmp.ne.s32.totalorder %s76, %s78
      %p82 = scmp.eq.s32.totalorder %s21, 0
      %p83 = por %p81, %p82
      %p84 = scmp.ne.s32.totalorder %s76, %s78
      %p85 = scmp.eq.s32.totalorder %s26, 1
      %p86 = por %p84, %p85
      %p87 = scmp.ne.s32.totalorder %s78, %s79
      %p88 = scmp.eq.s32.totalorder %s26, 0
      %p89 = por %p87, %p88
      %p90 = scmp.ne.s32.totalorder %s78, %s79
      %p91 = scmp.eq.s32.totalorder %s27, 1
      %p92 = por %p90, %p91
      %p94 = scmp.ne.s32.totalorder %s79, %s93
      %p95 = scmp.eq.s32.totalorder %s27, 0
      %p96 = por %p94, %p95
      %s98 = sadd.s32 %s97, 1
      %p101 = scmp.eq.s32.totalorder %s21, 1
      %p102 = scmp.ne.s32.totalorder %s97, %s99
      %p103 = scmp.eq.s32.totalorder %s21, 0
      %p104 = por %p102, %p103
      %p105 = scmp.ne.s32.totalorder %s97, %s99
      %p106 = scmp.eq.s32.totalorder %s26, 1
      %p107 = por %p105, %p106
      %p108 = scmp.ne.s32.totalorder %s99, %s100
      %p109 = scmp.eq.s32.totalorder %s26, 0
      %p110 = por %p108, %p109
      %p111 = scmp.ne.s32.totalorder %s99, %s100
      %p112 = scmp.eq.s32.totalorder %s27, 1
      %p113 = por %p111, %p112
      %p115 = scmp.ne.s32.totalorder %s100, %s114
      %p116 = scmp.eq.s32.totalorder %s27, 0
      %p117 = por %p115, %p116
      %s119 = sadd.s32 %s118, 1
      %p122 = scmp.eq.s32.totalorder %s21, 1
      %p123 = scmp.ne.s32.totalorder %s118, %s120
      %p124 = scmp.eq.s32.totalorder %s21, 0
      %p125 = por %p123, %p124
      %p126 = scmp.ne.s32.totalorder %s118, %s120
      %p127 = scmp.eq.s32.totalorder %s26, 1
      %p128 = por %p126, %p127
      %p129 = scmp.ne.s32.totalorder %s120, %s121
      %p130 = scmp.eq.s32.totalorder %s26, 0
      %p131 = por %p129, %p130
      %p132 = scmp.ne.s32.totalorder %s120, %s121
      %p133 = scmp.eq.s32.totalorder %s27, 1
      %p134 = por %p132, %p133
      %p136 = scmp.ne.s32.totalorder %s121, %s135
      %p137 = scmp.eq.s32.totalorder %s27, 0
      %p138 = por %p136, %p137
      %s140 = sadd.s32 %s139, 1
      %p143 = scmp.eq.s32.totalorder %s21, 1
      %p144 = scmp.ne.s32.totalorder %s139, %s141
      %p145 = scmp.eq.s32.totalorder %s21, 0
      %p146 = por %p144, %p145
      %p147 = scmp.ne.s32.totalorder %s139, %s141
      %p148 = scmp.eq.s32.totalorder %s26, 1
      %p149 = por %p147, %p148
      %p150 = scmp.ne.s32.totalorder %s141, %s142
      %p151 = scmp.eq.s32.totalorder %s26, 0
      %p152 = por %p150, %p151
      %p153 = scmp.ne.s32.totalorder %s141, %s142
      %p154 = scmp.eq.s32.totalorder %s27, 1
      %p155 = por %p153, %p154
      %p157 = scmp.ne.s32.totalorder %s142, %s156
      %p158 = scmp.eq.s32.totalorder %s27, 0
      %p159 = por %p157, %p158
      %s161 = sadd.s32 %s160, 1
      %p164 = scmp.eq.s32.totalorder %s21, 1
      %p165 = scmp.ne.s32.totalorder %s160, %s162
      %p166 = scmp.eq.s32.totalorder %s21, 0
      %p167 = por %p165, %p166
      %p168 = scmp.ne.s32.totalorder %s160, %s162
      %p169 = scmp.eq.s32.totalorder %s26, 1
      %p170 = por %p168, %p169
      %p171 = scmp.ne.s32.totalorder %s162, %s163
      %p172 = scmp.eq.s32.totalorder %s26, 0
      %p173 = por %p171, %p172
      %p174 = scmp.ne.s32.totalorder %s162, %s163
      %p175 = scmp.eq.s32.totalorder %s27, 1
      %p176 = por %p174, %p175
      %p178 = scmp.ne.s32.totalorder %s163, %s177
      %p179 = scmp.eq.s32.totalorder %s27, 0
      %p180 = por %p178, %p179
      %s182 = sadd.s32 %s181, 1
      %p185 = scmp.eq.s32.totalorder %s21, 1
      %p186 = scmp.ne.s32.totalorder %s181, %s183
      %p187 = scmp.eq.s32.totalorder %s21, 0
      %p188 = por %p186, %p187
      %p189 = scmp.ne.s32.totalorder %s181, %s183
      %p190 = scmp.eq.s32.totalorder %s26, 1
      %p191 = por %p189, %p190
      %p192 = scmp.ne.s32.totalorder %s183, %s184
      %p193 = scmp.eq.s32.totalorder %s26, 0
      %p194 = por %p192, %p193
      %p195 = scmp.ne.s32.totalorder %s183, %s184
      %p196 = scmp.eq.s32.totalorder %s27, 1
      %p197 = por %p195, %p196
      %p199 = scmp.ne.s32.totalorder %s184, %s198
      %p200 = scmp.eq.s32.totalorder %s27, 0
      %p201 = por %p199, %p200
      %s203 = sadd.s32 %s202, 1
      %p206 = scmp.eq.s32.totalorder %s21, 1
      %p207 = scmp.ne.s32.totalorder %s202, %s204
      %p208 = scmp.eq.s32.totalorder %s21, 0
      %p209 = por %p207, %p208
      %p210 = scmp.ne.s32.totalorder %s202, %s204
      %p211 = scmp.eq.s32.totalorder %s26, 1
      %p212 = por %p210, %p211
      %p213 = scmp.ne.s32.totalorder %s204, %s205
      %p214 = scmp.eq.s32.totalorder %s26, 0
      %p215 = por %p213, %p214
      %p216 = scmp.ne.s32.totalorder %s204, %s205
      %p217 = scmp.eq.s32.totalorder %s27, 1
      %p218 = por %p216, %p217
      %p220 = scmp.ne.s32.totalorder %s205, %s219
      %p221 = scmp.eq.s32.totalorder %s27, 0
      %p222 = por %p220, %p221
      %s224 = sadd.s32 %s223, 1
      %p227 = scmp.eq.s32.totalorder %s21, 1
      %p228 = scmp.ne.s32.totalorder %s223, %s225
      %p229 = scmp.eq.s32.totalorder %s21, 0
      %p230 = por %p228, %p229
      %p231 = scmp.ne.s32.totalorder %s223, %s225
      %p232 = scmp.eq.s32.totalorder %s26, 1
      %p233 = por %p231, %p232
      %p234 = scmp.ne.s32.totalorder %s225, %s226
      %p235 = scmp.eq.s32.totalorder %s26, 0
      %p236 = por %p234, %p235
      %p237 = scmp.ne.s32.totalorder %s225, %s226
      %p238 = scmp.eq.s32.totalorder %s27, 1
      %p239 = por %p237, %p238
      %p241 = scmp.ne.s32.totalorder %s226, %s240
      %p242 = scmp.eq.s32.totalorder %s27, 0
      %p243 = por %p241, %p242
      %s245 = sadd.s32 %s244, 1
      %p248 = scmp.eq.s32.totalorder %s21, 1
      %p249 = scmp.ne.s32.totalorder %s244, %s246
      %p250 = scmp.eq.s32.totalorder %s21, 0
      %p251 = por %p249, %p250
      %p252 = scmp.ne.s32.totalorder %s244, %s246
      %p253 = scmp.eq.s32.totalorder %s26, 1
      %p254 = por %p252, %p253
      %p255 = scmp.ne.s32.totalorder %s246, %s247
      %p256 = scmp.eq.s32.totalorder %s26, 0
      %p257 = por %p255, %p256
      %p258 = scmp.ne.s32.totalorder %s246, %s247
      %p259 = scmp.eq.s32.totalorder %s27, 1
      %p260 = por %p258, %p259
      %p262 = scmp.ne.s32.totalorder %s247, %s261
      %p263 = scmp.eq.s32.totalorder %s27, 0
      %p264 = por %p262, %p263
      %s266 = sadd.s32 %s265, 1
      %p269 = scmp.eq.s32.totalorder %s21, 1
      %p270 = scmp.ne.s32.totalorder %s265, %s267
      %p271 = scmp.eq.s32.totalorder %s21, 0
      %p272 = por %p270, %p271
      %p273 = scmp.ne.s32.totalorder %s265, %s267
      %p274 = scmp.eq.s32.totalorder %s26, 1
      %p275 = por %p273, %p274
      %p276 = scmp.ne.s32.totalorder %s267, %s268
      %p277 = scmp.eq.s32.totalorder %s26, 0
      %p278 = por %p276, %p277
      %p279 = scmp.ne.s32.totalorder %s267, %s268
      %p280 = scmp.eq.s32.totalorder %s27, 1
      %p281 = por %p279, %p280
      %p283 = scmp.ne.s32.totalorder %s268, %s282
      %p284 = scmp.eq.s32.totalorder %s27, 0
      %p285 = por %p283, %p284
      %s286 = ssub.s32 %s21, %s28
      %p287 = scmp.eq.s32.totalorder %s286, 0
      %s289 = sadd.s32 %s288, 1
      %s290 = scalar_select %p287, %s288, %s289
      %p293 = pneg %p287
      %p294 = scmp.eq.s32.totalorder %s21, 1
      %p295 = por %p293, %p294
      %p296 = scmp.ne.s32.totalorder %s288, %s291
      %p297 = scmp.eq.s32.totalorder %s21, 0
      %p298 = por %p296, %p297
      %p299 = scmp.ne.s32.totalorder %s288, %s291
      %p300 = scmp.eq.s32.totalorder %s26, 1
      %p301 = por %p299, %p300
      %p302 = scmp.ne.s32.totalorder %s291, %s292
      %p303 = scmp.eq.s32.totalorder %s26, 0
      %p304 = por %p302, %p303
      %p305 = scmp.ne.s32.totalorder %s291, %s292
      %p306 = scmp.eq.s32.totalorder %s27, 1
      %p307 = por %p305, %p306
      %p309 = scmp.ne.s32.totalorder %s292, %s308
      %p310 = scmp.eq.s32.totalorder %s27, 0
      %p311 = por %p309, %p310
      %p312 = scmp.le.s32.totalorder 1, %s21
      %p313 = scmp.lt.s32.totalorder %s21, 3
      %p314 = pnand %p312, %p313
      %p315 = pneg %p314
      // Predicated region
      $region9: #{inception_resnet_b_forward.1} parent=5 // pred_check
        _
      $region10: #{inception_resnet_b_forward.1} parent=5 // pred_check_branch
        %317 = sbr.rel (%p314) target = $region12
      $region11: #{inception_resnet_b_forward.1} parent=5 // pred_region
        %s318 = ssub.s32 %s21, 1
        // Predicated region
        $region13: #{inception_resnet_b_forward.1} parent=11 // pred_check
          %p319 = pneg %p68
        $region14: #{inception_resnet_b_forward.1} parent=11 // pred_check_branch
          %321 = sbr.rel (%p319) target = $region16
        $region15: #{inception_resnet_b_forward.1} parent=11 // pred_region
          %323 = vsyncadd [#allocation5], 0
          %s324 = sshll.u32 %s1, 4
          %s325 = int_to_ptr.hbm [resolvable:$true] %s324
          %s326 = sshll.u32 [#allocation4], 4
          %s327 = int_to_ptr.vmem [resolvable:$true] %s326
          %332 = dma.hbm_to_vmem [thread:$0]  %s325, 8192, %s327, [#allocation5], 64, 64, 4
        $region16: #{inception_resnet_b_forward.1} parent=11 // pred_fallthru
          _
        // Predicated region
        $region17: #{inception_resnet_b_forward.1} parent=11 // pred_check
          %p333 = pneg %p89
        $region18: #{inception_resnet_b_forward.1} parent=11 // pred_check_branch
          %335 = sbr.rel (%p333) target = $region20
        $region19: #{inception_resnet_b_forward.1} parent=11 // pred_region
          _
        $region20: #{inception_resnet_b_forward.1} parent=11 // pred_fallthru
          _
        // Predicated region
        $region21: #{inception_resnet_b_forward.1} parent=11 // pred_check
          %p336 = pneg %p110
        $region22: #{inception_resnet_b_forward.1} parent=11 // pred_check_branch
          %338 = sbr.rel (%p336) target = $region24
        $region23: #{inception_resnet_b_forward.1} parent=11 // pred_region
          %340 = vsyncadd [#allocation7], 0
          %s341 = sshll.u32 %s3, 4
          %s342 = int_to_ptr.hbm [resolvable:$true] %s341
          %s343 = sshll.u32 [#allocation6], 4
          %s344 = int_to_ptr.vmem [resolvable:$true] %s343
          %349 = dma.hbm_to_vmem [thread:$0]  %s342, 14336, %s344, [#allocation7], 128, 128, 8
        $region24: #{inception_resnet_b_forward.1} parent=11 // pred_fallthru
          _
        // Predicated region
        $region25: #{inception_resnet_b_forward.1} parent=11 // pred_check
          %p350 = pneg %p131
        $region26: #{inception_resnet_b_forward.1} parent=11 // pred_check_branch
          %352 = sbr.rel (%p350) target = $region28
        $region27: #{inception_resnet_b_forward.1} parent=11 // pred_region
          _
        $region28: #{inception_resnet_b_forward.1} parent=11 // pred_fallthru
          _
        // Predicated region
        $region29: #{inception_resnet_b_forward.1} parent=11 // pred_check
          %p353 = pneg %p152
        $region30: #{inception_resnet_b_forward.1} parent=11 // pred_check_branch
          %355 = sbr.rel (%p353) target = $region32
        $region31: #{inception_resnet_b_forward.1} parent=11 // pred_region
          _
        $region32: #{inception_resnet_b_forward.1} parent=11 // pred_fallthru
          _
        // Predicated region
        $region33: #{inception_resnet_b_forward.1} parent=11 // pred_check
          %p356 = pneg %p173
        $region34: #{inception_resnet_b_forward.1} parent=11 // pred_check_branch
          %358 = sbr.rel (%p356) target = $region36
        $region35: #{inception_resnet_b_forward.1} parent=11 // pred_region
          _
        $region36: #{inception_resnet_b_forward.1} parent=11 // pred_fallthru
          _
        // Predicated region
        $region37: #{inception_resnet_b_forward.1} parent=11 // pred_check
          %p359 = pneg %p194
        $region38: #{inception_resnet_b_forward.1} parent=11 // pred_check_branch
          %361 = sbr.rel (%p359) target = $region40
        $region39: #{inception_resnet_b_forward.1} parent=11 // pred_region
          %363 = vsyncadd [#allocation7], 0
          %s364 = sshll.u32 %s7, 4
          %s365 = int_to_ptr.hbm [resolvable:$true] %s364
          %s366 = sshll.u32 [#allocation8], 4
          %s367 = int_to_ptr.vmem [resolvable:$true] %s366
          %372 = dma.hbm_to_vmem [thread:$0]  %s365, 16384, %s367, [#allocation7], 128, 128, 8
        $region40: #{inception_resnet_b_forward.1} parent=11 // pred_fallthru
          _
        // Predicated region
        $region41: #{inception_resnet_b_forward.1} parent=11 // pred_check
          %p373 = pneg %p215
        $region42: #{inception_resnet_b_forward.1} parent=11 // pred_check_branch
          %375 = sbr.rel (%p373) target = $region44
        $region43: #{inception_resnet_b_forward.1} parent=11 // pred_region
          _
        $region44: #{inception_resnet_b_forward.1} parent=11 // pred_fallthru
          _
        // Predicated region
        $region45: #{inception_resnet_b_forward.1} parent=11 // pred_check
          %p376 = pneg %p236
        $region46: #{inception_resnet_b_forward.1} parent=11 // pred_check_branch
          %378 = sbr.rel (%p376) target = $region48
        $region47: #{inception_resnet_b_forward.1} parent=11 // pred_region
          %380 = vsyncadd [#allocation10], 0
          %s381 = sshll.u32 %s9, 4
          %s382 = int_to_ptr.hbm [resolvable:$true] %s381
          %s383 = sshll.u32 [#allocation9], 4
          %s384 = int_to_ptr.vmem [resolvable:$true] %s383
          %389 = dma.hbm_to_vmem [thread:$0]  %s382, 12288, %s384, [#allocation10], 512, 512, 32
        $region48: #{inception_resnet_b_forward.1} parent=11 // pred_fallthru
          _
        // Predicated region
        $region49: #{inception_resnet_b_forward.1} parent=11 // pred_check
          %p390 = pneg %p257
        $region50: #{inception_resnet_b_forward.1} parent=11 // pred_check_branch
          %392 = sbr.rel (%p390) target = $region52
        $region51: #{inception_resnet_b_forward.1} parent=11 // pred_region
          %394 = vsyncadd [#allocation10], 0
          %s395 = sshll.u32 %s10, 4
          %s396 = int_to_ptr.hbm [resolvable:$true] %s395
          %s397 = sshll.u32 [#allocation11], 4
          %s398 = int_to_ptr.vmem [resolvable:$true] %s397
          %403 = dma.hbm_to_vmem [thread:$0]  %s396, 12288, %s398, [#allocation10], 512, 512, 32
        $region52: #{inception_resnet_b_forward.1} parent=11 // pred_fallthru
          _
        // Predicated region
        $region53: #{inception_resnet_b_forward.1} parent=11 // pred_check
          %p404 = pneg %p278
        $region54: #{inception_resnet_b_forward.1} parent=11 // pred_check_branch
          %406 = sbr.rel (%p404) target = $region56
        $region55: #{inception_resnet_b_forward.1} parent=11 // pred_region
          _
        $region56: #{inception_resnet_b_forward.1} parent=11 // pred_fallthru
          _
      $region12: #{inception_resnet_b_forward.1} parent=5 // pred_fallthru
        _
      %p407 = scmp.lt.s32.totalorder %s21, 2
      // Predicated region
      $region57: #{inception_resnet_b_forward.1} parent=5 // pred_check
        %p408 = pneg %p407
      $region58: #{inception_resnet_b_forward.1} parent=5 // pred_check_branch
        %410 = sbr.rel (%p408) target = $region60
      $region59: #{inception_resnet_b_forward.1} parent=5 // pred_region
        // Predicated region
        $region61: #{inception_resnet_b_forward.1} parent=59 // pred_check
          %p411 = pneg %p41
        $region62: #{inception_resnet_b_forward.1} parent=59 // pred_check_branch
          %413 = sbr.rel (%p411) target = $region64
        $region63: #{inception_resnet_b_forward.1} parent=59 // pred_region
          %p414 = scmp.lt.s32.totalorder %s21, 1
          %s415 = scalar_select %p414, %s21, 1
          %s416 = smul.addr %s415, 40
          %s417 = smul.addr %s416, 8
          %s418 = scalar_lea.vmem %s0, %s417
        $region64: #{inception_resnet_b_forward.1} parent=59 // pred_fallthru
          _
      $region60: #{inception_resnet_b_forward.1} parent=5 // pred_fallthru
        _
      %p419 = scmp.le.s32.totalorder 1, %s21
      %p420 = scmp.lt.s32.totalorder %s21, 3
      %p421 = pnand %p419, %p420
      %p422 = pneg %p421
      // Predicated region
      $region65: #{inception_resnet_b_forward.1} parent=5 // pred_check
        _
      $region66: #{inception_resnet_b_forward.1} parent=5 // pred_check_branch
        %424 = sbr.rel (%p421) target = $region68
      $region67: #{inception_resnet_b_forward.1} parent=5 // pred_region
        %s425 = ssub.s32 %s21, 1
        // Predicated region
        $region69: #{inception_resnet_b_forward.1} parent=67 // pred_check
          %p426 = pneg %p68
        $region70: #{inception_resnet_b_forward.1} parent=67 // pred_check_branch
          %428 = sbr.rel (%p426) target = $region72
        $region71: #{inception_resnet_b_forward.1} parent=67 // pred_region
          %430 = dma.done [#allocation5], 8192
        $region72: #{inception_resnet_b_forward.1} parent=67 // pred_fallthru
          _
        // Predicated region
        $region73: #{inception_resnet_b_forward.1} parent=67 // pred_check
          %p431 = pneg %p110
        $region74: #{inception_resnet_b_forward.1} parent=67 // pred_check_branch
          %433 = sbr.rel (%p431) target = $region76
        $region75: #{inception_resnet_b_forward.1} parent=67 // pred_region
          %435 = dma.done [#allocation7], 14336
        $region76: #{inception_resnet_b_forward.1} parent=67 // pred_fallthru
          _
        // Predicated region
        $region77: #{inception_resnet_b_forward.1} parent=67 // pred_check
          %p436 = pneg %p194
        $region78: #{inception_resnet_b_forward.1} parent=67 // pred_check_branch
          %438 = sbr.rel (%p436) target = $region80
        $region79: #{inception_resnet_b_forward.1} parent=67 // pred_region
          %440 = dma.done [#allocation7], 16384
        $region80: #{inception_resnet_b_forward.1} parent=67 // pred_fallthru
          _
        // Predicated region
        $region81: #{inception_resnet_b_forward.1} parent=67 // pred_check
          %p441 = pneg %p236
        $region82: #{inception_resnet_b_forward.1} parent=67 // pred_check_branch
          %443 = sbr.rel (%p441) target = $region84
        $region83: #{inception_resnet_b_forward.1} parent=67 // pred_region
          %445 = dma.done [#allocation10], 12288
        $region84: #{inception_resnet_b_forward.1} parent=67 // pred_fallthru
          _
        // Predicated region
        $region85: #{inception_resnet_b_forward.1} parent=67 // pred_check
          %p446 = pneg %p257
        $region86: #{inception_resnet_b_forward.1} parent=67 // pred_check_branch
          %448 = sbr.rel (%p446) target = $region88
        $region87: #{inception_resnet_b_forward.1} parent=67 // pred_region
          %450 = dma.done [#allocation10], 12288
        $region88: #{inception_resnet_b_forward.1} parent=67 // pred_fallthru
          _
        %p451 = scmp.lt.s32.totalorder %s26, 1
        %s452 = scalar_select %p451, %s26, 1
        %s453 = smul.addr %s452, 40
        %s454 = smul.addr %s453, 8
        %s455 = scalar_lea.vmem %s0, %s454
        %p456 = pneg %p47
        %p457 = pneg %p44
        %p458 = pneg %p68
        %p459 = pneg %p65
        %p460 = pneg %p89
        %p461 = pneg %p86
        %p462 = pneg %p110
        %p463 = pneg %p107
        %p464 = pneg %p131
        %p465 = pneg %p128
        %p466 = pneg %p152
        %p467 = pneg %p149
        %p468 = pneg %p173
        %p469 = pneg %p170
        %p470 = pneg %p194
        %p471 = pneg %p191
        %p472 = pneg %p215
        %p473 = pneg %p212
        %p474 = pneg %p236
        %p475 = pneg %p233
        %p476 = pneg %p257
        %p477 = pneg %p254
        %p478 = pneg %p278
        %p479 = pneg %p275
        %p480 = pneg %p304
        %p481 = pneg %p301
        %p482 = scmp.lt.s32.totalorder %s26, 1
        %s483 = scalar_select %p482, %s26, 1
        %s484 = smul.addr %s483, 40
        %s485 = smul.addr %s484, 8
        %s486 = scalar_lea.vmem %s12, %s485
        %p487 = scmp.lt.s32.totalorder %s26, 1
        %s488 = scalar_select %p487, %s26, 1
        %s489 = smul.addr %s488, 40
        %s490 = smul.addr %s489, 8
        %s491 = scalar_lea.vmem %s0, %s490
        %p492 = scmp.lt.s32.totalorder %s26, 1
        %s493 = scalar_select %p492, %s26, 1
        %s494 = smul.addr %s493, 40
        %s495 = smul.addr %s494, 8
        %s496 = scalar_lea.vmem %s12, %s495
        %v498 = vld [vmem:[%s491] sm:$0xff]
        %v499 = vld [vmem:[%s491 + $0x8] sm:$0xff]
        %v500 = vld [vmem:[%s491 + $0x10] sm:$0xff]
        %v501 = vld [vmem:[%s491 + $0x18] sm:$0xff]
        %v502 = vld [vmem:[%s491 + $0x20] sm:$0xff]
        %v503 = vld [vmem:[%s491 + $0x28] sm:$0xff]
        %v504 = vld [vmem:[%s491 + $0x30] sm:$0xff]
        %v505 = vld [vmem:[%s491 + $0x38] sm:$0xff]
        %v506 = vld [vmem:[%s491 + $0x40] sm:$0xff]
        %v507 = vld [vmem:[%s491 + $0x48] sm:$0xff]
        %v508 = vld [vmem:[%s491 + $0x50] sm:$0xff]
        %v509 = vld [vmem:[%s491 + $0x58] sm:$0xff]
        %v510 = vld [vmem:[%s491 + $0x60] sm:$0xff]
        %v511 = vld [vmem:[%s491 + $0x68] sm:$0xff]
        %v512 = vld [vmem:[%s491 + $0x70] sm:$0xff]
        %v513 = vld [vmem:[%s491 + $0x78] sm:$0xff]
        %v514 = vld [vmem:[%s491 + $0x80] sm:$0xff]
        %v515 = vld [vmem:[%s491 + $0x88] sm:$0xff]
        %v516 = vld [vmem:[%s491 + $0x90] sm:$0xff]
        %v517 = vld [vmem:[%s491 + $0x98] sm:$0xff]
        %v518 = vld [vmem:[%s491 + $0xa0] sm:$0xff]
        %v519 = vld [vmem:[%s491 + $0xa8] sm:$0xff]
        %v520 = vld [vmem:[%s491 + $0xb0] sm:$0xff]
        %v521 = vld [vmem:[%s491 + $0xb8] sm:$0xff]
        %v522 = vld [vmem:[%s491 + $0xc0] sm:$0xff]
        %v523 = vld [vmem:[%s491 + $0xc8] sm:$0xff]
        %v524 = vld [vmem:[%s491 + $0xd0] sm:$0xff]
        %v525 = vld [vmem:[%s491 + $0xd8] sm:$0xff]
        %v526 = vld [vmem:[%s491 + $0xe0] sm:$0xff]
        %v527 = vld [vmem:[%s491 + $0xe8] sm:$0xff]
        %v528 = vld [vmem:[%s491 + $0xf0] sm:$0xff]
        %v529 = vld [vmem:[%s491 + $0xf8] sm:$0xff]
        %v530 = vld [vmem:[%s491 + $0x100] sm:$0xf]
        %v531 = vld [vmem:[%s491 + $0x108] sm:$0xf]
        %v532 = vld [vmem:[%s491 + $0x110] sm:$0xf]
        %v533 = vld [vmem:[%s491 + $0x118] sm:$0xf]
        %v534 = vld [vmem:[%s491 + $0x120] sm:$0xf]
        %v535 = vld [vmem:[%s491 + $0x128] sm:$0xf]
        %v536 = vld [vmem:[%s491 + $0x130] sm:$0xf]
        %v537 = vld [vmem:[%s491 + $0x138] sm:$0xf]
        %v538 = vpack.c.bf16 %v506, %v498
        %v539 = vpack.c.bf16 %v507, %v499
        %v540 = vpack.c.bf16 %v508, %v500
        %v541 = vpack.c.bf16 %v509, %v501
        %v542 = vpack.c.bf16 %v510, %v502
        %v543 = vpack.c.bf16 %v511, %v503
        %v544 = vpack.c.bf16 %v512, %v504
        %v545 = vpack.c.bf16 %v513, %v505
        %v546 = vpack.c.bf16 %v522, %v514
        %v547 = vpack.c.bf16 %v523, %v515
        %v548 = vpack.c.bf16 %v524, %v516
        %v549 = vpack.c.bf16 %v525, %v517
        %v550 = vpack.c.bf16 %v526, %v518
        %v551 = vpack.c.bf16 %v527, %v519
        %v552 = vpack.c.bf16 %v528, %v520
        %v553 = vpack.c.bf16 %v529, %v521
        %v554 = vpack.c.bf16 %v530, %v530
        %v555 = vpack.c.bf16 %v531, %v531
        %v556 = vpack.c.bf16 %v532, %v532
        %v557 = vpack.c.bf16 %v533, %v533
        %v558 = vpack.c.bf16 %v534, %v534
        %v559 = vpack.c.bf16 %v535, %v535
        %v560 = vpack.c.bf16 %v536, %v536
        %v561 = vpack.c.bf16 %v537, %v537
        %v562 = vld [vmem:[#allocation4] sm:$0xf]
        %v563 = vld [vmem:[#allocation4 + $0x4] sm:$0xf]
        %v564 = vld [vmem:[#allocation4 + $0x8] sm:$0xf]
        %v565 = vld [vmem:[#allocation4 + $0xc] sm:$0xf]
        %v566 = vld [vmem:[#allocation4 + $0x10] sm:$0xf]
        %v567 = vld [vmem:[#allocation4 + $0x14] sm:$0xf]
        %v568 = vld [vmem:[#allocation4 + $0x18] sm:$0xf]
        %v569 = vld [vmem:[#allocation4 + $0x1c] sm:$0xf]
        %v570 = vld [vmem:[#allocation4 + $0x20] sm:$0xf]
        %v571 = vld [vmem:[#allocation4 + $0x24] sm:$0xf]
        %v572 = vld [vmem:[#allocation4 + $0x28] sm:$0xf]
        %v573 = vld [vmem:[#allocation4 + $0x2c] sm:$0xf]
        %v574 = vld [vmem:[#allocation4 + $0x30] sm:$0xf]
        %v575 = vld [vmem:[#allocation4 + $0x34] sm:$0xf]
        %v576 = vld [vmem:[#allocation4 + $0x38] sm:$0xf]
        %v577 = vld [vmem:[#allocation4 + $0x3c] sm:$0xf]
        %v578 = vld [vmem:[#allocation4 + $0x40] sm:$0xf]
        %v579 = vld [vmem:[#allocation4 + $0x44] sm:$0xf]
        %v580 = vld [vmem:[#allocation4 + $0x48] sm:$0xf]
        %v581 = vld [vmem:[#allocation4 + $0x4c] sm:$0xf]
        %v582 = vld [vmem:[#allocation4 + $0x50] sm:$0xf]
        %v583 = vld [vmem:[#allocation4 + $0x54] sm:$0xf]
        %v584 = vld [vmem:[#allocation4 + $0x58] sm:$0xf]
        %v585 = vld [vmem:[#allocation4 + $0x5c] sm:$0xf]
        %v586 = vld [vmem:[#allocation4 + $0x60] sm:$0xf]
        %v587 = vld [vmem:[#allocation4 + $0x64] sm:$0xf]
        %v588 = vld [vmem:[#allocation4 + $0x68] sm:$0xf]
        %v589 = vld [vmem:[#allocation4 + $0x6c] sm:$0xf]
        %v590 = vld [vmem:[#allocation4 + $0x70] sm:$0xf]
        %v591 = vld [vmem:[#allocation4 + $0x74] sm:$0xf]
        %v592 = vld [vmem:[#allocation4 + $0x78] sm:$0xf]
        %v593 = vld [vmem:[#allocation4 + $0x7c] sm:$0xf]
        %v594 = vld [vmem:[#allocation4 + $0x80] sm:$0xf]
        %v595 = vld [vmem:[#allocation4 + $0x84] sm:$0xf]
        %v596 = vld [vmem:[#allocation4 + $0x88] sm:$0xf]
        %v597 = vld [vmem:[#allocation4 + $0x8c] sm:$0xf]
        %v598 = vld [vmem:[#allocation4 + $0x90] sm:$0xf]
        %v599 = vld [vmem:[#allocation4 + $0x94] sm:$0xf]
        %v600 = vld [vmem:[#allocation4 + $0x98] sm:$0xf]
        %v601 = vld [vmem:[#allocation4 + $0x9c] sm:$0xf]
        %v602 = vld [vmem:[#allocation4 + $0xa0] sm:$0xf]
        %v603 = vld [vmem:[#allocation4 + $0xa4] sm:$0xf]
        %v604 = vld [vmem:[#allocation4 + $0xa8] sm:$0xf]
        %v605 = vld [vmem:[#allocation4 + $0xac] sm:$0xf]
        %v606 = vld [vmem:[#allocation4 + $0xb0] sm:$0xf]
        %v607 = vld [vmem:[#allocation4 + $0xb4] sm:$0xf]
        %v608 = vld [vmem:[#allocation4 + $0xb8] sm:$0xf]
        %v609 = vld [vmem:[#allocation4 + $0xbc] sm:$0xf]
        %v610 = vld [vmem:[#allocation4 + $0xc0] sm:$0xf]
        %v611 = vld [vmem:[#allocation4 + $0xc4] sm:$0xf]
        %v612 = vld [vmem:[#allocation4 + $0xc8] sm:$0xf]
        %v613 = vld [vmem:[#allocation4 + $0xcc] sm:$0xf]
        %v614 = vld [vmem:[#allocation4 + $0xd0] sm:$0xf]
        %v615 = vld [vmem:[#allocation4 + $0xd4] sm:$0xf]
        %v616 = vld [vmem:[#allocation4 + $0xd8] sm:$0xf]
        %v617 = vld [vmem:[#allocation4 + $0xdc] sm:$0xf]
        %v618 = vld [vmem:[#allocation4 + $0xe0] sm:$0xf]
        %v619 = vld [vmem:[#allocation4 + $0xe4] sm:$0xf]
        %v620 = vld [vmem:[#allocation4 + $0xe8] sm:$0xf]
        %v621 = vld [vmem:[#allocation4 + $0xec] sm:$0xf]
        %v622 = vld [vmem:[#allocation4 + $0xf0] sm:$0xf]
        %v623 = vld [vmem:[#allocation4 + $0xf4] sm:$0xf]
        %v624 = vld [vmem:[#allocation4 + $0xf8] sm:$0xf]
        %v625 = vld [vmem:[#allocation4 + $0xfc] sm:$0xf]
        %v626 = vld [vmem:[#allocation4 + $0x100] sm:$0xf]
        %v627 = vld [vmem:[#allocation4 + $0x104] sm:$0xf]
        %v628 = vld [vmem:[#allocation4 + $0x108] sm:$0xf]
        %v629 = vld [vmem:[#allocation4 + $0x10c] sm:$0xf]
        %v630 = vld [vmem:[#allocation4 + $0x110] sm:$0xf]
        %v631 = vld [vmem:[#allocation4 + $0x114] sm:$0xf]
        %v632 = vld [vmem:[#allocation4 + $0x118] sm:$0xf]
        %v633 = vld [vmem:[#allocation4 + $0x11c] sm:$0xf]
        %v634 = vld [vmem:[#allocation4 + $0x120] sm:$0xf]
        %v635 = vld [vmem:[#allocation4 + $0x124] sm:$0xf]
        %v636 = vld [vmem:[#allocation4 + $0x128] sm:$0xf]
        %v637 = vld [vmem:[#allocation4 + $0x12c] sm:$0xf]
        %v638 = vld [vmem:[#allocation4 + $0x130] sm:$0xf]
        %v639 = vld [vmem:[#allocation4 + $0x134] sm:$0xf]
        %v640 = vld [vmem:[#allocation4 + $0x138] sm:$0xf]
        %v641 = vld [vmem:[#allocation4 + $0x13c] sm:$0xf]
        %v642 = vld [vmem:[#allocation4 + $0x140] sm:$0xf]
        %v643 = vld [vmem:[#allocation4 + $0x144] sm:$0xf]
        %v644 = vld [vmem:[#allocation4 + $0x148] sm:$0xf]
        %v645 = vld [vmem:[#allocation4 + $0x14c] sm:$0xf]
        %v646 = vld [vmem:[#allocation4 + $0x150] sm:$0xf]
        %v647 = vld [vmem:[#allocation4 + $0x154] sm:$0xf]
        %v648 = vld [vmem:[#allocation4 + $0x158] sm:$0xf]
        %v649 = vld [vmem:[#allocation4 + $0x15c] sm:$0xf]
        %v650 = vld [vmem:[#allocation4 + $0x160] sm:$0xf]
        %v651 = vld [vmem:[#allocation4 + $0x164] sm:$0xf]
        %v652 = vld [vmem:[#allocation4 + $0x168] sm:$0xf]
        %v653 = vld [vmem:[#allocation4 + $0x16c] sm:$0xf]
        %v654 = vld [vmem:[#allocation4 + $0x170] sm:$0xf]
        %v655 = vld [vmem:[#allocation4 + $0x174] sm:$0xf]
        %v656 = vld [vmem:[#allocation4 + $0x178] sm:$0xf]
        %v657 = vld [vmem:[#allocation4 + $0x17c] sm:$0xf]
        %v658 = vld [vmem:[#allocation4 + $0x180] sm:$0xf]
        %v659 = vld [vmem:[#allocation4 + $0x184] sm:$0xf]
        %v660 = vld [vmem:[#allocation4 + $0x188] sm:$0xf]
        %v661 = vld [vmem:[#allocation4 + $0x18c] sm:$0xf]
        %v662 = vld [vmem:[#allocation4 + $0x190] sm:$0xf]
        %v663 = vld [vmem:[#allocation4 + $0x194] sm:$0xf]
        %v664 = vld [vmem:[#allocation4 + $0x198] sm:$0xf]
        %v665 = vld [vmem:[#allocation4 + $0x19c] sm:$0xf]
        %v666 = vld [vmem:[#allocation4 + $0x1a0] sm:$0xf]
        %v667 = vld [vmem:[#allocation4 + $0x1a4] sm:$0xf]
        %v668 = vld [vmem:[#allocation4 + $0x1a8] sm:$0xf]
        %v669 = vld [vmem:[#allocation4 + $0x1ac] sm:$0xf]
        %v670 = vld [vmem:[#allocation4 + $0x1b0] sm:$0xf]
        %v671 = vld [vmem:[#allocation4 + $0x1b4] sm:$0xf]
        %v672 = vld [vmem:[#allocation4 + $0x1b8] sm:$0xf]
        %v673 = vld [vmem:[#allocation4 + $0x1bc] sm:$0xf]
        %v674 = vld [vmem:[#allocation4 + $0x1c0] sm:$0xf]
        %v675 = vld [vmem:[#allocation4 + $0x1c4] sm:$0xf]
        %v676 = vld [vmem:[#allocation4 + $0x1c8] sm:$0xf]
        %v677 = vld [vmem:[#allocation4 + $0x1cc] sm:$0xf]
        %v678 = vld [vmem:[#allocation4 + $0x1d0] sm:$0xf]
        %v679 = vld [vmem:[#allocation4 + $0x1d4] sm:$0xf]
        %v680 = vld [vmem:[#allocation4 + $0x1d8] sm:$0xf]
        %v681 = vld [vmem:[#allocation4 + $0x1dc] sm:$0xf]
        %v682 = vld [vmem:[#allocation4 + $0x1e0] sm:$0xf]
        %v683 = vld [vmem:[#allocation4 + $0x1e4] sm:$0xf]
        %v684 = vld [vmem:[#allocation4 + $0x1e8] sm:$0xf]
        %v685 = vld [vmem:[#allocation4 + $0x1ec] sm:$0xf]
        %v686 = vld [vmem:[#allocation4 + $0x1f0] sm:$0xf]
        %v687 = vld [vmem:[#allocation4 + $0x1f4] sm:$0xf]
        %v688 = vld [vmem:[#allocation4 + $0x1f8] sm:$0xf]
        %v689 = vld [vmem:[#allocation4 + $0x1fc] sm:$0xf]
        %v690 = vld [vmem:[%s2] sm:$0x1]
        %v692 = vperm.slane %v690, 0
        %v822 = vunpack.c.l.b16 %v562
        %v823 = vunpack.c.l.b16 %v563
        %v824 = vunpack.c.l.b16 %v564
        %v825 = vunpack.c.l.b16 %v565
        %v826 = vunpack.c.l.b16 %v566
        %v827 = vunpack.c.l.b16 %v567
        %v828 = vunpack.c.l.b16 %v568
        %v829 = vunpack.c.l.b16 %v569
        %v830 = vunpack.c.l.b16 %v570
        %v831 = vunpack.c.l.b16 %v571
        %v832 = vunpack.c.l.b16 %v572
        %v833 = vunpack.c.l.b16 %v573
        %v834 = vunpack.c.l.b16 %v574
        %v835 = vunpack.c.l.b16 %v575
        %v836 = vunpack.c.l.b16 %v576
        %v837 = vunpack.c.l.b16 %v577
        %v838 = vunpack.c.l.b16 %v578
        %v839 = vunpack.c.l.b16 %v579
        %v840 = vunpack.c.l.b16 %v580
        %v841 = vunpack.c.l.b16 %v581
        %v842 = vunpack.c.l.b16 %v582
        %v843 = vunpack.c.l.b16 %v583
        %v844 = vunpack.c.l.b16 %v584
        %v845 = vunpack.c.l.b16 %v585
        %v846 = vunpack.c.l.b16 %v586
        %v847 = vunpack.c.l.b16 %v587
        %v848 = vunpack.c.l.b16 %v588
        %v849 = vunpack.c.l.b16 %v589
        %v850 = vunpack.c.l.b16 %v590
        %v851 = vunpack.c.l.b16 %v591
        %v852 = vunpack.c.l.b16 %v592
        %v853 = vunpack.c.l.b16 %v593
        %v854 = vunpack.c.l.b16 %v594
        %v855 = vunpack.c.l.b16 %v595
        %v856 = vunpack.c.l.b16 %v596
        %v857 = vunpack.c.l.b16 %v597
        %v858 = vunpack.c.l.b16 %v598
        %v859 = vunpack.c.l.b16 %v599
        %v860 = vunpack.c.l.b16 %v600
        %v861 = vunpack.c.l.b16 %v601
        %v862 = vunpack.c.l.b16 %v602
        %v863 = vunpack.c.l.b16 %v603
        %v864 = vunpack.c.l.b16 %v604
        %v865 = vunpack.c.l.b16 %v605
        %v866 = vunpack.c.l.b16 %v606
        %v867 = vunpack.c.l.b16 %v607
        %v868 = vunpack.c.l.b16 %v608
        %v869 = vunpack.c.l.b16 %v609
        %v870 = vunpack.c.l.b16 %v610
        %v871 = vunpack.c.l.b16 %v611
        %v872 = vunpack.c.l.b16 %v612
        %v873 = vunpack.c.l.b16 %v613
        %v874 = vunpack.c.l.b16 %v614
        %v875 = vunpack.c.l.b16 %v615
        %v876 = vunpack.c.l.b16 %v616
        %v877 = vunpack.c.l.b16 %v617
        %v878 = vunpack.c.l.b16 %v618
        %v879 = vunpack.c.l.b16 %v619
        %v880 = vunpack.c.l.b16 %v620
        %v881 = vunpack.c.l.b16 %v621
        %v882 = vunpack.c.l.b16 %v622
        %v883 = vunpack.c.l.b16 %v623
        %v884 = vunpack.c.l.b16 %v624
        %v885 = vunpack.c.l.b16 %v625
        %v886 = vunpack.c.l.b16 %v626
        %v887 = vunpack.c.l.b16 %v627
        %v888 = vunpack.c.l.b16 %v628
        %v889 = vunpack.c.l.b16 %v629
        %v890 = vunpack.c.l.b16 %v630
        %v891 = vunpack.c.l.b16 %v631
        %v892 = vunpack.c.l.b16 %v632
        %v893 = vunpack.c.l.b16 %v633
        %v894 = vunpack.c.l.b16 %v634
        %v895 = vunpack.c.l.b16 %v635
        %v896 = vunpack.c.l.b16 %v636
        %v897 = vunpack.c.l.b16 %v637
        %v898 = vunpack.c.l.b16 %v638
        %v899 = vunpack.c.l.b16 %v639
        %v900 = vunpack.c.l.b16 %v640
        %v901 = vunpack.c.l.b16 %v641
        %v902 = vunpack.c.l.b16 %v642
        %v903 = vunpack.c.l.b16 %v643
        %v904 = vunpack.c.l.b16 %v644
        %v905 = vunpack.c.l.b16 %v645
        %v906 = vunpack.c.l.b16 %v646
        %v907 = vunpack.c.l.b16 %v647
        %v908 = vunpack.c.l.b16 %v648
        %v909 = vunpack.c.l.b16 %v649
        %v910 = vunpack.c.l.b16 %v650
        %v911 = vunpack.c.l.b16 %v651
        %v912 = vunpack.c.l.b16 %v652
        %v913 = vunpack.c.l.b16 %v653
        %v914 = vunpack.c.l.b16 %v654
        %v915 = vunpack.c.l.b16 %v655
        %v916 = vunpack.c.l.b16 %v656
        %v917 = vunpack.c.l.b16 %v657
        %v918 = vunpack.c.l.b16 %v658
        %v919 = vunpack.c.l.b16 %v659
        %v920 = vunpack.c.l.b16 %v660
        %v921 = vunpack.c.l.b16 %v661
        %v922 = vunpack.c.l.b16 %v662
        %v923 = vunpack.c.l.b16 %v663
        %v924 = vunpack.c.l.b16 %v664
        %v925 = vunpack.c.l.b16 %v665
        %v926 = vunpack.c.l.b16 %v666
        %v927 = vunpack.c.l.b16 %v667
        %v928 = vunpack.c.l.b16 %v668
        %v929 = vunpack.c.l.b16 %v669
        %v930 = vunpack.c.l.b16 %v670
        %v931 = vunpack.c.l.b16 %v671
        %v932 = vunpack.c.l.b16 %v672
        %v933 = vunpack.c.l.b16 %v673
        %v934 = vunpack.c.l.b16 %v674
        %v935 = vunpack.c.l.b16 %v675
        %v936 = vunpack.c.l.b16 %v676
        %v937 = vunpack.c.l.b16 %v677
        %v938 = vunpack.c.l.b16 %v678
        %v939 = vunpack.c.l.b16 %v679
        %v940 = vunpack.c.l.b16 %v680
        %v941 = vunpack.c.l.b16 %v681
        %v942 = vunpack.c.l.b16 %v682
        %v943 = vunpack.c.l.b16 %v683
        %v944 = vunpack.c.l.b16 %v684
        %v945 = vunpack.c.l.b16 %v685
        %v946 = vunpack.c.l.b16 %v686
        %v947 = vunpack.c.l.b16 %v687
        %v948 = vunpack.c.l.b16 %v688
        %v949 = vunpack.c.l.b16 %v689
        %v950 = vpack.c.b16 %v823, %v822
        %v951 = vpack.c.b16 %v825, %v824
        %v952 = vpack.c.b16 %v827, %v826
        %v953 = vpack.c.b16 %v829, %v828
        %v954 = vpack.c.b16 %v831, %v830
        %v955 = vpack.c.b16 %v833, %v832
        %v956 = vpack.c.b16 %v835, %v834
        %v957 = vpack.c.b16 %v837, %v836
        %v958 = vpack.c.b16 %v839, %v838
        %v959 = vpack.c.b16 %v841, %v840
        %v960 = vpack.c.b16 %v843, %v842
        %v961 = vpack.c.b16 %v845, %v844
        %v962 = vpack.c.b16 %v847, %v846
        %v963 = vpack.c.b16 %v849, %v848
        %v964 = vpack.c.b16 %v851, %v850
        %v965 = vpack.c.b16 %v853, %v852
        %v966 = vpack.c.b16 %v855, %v854
        %v967 = vpack.c.b16 %v857, %v856
        %v968 = vpack.c.b16 %v859, %v858
        %v969 = vpack.c.b16 %v861, %v860
        %v970 = vpack.c.b16 %v863, %v862
        %v971 = vpack.c.b16 %v865, %v864
        %v972 = vpack.c.b16 %v867, %v866
        %v973 = vpack.c.b16 %v869, %v868
        %v974 = vpack.c.b16 %v871, %v870
        %v975 = vpack.c.b16 %v873, %v872
        %v976 = vpack.c.b16 %v875, %v874
        %v977 = vpack.c.b16 %v877, %v876
        %v978 = vpack.c.b16 %v879, %v878
        %v979 = vpack.c.b16 %v881, %v880
        %v980 = vpack.c.b16 %v883, %v882
        %v981 = vpack.c.b16 %v885, %v884
        %v982 = vpack.c.b16 %v887, %v886
        %v983 = vpack.c.b16 %v889, %v888
        %v984 = vpack.c.b16 %v891, %v890
        %v985 = vpack.c.b16 %v893, %v892
        %v986 = vpack.c.b16 %v895, %v894
        %v987 = vpack.c.b16 %v897, %v896
        %v988 = vpack.c.b16 %v899, %v898
        %v989 = vpack.c.b16 %v901, %v900
        %v990 = vpack.c.b16 %v903, %v902
        %v991 = vpack.c.b16 %v905, %v904
        %v992 = vpack.c.b16 %v907, %v906
        %v993 = vpack.c.b16 %v909, %v908
        %v994 = vpack.c.b16 %v911, %v910
        %v995 = vpack.c.b16 %v913, %v912
        %v996 = vpack.c.b16 %v915, %v914
        %v997 = vpack.c.b16 %v917, %v916
        %v998 = vpack.c.b16 %v919, %v918
        %v999 = vpack.c.b16 %v921, %v920
        %v1000 = vpack.c.b16 %v923, %v922
        %v1001 = vpack.c.b16 %v925, %v924
        %v1002 = vpack.c.b16 %v927, %v926
        %v1003 = vpack.c.b16 %v929, %v928
        %v1004 = vpack.c.b16 %v931, %v930
        %v1005 = vpack.c.b16 %v933, %v932
        %v1006 = vpack.c.b16 %v935, %v934
        %v1007 = vpack.c.b16 %v937, %v936
        %v1008 = vpack.c.b16 %v939, %v938
        %v1009 = vpack.c.b16 %v941, %v940
        %v1010 = vpack.c.b16 %v943, %v942
        %v1011 = vpack.c.b16 %v945, %v944
        %v1012 = vpack.c.b16 %v947, %v946
        %v1013 = vpack.c.b16 %v949, %v948
        %1078 = vmatpush.bf16.msra.mxu0 %v957
        %1079 = vmatpush.bf16.msra.mxu0 %v956
        %1080 = vmatpush.bf16.msra.mxu0 %v955
        %1081 = vmatpush.bf16.msra.mxu0 %v954
        %1082 = vmatpush.bf16.msra.mxu0 %v953
        %1083 = vmatpush.bf16.msra.mxu0 %v952
        %1084 = vmatpush.bf16.msra.mxu0 %v951
        %1085 = vmatpush.bf16.msra.mxu0 %v950
        %1086 = vmatmul.bf16.gmra.mxu0 %v538
        %v1087 = vpop.f32.mrf.mxu0
        %v1088 = vadd.f32 %v692, %v1087
        %v1089 = vpop.f32.mrf.mxu0
        %v1090 = vadd.f32 %v692, %v1089
        %1091 = vmatmul.bf16.gmra.mxu0 %v546
        %v1092 = vpop.f32.mrf.mxu0
        %v1093 = vadd.f32 %v692, %v1092
        %v1094 = vpop.f32.mrf.mxu0
        %v1095 = vadd.f32 %v692, %v1094
        %1096 = vmatmul.bf16.gmra.mxu0 %v554
        %v1097 = vpop.f32.mrf.mxu0
        %v1098 = vadd.f32 %v692, %v1097
        %v1099 = vpop.f32.mrf.mxu0
        %1100 = vdwg.mxu0
        %1101 = vmatpush.bf16.msra.mxu0 %v965
        %1102 = vmatpush.bf16.msra.mxu0 %v964
        %1103 = vmatpush.bf16.msra.mxu0 %v963
        %1104 = vmatpush.bf16.msra.mxu0 %v962
        %1105 = vmatpush.bf16.msra.mxu0 %v961
        %1106 = vmatpush.bf16.msra.mxu0 %v960
        %1107 = vmatpush.bf16.msra.mxu0 %v959
        %1108 = vmatpush.bf16.msra.mxu0 %v958
        %1109 = vmatmul.bf16.gmra.mxu0 %v539
        %v1110 = vpop.f32.mrf.mxu0
        %v1111 = vadd.f32 %v1088, %v1110
        %v1112 = vpop.f32.mrf.mxu0
        %v1113 = vadd.f32 %v1090, %v1112
        %1114 = vmatmul.bf16.gmra.mxu0 %v547
        %v1115 = vpop.f32.mrf.mxu0
        %v1116 = vadd.f32 %v1093, %v1115
        %v1117 = vpop.f32.mrf.mxu0
        %v1118 = vadd.f32 %v1095, %v1117
        %1119 = vmatmul.bf16.gmra.mxu0 %v555
        %v1120 = vpop.f32.mrf.mxu0
        %v1121 = vadd.f32 %v1098, %v1120
        %v1122 = vpop.f32.mrf.mxu0
        %1123 = vdwg.mxu0
        %1124 = vmatpush.bf16.msra.mxu0 %v973
        %1125 = vmatpush.bf16.msra.mxu0 %v972
        %1126 = vmatpush.bf16.msra.mxu0 %v971
        %1127 = vmatpush.bf16.msra.mxu0 %v970
        %1128 = vmatpush.bf16.msra.mxu0 %v969
        %1129 = vmatpush.bf16.msra.mxu0 %v968
        %1130 = vmatpush.bf16.msra.mxu0 %v967
        %1131 = vmatpush.bf16.msra.mxu0 %v966
        %1132 = vmatmul.bf16.gmra.mxu0 %v540
        %v1133 = vpop.f32.mrf.mxu0
        %v1134 = vadd.f32 %v1111, %v1133
        %v1135 = vpop.f32.mrf.mxu0
        %v1136 = vadd.f32 %v1113, %v1135
        %1137 = vmatmul.bf16.gmra.mxu0 %v548
        %v1138 = vpop.f32.mrf.mxu0
        %v1139 = vadd.f32 %v1116, %v1138
        %v1140 = vpop.f32.mrf.mxu0
        %v1141 = vadd.f32 %v1118, %v1140
        %1142 = vmatmul.bf16.gmra.mxu0 %v556
        %v1143 = vpop.f32.mrf.mxu0
        %v1144 = vadd.f32 %v1121, %v1143
        %v1145 = vpop.f32.mrf.mxu0
        %1146 = vdwg.mxu0
        %1147 = vmatpush.bf16.msra.mxu0 %v981
        %1148 = vmatpush.bf16.msra.mxu0 %v980
        %1149 = vmatpush.bf16.msra.mxu0 %v979
        %1150 = vmatpush.bf16.msra.mxu0 %v978
        %1151 = vmatpush.bf16.msra.mxu0 %v977
        %1152 = vmatpush.bf16.msra.mxu0 %v976
        %1153 = vmatpush.bf16.msra.mxu0 %v975
        %1154 = vmatpush.bf16.msra.mxu0 %v974
        %1155 = vmatmul.bf16.gmra.mxu0 %v541
        %v1156 = vpop.f32.mrf.mxu0
        %v1157 = vadd.f32 %v1134, %v1156
        %v1158 = vpop.f32.mrf.mxu0
        %v1159 = vadd.f32 %v1136, %v1158
        %1160 = vmatmul.bf16.gmra.mxu0 %v549
        %v1161 = vpop.f32.mrf.mxu0
        %v1162 = vadd.f32 %v1139, %v1161
        %v1163 = vpop.f32.mrf.mxu0
        %v1164 = vadd.f32 %v1141, %v1163
        %1165 = vmatmul.bf16.gmra.mxu0 %v557
        %v1166 = vpop.f32.mrf.mxu0
        %v1167 = vadd.f32 %v1144, %v1166
        %v1168 = vpop.f32.mrf.mxu0
        %1169 = vdwg.mxu0
        %1170 = vmatpush.bf16.msra.mxu0 %v989
        %1171 = vmatpush.bf16.msra.mxu0 %v988
        %1172 = vmatpush.bf16.msra.mxu0 %v987
        %1173 = vmatpush.bf16.msra.mxu0 %v986
        %1174 = vmatpush.bf16.msra.mxu0 %v985
        %1175 = vmatpush.bf16.msra.mxu0 %v984
        %1176 = vmatpush.bf16.msra.mxu0 %v983
        %1177 = vmatpush.bf16.msra.mxu0 %v982
        %1178 = vmatmul.bf16.gmra.mxu0 %v542
        %v1179 = vpop.f32.mrf.mxu0
        %v1180 = vadd.f32 %v1157, %v1179
        %v1181 = vpop.f32.mrf.mxu0
        %v1182 = vadd.f32 %v1159, %v1181
        %1183 = vmatmul.bf16.gmra.mxu0 %v550
        %v1184 = vpop.f32.mrf.mxu0
        %v1185 = vadd.f32 %v1162, %v1184
        %v1186 = vpop.f32.mrf.mxu0
        %v1187 = vadd.f32 %v1164, %v1186
        %1188 = vmatmul.bf16.gmra.mxu0 %v558
        %v1189 = vpop.f32.mrf.mxu0
        %v1190 = vadd.f32 %v1167, %v1189
        %v1191 = vpop.f32.mrf.mxu0
        %1192 = vdwg.mxu0
        %1193 = vmatpush.bf16.msra.mxu0 %v997
        %1194 = vmatpush.bf16.msra.mxu0 %v996
        %1195 = vmatpush.bf16.msra.mxu0 %v995
        %1196 = vmatpush.bf16.msra.mxu0 %v994
        %1197 = vmatpush.bf16.msra.mxu0 %v993
        %1198 = vmatpush.bf16.msra.mxu0 %v992
        %1199 = vmatpush.bf16.msra.mxu0 %v991
        %1200 = vmatpush.bf16.msra.mxu0 %v990
        %1201 = vmatmul.bf16.gmra.mxu0 %v543
        %v1202 = vpop.f32.mrf.mxu0
        %v1203 = vadd.f32 %v1180, %v1202
        %v1204 = vpop.f32.mrf.mxu0
        %v1205 = vadd.f32 %v1182, %v1204
        %1206 = vmatmul.bf16.gmra.mxu0 %v551
        %v1207 = vpop.f32.mrf.mxu0
        %v1208 = vadd.f32 %v1185, %v1207
        %v1209 = vpop.f32.mrf.mxu0
        %v1210 = vadd.f32 %v1187, %v1209
        %1211 = vmatmul.bf16.gmra.mxu0 %v559
        %v1212 = vpop.f32.mrf.mxu0
        %v1213 = vadd.f32 %v1190, %v1212
        %v1214 = vpop.f32.mrf.mxu0
        %1215 = vdwg.mxu0
        %1216 = vmatpush.bf16.msra.mxu0 %v1005
        %1217 = vmatpush.bf16.msra.mxu0 %v1004
        %1218 = vmatpush.bf16.msra.mxu0 %v1003
        %1219 = vmatpush.bf16.msra.mxu0 %v1002
        %1220 = vmatpush.bf16.msra.mxu0 %v1001
        %1221 = vmatpush.bf16.msra.mxu0 %v1000
        %1222 = vmatpush.bf16.msra.mxu0 %v999
        %1223 = vmatpush.bf16.msra.mxu0 %v998
        %1224 = vmatmul.bf16.gmra.mxu0 %v544
        %v1225 = vpop.f32.mrf.mxu0
        %v1226 = vadd.f32 %v1203, %v1225
        %v1227 = vpop.f32.mrf.mxu0
        %v1228 = vadd.f32 %v1205, %v1227
        %1229 = vmatmul.bf16.gmra.mxu0 %v552
        %v1230 = vpop.f32.mrf.mxu0
        %v1231 = vadd.f32 %v1208, %v1230
        %v1232 = vpop.f32.mrf.mxu0
        %v1233 = vadd.f32 %v1210, %v1232
        %1234 = vmatmul.bf16.gmra.mxu0 %v560
        %v1235 = vpop.f32.mrf.mxu0
        %v1236 = vadd.f32 %v1213, %v1235
        %v1237 = vpop.f32.mrf.mxu0
        %1238 = vdwg.mxu0
        %1239 = vmatpush.bf16.msra.mxu0 %v1013
        %1240 = vmatpush.bf16.msra.mxu0 %v1012
        %1241 = vmatpush.bf16.msra.mxu0 %v1011
        %1242 = vmatpush.bf16.msra.mxu0 %v1010
        %1243 = vmatpush.bf16.msra.mxu0 %v1009
        %1244 = vmatpush.bf16.msra.mxu0 %v1008
        %1245 = vmatpush.bf16.msra.mxu0 %v1007
        %1246 = vmatpush.bf16.msra.mxu0 %v1006
        %1247 = vmatmul.bf16.gmra.mxu0 %v545
        %v1248 = vpop.f32.mrf.mxu0
        %v1249 = vadd.f32 %v1226, %v1248
        %v1250 = vpop.f32.mrf.mxu0
        %v1251 = vadd.f32 %v1228, %v1250
        %1252 = vmatmul.bf16.gmra.mxu0 %v553
        %v1253 = vpop.f32.mrf.mxu0
        %v1254 = vadd.f32 %v1231, %v1253
        %v1255 = vpop.f32.mrf.mxu0
        %v1256 = vadd.f32 %v1233, %v1255
        %1257 = vmatmul.bf16.gmra.mxu0 %v561
        %v1258 = vpop.f32.mrf.mxu0
        %v1259 = vadd.f32 %v1236, %v1258
        %v1260 = vpop.f32.mrf.mxu0
        %1261 = vdwg.mxu0
        %1262 = vst [vmem:[#allocation2] sm:$0xff] 0.0
        %1263 = vst [vmem:[#allocation2 + $0x8] sm:$0x3] 0.0
        %1264 = vst [vmem:[#allocation2 + $0x10] sm:$0xff] 0.0
        %1265 = vst [vmem:[#allocation2 + $0x18] sm:$0x3] 0.0
        %1266 = vst [vmem:[#allocation2 + $0x20] sm:$0xff] 0.0
        %1267 = vst [vmem:[#allocation2 + $0x28] sm:$0x3] 0.0
        %1268 = vst [vmem:[#allocation2 + $0x30] sm:$0xff] 0.0
        %1269 = vst [vmem:[#allocation2 + $0x38] sm:$0x3] 0.0
        %1270 = vst [vmem:[#allocation2 + $0x40] sm:$0xff] 0.0
        %1271 = vst [vmem:[#allocation2 + $0x48] sm:$0x3] 0.0
        %1272 = vst [vmem:[#allocation2 + $0x50] sm:$0xff] 0.0
        %1273 = vst [vmem:[#allocation2 + $0x58] sm:$0x3] 0.0
        %1274 = vst [vmem:[#allocation2 + $0x60] sm:$0xff] 0.0
        %1275 = vst [vmem:[#allocation2 + $0x68] sm:$0x3] 0.0
        %1276 = vst [vmem:[#allocation2 + $0x70] sm:$0xff] 0.0
        %1277 = vst [vmem:[#allocation2 + $0x78] sm:$0x3] 0.0
        %1278 = vst [vmem:[#allocation2 + $0x80] sm:$0xff] 0.0
        %1279 = vst [vmem:[#allocation2 + $0x88] sm:$0x3] 0.0
        %1280 = vst [vmem:[#allocation2 + $0x90] sm:$0xff] 0.0
        %1281 = vst [vmem:[#allocation2 + $0x98] sm:$0x3] 0.0
        %v1282 = vld [vmem:[%s2] sm:$0x1]
        %v1284 = vperm.slane %v1282, 0
        %s1286 = scalar_lea.vmem [#allocation2], 16
        %1287 = vst [vmem:[%s1286 + $0x1] sm:$0xff] %v1284
        %1288 = vst [vmem:[%s1286 + $0x11] sm:$0xff] %v1284
        %1289 = vst [vmem:[%s1286 + $0x21] sm:$0xff] %v1284
        %1290 = vst [vmem:[%s1286 + $0x31] sm:$0xff] %v1284
        %1291 = vst [vmem:[%s1286 + $0x41] sm:$0xff] %v1284
        %1292 = vst [vmem:[%s1286 + $0x51] sm:$0xff] %v1284
        %1293 = vst [vmem:[%s1286 + $0x61] sm:$0xff] %v1284
        %1294 = vst [vmem:[%s1286 + $0x71] sm:$0xff] %v1284
        %v1300 = vrot.slane %v1249, 2
        %v1301 = vrot.slane %v1249, 4
        %v1302 = vrot.slane %v1249, 6
        %v1303 = vrot.slane %v1251, 2
        %v1304 = vrot.slane %v1251, 4
        %v1305 = vrot.slane %v1251, 6
        %v1306 = vrot.slane %v1254, 2
        %v1307 = vrot.slane %v1254, 4
        %v1308 = vrot.slane %v1254, 6
        %v1309 = vrot.slane %v1256, 2
        %v1310 = vrot.slane %v1256, 4
        %v1311 = vrot.slane %v1256, 6
        %v1312 = vrot.slane %v1259, 2
        %1313 = vst [vmem:[#allocation1] ss:$4 sm:$0xff] %v1249
        %s1314 = scalar_lea.vmem [#allocation1], 1
        %1315 = vst [vmem:[%s1314] ss:$4 sm:$0xff] %v1300
        %s1316 = scalar_lea.vmem [#allocation1], 2
        %1317 = vst [vmem:[%s1316] ss:$4 sm:$0xff] %v1301
        %v1318 = vld.sshfl [vmem:[#allocation1] sm:$0xff pattern:$0x73625140]
        %s1319 = scalar_lea.vmem [#allocation1], 32
        %1320 = vst [vmem:[%s1319] ss:$4 sm:$0xff] %v1302
        %s1321 = scalar_lea.vmem [#allocation1], 33
        %1322 = vst [vmem:[%s1321] ss:$4 sm:$0xff] %v1251
        %s1323 = scalar_lea.vmem [#allocation1], 34
        %1324 = vst [vmem:[%s1323] ss:$4 sm:$0xff] %v1303
        %v1325 = vld.sshfl [vmem:[#allocation1 + $0x20] sm:$0xff pattern:$0x73625140]
        %1326 = vst [vmem:[#allocation1] ss:$4 sm:$0xff] %v1304
        %1327 = vst [vmem:[%s1314] ss:$4 sm:$0xff] %v1305
        %1328 = vst [vmem:[%s1316] ss:$4 sm:$0xff] %v1254
        %v1329 = vld.sshfl [vmem:[#allocation1] sm:$0xff pattern:$0x73625140]
        %1330 = vst [vmem:[%s1319] ss:$4 sm:$0xff] %v1306
        %1331 = vst [vmem:[%s1321] ss:$4 sm:$0xff] %v1307
        %1332 = vst [vmem:[%s1323] ss:$4 sm:$0xff] %v1308
        %v1333 = vld.sshfl [vmem:[#allocation1 + $0x20] sm:$0xff pattern:$0x73625140]
        %1334 = vst [vmem:[#allocation1] ss:$4 sm:$0xff] %v1256
        %1335 = vst [vmem:[%s1314] ss:$4 sm:$0xff] %v1309
        %1336 = vst [vmem:[%s1316] ss:$4 sm:$0xff] %v1310
        %v1337 = vld.sshfl [vmem:[#allocation1] sm:$0xff pattern:$0x73625140]
        %1338 = vst [vmem:[%s1319] ss:$4 sm:$0xff] %v1311
        %1339 = vst [vmem:[%s1321] ss:$4 sm:$0xff] %v1259
        %1340 = vst [vmem:[%s1323] ss:$4 sm:$0xff] %v1312
        %v1341 = vld.sshfl [vmem:[#allocation1 + $0x20] sm:$0xff pattern:$0x73625140]
        %s1348 = scalar_lea.vmem [#allocation2], 32
        %1349 = vst [vmem:[%s1348 + $0x2] sm:$0x3f] %v1318
        %1350 = vst [vmem:[%s1348 + $0x12] sm:$0x3f] %v1325
        %1351 = vst [vmem:[%s1348 + $0x22] sm:$0x3f] %v1329
        %1352 = vst [vmem:[%s1348 + $0x32] sm:$0x3f] %v1333
        %1353 = vst [vmem:[%s1348 + $0x42] sm:$0x3f] %v1337
        %1354 = vst [vmem:[%s1348 + $0x52] sm:$0x3f] %v1341
        %v1355 = vld [vmem:[%s4] sm:$0x3]
        %v1356 = vld [vmem:[#allocation2] sm:$0xff]
        %v1357 = vld [vmem:[#allocation2 + $0x8] sm:$0x3]
        %v1358 = vld [vmem:[#allocation2 + $0x10] sm:$0xff]
        %v1359 = vld [vmem:[#allocation2 + $0x18] sm:$0x3]
        %v1360 = vld [vmem:[#allocation2 + $0x20] sm:$0xff]
        %v1361 = vld [vmem:[#allocation2 + $0x28] sm:$0x3]
        %v1362 = vld [vmem:[#allocation2 + $0x30] sm:$0xff]
        %v1363 = vld [vmem:[#allocation2 + $0x38] sm:$0x3]
        %v1372 = vrot.slane %v1356, 2
        %v1373 = vrot.slane %v1356, 4
        %v1374 = vrot.slane %v1356, 6
        %v1375 = vrot.slane %v1358, 2
        %v1376 = vrot.slane %v1358, 4
        %v1377 = vrot.slane %v1358, 6
        %v1378 = vrot.slane %v1360, 2
        %v1379 = vrot.slane %v1360, 4
        %v1380 = vrot.slane %v1360, 6
        %v1381 = vrot.slane %v1362, 2
        %v1382 = vrot.slane %v1362, 4
        %v1383 = vrot.slane %v1362, 6
        %1384 = vst [vmem:[#allocation1] ss:$4 sm:$0xff] %v1356
        %s1385 = scalar_lea.vmem [#allocation1], 1
        %1386 = vst [vmem:[%s1385] ss:$4 sm:$0xff] %v1372
        %s1387 = scalar_lea.vmem [#allocation1], 2
        %1388 = vst [vmem:[%s1387] ss:$4 sm:$0xff] %v1373
        %s1389 = scalar_lea.vmem [#allocation1], 3
        %1390 = vst [vmem:[%s1389] ss:$4 sm:$0xff] %v1374
        %s1391 = scalar_lea.vmem [#allocation1], 32
        %1392 = vst [vmem:[%s1391] ss:$4 sm:$0xff] %v1357
        %s1393 = scalar_lea.vmem [#allocation1], 33
        %1394 = vst [vmem:[%s1393] ss:$4 sm:$0xff] %v1358
        %s1395 = scalar_lea.vmem [#allocation1], 34
        %1396 = vst [vmem:[%s1395] ss:$4 sm:$0xff] %v1375
        %s1397 = scalar_lea.vmem [#allocation1], 35
        %1398 = vst [vmem:[%s1397] ss:$4 sm:$0xff] %v1376
        %v1399 = vld.sshfl [vmem:[#allocation1] sm:$0xff pattern:$0x73625140]
        %v1400 = vld.sshfl [vmem:[#allocation1 + $0x20] sm:$0xff pattern:$0x73625140]
        %1401 = vst [vmem:[#allocation1] ss:$4 sm:$0xff] %v1377
        %1402 = vst [vmem:[%s1385] ss:$4 sm:$0xff] %v1359
        %1403 = vst [vmem:[%s1387] ss:$4 sm:$0xff] %v1360
        %1404 = vst [vmem:[%s1389] ss:$4 sm:$0xff] %v1378
        %1405 = vst [vmem:[%s1391] ss:$4 sm:$0xff] %v1379
        %1406 = vst [vmem:[%s1393] ss:$4 sm:$0xff] %v1380
        %1407 = vst [vmem:[%s1395] ss:$4 sm:$0xff] %v1361
        %1408 = vst [vmem:[%s1397] ss:$4 sm:$0xff] %v1362
        %v1409 = vld.sshfl [vmem:[#allocation1] sm:$0xff pattern:$0x73625140]
        %v1410 = vld.sshfl [vmem:[#allocation1 + $0x20] sm:$0xff pattern:$0x73625140]
        %1411 = vst [vmem:[#allocation1] ss:$4 sm:$0xff] %v1381
        %1412 = vst [vmem:[%s1385] ss:$4 sm:$0xff] %v1382
        %1413 = vst [vmem:[%s1387] ss:$4 sm:$0xff] %v1383
        %1414 = vst [vmem:[%s1389] ss:$4 sm:$0xff] %v1363
        %v1415 = vld.sshfl [vmem:[#allocation1] sm:$0xff pattern:$0x73625140]
        %v1421 = vpack.c.bf16 %v1400, %v1399
        %v1422 = vpack.c.bf16 %v1410, %v1409
        %v1423 = vpack.c.bf16 %v1415, %v1415
        %v1424 = vld [vmem:[#allocation6] sm:$0xff]
        %v1425 = vld [vmem:[#allocation6 + $0x8] sm:$0xff]
        %v1426 = vld [vmem:[#allocation6 + $0x10] sm:$0xff]
        %v1427 = vld [vmem:[#allocation6 + $0x18] sm:$0xff]
        %v1428 = vld [vmem:[#allocation6 + $0x20] sm:$0xff]
        %v1429 = vld [vmem:[#allocation6 + $0x28] sm:$0xff]
        %v1430 = vld [vmem:[#allocation6 + $0x30] sm:$0xff]
        %v1431 = vld [vmem:[#allocation6 + $0x38] sm:$0xff]
        %v1432 = vld [vmem:[#allocation6 + $0x40] sm:$0xff]
        %v1433 = vld [vmem:[#allocation6 + $0x48] sm:$0xff]
        %v1434 = vld [vmem:[#allocation6 + $0x50] sm:$0xff]
        %v1435 = vld [vmem:[#allocation6 + $0x58] sm:$0xff]
        %v1436 = vld [vmem:[#allocation6 + $0x60] sm:$0xff]
        %v1437 = vld [vmem:[#allocation6 + $0x68] sm:$0xff]
        %v1438 = vld [vmem:[#allocation6 + $0x70] sm:$0xff]
        %v1439 = vld [vmem:[#allocation6 + $0x78] sm:$0xff]
        %v1456 = vunpack.c.l.b16 %v1424
        %v1457 = vunpack.c.h.b16 %v1424
        %v1458 = vunpack.c.l.b16 %v1425
        %v1459 = vunpack.c.h.b16 %v1425
        %v1460 = vunpack.c.l.b16 %v1426
        %v1461 = vunpack.c.h.b16 %v1426
        %v1462 = vunpack.c.l.b16 %v1427
        %v1463 = vunpack.c.h.b16 %v1427
        %v1464 = vunpack.c.l.b16 %v1428
        %v1465 = vunpack.c.h.b16 %v1428
        %v1466 = vunpack.c.l.b16 %v1429
        %v1467 = vunpack.c.h.b16 %v1429
        %v1468 = vunpack.c.l.b16 %v1430
        %v1469 = vunpack.c.h.b16 %v1430
        %v1470 = vunpack.c.l.b16 %v1431
        %v1471 = vunpack.c.h.b16 %v1431
        %v1472 = vunpack.c.l.b16 %v1432
        %v1473 = vunpack.c.h.b16 %v1432
        %v1474 = vunpack.c.l.b16 %v1433
        %v1475 = vunpack.c.h.b16 %v1433
        %v1476 = vunpack.c.l.b16 %v1434
        %v1477 = vunpack.c.h.b16 %v1434
        %v1478 = vunpack.c.l.b16 %v1435
        %v1479 = vunpack.c.h.b16 %v1435
        %v1480 = vunpack.c.l.b16 %v1436
        %v1481 = vunpack.c.h.b16 %v1436
        %v1482 = vunpack.c.l.b16 %v1437
        %v1483 = vunpack.c.h.b16 %v1437
        %v1484 = vunpack.c.l.b16 %v1438
        %v1485 = vunpack.c.h.b16 %v1438
        %v1486 = vunpack.c.l.b16 %v1439
        %v1487 = vunpack.c.h.b16 %v1439
        %v1488 = vpack.c.b16 %v1458, %v1456
        %v1489 = vpack.c.b16 %v1459, %v1457
        %v1490 = vpack.c.b16 %v1462, %v1460
        %v1491 = vpack.c.b16 %v1463, %v1461
        %v1492 = vpack.c.b16 %v1466, %v1464
        %v1493 = vpack.c.b16 %v1467, %v1465
        %v1494 = vpack.c.b16 %v1470, %v1468
        %v1495 = vpack.c.b16 %v1471, %v1469
        %v1496 = vpack.c.b16 %v1474, %v1472
        %v1497 = vpack.c.b16 %v1475, %v1473
        %v1498 = vpack.c.b16 %v1478, %v1476
        %v1499 = vpack.c.b16 %v1479, %v1477
        %v1500 = vpack.c.b16 %v1482, %v1480
        %v1501 = vpack.c.b16 %v1483, %v1481
        %v1502 = vpack.c.b16 %v1486, %v1484
        %v1503 = vpack.c.b16 %v1487, %v1485
        %1520 = vmatpush.bf16.msra.mxu0 %v1502
        %1521 = vmatpush.bf16.msra.mxu0 %v1500
        %1522 = vmatpush.bf16.msra.mxu0 %v1498
        %1523 = vmatpush.bf16.msra.mxu0 %v1496
        %1524 = vmatpush.bf16.msra.mxu0 %v1494
        %1525 = vmatpush.bf16.msra.mxu0 %v1492
        %1526 = vmatpush.bf16.msra.mxu0 %v1490
        %1527 = vmatpush.bf16.msra.mxu0 %v1488
        %1528 = vmatmul.bf16.gmra.mxu0 %v1421
        %v1529 = vpop.f32.mrf.mxu0
        %v1530 = vadd.f32 0.0, %v1529
        %v1531 = vpop.f32.mrf.mxu0
        %v1532 = vadd.f32 0.0, %v1531
        %1533 = vmatmul.bf16.gmra.mxu0 %v1422
        %v1534 = vpop.f32.mrf.mxu0
        %v1535 = vadd.f32 0.0, %v1534
        %v1536 = vpop.f32.mrf.mxu0
        %v1537 = vadd.f32 0.0, %v1536
        %1538 = vmatmul.bf16.gmra.mxu0 %v1423
        %v1539 = vpop.f32.mrf.mxu0
        %v1540 = vadd.f32 0.0, %v1539
        %v1541 = vpop.f32.mrf.mxu0
        %1542 = vdwg.mxu0
        %1543 = vmatpush.bf16.msra.mxu0 %v1503
        %1544 = vmatpush.bf16.msra.mxu0 %v1501
        %1545 = vmatpush.bf16.msra.mxu0 %v1499
        %1546 = vmatpush.bf16.msra.mxu0 %v1497
        %1547 = vmatpush.bf16.msra.mxu0 %v1495
        %1548 = vmatpush.bf16.msra.mxu0 %v1493
        %1549 = vmatpush.bf16.msra.mxu0 %v1491
        %1550 = vmatpush.bf16.msra.mxu0 %v1489
        %1551 = vmatmul.bf16.gmra.mxu0 %v1421
        %v1552 = vpop.f32.mrf.mxu0
        %v1553 = vadd.f32 0.0, %v1552
        %v1554 = vpop.f32.mrf.mxu0
        %v1555 = vadd.f32 0.0, %v1554
        %1556 = vmatmul.bf16.gmra.mxu0 %v1422
        %v1557 = vpop.f32.mrf.mxu0
        %v1558 = vadd.f32 0.0, %v1557
        %v1559 = vpop.f32.mrf.mxu0
        %v1560 = vadd.f32 0.0, %v1559
        %1561 = vmatmul.bf16.gmra.mxu0 %v1423
        %v1562 = vpop.f32.mrf.mxu0
        %v1563 = vadd.f32 0.0, %v1562
        %v1564 = vpop.f32.mrf.mxu0
        %1565 = vdwg.mxu0
        %v1567 = vperm.slane %v1355, 0
        %v1568 = vperm.slane %v1355, 1
        %v1571 = vadd.f32 %v1567, %v1530
        %v1572 = vadd.f32 %v1568, %v1553
        %v1573 = vadd.f32 %v1567, %v1532
        %v1574 = vadd.f32 %v1568, %v1555
        %v1575 = vadd.f32 %v1567, %v1535
        %v1576 = vadd.f32 %v1568, %v1558
        %v1577 = vadd.f32 %v1567, %v1537
        %v1578 = vadd.f32 %v1568, %v1560
        %v1579 = vadd.f32 %v1567, %v1540
        %v1580 = vadd.f32 %v1568, %v1563
        %v1581 = vld [vmem:[%s1286] sm:$0xff]
        %v1582 = vld [vmem:[%s1286 + $0x8] sm:$0x3]
        %v1583 = vld [vmem:[%s1286 + $0x10] sm:$0xff]
        %v1584 = vld [vmem:[%s1286 + $0x18] sm:$0x3]
        %v1585 = vld [vmem:[%s1286 + $0x20] sm:$0xff]
        %v1586 = vld [vmem:[%s1286 + $0x28] sm:$0x3]
        %v1587 = vld [vmem:[%s1286 + $0x30] sm:$0xff]
        %v1588 = vld [vmem:[%s1286 + $0x38] sm:$0x3]
        %v1597 = vrot.slane %v1581, 2
        %v1598 = vrot.slane %v1581, 4
        %v1599 = vrot.slane %v1581, 6
        %v1600 = vrot.slane %v1583, 2
        %v1601 = vrot.slane %v1583, 4
        %v1602 = vrot.slane %v1583, 6
        %v1603 = vrot.slane %v1585, 2
        %v1604 = vrot.slane %v1585, 4
        %v1605 = vrot.slane %v1585, 6
        %v1606 = vrot.slane %v1587, 2
        %v1607 = vrot.slane %v1587, 4
        %v1608 = vrot.slane %v1587, 6
        %1609 = vst [vmem:[#allocation1] ss:$4 sm:$0xff] %v1581
        %s1610 = scalar_lea.vmem [#allocation1], 1
        %1611 = vst [vmem:[%s1610] ss:$4 sm:$0xff] %v1597
        %s1612 = scalar_lea.vmem [#allocation1], 2
        %1613 = vst [vmem:[%s1612] ss:$4 sm:$0xff] %v1598
        %s1614 = scalar_lea.vmem [#allocation1], 3
        %1615 = vst [vmem:[%s1614] ss:$4 sm:$0xff] %v1599
        %s1616 = scalar_lea.vmem [#allocation1], 32
        %1617 = vst [vmem:[%s1616] ss:$4 sm:$0xff] %v1582
        %s1618 = scalar_lea.vmem [#allocation1], 33
        %1619 = vst [vmem:[%s1618] ss:$4 sm:$0xff] %v1583
        %s1620 = scalar_lea.vmem [#allocation1], 34
        %1621 = vst [vmem:[%s1620] ss:$4 sm:$0xff] %v1600
        %s1622 = scalar_lea.vmem [#allocation1], 35
        %1623 = vst [vmem:[%s1622] ss:$4 sm:$0xff] %v1601
        %v1624 = vld.sshfl [vmem:[#allocation1] sm:$0xff pattern:$0x73625140]
        %v1625 = vld.sshfl [vmem:[#allocation1 + $0x20] sm:$0xff pattern:$0x73625140]
        %1626 = vst [vmem:[#allocation1] ss:$4 sm:$0xff] %v1602
        %1627 = vst [vmem:[%s1610] ss:$4 sm:$0xff] %v1584
        %1628 = vst [vmem:[%s1612] ss:$4 sm:$0xff] %v1585
        %1629 = vst [vmem:[%s1614] ss:$4 sm:$0xff] %v1603
        %1630 = vst [vmem:[%s1616] ss:$4 sm:$0xff] %v1604
        %1631 = vst [vmem:[%s1618] ss:$4 sm:$0xff] %v1605
        %1632 = vst [vmem:[%s1620] ss:$4 sm:$0xff] %v1586
        %1633 = vst [vmem:[%s1622] ss:$4 sm:$0xff] %v1587
        %v1634 = vld.sshfl [vmem:[#allocation1] sm:$0xff pattern:$0x73625140]
        %v1635 = vld.sshfl [vmem:[#allocation1 + $0x20] sm:$0xff pattern:$0x73625140]
        %1636 = vst [vmem:[#allocation1] ss:$4 sm:$0xff] %v1606
        %1637 = vst [vmem:[%s1610] ss:$4 sm:$0xff] %v1607
        %1638 = vst [vmem:[%s1612] ss:$4 sm:$0xff] %v1608
        %1639 = vst [vmem:[%s1614] ss:$4 sm:$0xff] %v1588
        %v1640 = vld.sshfl [vmem:[#allocation1] sm:$0xff pattern:$0x73625140]
        %v1646 = vpack.c.bf16 %v1625, %v1624
        %v1647 = vpack.c.bf16 %v1635, %v1634
        %v1648 = vpack.c.bf16 %v1640, %v1640
        %s1649 = scalar_lea.vmem [#allocation6], 128
        %v1650 = vld [vmem:[%s1649] sm:$0xff]
        %v1651 = vld [vmem:[%s1649 + $0x8] sm:$0xff]
        %v1652 = vld [vmem:[%s1649 + $0x10] sm:$0xff]
        %v1653 = vld [vmem:[%s1649 + $0x18] sm:$0xff]
        %v1654 = vld [vmem:[%s1649 + $0x20] sm:$0xff]
        %v1655 = vld [vmem:[%s1649 + $0x28] sm:$0xff]
        %v1656 = vld [vmem:[%s1649 + $0x30] sm:$0xff]
        %v1657 = vld [vmem:[%s1649 + $0x38] sm:$0xff]
        %v1658 = vld [vmem:[%s1649 + $0x40] sm:$0xff]
        %v1659 = vld [vmem:[%s1649 + $0x48] sm:$0xff]
        %v1660 = vld [vmem:[%s1649 + $0x50] sm:$0xff]
        %v1661 = vld [vmem:[%s1649 + $0x58] sm:$0xff]
        %v1662 = vld [vmem:[%s1649 + $0x60] sm:$0xff]
        %v1663 = vld [vmem:[%s1649 + $0x68] sm:$0xff]
        %v1664 = vld [vmem:[%s1649 + $0x70] sm:$0xff]
        %v1665 = vld [vmem:[%s1649 + $0x78] sm:$0xff]
        %v1682 = vunpack.c.l.b16 %v1650
        %v1683 = vunpack.c.h.b16 %v1650
        %v1684 = vunpack.c.l.b16 %v1651
        %v1685 = vunpack.c.h.b16 %v1651
        %v1686 = vunpack.c.l.b16 %v1652
        %v1687 = vunpack.c.h.b16 %v1652
        %v1688 = vunpack.c.l.b16 %v1653
        %v1689 = vunpack.c.h.b16 %v1653
        %v1690 = vunpack.c.l.b16 %v1654
        %v1691 = vunpack.c.h.b16 %v1654
        %v1692 = vunpack.c.l.b16 %v1655
        %v1693 = vunpack.c.h.b16 %v1655
        %v1694 = vunpack.c.l.b16 %v1656
        %v1695 = vunpack.c.h.b16 %v1656
        %v1696 = vunpack.c.l.b16 %v1657
        %v1697 = vunpack.c.h.b16 %v1657
        %v1698 = vunpack.c.l.b16 %v1658
        %v1699 = vunpack.c.h.b16 %v1658
        %v1700 = vunpack.c.l.b16 %v1659
        %v1701 = vunpack.c.h.b16 %v1659
        %v1702 = vunpack.c.l.b16 %v1660
        %v1703 = vunpack.c.h.b16 %v1660
        %v1704 = vunpack.c.l.b16 %v1661
        %v1705 = vunpack.c.h.b16 %v1661
        %v1706 = vunpack.c.l.b16 %v1662
        %v1707 = vunpack.c.h.b16 %v1662
        %v1708 = vunpack.c.l.b16 %v1663
        %v1709 = vunpack.c.h.b16 %v1663
        %v1710 = vunpack.c.l.b16 %v1664
        %v1711 = vunpack.c.h.b16 %v1664
        %v1712 = vunpack.c.l.b16 %v1665
        %v1713 = vunpack.c.h.b16 %v1665
        %v1714 = vpack.c.b16 %v1684, %v1682
        %v1715 = vpack.c.b16 %v1685, %v1683
        %v1716 = vpack.c.b16 %v1688, %v1686
        %v1717 = vpack.c.b16 %v1689, %v1687
        %v1718 = vpack.c.b16 %v1692, %v1690
        %v1719 = vpack.c.b16 %v1693, %v1691
        %v1720 = vpack.c.b16 %v1696, %v1694
        %v1721 = vpack.c.b16 %v1697, %v1695
        %v1722 = vpack.c.b16 %v1700, %v1698
        %v1723 = vpack.c.b16 %v1701, %v1699
        %v1724 = vpack.c.b16 %v1704, %v1702
        %v1725 = vpack.c.b16 %v1705, %v1703
        %v1726 = vpack.c.b16 %v1708, %v1706
        %v1727 = vpack.c.b16 %v1709, %v1707
        %v1728 = vpack.c.b16 %v1712, %v1710
        %v1729 = vpack.c.b16 %v1713, %v1711
        %1746 = vmatpush.bf16.msra.mxu0 %v1728
        %1747 = vmatpush.bf16.msra.mxu0 %v1726
        %1748 = vmatpush.bf16.msra.mxu0 %v1724
        %1749 = vmatpush.bf16.msra.mxu0 %v1722
        %1750 = vmatpush.bf16.msra.mxu0 %v1720
        %1751 = vmatpush.bf16.msra.mxu0 %v1718
        %1752 = vmatpush.bf16.msra.mxu0 %v1716
        %1753 = vmatpush.bf16.msra.mxu0 %v1714
        %1754 = vmatmul.bf16.gmra.mxu0 %v1646
        %v1755 = vpop.f32.mrf.mxu0
        %v1756 = vadd.f32 0.0, %v1755
        %v1757 = vpop.f32.mrf.mxu0
        %v1758 = vadd.f32 0.0, %v1757
        %1759 = vmatmul.bf16.gmra.mxu0 %v1647
        %v1760 = vpop.f32.mrf.mxu0
        %v1761 = vadd.f32 0.0, %v1760
        %v1762 = vpop.f32.mrf.mxu0
        %v1763 = vadd.f32 0.0, %v1762
        %1764 = vmatmul.bf16.gmra.mxu0 %v1648
        %v1765 = vpop.f32.mrf.mxu0
        %v1766 = vadd.f32 0.0, %v1765
        %v1767 = vpop.f32.mrf.mxu0
        %1768 = vdwg.mxu0
        %1769 = vmatpush.bf16.msra.mxu0 %v1729
        %1770 = vmatpush.bf16.msra.mxu0 %v1727
        %1771 = vmatpush.bf16.msra.mxu0 %v1725
        %1772 = vmatpush.bf16.msra.mxu0 %v1723
        %1773 = vmatpush.bf16.msra.mxu0 %v1721
        %1774 = vmatpush.bf16.msra.mxu0 %v1719
        %1775 = vmatpush.bf16.msra.mxu0 %v1717
        %1776 = vmatpush.bf16.msra.mxu0 %v1715
        %1777 = vmatmul.bf16.gmra.mxu0 %v1646
        %v1778 = vpop.f32.mrf.mxu0
        %v1779 = vadd.f32 0.0, %v1778
        %v1780 = vpop.f32.mrf.mxu0
        %v1781 = vadd.f32 0.0, %v1780
        %1782 = vmatmul.bf16.gmra.mxu0 %v1647
        %v1783 = vpop.f32.mrf.mxu0
        %v1784 = vadd.f32 0.0, %v1783
        %v1785 = vpop.f32.mrf.mxu0
        %v1786 = vadd.f32 0.0, %v1785
        %1787 = vmatmul.bf16.gmra.mxu0 %v1648
        %v1788 = vpop.f32.mrf.mxu0
        %v1789 = vadd.f32 0.0, %v1788
        %v1790 = vpop.f32.mrf.mxu0
        %1791 = vdwg.mxu0
        %v1792 = vadd.f32 %v1571, %v1756
        %v1793 = vadd.f32 %v1572, %v1779
        %v1794 = vadd.f32 %v1573, %v1758
        %v1795 = vadd.f32 %v1574, %v1781
        %v1796 = vadd.f32 %v1575, %v1761
        %v1797 = vadd.f32 %v1576, %v1784
        %v1798 = vadd.f32 %v1577, %v1763
        %v1799 = vadd.f32 %v1578, %v1786
        %v1800 = vadd.f32 %v1579, %v1766
        %v1801 = vadd.f32 %v1580, %v1789
        %v1802 = vld [vmem:[%s1348] sm:$0xff]
        %v1803 = vld [vmem:[%s1348 + $0x8] sm:$0x3]
        %v1804 = vld [vmem:[%s1348 + $0x10] sm:$0xff]
        %v1805 = vld [vmem:[%s1348 + $0x18] sm:$0x3]
        %v1806 = vld [vmem:[%s1348 + $0x20] sm:$0xff]
        %v1807 = vld [vmem:[%s1348 + $0x28] sm:$0x3]
        %v1808 = vld [vmem:[%s1348 + $0x30] sm:$0xff]
        %v1809 = vld [vmem:[%s1348 + $0x38] sm:$0x3]
        %v1818 = vrot.slane %v1802, 2
        %v1819 = vrot.slane %v1802, 4
        %v1820 = vrot.slane %v1802, 6
        %v1821 = vrot.slane %v1804, 2
        %v1822 = vrot.slane %v1804, 4
        %v1823 = vrot.slane %v1804, 6
        %v1824 = vrot.slane %v1806, 2
        %v1825 = vrot.slane %v1806, 4
        %v1826 = vrot.slane %v1806, 6
        %v1827 = vrot.slane %v1808, 2
        %v1828 = vrot.slane %v1808, 4
        %v1829 = vrot.slane %v1808, 6
        %1830 = vst [vmem:[#allocation1] ss:$4 sm:$0xff] %v1802
        %s1831 = scalar_lea.vmem [#allocation1], 1
        %1832 = vst [vmem:[%s1831] ss:$4 sm:$0xff] %v1818
        %s1833 = scalar_lea.vmem [#allocation1], 2
        %1834 = vst [vmem:[%s1833] ss:$4 sm:$0xff] %v1819
        %s1835 = scalar_lea.vmem [#allocation1], 3
        %1836 = vst [vmem:[%s1835] ss:$4 sm:$0xff] %v1820
        %s1837 = scalar_lea.vmem [#allocation1], 32
        %1838 = vst [vmem:[%s1837] ss:$4 sm:$0xff] %v1803
        %s1839 = scalar_lea.vmem [#allocation1], 33
        %1840 = vst [vmem:[%s1839] ss:$4 sm:$0xff] %v1804
        %s1841 = scalar_lea.vmem [#allocation1], 34
        %1842 = vst [vmem:[%s1841] ss:$4 sm:$0xff] %v1821
        %s1843 = scalar_lea.vmem [#allocation1], 35
        %1844 = vst [vmem:[%s1843] ss:$4 sm:$0xff] %v1822
        %v1845 = vld.sshfl [vmem:[#allocation1] sm:$0xff pattern:$0x73625140]
        %v1846 = vld.sshfl [vmem:[#allocation1 + $0x20] sm:$0xff pattern:$0x73625140]
        %1847 = vst [vmem:[#allocation1] ss:$4 sm:$0xff] %v1823
        %1848 = vst [vmem:[%s1831] ss:$4 sm:$0xff] %v1805
        %1849 = vst [vmem:[%s1833] ss:$4 sm:$0xff] %v1806
        %1850 = vst [vmem:[%s1835] ss:$4 sm:$0xff] %v1824
        %1851 = vst [vmem:[%s1837] ss:$4 sm:$0xff] %v1825
        %1852 = vst [vmem:[%s1839] ss:$4 sm:$0xff] %v1826
        %1853 = vst [vmem:[%s1841] ss:$4 sm:$0xff] %v1807
        %1854 = vst [vmem:[%s1843] ss:$4 sm:$0xff] %v1808
        %v1855 = vld.sshfl [vmem:[#allocation1] sm:$0xff pattern:$0x73625140]
        %v1856 = vld.sshfl [vmem:[#allocation1 + $0x20] sm:$0xff pattern:$0x73625140]
        %1857 = vst [vmem:[#allocation1] ss:$4 sm:$0xff] %v1827
        %1858 = vst [vmem:[%s1831] ss:$4 sm:$0xff] %v1828
        %1859 = vst [vmem:[%s1833] ss:$4 sm:$0xff] %v1829
        %1860 = vst [vmem:[%s1835] ss:$4 sm:$0xff] %v1809
        %v1861 = vld.sshfl [vmem:[#allocation1] sm:$0xff pattern:$0x73625140]
        %v1867 = vpack.c.bf16 %v1846, %v1845
        %v1868 = vpack.c.bf16 %v1856, %v1855
        %v1869 = vpack.c.bf16 %v1861, %v1861
        %s1870 = scalar_lea.vmem [#allocation6], 256
        %v1871 = vld [vmem:[%s1870] sm:$0xff]
        %v1872 = vld [vmem:[%s1870 + $0x8] sm:$0xff]
        %v1873 = vld [vmem:[%s1870 + $0x10] sm:$0xff]
        %v1874 = vld [vmem:[%s1870 + $0x18] sm:$0xff]
        %v1875 = vld [vmem:[%s1870 + $0x20] sm:$0xff]
        %v1876 = vld [vmem:[%s1870 + $0x28] sm:$0xff]
        %v1877 = vld [vmem:[%s1870 + $0x30] sm:$0xff]
        %v1878 = vld [vmem:[%s1870 + $0x38] sm:$0xff]
        %v1879 = vld [vmem:[%s1870 + $0x40] sm:$0xff]
        %v1880 = vld [vmem:[%s1870 + $0x48] sm:$0xff]
        %v1881 = vld [vmem:[%s1870 + $0x50] sm:$0xff]
        %v1882 = vld [vmem:[%s1870 + $0x58] sm:$0xff]
        %v1883 = vld [vmem:[%s1870 + $0x60] sm:$0xff]
        %v1884 = vld [vmem:[%s1870 + $0x68] sm:$0xff]
        %v1885 = vld [vmem:[%s1870 + $0x70] sm:$0xff]
        %v1886 = vld [vmem:[%s1870 + $0x78] sm:$0xff]
        %v1903 = vunpack.c.l.b16 %v1871
        %v1904 = vunpack.c.h.b16 %v1871
        %v1905 = vunpack.c.l.b16 %v1872
        %v1906 = vunpack.c.h.b16 %v1872
        %v1907 = vunpack.c.l.b16 %v1873
        %v1908 = vunpack.c.h.b16 %v1873
        %v1909 = vunpack.c.l.b16 %v1874
        %v1910 = vunpack.c.h.b16 %v1874
        %v1911 = vunpack.c.l.b16 %v1875
        %v1912 = vunpack.c.h.b16 %v1875
        %v1913 = vunpack.c.l.b16 %v1876
        %v1914 = vunpack.c.h.b16 %v1876
        %v1915 = vunpack.c.l.b16 %v1877
        %v1916 = vunpack.c.h.b16 %v1877
        %v1917 = vunpack.c.l.b16 %v1878
        %v1918 = vunpack.c.h.b16 %v1878
        %v1919 = vunpack.c.l.b16 %v1879
        %v1920 = vunpack.c.h.b16 %v1879
        %v1921 = vunpack.c.l.b16 %v1880
        %v1922 = vunpack.c.h.b16 %v1880
        %v1923 = vunpack.c.l.b16 %v1881
        %v1924 = vunpack.c.h.b16 %v1881
        %v1925 = vunpack.c.l.b16 %v1882
        %v1926 = vunpack.c.h.b16 %v1882
        %v1927 = vunpack.c.l.b16 %v1883
        %v1928 = vunpack.c.h.b16 %v1883
        %v1929 = vunpack.c.l.b16 %v1884
        %v1930 = vunpack.c.h.b16 %v1884
        %v1931 = vunpack.c.l.b16 %v1885
        %v1932 = vunpack.c.h.b16 %v1885
        %v1933 = vunpack.c.l.b16 %v1886
        %v1934 = vunpack.c.h.b16 %v1886
        %v1935 = vpack.c.b16 %v1905, %v1903
        %v1936 = vpack.c.b16 %v1906, %v1904
        %v1937 = vpack.c.b16 %v1909, %v1907
        %v1938 = vpack.c.b16 %v1910, %v1908
        %v1939 = vpack.c.b16 %v1913, %v1911
        %v1940 = vpack.c.b16 %v1914, %v1912
        %v1941 = vpack.c.b16 %v1917, %v1915
        %v1942 = vpack.c.b16 %v1918, %v1916
        %v1943 = vpack.c.b16 %v1921, %v1919
        %v1944 = vpack.c.b16 %v1922, %v1920
        %v1945 = vpack.c.b16 %v1925, %v1923
        %v1946 = vpack.c.b16 %v1926, %v1924
        %v1947 = vpack.c.b16 %v1929, %v1927
        %v1948 = vpack.c.b16 %v1930, %v1928
        %v1949 = vpack.c.b16 %v1933, %v1931
        %v1950 = vpack.c.b16 %v1934, %v1932
        %1967 = vmatpush.bf16.msra.mxu0 %v1949
        %1968 = vmatpush.bf16.msra.mxu0 %v1947
        %1969 = vmatpush.bf16.msra.mxu0 %v1945
        %1970 = vmatpush.bf16.msra.mxu0 %v1943
        %1971 = vmatpush.bf16.msra.mxu0 %v1941
        %1972 = vmatpush.bf16.msra.mxu0 %v1939
        %1973 = vmatpush.bf16.msra.mxu0 %v1937
        %1974 = vmatpush.bf16.msra.mxu0 %v1935
        %1975 = vmatmul.bf16.gmra.mxu0 %v1867
        %v1976 = vpop.f32.mrf.mxu0
        %v1977 = vadd.f32 0.0, %v1976
        %v1978 = vpop.f32.mrf.mxu0
        %v1979 = vadd.f32 0.0, %v1978
        %1980 = vmatmul.bf16.gmra.mxu0 %v1868
        %v1981 = vpop.f32.mrf.mxu0
        %v1982 = vadd.f32 0.0, %v1981
        %v1983 = vpop.f32.mrf.mxu0
        %v1984 = vadd.f32 0.0, %v1983
        %1985 = vmatmul.bf16.gmra.mxu0 %v1869
        %v1986 = vpop.f32.mrf.mxu0
        %v1987 = vadd.f32 0.0, %v1986
        %v1988 = vpop.f32.mrf.mxu0
        %1989 = vdwg.mxu0
        %1990 = vmatpush.bf16.msra.mxu0 %v1950
        %1991 = vmatpush.bf16.msra.mxu0 %v1948
        %1992 = vmatpush.bf16.msra.mxu0 %v1946
        %1993 = vmatpush.bf16.msra.mxu0 %v1944
        %1994 = vmatpush.bf16.msra.mxu0 %v1942
        %1995 = vmatpush.bf16.msra.mxu0 %v1940
        %1996 = vmatpush.bf16.msra.mxu0 %v1938
        %1997 = vmatpush.bf16.msra.mxu0 %v1936
        %1998 = vmatmul.bf16.gmra.mxu0 %v1867
        %v1999 = vpop.f32.mrf.mxu0
        %v2000 = vadd.f32 0.0, %v1999
        %v2001 = vpop.f32.mrf.mxu0
        %v2002 = vadd.f32 0.0, %v2001
        %2003 = vmatmul.bf16.gmra.mxu0 %v1868
        %v2004 = vpop.f32.mrf.mxu0
        %v2005 = vadd.f32 0.0, %v2004
        %v2006 = vpop.f32.mrf.mxu0
        %v2007 = vadd.f32 0.0, %v2006
        %2008 = vmatmul.bf16.gmra.mxu0 %v1869
        %v2009 = vpop.f32.mrf.mxu0
        %v2010 = vadd.f32 0.0, %v2009
        %v2011 = vpop.f32.mrf.mxu0
        %2012 = vdwg.mxu0
        %v2013 = vadd.f32 %v1792, %v1977
        %v2014 = vadd.f32 %v1793, %v2000
        %v2015 = vadd.f32 %v1794, %v1979
        %v2016 = vadd.f32 %v1795, %v2002
        %v2017 = vadd.f32 %v1796, %v1982
        %v2018 = vadd.f32 %v1797, %v2005
        %v2019 = vadd.f32 %v1798, %v1984
        %v2020 = vadd.f32 %v1799, %v2007
        %v2021 = vadd.f32 %v1800, %v1987
        %v2022 = vadd.f32 %v1801, %v2010
        %s2023 = scalar_lea.vmem [#allocation2], 48
        %v2024 = vld [vmem:[%s2023] sm:$0xff]
        %v2025 = vld [vmem:[%s2023 + $0x8] sm:$0x3]
        %v2026 = vld [vmem:[%s2023 + $0x10] sm:$0xff]
        %v2027 = vld [vmem:[%s2023 + $0x18] sm:$0x3]
        %v2028 = vld [vmem:[%s2023 + $0x20] sm:$0xff]
        %v2029 = vld [vmem:[%s2023 + $0x28] sm:$0x3]
        %v2030 = vld [vmem:[%s2023 + $0x30] sm:$0xff]
        %v2031 = vld [vmem:[%s2023 + $0x38] sm:$0x3]
        %v2040 = vrot.slane %v2024, 2
        %v2041 = vrot.slane %v2024, 4
        %v2042 = vrot.slane %v2024, 6
        %v2043 = vrot.slane %v2026, 2
        %v2044 = vrot.slane %v2026, 4
        %v2045 = vrot.slane %v2026, 6
        %v2046 = vrot.slane %v2028, 2
        %v2047 = vrot.slane %v2028, 4
        %v2048 = vrot.slane %v2028, 6
        %v2049 = vrot.slane %v2030, 2
        %v2050 = vrot.slane %v2030, 4
        %v2051 = vrot.slane %v2030, 6
        %2052 = vst [vmem:[#allocation1] ss:$4 sm:$0xff] %v2024
        %s2053 = scalar_lea.vmem [#allocation1], 1
        %2054 = vst [vmem:[%s2053] ss:$4 sm:$0xff] %v2040
        %s2055 = scalar_lea.vmem [#allocation1], 2
        %2056 = vst [vmem:[%s2055] ss:$4 sm:$0xff] %v2041
        %s2057 = scalar_lea.vmem [#allocation1], 3
        %2058 = vst [vmem:[%s2057] ss:$4 sm:$0xff] %v2042
        %s2059 = scalar_lea.vmem [#allocation1], 32
        %2060 = vst [vmem:[%s2059] ss:$4 sm:$0xff] %v2025
        %s2061 = scalar_lea.vmem [#allocation1], 33
        %2062 = vst [vmem:[%s2061] ss:$4 sm:$0xff] %v2026
        %s2063 = scalar_lea.vmem [#allocation1], 34
        %2064 = vst [vmem:[%s2063] ss:$4 sm:$0xff] %v2043
        %s2065 = scalar_lea.vmem [#allocation1], 35
        %2066 = vst [vmem:[%s2065] ss:$4 sm:$0xff] %v2044
        %v2067 = vld.sshfl [vmem:[#allocation1] sm:$0xff pattern:$0x73625140]
        %v2068 = vld.sshfl [vmem:[#allocation1 + $0x20] sm:$0xff pattern:$0x73625140]
        %2069 = vst [vmem:[#allocation1] ss:$4 sm:$0xff] %v2045
        %2070 = vst [vmem:[%s2053] ss:$4 sm:$0xff] %v2027
        %2071 = vst [vmem:[%s2055] ss:$4 sm:$0xff] %v2028
        %2072 = vst [vmem:[%s2057] ss:$4 sm:$0xff] %v2046
        %2073 = vst [vmem:[%s2059] ss:$4 sm:$0xff] %v2047
        %2074 = vst [vmem:[%s2061] ss:$4 sm:$0xff] %v2048
        %2075 = vst [vmem:[%s2063] ss:$4 sm:$0xff] %v2029
        %2076 = vst [vmem:[%s2065] ss:$4 sm:$0xff] %v2030
        %v2077 = vld.sshfl [vmem:[#allocation1] sm:$0xff pattern:$0x73625140]
        %v2078 = vld.sshfl [vmem:[#allocation1 + $0x20] sm:$0xff pattern:$0x73625140]
        %2079 = vst [vmem:[#allocation1] ss:$4 sm:$0xff] %v2049
        %2080 = vst [vmem:[%s2053] ss:$4 sm:$0xff] %v2050
        %2081 = vst [vmem:[%s2055] ss:$4 sm:$0xff] %v2051
        %2082 = vst [vmem:[%s2057] ss:$4 sm:$0xff] %v2031
        %v2083 = vld.sshfl [vmem:[#allocation1] sm:$0xff pattern:$0x73625140]
        %v2089 = vpack.c.bf16 %v2068, %v2067
        %v2090 = vpack.c.bf16 %v2078, %v2077
        %v2091 = vpack.c.bf16 %v2083, %v2083
        %s2092 = scalar_lea.vmem [#allocation6], 384
        %v2093 = vld [vmem:[%s2092] sm:$0xff]
        %v2094 = vld [vmem:[%s2092 + $0x8] sm:$0xff]
        %v2095 = vld [vmem:[%s2092 + $0x10] sm:$0xff]
        %v2096 = vld [vmem:[%s2092 + $0x18] sm:$0xff]
        %v2097 = vld [vmem:[%s2092 + $0x20] sm:$0xff]
        %v2098 = vld [vmem:[%s2092 + $0x28] sm:$0xff]
        %v2099 = vld [vmem:[%s2092 + $0x30] sm:$0xff]
        %v2100 = vld [vmem:[%s2092 + $0x38] sm:$0xff]
        %v2101 = vld [vmem:[%s2092 + $0x40] sm:$0xff]
        %v2102 = vld [vmem:[%s2092 + $0x48] sm:$0xff]
        %v2103 = vld [vmem:[%s2092 + $0x50] sm:$0xff]
        %v2104 = vld [vmem:[%s2092 + $0x58] sm:$0xff]
        %v2105 = vld [vmem:[%s2092 + $0x60] sm:$0xff]
        %v2106 = vld [vmem:[%s2092 + $0x68] sm:$0xff]
        %v2107 = vld [vmem:[%s2092 + $0x70] sm:$0xff]
        %v2108 = vld [vmem:[%s2092 + $0x78] sm:$0xff]
        %v2125 = vunpack.c.l.b16 %v2093
        %v2126 = vunpack.c.h.b16 %v2093
        %v2127 = vunpack.c.l.b16 %v2094
        %v2128 = vunpack.c.h.b16 %v2094
        %v2129 = vunpack.c.l.b16 %v2095
        %v2130 = vunpack.c.h.b16 %v2095
        %v2131 = vunpack.c.l.b16 %v2096
        %v2132 = vunpack.c.h.b16 %v2096
        %v2133 = vunpack.c.l.b16 %v2097
        %v2134 = vunpack.c.h.b16 %v2097
        %v2135 = vunpack.c.l.b16 %v2098
        %v2136 = vunpack.c.h.b16 %v2098
        %v2137 = vunpack.c.l.b16 %v2099
        %v2138 = vunpack.c.h.b16 %v2099
        %v2139 = vunpack.c.l.b16 %v2100
        %v2140 = vunpack.c.h.b16 %v2100
        %v2141 = vunpack.c.l.b16 %v2101
        %v2142 = vunpack.c.h.b16 %v2101
        %v2143 = vunpack.c.l.b16 %v2102
        %v2144 = vunpack.c.h.b16 %v2102
        %v2145 = vunpack.c.l.b16 %v2103
        %v2146 = vunpack.c.h.b16 %v2103
        %v2147 = vunpack.c.l.b16 %v2104
        %v2148 = vunpack.c.h.b16 %v2104
        %v2149 = vunpack.c.l.b16 %v2105
        %v2150 = vunpack.c.h.b16 %v2105
        %v2151 = vunpack.c.l.b16 %v2106
        %v2152 = vunpack.c.h.b16 %v2106
        %v2153 = vunpack.c.l.b16 %v2107
        %v2154 = vunpack.c.h.b16 %v2107
        %v2155 = vunpack.c.l.b16 %v2108
        %v2156 = vunpack.c.h.b16 %v2108
        %v2157 = vpack.c.b16 %v2127, %v2125
        %v2158 = vpack.c.b16 %v2128, %v2126
        %v2159 = vpack.c.b16 %v2131, %v2129
        %v2160 = vpack.c.b16 %v2132, %v2130
        %v2161 = vpack.c.b16 %v2135, %v2133
        %v2162 = vpack.c.b16 %v2136, %v2134
        %v2163 = vpack.c.b16 %v2139, %v2137
        %v2164 = vpack.c.b16 %v2140, %v2138
        %v2165 = vpack.c.b16 %v2143, %v2141
        %v2166 = vpack.c.b16 %v2144, %v2142
        %v2167 = vpack.c.b16 %v2147, %v2145
        %v2168 = vpack.c.b16 %v2148, %v2146
        %v2169 = vpack.c.b16 %v2151, %v2149
        %v2170 = vpack.c.b16 %v2152, %v2150
        %v2171 = vpack.c.b16 %v2155, %v2153
        %v2172 = vpack.c.b16 %v2156, %v2154
        %2189 = vmatpush.bf16.msra.mxu0 %v2171
        %2190 = vmatpush.bf16.msra.mxu0 %v2169
        %2191 = vmatpush.bf16.msra.mxu0 %v2167
        %2192 = vmatpush.bf16.msra.mxu0 %v2165
        %2193 = vmatpush.bf16.msra.mxu0 %v2163
        %2194 = vmatpush.bf16.msra.mxu0 %v2161
        %2195 = vmatpush.bf16.msra.mxu0 %v2159
        %2196 = vmatpush.bf16.msra.mxu0 %v2157
        %2197 = vmatmul.bf16.gmra.mxu0 %v2089
        %v2198 = vpop.f32.mrf.mxu0
        %v2199 = vadd.f32 0.0, %v2198
        %v2200 = vpop.f32.mrf.mxu0
        %v2201 = vadd.f32 0.0, %v2200
        %2202 = vmatmul.bf16.gmra.mxu0 %v2090
        %v2203 = vpop.f32.mrf.mxu0
        %v2204 = vadd.f32 0.0, %v2203
        %v2205 = vpop.f32.mrf.mxu0
        %v2206 = vadd.f32 0.0, %v2205
        %2207 = vmatmul.bf16.gmra.mxu0 %v2091
        %v2208 = vpop.f32.mrf.mxu0
        %v2209 = vadd.f32 0.0, %v2208
        %v2210 = vpop.f32.mrf.mxu0
        %2211 = vdwg.mxu0
        %2212 = vmatpush.bf16.msra.mxu0 %v2172
        %2213 = vmatpush.bf16.msra.mxu0 %v2170
        %2214 = vmatpush.bf16.msra.mxu0 %v2168
        %2215 = vmatpush.bf16.msra.mxu0 %v2166
        %2216 = vmatpush.bf16.msra.mxu0 %v2164
        %2217 = vmatpush.bf16.msra.mxu0 %v2162
        %2218 = vmatpush.bf16.msra.mxu0 %v2160
        %2219 = vmatpush.bf16.msra.mxu0 %v2158
        %2220 = vmatmul.bf16.gmra.mxu0 %v2089
        %v2221 = vpop.f32.mrf.mxu0
        %v2222 = vadd.f32 0.0, %v2221
        %v2223 = vpop.f32.mrf.mxu0
        %v2224 = vadd.f32 0.0, %v2223
        %2225 = vmatmul.bf16.gmra.mxu0 %v2090
        %v2226 = vpop.f32.mrf.mxu0
        %v2227 = vadd.f32 0.0, %v2226
        %v2228 = vpop.f32.mrf.mxu0
        %v2229 = vadd.f32 0.0, %v2228
        %2230 = vmatmul.bf16.gmra.mxu0 %v2091
        %v2231 = vpop.f32.mrf.mxu0
        %v2232 = vadd.f32 0.0, %v2231
        %v2233 = vpop.f32.mrf.mxu0
        %2234 = vdwg.mxu0
        %v2235 = vadd.f32 %v2013, %v2199
        %v2236 = vadd.f32 %v2014, %v2222
        %v2237 = vadd.f32 %v2015, %v2201
        %v2238 = vadd.f32 %v2016, %v2224
        %v2239 = vadd.f32 %v2017, %v2204
        %v2240 = vadd.f32 %v2018, %v2227
        %v2241 = vadd.f32 %v2019, %v2206
        %v2242 = vadd.f32 %v2020, %v2229
        %v2243 = vadd.f32 %v2021, %v2209
        %v2244 = vadd.f32 %v2022, %v2232
        %s2245 = scalar_lea.vmem [#allocation2], 64
        %v2246 = vld [vmem:[%s2245] sm:$0xff]
        %v2247 = vld [vmem:[%s2245 + $0x8] sm:$0x3]
        %v2248 = vld [vmem:[%s2245 + $0x10] sm:$0xff]
        %v2249 = vld [vmem:[%s2245 + $0x18] sm:$0x3]
        %v2250 = vld [vmem:[%s2245 + $0x20] sm:$0xff]
        %v2251 = vld [vmem:[%s2245 + $0x28] sm:$0x3]
        %v2252 = vld [vmem:[%s2245 + $0x30] sm:$0xff]
        %v2253 = vld [vmem:[%s2245 + $0x38] sm:$0x3]
        %v2262 = vrot.slane %v2246, 2
        %v2263 = vrot.slane %v2246, 4
        %v2264 = vrot.slane %v2246, 6
        %v2265 = vrot.slane %v2248, 2
        %v2266 = vrot.slane %v2248, 4
        %v2267 = vrot.slane %v2248, 6
        %v2268 = vrot.slane %v2250, 2
        %v2269 = vrot.slane %v2250, 4
        %v2270 = vrot.slane %v2250, 6
        %v2271 = vrot.slane %v2252, 2
        %v2272 = vrot.slane %v2252, 4
        %v2273 = vrot.slane %v2252, 6
        %2274 = vst [vmem:[#allocation1] ss:$4 sm:$0xff] %v2246
        %s2275 = scalar_lea.vmem [#allocation1], 1
        %2276 = vst [vmem:[%s2275] ss:$4 sm:$0xff] %v2262
        %s2277 = scalar_lea.vmem [#allocation1], 2
        %2278 = vst [vmem:[%s2277] ss:$4 sm:$0xff] %v2263
        %s2279 = scalar_lea.vmem [#allocation1], 3
        %2280 = vst [vmem:[%s2279] ss:$4 sm:$0xff] %v2264
        %s2281 = scalar_lea.vmem [#allocation1], 32
        %2282 = vst [vmem:[%s2281] ss:$4 sm:$0xff] %v2247
        %s2283 = scalar_lea.vmem [#allocation1], 33
        %2284 = vst [vmem:[%s2283] ss:$4 sm:$0xff] %v2248
        %s2285 = scalar_lea.vmem [#allocation1], 34
        %2286 = vst [vmem:[%s2285] ss:$4 sm:$0xff] %v2265
        %s2287 = scalar_lea.vmem [#allocation1], 35
        %2288 = vst [vmem:[%s2287] ss:$4 sm:$0xff] %v2266
        %v2289 = vld.sshfl [vmem:[#allocation1] sm:$0xff pattern:$0x73625140]
        %v2290 = vld.sshfl [vmem:[#allocation1 + $0x20] sm:$0xff pattern:$0x73625140]
        %2291 = vst [vmem:[#allocation1] ss:$4 sm:$0xff] %v2267
        %2292 = vst [vmem:[%s2275] ss:$4 sm:$0xff] %v2249
        %2293 = vst [vmem:[%s2277] ss:$4 sm:$0xff] %v2250
        %2294 = vst [vmem:[%s2279] ss:$4 sm:$0xff] %v2268
        %2295 = vst [vmem:[%s2281] ss:$4 sm:$0xff] %v2269
        %2296 = vst [vmem:[%s2283] ss:$4 sm:$0xff] %v2270
        %2297 = vst [vmem:[%s2285] ss:$4 sm:$0xff] %v2251
        %2298 = vst [vmem:[%s2287] ss:$4 sm:$0xff] %v2252
        %v2299 = vld.sshfl [vmem:[#allocation1] sm:$0xff pattern:$0x73625140]
        %v2300 = vld.sshfl [vmem:[#allocation1 + $0x20] sm:$0xff pattern:$0x73625140]
        %2301 = vst [vmem:[#allocation1] ss:$4 sm:$0xff] %v2271
        %2302 = vst [vmem:[%s2275] ss:$4 sm:$0xff] %v2272
        %2303 = vst [vmem:[%s2277] ss:$4 sm:$0xff] %v2273
        %2304 = vst [vmem:[%s2279] ss:$4 sm:$0xff] %v2253
        %v2305 = vld.sshfl [vmem:[#allocation1] sm:$0xff pattern:$0x73625140]
        %v2311 = vpack.c.bf16 %v2290, %v2289
        %v2312 = vpack.c.bf16 %v2300, %v2299
        %v2313 = vpack.c.bf16 %v2305, %v2305
        %s2314 = scalar_lea.vmem [#allocation6], 512
        %v2315 = vld [vmem:[%s2314] sm:$0xff]
        %v2316 = vld [vmem:[%s2314 + $0x8] sm:$0xff]
        %v2317 = vld [vmem:[%s2314 + $0x10] sm:$0xff]
        %v2318 = vld [vmem:[%s2314 + $0x18] sm:$0xff]
        %v2319 = vld [vmem:[%s2314 + $0x20] sm:$0xff]
        %v2320 = vld [vmem:[%s2314 + $0x28] sm:$0xff]
        %v2321 = vld [vmem:[%s2314 + $0x30] sm:$0xff]
        %v2322 = vld [vmem:[%s2314 + $0x38] sm:$0xff]
        %v2323 = vld [vmem:[%s2314 + $0x40] sm:$0xff]
        %v2324 = vld [vmem:[%s2314 + $0x48] sm:$0xff]
        %v2325 = vld [vmem:[%s2314 + $0x50] sm:$0xff]
        %v2326 = vld [vmem:[%s2314 + $0x58] sm:$0xff]
        %v2327 = vld [vmem:[%s2314 + $0x60] sm:$0xff]
        %v2328 = vld [vmem:[%s2314 + $0x68] sm:$0xff]
        %v2329 = vld [vmem:[%s2314 + $0x70] sm:$0xff]
        %v2330 = vld [vmem:[%s2314 + $0x78] sm:$0xff]
        %v2347 = vunpack.c.l.b16 %v2315
        %v2348 = vunpack.c.h.b16 %v2315
        %v2349 = vunpack.c.l.b16 %v2316
        %v2350 = vunpack.c.h.b16 %v2316
        %v2351 = vunpack.c.l.b16 %v2317
        %v2352 = vunpack.c.h.b16 %v2317
        %v2353 = vunpack.c.l.b16 %v2318
        %v2354 = vunpack.c.h.b16 %v2318
        %v2355 = vunpack.c.l.b16 %v2319
        %v2356 = vunpack.c.h.b16 %v2319
        %v2357 = vunpack.c.l.b16 %v2320
        %v2358 = vunpack.c.h.b16 %v2320
        %v2359 = vunpack.c.l.b16 %v2321
        %v2360 = vunpack.c.h.b16 %v2321
        %v2361 = vunpack.c.l.b16 %v2322
        %v2362 = vunpack.c.h.b16 %v2322
        %v2363 = vunpack.c.l.b16 %v2323
        %v2364 = vunpack.c.h.b16 %v2323
        %v2365 = vunpack.c.l.b16 %v2324
        %v2366 = vunpack.c.h.b16 %v2324
        %v2367 = vunpack.c.l.b16 %v2325
        %v2368 = vunpack.c.h.b16 %v2325
        %v2369 = vunpack.c.l.b16 %v2326
        %v2370 = vunpack.c.h.b16 %v2326
        %v2371 = vunpack.c.l.b16 %v2327
        %v2372 = vunpack.c.h.b16 %v2327
        %v2373 = vunpack.c.l.b16 %v2328
        %v2374 = vunpack.c.h.b16 %v2328
        %v2375 = vunpack.c.l.b16 %v2329
        %v2376 = vunpack.c.h.b16 %v2329
        %v2377 = vunpack.c.l.b16 %v2330
        %v2378 = vunpack.c.h.b16 %v2330
        %v2379 = vpack.c.b16 %v2349, %v2347
        %v2380 = vpack.c.b16 %v2350, %v2348
        %v2381 = vpack.c.b16 %v2353, %v2351
        %v2382 = vpack.c.b16 %v2354, %v2352
        %v2383 = vpack.c.b16 %v2357, %v2355
        %v2384 = vpack.c.b16 %v2358, %v2356
        %v2385 = vpack.c.b16 %v2361, %v2359
        %v2386 = vpack.c.b16 %v2362, %v2360
        %v2387 = vpack.c.b16 %v2365, %v2363
        %v2388 = vpack.c.b16 %v2366, %v2364
        %v2389 = vpack.c.b16 %v2369, %v2367
        %v2390 = vpack.c.b16 %v2370, %v2368
        %v2391 = vpack.c.b16 %v2373, %v2371
        %v2392 = vpack.c.b16 %v2374, %v2372
        %v2393 = vpack.c.b16 %v2377, %v2375
        %v2394 = vpack.c.b16 %v2378, %v2376
        %2411 = vmatpush.bf16.msra.mxu0 %v2393
        %2412 = vmatpush.bf16.msra.mxu0 %v2391
        %2413 = vmatpush.bf16.msra.mxu0 %v2389
        %2414 = vmatpush.bf16.msra.mxu0 %v2387
        %2415 = vmatpush.bf16.msra.mxu0 %v2385
        %2416 = vmatpush.bf16.msra.mxu0 %v2383
        %2417 = vmatpush.bf16.msra.mxu0 %v2381
        %2418 = vmatpush.bf16.msra.mxu0 %v2379
        %2419 = vmatmul.bf16.gmra.mxu0 %v2311
        %v2420 = vpop.f32.mrf.mxu0
        %v2421 = vadd.f32 0.0, %v2420
        %v2422 = vpop.f32.mrf.mxu0
        %v2423 = vadd.f32 0.0, %v2422
        %2424 = vmatmul.bf16.gmra.mxu0 %v2312
        %v2425 = vpop.f32.mrf.mxu0
        %v2426 = vadd.f32 0.0, %v2425
        %v2427 = vpop.f32.mrf.mxu0
        %v2428 = vadd.f32 0.0, %v2427
        %2429 = vmatmul.bf16.gmra.mxu0 %v2313
        %v2430 = vpop.f32.mrf.mxu0
        %v2431 = vadd.f32 0.0, %v2430
        %v2432 = vpop.f32.mrf.mxu0
        %2433 = vdwg.mxu0
        %2434 = vmatpush.bf16.msra.mxu0 %v2394
        %2435 = vmatpush.bf16.msra.mxu0 %v2392
        %2436 = vmatpush.bf16.msra.mxu0 %v2390
        %2437 = vmatpush.bf16.msra.mxu0 %v2388
        %2438 = vmatpush.bf16.msra.mxu0 %v2386
        %2439 = vmatpush.bf16.msra.mxu0 %v2384
        %2440 = vmatpush.bf16.msra.mxu0 %v2382
        %2441 = vmatpush.bf16.msra.mxu0 %v2380
        %2442 = vmatmul.bf16.gmra.mxu0 %v2311
        %v2443 = vpop.f32.mrf.mxu0
        %v2444 = vadd.f32 0.0, %v2443
        %v2445 = vpop.f32.mrf.mxu0
        %v2446 = vadd.f32 0.0, %v2445
        %2447 = vmatmul.bf16.gmra.mxu0 %v2312
        %v2448 = vpop.f32.mrf.mxu0
        %v2449 = vadd.f32 0.0, %v2448
        %v2450 = vpop.f32.mrf.mxu0
        %v2451 = vadd.f32 0.0, %v2450
        %2452 = vmatmul.bf16.gmra.mxu0 %v2313
        %v2453 = vpop.f32.mrf.mxu0
        %v2454 = vadd.f32 0.0, %v2453
        %v2455 = vpop.f32.mrf.mxu0
        %2456 = vdwg.mxu0
        %v2457 = vadd.f32 %v2235, %v2421
        %v2458 = vadd.f32 %v2236, %v2444
        %v2459 = vadd.f32 %v2237, %v2423
        %v2460 = vadd.f32 %v2238, %v2446
        %v2461 = vadd.f32 %v2239, %v2426
        %v2462 = vadd.f32 %v2240, %v2449
        %v2463 = vadd.f32 %v2241, %v2428
        %v2464 = vadd.f32 %v2242, %v2451
        %v2465 = vadd.f32 %v2243, %v2431
        %v2466 = vadd.f32 %v2244, %v2454
        %s2467 = scalar_lea.vmem [#allocation2], 80
        %v2468 = vld [vmem:[%s2467] sm:$0xff]
        %v2469 = vld [vmem:[%s2467 + $0x8] sm:$0x3]
        %v2470 = vld [vmem:[%s2467 + $0x10] sm:$0xff]
        %v2471 = vld [vmem:[%s2467 + $0x18] sm:$0x3]
        %v2472 = vld [vmem:[%s2467 + $0x20] sm:$0xff]
        %v2473 = vld [vmem:[%s2467 + $0x28] sm:$0x3]
        %v2474 = vld [vmem:[%s2467 + $0x30] sm:$0xff]
        %v2475 = vld [vmem:[%s2467 + $0x38] sm:$0x3]
        %v2484 = vrot.slane %v2468, 2
        %v2485 = vrot.slane %v2468, 4
        %v2486 = vrot.slane %v2468, 6
        %v2487 = vrot.slane %v2470, 2
        %v2488 = vrot.slane %v2470, 4
        %v2489 = vrot.slane %v2470, 6
        %v2490 = vrot.slane %v2472, 2
        %v2491 = vrot.slane %v2472, 4
        %v2492 = vrot.slane %v2472, 6
        %v2493 = vrot.slane %v2474, 2
        %v2494 = vrot.slane %v2474, 4
        %v2495 = vrot.slane %v2474, 6
        %2496 = vst [vmem:[#allocation1] ss:$4 sm:$0xff] %v2468
        %s2497 = scalar_lea.vmem [#allocation1], 1
        %2498 = vst [vmem:[%s2497] ss:$4 sm:$0xff] %v2484
        %s2499 = scalar_lea.vmem [#allocation1], 2
        %2500 = vst [vmem:[%s2499] ss:$4 sm:$0xff] %v2485
        %s2501 = scalar_lea.vmem [#allocation1], 3
        %2502 = vst [vmem:[%s2501] ss:$4 sm:$0xff] %v2486
        %s2503 = scalar_lea.vmem [#allocation1], 32
        %2504 = vst [vmem:[%s2503] ss:$4 sm:$0xff] %v2469
        %s2505 = scalar_lea.vmem [#allocation1], 33
        %2506 = vst [vmem:[%s2505] ss:$4 sm:$0xff] %v2470
        %s2507 = scalar_lea.vmem [#allocation1], 34
        %2508 = vst [vmem:[%s2507] ss:$4 sm:$0xff] %v2487
        %s2509 = scalar_lea.vmem [#allocation1], 35
        %2510 = vst [vmem:[%s2509] ss:$4 sm:$0xff] %v2488
        %v2511 = vld.sshfl [vmem:[#allocation1] sm:$0xff pattern:$0x73625140]
        %v2512 = vld.sshfl [vmem:[#allocation1 + $0x20] sm:$0xff pattern:$0x73625140]
        %2513 = vst [vmem:[#allocation1] ss:$4 sm:$0xff] %v2489
        %2514 = vst [vmem:[%s2497] ss:$4 sm:$0xff] %v2471
        %2515 = vst [vmem:[%s2499] ss:$4 sm:$0xff] %v2472
        %2516 = vst [vmem:[%s2501] ss:$4 sm:$0xff] %v2490
        %2517 = vst [vmem:[%s2503] ss:$4 sm:$0xff] %v2491
        %2518 = vst [vmem:[%s2505] ss:$4 sm:$0xff] %v2492
        %2519 = vst [vmem:[%s2507] ss:$4 sm:$0xff] %v2473
        %2520 = vst [vmem:[%s2509] ss:$4 sm:$0xff] %v2474
        %v2521 = vld.sshfl [vmem:[#allocation1] sm:$0xff pattern:$0x73625140]
        %v2522 = vld.sshfl [vmem:[#allocation1 + $0x20] sm:$0xff pattern:$0x73625140]
        %2523 = vst [vmem:[#allocation1] ss:$4 sm:$0xff] %v2493
        %2524 = vst [vmem:[%s2497] ss:$4 sm:$0xff] %v2494
        %2525 = vst [vmem:[%s2499] ss:$4 sm:$0xff] %v2495
        %2526 = vst [vmem:[%s2501] ss:$4 sm:$0xff] %v2475
        %v2527 = vld.sshfl [vmem:[#allocation1] sm:$0xff pattern:$0x73625140]
        %v2533 = vpack.c.bf16 %v2512, %v2511
        %v2534 = vpack.c.bf16 %v2522, %v2521
        %v2535 = vpack.c.bf16 %v2527, %v2527
        %s2536 = scalar_lea.vmem [#allocation6], 640
        %v2537 = vld [vmem:[%s2536] sm:$0xff]
        %v2538 = vld [vmem:[%s2536 + $0x8] sm:$0xff]
        %v2539 = vld [vmem:[%s2536 + $0x10] sm:$0xff]
        %v2540 = vld [vmem:[%s2536 + $0x18] sm:$0xff]
        %v2541 = vld [vmem:[%s2536 + $0x20] sm:$0xff]
        %v2542 = vld [vmem:[%s2536 + $0x28] sm:$0xff]
        %v2543 = vld [vmem:[%s2536 + $0x30] sm:$0xff]
        %v2544 = vld [vmem:[%s2536 + $0x38] sm:$0xff]
        %v2545 = vld [vmem:[%s2536 + $0x40] sm:$0xff]
        %v2546 = vld [vmem:[%s2536 + $0x48] sm:$0xff]
        %v2547 = vld [vmem:[%s2536 + $0x50] sm:$0xff]
        %v2548 = vld [vmem:[%s2536 + $0x58] sm:$0xff]
        %v2549 = vld [vmem:[%s2536 + $0x60] sm:$0xff]
        %v2550 = vld [vmem:[%s2536 + $0x68] sm:$0xff]
        %v2551 = vld [vmem:[%s2536 + $0x70] sm:$0xff]
        %v2552 = vld [vmem:[%s2536 + $0x78] sm:$0xff]
        %v2569 = vunpack.c.l.b16 %v2537
        %v2570 = vunpack.c.h.b16 %v2537
        %v2571 = vunpack.c.l.b16 %v2538
        %v2572 = vunpack.c.h.b16 %v2538
        %v2573 = vunpack.c.l.b16 %v2539
        %v2574 = vunpack.c.h.b16 %v2539
        %v2575 = vunpack.c.l.b16 %v2540
        %v2576 = vunpack.c.h.b16 %v2540
        %v2577 = vunpack.c.l.b16 %v2541
        %v2578 = vunpack.c.h.b16 %v2541
        %v2579 = vunpack.c.l.b16 %v2542
        %v2580 = vunpack.c.h.b16 %v2542
        %v2581 = vunpack.c.l.b16 %v2543
        %v2582 = vunpack.c.h.b16 %v2543
        %v2583 = vunpack.c.l.b16 %v2544
        %v2584 = vunpack.c.h.b16 %v2544
        %v2585 = vunpack.c.l.b16 %v2545
        %v2586 = vunpack.c.h.b16 %v2545
        %v2587 = vunpack.c.l.b16 %v2546
        %v2588 = vunpack.c.h.b16 %v2546
        %v2589 = vunpack.c.l.b16 %v2547
        %v2590 = vunpack.c.h.b16 %v2547
        %v2591 = vunpack.c.l.b16 %v2548
        %v2592 = vunpack.c.h.b16 %v2548
        %v2593 = vunpack.c.l.b16 %v2549
        %v2594 = vunpack.c.h.b16 %v2549
        %v2595 = vunpack.c.l.b16 %v2550
        %v2596 = vunpack.c.h.b16 %v2550
        %v2597 = vunpack.c.l.b16 %v2551
        %v2598 = vunpack.c.h.b16 %v2551
        %v2599 = vunpack.c.l.b16 %v2552
        %v2600 = vunpack.c.h.b16 %v2552
        %v2601 = vpack.c.b16 %v2571, %v2569
        %v2602 = vpack.c.b16 %v2572, %v2570
        %v2603 = vpack.c.b16 %v2575, %v2573
        %v2604 = vpack.c.b16 %v2576, %v2574
        %v2605 = vpack.c.b16 %v2579, %v2577
        %v2606 = vpack.c.b16 %v2580, %v2578
        %v2607 = vpack.c.b16 %v2583, %v2581
        %v2608 = vpack.c.b16 %v2584, %v2582
        %v2609 = vpack.c.b16 %v2587, %v2585
        %v2610 = vpack.c.b16 %v2588, %v2586
        %v2611 = vpack.c.b16 %v2591, %v2589
        %v2612 = vpack.c.b16 %v2592, %v2590
        %v2613 = vpack.c.b16 %v2595, %v2593
        %v2614 = vpack.c.b16 %v2596, %v2594
        %v2615 = vpack.c.b16 %v2599, %v2597
        %v2616 = vpack.c.b16 %v2600, %v2598
        %2633 = vmatpush.bf16.msra.mxu0 %v2615
        %2634 = vmatpush.bf16.msra.mxu0 %v2613
        %2635 = vmatpush.bf16.msra.mxu0 %v2611
        %2636 = vmatpush.bf16.msra.mxu0 %v2609
        %2637 = vmatpush.bf16.msra.mxu0 %v2607
        %2638 = vmatpush.bf16.msra.mxu0 %v2605
        %2639 = vmatpush.bf16.msra.mxu0 %v2603
        %2640 = vmatpush.bf16.msra.mxu0 %v2601
        %2641 = vmatmul.bf16.gmra.mxu0 %v2533
        %v2642 = vpop.f32.mrf.mxu0
        %v2643 = vadd.f32 0.0, %v2642
        %v2644 = vpop.f32.mrf.mxu0
        %v2645 = vadd.f32 0.0, %v2644
        %2646 = vmatmul.bf16.gmra.mxu0 %v2534
        %v2647 = vpop.f32.mrf.mxu0
        %v2648 = vadd.f32 0.0, %v2647
        %v2649 = vpop.f32.mrf.mxu0
        %v2650 = vadd.f32 0.0, %v2649
        %2651 = vmatmul.bf16.gmra.mxu0 %v2535
        %v2652 = vpop.f32.mrf.mxu0
        %v2653 = vadd.f32 0.0, %v2652
        %v2654 = vpop.f32.mrf.mxu0
        %2655 = vdwg.mxu0
        %2656 = vmatpush.bf16.msra.mxu0 %v2616
        %2657 = vmatpush.bf16.msra.mxu0 %v2614
        %2658 = vmatpush.bf16.msra.mxu0 %v2612
        %2659 = vmatpush.bf16.msra.mxu0 %v2610
        %2660 = vmatpush.bf16.msra.mxu0 %v2608
        %2661 = vmatpush.bf16.msra.mxu0 %v2606
        %2662 = vmatpush.bf16.msra.mxu0 %v2604
        %2663 = vmatpush.bf16.msra.mxu0 %v2602
        %2664 = vmatmul.bf16.gmra.mxu0 %v2533
        %v2665 = vpop.f32.mrf.mxu0
        %v2666 = vadd.f32 0.0, %v2665
        %v2667 = vpop.f32.mrf.mxu0
        %v2668 = vadd.f32 0.0, %v2667
        %2669 = vmatmul.bf16.gmra.mxu0 %v2534
        %v2670 = vpop.f32.mrf.mxu0
        %v2671 = vadd.f32 0.0, %v2670
        %v2672 = vpop.f32.mrf.mxu0
        %v2673 = vadd.f32 0.0, %v2672
        %2674 = vmatmul.bf16.gmra.mxu0 %v2535
        %v2675 = vpop.f32.mrf.mxu0
        %v2676 = vadd.f32 0.0, %v2675
        %v2677 = vpop.f32.mrf.mxu0
        %2678 = vdwg.mxu0
        %v2679 = vadd.f32 %v2457, %v2643
        %v2680 = vadd.f32 %v2458, %v2666
        %v2681 = vadd.f32 %v2459, %v2645
        %v2682 = vadd.f32 %v2460, %v2668
        %v2683 = vadd.f32 %v2461, %v2648
        %v2684 = vadd.f32 %v2462, %v2671
        %v2685 = vadd.f32 %v2463, %v2650
        %v2686 = vadd.f32 %v2464, %v2673
        %v2687 = vadd.f32 %v2465, %v2653
        %v2688 = vadd.f32 %v2466, %v2676
        %s2689 = scalar_lea.vmem [#allocation2], 96
        %v2690 = vld [vmem:[%s2689] sm:$0xff]
        %v2691 = vld [vmem:[%s2689 + $0x8] sm:$0x3]
        %v2692 = vld [vmem:[%s2689 + $0x10] sm:$0xff]
        %v2693 = vld [vmem:[%s2689 + $0x18] sm:$0x3]
        %v2694 = vld [vmem:[%s2689 + $0x20] sm:$0xff]
        %v2695 = vld [vmem:[%s2689 + $0x28] sm:$0x3]
        %v2696 = vld [vmem:[%s2689 + $0x30] sm:$0xff]
        %v2697 = vld [vmem:[%s2689 + $0x38] sm:$0x3]
        %v2706 = vrot.slane %v2690, 2
        %v2707 = vrot.slane %v2690, 4
        %v2708 = vrot.slane %v2690, 6
        %v2709 = vrot.slane %v2692, 2
        %v2710 = vrot.slane %v2692, 4
        %v2711 = vrot.slane %v2692, 6
        %v2712 = vrot.slane %v2694, 2
        %v2713 = vrot.slane %v2694, 4
        %v2714 = vrot.slane %v2694, 6
        %v2715 = vrot.slane %v2696, 2
        %v2716 = vrot.slane %v2696, 4
        %v2717 = vrot.slane %v2696, 6
        %2718 = vst [vmem:[#allocation1] ss:$4 sm:$0xff] %v2690
        %s2719 = scalar_lea.vmem [#allocation1], 1
        %2720 = vst [vmem:[%s2719] ss:$4 sm:$0xff] %v2706
        %s2721 = scalar_lea.vmem [#allocation1], 2
        %2722 = vst [vmem:[%s2721] ss:$4 sm:$0xff] %v2707
        %s2723 = scalar_lea.vmem [#allocation1], 3
        %2724 = vst [vmem:[%s2723] ss:$4 sm:$0xff] %v2708
        %s2725 = scalar_lea.vmem [#allocation1], 32
        %2726 = vst [vmem:[%s2725] ss:$4 sm:$0xff] %v2691
        %s2727 = scalar_lea.vmem [#allocation1], 33
        %2728 = vst [vmem:[%s2727] ss:$4 sm:$0xff] %v2692
        %s2729 = scalar_lea.vmem [#allocation1], 34
        %2730 = vst [vmem:[%s2729] ss:$4 sm:$0xff] %v2709
        %s2731 = scalar_lea.vmem [#allocation1], 35
        %2732 = vst [vmem:[%s2731] ss:$4 sm:$0xff] %v2710
        %v2733 = vld.sshfl [vmem:[#allocation1] sm:$0xff pattern:$0x73625140]
        %v2734 = vld.sshfl [vmem:[#allocation1 + $0x20] sm:$0xff pattern:$0x73625140]
        %2735 = vst [vmem:[#allocation1] ss:$4 sm:$0xff] %v2711
        %2736 = vst [vmem:[%s2719] ss:$4 sm:$0xff] %v2693
        %2737 = vst [vmem:[%s2721] ss:$4 sm:$0xff] %v2694
        %2738 = vst [vmem:[%s2723] ss:$4 sm:$0xff] %v2712
        %2739 = vst [vmem:[%s2725] ss:$4 sm:$0xff] %v2713
        %2740 = vst [vmem:[%s2727] ss:$4 sm:$0xff] %v2714
        %2741 = vst [vmem:[%s2729] ss:$4 sm:$0xff] %v2695
        %2742 = vst [vmem:[%s2731] ss:$4 sm:$0xff] %v2696
        %v2743 = vld.sshfl [vmem:[#allocation1] sm:$0xff pattern:$0x73625140]
        %v2744 = vld.sshfl [vmem:[#allocation1 + $0x20] sm:$0xff pattern:$0x73625140]
        %2745 = vst [vmem:[#allocation1] ss:$4 sm:$0xff] %v2715
        %2746 = vst [vmem:[%s2719] ss:$4 sm:$0xff] %v2716
        %2747 = vst [vmem:[%s2721] ss:$4 sm:$0xff] %v2717
        %2748 = vst [vmem:[%s2723] ss:$4 sm:$0xff] %v2697
        %v2749 = vld.sshfl [vmem:[#allocation1] sm:$0xff pattern:$0x73625140]
        %v2755 = vpack.c.bf16 %v2734, %v2733
        %v2756 = vpack.c.bf16 %v2744, %v2743
        %v2757 = vpack.c.bf16 %v2749, %v2749
        %s2758 = scalar_lea.vmem [#allocation6], 768
        %v2759 = vld [vmem:[%s2758] sm:$0xff]
        %v2760 = vld [vmem:[%s2758 + $0x8] sm:$0xff]
        %v2761 = vld [vmem:[%s2758 + $0x10] sm:$0xff]
        %v2762 = vld [vmem:[%s2758 + $0x18] sm:$0xff]
        %v2763 = vld [vmem:[%s2758 + $0x20] sm:$0xff]
        %v2764 = vld [vmem:[%s2758 + $0x28] sm:$0xff]
        %v2765 = vld [vmem:[%s2758 + $0x30] sm:$0xff]
        %v2766 = vld [vmem:[%s2758 + $0x38] sm:$0xff]
        %v2767 = vld [vmem:[%s2758 + $0x40] sm:$0xff]
        %v2768 = vld [vmem:[%s2758 + $0x48] sm:$0xff]
        %v2769 = vld [vmem:[%s2758 + $0x50] sm:$0xff]
        %v2770 = vld [vmem:[%s2758 + $0x58] sm:$0xff]
        %v2771 = vld [vmem:[%s2758 + $0x60] sm:$0xff]
        %v2772 = vld [vmem:[%s2758 + $0x68] sm:$0xff]
        %v2773 = vld [vmem:[%s2758 + $0x70] sm:$0xff]
        %v2774 = vld [vmem:[%s2758 + $0x78] sm:$0xff]
        %v2791 = vunpack.c.l.b16 %v2759
        %v2792 = vunpack.c.h.b16 %v2759
        %v2793 = vunpack.c.l.b16 %v2760
        %v2794 = vunpack.c.h.b16 %v2760
        %v2795 = vunpack.c.l.b16 %v2761
        %v2796 = vunpack.c.h.b16 %v2761
        %v2797 = vunpack.c.l.b16 %v2762
        %v2798 = vunpack.c.h.b16 %v2762
        %v2799 = vunpack.c.l.b16 %v2763
        %v2800 = vunpack.c.h.b16 %v2763
        %v2801 = vunpack.c.l.b16 %v2764
        %v2802 = vunpack.c.h.b16 %v2764
        %v2803 = vunpack.c.l.b16 %v2765
        %v2804 = vunpack.c.h.b16 %v2765
        %v2805 = vunpack.c.l.b16 %v2766
        %v2806 = vunpack.c.h.b16 %v2766
        %v2807 = vunpack.c.l.b16 %v2767
        %v2808 = vunpack.c.h.b16 %v2767
        %v2809 = vunpack.c.l.b16 %v2768
        %v2810 = vunpack.c.h.b16 %v2768
        %v2811 = vunpack.c.l.b16 %v2769
        %v2812 = vunpack.c.h.b16 %v2769
        %v2813 = vunpack.c.l.b16 %v2770
        %v2814 = vunpack.c.h.b16 %v2770
        %v2815 = vunpack.c.l.b16 %v2771
        %v2816 = vunpack.c.h.b16 %v2771
        %v2817 = vunpack.c.l.b16 %v2772
        %v2818 = vunpack.c.h.b16 %v2772
        %v2819 = vunpack.c.l.b16 %v2773
        %v2820 = vunpack.c.h.b16 %v2773
        %v2821 = vunpack.c.l.b16 %v2774
        %v2822 = vunpack.c.h.b16 %v2774
        %v2823 = vpack.c.b16 %v2793, %v2791
        %v2824 = vpack.c.b16 %v2794, %v2792
        %v2825 = vpack.c.b16 %v2797, %v2795
        %v2826 = vpack.c.b16 %v2798, %v2796
        %v2827 = vpack.c.b16 %v2801, %v2799
        %v2828 = vpack.c.b16 %v2802, %v2800
        %v2829 = vpack.c.b16 %v2805, %v2803
        %v2830 = vpack.c.b16 %v2806, %v2804
        %v2831 = vpack.c.b16 %v2809, %v2807
        %v2832 = vpack.c.b16 %v2810, %v2808
        %v2833 = vpack.c.b16 %v2813, %v2811
        %v2834 = vpack.c.b16 %v2814, %v2812
        %v2835 = vpack.c.b16 %v2817, %v2815
        %v2836 = vpack.c.b16 %v2818, %v2816
        %v2837 = vpack.c.b16 %v2821, %v2819
        %v2838 = vpack.c.b16 %v2822, %v2820
        %2855 = vmatpush.bf16.msra.mxu0 %v2837
        %2856 = vmatpush.bf16.msra.mxu0 %v2835
        %2857 = vmatpush.bf16.msra.mxu0 %v2833
        %2858 = vmatpush.bf16.msra.mxu0 %v2831
        %2859 = vmatpush.bf16.msra.mxu0 %v2829
        %2860 = vmatpush.bf16.msra.mxu0 %v2827
        %2861 = vmatpush.bf16.msra.mxu0 %v2825
        %2862 = vmatpush.bf16.msra.mxu0 %v2823
        %2863 = vmatmul.bf16.gmra.mxu0 %v2755
        %v2864 = vpop.f32.mrf.mxu0
        %v2865 = vadd.f32 0.0, %v2864
        %v2866 = vpop.f32.mrf.mxu0
        %v2867 = vadd.f32 0.0, %v2866
        %2868 = vmatmul.bf16.gmra.mxu0 %v2756
        %v2869 = vpop.f32.mrf.mxu0
        %v2870 = vadd.f32 0.0, %v2869
        %v2871 = vpop.f32.mrf.mxu0
        %v2872 = vadd.f32 0.0, %v2871
        %2873 = vmatmul.bf16.gmra.mxu0 %v2757
        %v2874 = vpop.f32.mrf.mxu0
        %v2875 = vadd.f32 0.0, %v2874
        %v2876 = vpop.f32.mrf.mxu0
        %2877 = vdwg.mxu0
        %2878 = vmatpush.bf16.msra.mxu0 %v2838
        %2879 = vmatpush.bf16.msra.mxu0 %v2836
        %2880 = vmatpush.bf16.msra.mxu0 %v2834
        %2881 = vmatpush.bf16.msra.mxu0 %v2832
        %2882 = vmatpush.bf16.msra.mxu0 %v2830
        %2883 = vmatpush.bf16.msra.mxu0 %v2828
        %2884 = vmatpush.bf16.msra.mxu0 %v2826
        %2885 = vmatpush.bf16.msra.mxu0 %v2824
        %2886 = vmatmul.bf16.gmra.mxu0 %v2755
        %v2887 = vpop.f32.mrf.mxu0
        %v2888 = vadd.f32 0.0, %v2887
        %v2889 = vpop.f32.mrf.mxu0
        %v2890 = vadd.f32 0.0, %v2889
        %2891 = vmatmul.bf16.gmra.mxu0 %v2756
        %v2892 = vpop.f32.mrf.mxu0
        %v2893 = vadd.f32 0.0, %v2892
        %v2894 = vpop.f32.mrf.mxu0
        %v2895 = vadd.f32 0.0, %v2894
        %2896 = vmatmul.bf16.gmra.mxu0 %v2757
        %v2897 = vpop.f32.mrf.mxu0
        %v2898 = vadd.f32 0.0, %v2897
        %v2899 = vpop.f32.mrf.mxu0
        %2900 = vdwg.mxu0
        %v2901 = vadd.f32 %v2679, %v2865
        %v2902 = vadd.f32 %v2680, %v2888
        %v2903 = vadd.f32 %v2681, %v2867
        %v2904 = vadd.f32 %v2682, %v2890
        %v2905 = vadd.f32 %v2683, %v2870
        %v2906 = vadd.f32 %v2684, %v2893
        %v2907 = vadd.f32 %v2685, %v2872
        %v2908 = vadd.f32 %v2686, %v2895
        %v2909 = vadd.f32 %v2687, %v2875
        %v2910 = vadd.f32 %v2688, %v2898
        %2911 = vst [vmem:[#allocation3] sm:$0xff] 0.0
        %vm2912 = vcmask 261120
        %2913 = vst.msk [vmem:[#allocation3 + $0x8] sm:$0xff] %vm2912, 0.0
        %2914 = vst [vmem:[#allocation3 + $0x10] sm:$0xf] 0.0
        %vm2915 = vcmask 257024
        %2916 = vst.msk [vmem:[#allocation3 + $0x18] sm:$0xf] %vm2915, 0.0
        %2917 = vst [vmem:[#allocation3 + $0x20] sm:$0xff] 0.0
        %2918 = vst.msk [vmem:[#allocation3 + $0x28] sm:$0xff] %vm2912, 0.0
        %2919 = vst [vmem:[#allocation3 + $0x30] sm:$0xf] 0.0
        %2920 = vst.msk [vmem:[#allocation3 + $0x38] sm:$0xf] %vm2915, 0.0
        %2921 = vst [vmem:[#allocation3 + $0x40] sm:$0xff] 0.0
        %2922 = vst.msk [vmem:[#allocation3 + $0x48] sm:$0xff] %vm2912, 0.0
        %2923 = vst [vmem:[#allocation3 + $0x50] sm:$0xf] 0.0
        %2924 = vst.msk [vmem:[#allocation3 + $0x58] sm:$0xf] %vm2915, 0.0
        %2925 = vst [vmem:[#allocation3 + $0x60] sm:$0xff] 0.0
        %2926 = vst.msk [vmem:[#allocation3 + $0x68] sm:$0xff] %vm2912, 0.0
        %2927 = vst [vmem:[#allocation3 + $0x70] sm:$0xf] 0.0
        %2928 = vst.msk [vmem:[#allocation3 + $0x78] sm:$0xf] %vm2915, 0.0
        %2929 = vst [vmem:[#allocation3 + $0x80] sm:$0xff] 0.0
        %2930 = vst.msk [vmem:[#allocation3 + $0x88] sm:$0xff] %vm2912, 0.0
        %2931 = vst [vmem:[#allocation3 + $0x90] sm:$0xf] 0.0
        %2932 = vst.msk [vmem:[#allocation3 + $0x98] sm:$0xf] %vm2915, 0.0
        %2933 = vst [vmem:[#allocation3 + $0xa0] sm:$0xff] 0.0
        %2934 = vst.msk [vmem:[#allocation3 + $0xa8] sm:$0xff] %vm2912, 0.0
        %2935 = vst [vmem:[#allocation3 + $0xb0] sm:$0xf] 0.0
        %2936 = vst.msk [vmem:[#allocation3 + $0xb8] sm:$0xf] %vm2915, 0.0
        %v2947 = vrot.slane %v2902, 6
        %v2948 = vrot.slane %v2904, 6
        %v2949 = vrot.slane %v2906, 6
        %v2950 = vrot.slane %v2908, 6
        %v2951 = vrot.slane %v2910, 6
        %vm2952 = vcmask 1041408
        %v2953 = vsel %vm2952, %v2901, %v2947
        %vm2954 = vcmask 1043458
        %v2955 = vsel %vm2954, %v2901, %v2947
        %v2956 = vrot.slane %v2955, 2
        %vm2957 = vcmask 1045508
        %v2958 = vsel %vm2957, %v2901, %v2947
        %v2959 = vrot.slane %v2958, 4
        %vm2960 = vcmask 1045504
        %v2961 = vsel %vm2960, %v2947, %v2901
        %v2962 = vrot.slane %v2961, 6
        %v2963 = vsel %vm2952, %v2903, %v2948
        %v2964 = vsel %vm2954, %v2903, %v2948
        %v2965 = vrot.slane %v2964, 2
        %v2966 = vsel %vm2957, %v2903, %v2948
        %v2967 = vrot.slane %v2966, 4
        %v2968 = vsel %vm2960, %v2948, %v2903
        %v2969 = vrot.slane %v2968, 6
        %v2970 = vsel %vm2952, %v2905, %v2949
        %v2971 = vsel %vm2954, %v2905, %v2949
        %v2972 = vrot.slane %v2971, 2
        %v2973 = vsel %vm2957, %v2905, %v2949
        %v2974 = vrot.slane %v2973, 4
        %v2975 = vsel %vm2960, %v2949, %v2905
        %v2976 = vrot.slane %v2975, 6
        %v2977 = vsel %vm2952, %v2907, %v2950
        %v2978 = vsel %vm2954, %v2907, %v2950
        %v2979 = vrot.slane %v2978, 2
        %v2980 = vsel %vm2957, %v2907, %v2950
        %v2981 = vrot.slane %v2980, 4
        %v2982 = vsel %vm2960, %v2950, %v2907
        %v2983 = vrot.slane %v2982, 6
        %v2984 = vsel %vm2952, %v2909, %v2951
        %v2985 = vsel %vm2954, %v2909, %v2951
        %v2986 = vrot.slane %v2985, 2
        %v2987 = vsel %vm2957, %v2909, %v2951
        %v2988 = vrot.slane %v2987, 4
        %v2989 = vsel %vm2960, %v2951, %v2909
        %v2990 = vrot.slane %v2989, 6
        %2991 = vst [vmem:[#allocation1] ss:$4 sm:$0xff] %v2953
        %s2992 = scalar_lea.vmem [#allocation1], 1
        %2993 = vst [vmem:[%s2992] ss:$4 sm:$0xff] %v2956
        %s2994 = scalar_lea.vmem [#allocation1], 2
        %2995 = vst [vmem:[%s2994] ss:$4 sm:$0xff] %v2959
        %s2996 = scalar_lea.vmem [#allocation1], 3
        %2997 = vst [vmem:[%s2996] ss:$4 sm:$0xff] %v2962
        %s2998 = scalar_lea.vmem [#allocation1], 32
        %2999 = vst [vmem:[%s2998] ss:$4 sm:$0xff] %v2963
        %v3000 = vld.sshfl [vmem:[#allocation1] sm:$0xff pattern:$0x73625140]
        %v3001 = vld.sshfl [vmem:[#allocation1 + $0x8] sm:$0xff pattern:$0x73625140]
        %v3002 = vld.sshfl [vmem:[#allocation1 + $0x20] sm:$0xff pattern:$0x73625140]
        %v3003 = vld.sshfl [vmem:[#allocation1 + $0x28] sm:$0xff pattern:$0x73625140]
        %3004 = vst [vmem:[#allocation1] ss:$4 sm:$0xff] %v2965
        %3005 = vst [vmem:[%s2992] ss:$4 sm:$0xff] %v2967
        %3006 = vst [vmem:[%s2994] ss:$4 sm:$0xff] %v2969
        %3007 = vst [vmem:[%s2996] ss:$4 sm:$0xff] %v2970
        %3008 = vst [vmem:[%s2998] ss:$4 sm:$0xff] %v2972
        %v3009 = vld.sshfl [vmem:[#allocation1] sm:$0xff pattern:$0x73625140]
        %v3010 = vld.sshfl [vmem:[#allocation1 + $0x8] sm:$0xff pattern:$0x73625140]
        %v3011 = vld.sshfl [vmem:[#allocation1 + $0x20] sm:$0xff pattern:$0x73625140]
        %v3012 = vld.sshfl [vmem:[#allocation1 + $0x28] sm:$0xff pattern:$0x73625140]
        %3013 = vst [vmem:[#allocation1] ss:$4 sm:$0xff] %v2974
        %3014 = vst [vmem:[%s2992] ss:$4 sm:$0xff] %v2976
        %3015 = vst [vmem:[%s2994] ss:$4 sm:$0xff] %v2977
        %3016 = vst [vmem:[%s2996] ss:$4 sm:$0xff] %v2979
        %3017 = vst [vmem:[%s2998] ss:$4 sm:$0xff] %v2981
        %v3018 = vld.sshfl [vmem:[#allocation1] sm:$0xff pattern:$0x73625140]
        %v3019 = vld.sshfl [vmem:[#allocation1 + $0x8] sm:$0xff pattern:$0x73625140]
        %v3020 = vld.sshfl [vmem:[#allocation1 + $0x20] sm:$0xff pattern:$0x73625140]
        %v3021 = vld.sshfl [vmem:[#allocation1 + $0x28] sm:$0xff pattern:$0x73625140]
        %3022 = vst [vmem:[#allocation1] ss:$4 sm:$0xff] %v2983
        %3023 = vst [vmem:[%s2992] ss:$4 sm:$0xff] %v2984
        %3024 = vst [vmem:[%s2994] ss:$4 sm:$0xff] %v2986
        %3025 = vst [vmem:[%s2996] ss:$4 sm:$0xff] %v2988
        %3026 = vst [vmem:[%s2998] ss:$4 sm:$0xff] %v2990
        %v3027 = vld.sshfl [vmem:[#allocation1] sm:$0xff pattern:$0x73625140]
        %v3028 = vld.sshfl [vmem:[#allocation1 + $0x8] sm:$0xff pattern:$0x73625140]
        %v3029 = vld.sshfl [vmem:[#allocation1 + $0x20] sm:$0xff pattern:$0x73625140]
        %v3030 = vld.sshfl [vmem:[#allocation1 + $0x28] sm:$0xff pattern:$0x73625140]
        %vm3031 = vcmask 1040384
        %v3032 = vrot.slane %v3000, 7
        %v3033 = vrot.slane %v3001, 7
        %v3034 = vrot.slane %v3002, 7
        %v3035 = vsel %vm3031, %v3032, %v3034
        %v3036 = vrot.slane %v3003, 7
        %v3037 = vsel %vm3031, %v3033, %v3036
        %v3038 = vrot.slane %v3009, 7
        %v3039 = vrot.slane %v3010, 7
        %v3040 = vrot.slane %v3011, 7
        %v3041 = vsel %vm3031, %v3038, %v3040
        %v3042 = vrot.slane %v3012, 7
        %v3043 = vsel %vm3031, %v3039, %v3042
        %v3044 = vrot.slane %v3018, 7
        %v3045 = vrot.slane %v3019, 7
        %v3046 = vrot.slane %v3020, 7
        %v3047 = vsel %vm3031, %v3044, %v3046
        %v3048 = vrot.slane %v3021, 7
        %v3049 = vsel %vm3031, %v3045, %v3048
        %v3050 = vrot.slane %v3027, 7
        %v3051 = vrot.slane %v3028, 7
        %v3052 = vrot.slane %v3029, 7
        %v3053 = vsel %vm3031, %v3050, %v3052
        %v3054 = vrot.slane %v3030, 7
        %v3055 = vsel %vm3031, %v3051, %v3054
        %s3072 = scalar_lea.vmem [#allocation3], 32
        %3073 = vst [vmem:[%s3072] sm:$0xfe] %v3032
        %vm3074 = vcmask 261121
        %3075 = vst.msk [vmem:[%s3072 + $0x8] sm:$0xfe] %vm3074, %v3033
        %3076 = vst [vmem:[%s3072 + $0x10] sm:$0x7] %v3035
        %vm3077 = vcmask 256000
        %3078 = vst.msk [vmem:[%s3072 + $0x18] sm:$0x7] %vm3077, %v3037
        %3079 = vst [vmem:[%s3072 + $0x20] sm:$0xfe] %v3038
        %3080 = vst.msk [vmem:[%s3072 + $0x28] sm:$0xfe] %vm3074, %v3039
        %3081 = vst [vmem:[%s3072 + $0x30] sm:$0x7] %v3041
        %3082 = vst.msk [vmem:[%s3072 + $0x38] sm:$0x7] %vm3077, %v3043
        %3083 = vst [vmem:[%s3072 + $0x40] sm:$0xfe] %v3044
        %3084 = vst.msk [vmem:[%s3072 + $0x48] sm:$0xfe] %vm3074, %v3045
        %3085 = vst [vmem:[%s3072 + $0x50] sm:$0x7] %v3047
        %3086 = vst.msk [vmem:[%s3072 + $0x58] sm:$0x7] %vm3077, %v3049
        %3087 = vst [vmem:[%s3072 + $0x60] sm:$0xfe] %v3050
        %3088 = vst.msk [vmem:[%s3072 + $0x68] sm:$0xfe] %vm3074, %v3051
        %3089 = vst [vmem:[%s3072 + $0x70] sm:$0x7] %v3053
        %3090 = vst.msk [vmem:[%s3072 + $0x78] sm:$0x7] %vm3077, %v3055
        %v3091 = vld [vmem:[%s6] sm:$0x3]
        %v3092 = vld [vmem:[#allocation3] sm:$0x3f]
        %v3093 = vld [vmem:[#allocation3 + $0x8] sm:$0x3f]
        %v3094 = vld [vmem:[#allocation3 + $0x20] sm:$0x3f]
        %v3095 = vld [vmem:[#allocation3 + $0x28] sm:$0x3f]
        %v3096 = vld [vmem:[#allocation3 + $0x40] sm:$0x3f]
        %v3097 = vld [vmem:[#allocation3 + $0x48] sm:$0x3f]
        %v3098 = vld [vmem:[#allocation3 + $0x60] sm:$0x3f]
        %v3099 = vld [vmem:[#allocation3 + $0x68] sm:$0x3f]
        %v3100 = vld [vmem:[#allocation3 + $0x80] sm:$0x3f]
        %v3101 = vld [vmem:[#allocation3 + $0x88] sm:$0x3f]
        %v3102 = vld [vmem:[#allocation3 + $0xa0] sm:$0x3f]
        %v3103 = vld [vmem:[#allocation3 + $0xa8] sm:$0x3f]
        %v3116 = vrot.slane %v3093, 6
        %v3117 = vrot.slane %v3095, 6
        %v3118 = vrot.slane %v3097, 6
        %v3119 = vrot.slane %v3099, 6
        %v3120 = vrot.slane %v3101, 6
        %v3121 = vrot.slane %v3103, 6
        %v3122 = vsel %vm2952, %v3092, %v3116
        %v3123 = vsel %vm2954, %v3092, %v3116
        %v3124 = vrot.slane %v3123, 2
        %v3125 = vsel %vm2957, %v3092, %v3116
        %v3126 = vrot.slane %v3125, 4
        %v3127 = vsel %vm2952, %v3094, %v3117
        %v3128 = vsel %vm2954, %v3094, %v3117
        %v3129 = vrot.slane %v3128, 2
        %v3130 = vsel %vm2957, %v3094, %v3117
        %v3131 = vrot.slane %v3130, 4
        %v3132 = vsel %vm2952, %v3096, %v3118
        %v3133 = vsel %vm2954, %v3096, %v3118
        %v3134 = vrot.slane %v3133, 2
        %v3135 = vsel %vm2957, %v3096, %v3118
        %v3136 = vrot.slane %v3135, 4
        %v3137 = vsel %vm2952, %v3098, %v3119
        %v3138 = vsel %vm2954, %v3098, %v3119
        %v3139 = vrot.slane %v3138, 2
        %v3140 = vsel %vm2957, %v3098, %v3119
        %v3141 = vrot.slane %v3140, 4
        %v3142 = vsel %vm2952, %v3100, %v3120
        %v3143 = vsel %vm2954, %v3100, %v3120
        %v3144 = vrot.slane %v3143, 2
        %v3145 = vsel %vm2957, %v3100, %v3120
        %v3146 = vrot.slane %v3145, 4
        %v3147 = vsel %vm2952, %v3102, %v3121
        %v3148 = vsel %vm2954, %v3102, %v3121
        %v3149 = vrot.slane %v3148, 2
        %v3150 = vsel %vm2957, %v3102, %v3121
        %v3151 = vrot.slane %v3150, 4
        %3152 = vst [vmem:[#allocation1] ss:$4 sm:$0xff] %v3122
        %s3153 = scalar_lea.vmem [#allocation1], 1
        %3154 = vst [vmem:[%s3153] ss:$4 sm:$0xff] %v3124
        %s3155 = scalar_lea.vmem [#allocation1], 2
        %3156 = vst [vmem:[%s3155] ss:$4 sm:$0xff] %v3126
        %s3157 = scalar_lea.vmem [#allocation1], 3
        %3158 = vst [vmem:[%s3157] ss:$4 sm:$0xff] %v3127
        %s3159 = scalar_lea.vmem [#allocation1], 32
        %3160 = vst [vmem:[%s3159] ss:$4 sm:$0xff] %v3129
        %s3161 = scalar_lea.vmem [#allocation1], 33
        %3162 = vst [vmem:[%s3161] ss:$4 sm:$0xff] %v3131
        %s3163 = scalar_lea.vmem [#allocation1], 34
        %3164 = vst [vmem:[%s3163] ss:$4 sm:$0xff] %v3132
        %s3165 = scalar_lea.vmem [#allocation1], 35
        %3166 = vst [vmem:[%s3165] ss:$4 sm:$0xff] %v3134
        %v3167 = vld.sshfl [vmem:[#allocation1] sm:$0xff pattern:$0x73625140]
        %v3168 = vld.sshfl [vmem:[#allocation1 + $0x8] sm:$0xff pattern:$0x73625140]
        %v3169 = vld.sshfl [vmem:[#allocation1 + $0x20] sm:$0xff pattern:$0x73625140]
        %v3170 = vld.sshfl [vmem:[#allocation1 + $0x28] sm:$0xff pattern:$0x73625140]
        %3171 = vst [vmem:[#allocation1] ss:$4 sm:$0xff] %v3136
        %3172 = vst [vmem:[%s3153] ss:$4 sm:$0xff] %v3137
        %3173 = vst [vmem:[%s3155] ss:$4 sm:$0xff] %v3139
        %3174 = vst [vmem:[%s3157] ss:$4 sm:$0xff] %v3141
        %3175 = vst [vmem:[%s3159] ss:$4 sm:$0xff] %v3142
        %3176 = vst [vmem:[%s3161] ss:$4 sm:$0xff] %v3144
        %3177 = vst [vmem:[%s3163] ss:$4 sm:$0xff] %v3146
        %3178 = vst [vmem:[%s3165] ss:$4 sm:$0xff] %v3147
        %v3179 = vld.sshfl [vmem:[#allocation1] sm:$0xff pattern:$0x73625140]
        %v3180 = vld.sshfl [vmem:[#allocation1 + $0x8] sm:$0xff pattern:$0x73625140]
        %v3181 = vld.sshfl [vmem:[#allocation1 + $0x20] sm:$0xff pattern:$0x73625140]
        %v3182 = vld.sshfl [vmem:[#allocation1 + $0x28] sm:$0xff pattern:$0x73625140]
        %3183 = vst [vmem:[#allocation1] ss:$4 sm:$0xff] %v3149
        %3184 = vst [vmem:[%s3153] ss:$4 sm:$0xff] %v3151
        %v3185 = vld.sshfl [vmem:[#allocation1] sm:$0xff pattern:$0x73625140]
        %v3186 = vld.sshfl [vmem:[#allocation1 + $0x8] sm:$0xff pattern:$0x73625140]
        %v3197 = vpack.c.bf16 %v3169, %v3167
        %v3198 = vpack.c.bf16 %v3170, %v3168
        %v3199 = vpack.c.bf16 %v3181, %v3179
        %v3200 = vpack.c.bf16 %v3182, %v3180
        %v3201 = vpack.c.bf16 %v3185, %v3185
        %v3202 = vpack.c.bf16 %v3186, %v3186
        %v3203 = vld [vmem:[%s5] sm:$0xff]
        %v3204 = vld [vmem:[%s5 + $0x8] sm:$0xff]
        %v3205 = vld [vmem:[%s5 + $0x10] sm:$0xff]
        %v3206 = vld [vmem:[%s5 + $0x18] sm:$0xff]
        %v3207 = vld [vmem:[%s5 + $0x20] sm:$0xff]
        %v3208 = vld [vmem:[%s5 + $0x28] sm:$0xff]
        %v3209 = vld [vmem:[%s5 + $0x30] sm:$0xff]
        %v3210 = vld [vmem:[%s5 + $0x38] sm:$0xff]
        %v3211 = vld [vmem:[%s5 + $0x40] sm:$0xff]
        %v3212 = vld [vmem:[%s5 + $0x48] sm:$0xff]
        %v3213 = vld [vmem:[%s5 + $0x50] sm:$0xff]
        %v3214 = vld [vmem:[%s5 + $0x58] sm:$0xff]
        %v3215 = vld [vmem:[%s5 + $0x60] sm:$0xff]
        %v3216 = vld [vmem:[%s5 + $0x68] sm:$0xff]
        %v3217 = vld [vmem:[%s5 + $0x70] sm:$0xff]
        %v3218 = vld [vmem:[%s5 + $0x78] sm:$0xff]
        %v3219 = vld [vmem:[%s5 + $0x80] sm:$0xff]
        %v3220 = vld [vmem:[%s5 + $0x88] sm:$0xff]
        %v3221 = vld [vmem:[%s5 + $0x90] sm:$0xff]
        %v3222 = vld [vmem:[%s5 + $0x98] sm:$0xff]
        %v3243 = vunpack.c.l.b16 %v3203
        %v3244 = vunpack.c.h.b16 %v3203
        %v3245 = vunpack.c.l.b16 %v3204
        %v3246 = vunpack.c.h.b16 %v3204
        %v3247 = vunpack.c.l.b16 %v3205
        %v3248 = vunpack.c.h.b16 %v3205
        %v3249 = vunpack.c.l.b16 %v3206
        %v3250 = vunpack.c.h.b16 %v3206
        %v3251 = vunpack.c.l.b16 %v3207
        %v3252 = vunpack.c.h.b16 %v3207
        %v3253 = vunpack.c.l.b16 %v3208
        %v3254 = vunpack.c.h.b16 %v3208
        %v3255 = vunpack.c.l.b16 %v3209
        %v3256 = vunpack.c.h.b16 %v3209
        %v3257 = vunpack.c.l.b16 %v3210
        %v3258 = vunpack.c.h.b16 %v3210
        %v3259 = vunpack.c.l.b16 %v3211
        %v3260 = vunpack.c.h.b16 %v3211
        %v3261 = vunpack.c.l.b16 %v3212
        %v3262 = vunpack.c.h.b16 %v3212
        %v3263 = vunpack.c.l.b16 %v3213
        %v3264 = vunpack.c.h.b16 %v3213
        %v3265 = vunpack.c.l.b16 %v3214
        %v3266 = vunpack.c.h.b16 %v3214
        %v3267 = vunpack.c.l.b16 %v3215
        %v3268 = vunpack.c.h.b16 %v3215
        %v3269 = vunpack.c.l.b16 %v3216
        %v3270 = vunpack.c.h.b16 %v3216
        %v3271 = vunpack.c.l.b16 %v3217
        %v3272 = vunpack.c.h.b16 %v3217
        %v3273 = vunpack.c.l.b16 %v3218
        %v3274 = vunpack.c.h.b16 %v3218
        %v3275 = vunpack.c.l.b16 %v3219
        %v3276 = vunpack.c.h.b16 %v3219
        %v3277 = vunpack.c.l.b16 %v3220
        %v3278 = vunpack.c.h.b16 %v3220
        %v3279 = vunpack.c.l.b16 %v3221
        %v3280 = vunpack.c.h.b16 %v3221
        %v3281 = vunpack.c.l.b16 %v3222
        %v3282 = vunpack.c.h.b16 %v3222
        %v3283 = vpack.c.b16 %v3245, %v3243
        %v3284 = vpack.c.b16 %v3246, %v3244
        %v3285 = vpack.c.b16 %v3249, %v3247
        %v3286 = vpack.c.b16 %v3250, %v3248
        %v3287 = vpack.c.b16 %v3253, %v3251
        %v3288 = vpack.c.b16 %v3254, %v3252
        %v3289 = vpack.c.b16 %v3257, %v3255
        %v3290 = vpack.c.b16 %v3258, %v3256
        %v3291 = vpack.c.b16 %v3261, %v3259
        %v3292 = vpack.c.b16 %v3262, %v3260
        %v3293 = vpack.c.b16 %v3265, %v3263
        %v3294 = vpack.c.b16 %v3266, %v3264
        %v3295 = vpack.c.b16 %v3269, %v3267
        %v3296 = vpack.c.b16 %v3270, %v3268
        %v3297 = vpack.c.b16 %v3273, %v3271
        %v3298 = vpack.c.b16 %v3274, %v3272
        %v3299 = vpack.c.b16 %v3277, %v3275
        %v3300 = vpack.c.b16 %v3278, %v3276
        %v3301 = vpack.c.b16 %v3281, %v3279
        %v3302 = vpack.c.b16 %v3282, %v3280
        %v3324 = vsel %vm2912, %v3198, 0
        %v3327 = vsel %vm2912, %v3200, 0
        %v3330 = vsel %vm2912, %v3202, 0
        %3332 = vmatpush.bf16.msra.mxu0 %v3297
        %3333 = vmatpush.bf16.msra.mxu0 %v3295
        %3334 = vmatpush.bf16.msra.mxu0 %v3293
        %3335 = vmatpush.bf16.msra.mxu0 %v3291
        %3336 = vmatpush.bf16.msra.mxu0 %v3289
        %3337 = vmatpush.bf16.msra.mxu0 %v3287
        %3338 = vmatpush.bf16.msra.mxu0 %v3285
        %3339 = vmatpush.bf16.msra.mxu0 %v3283
        %3340 = vmatmul.bf16.gmra.mxu0 %v3197
        %v3341 = vpop.f32.mrf.mxu0
        %v3342 = vadd.f32 0.0, %v3341
        %v3343 = vpop.f32.mrf.mxu0
        %v3344 = vadd.f32 0.0, %v3343
        %3345 = vmatmul.bf16.gmra.mxu0 %v3199
        %v3346 = vpop.f32.mrf.mxu0
        %v3347 = vadd.f32 0.0, %v3346
        %v3348 = vpop.f32.mrf.mxu0
        %v3349 = vadd.f32 0.0, %v3348
        %3350 = vmatmul.bf16.gmra.mxu0 %v3201
        %v3351 = vpop.f32.mrf.mxu0
        %v3352 = vadd.f32 0.0, %v3351
        %v3353 = vpop.f32.mrf.mxu0
        %3354 = vdwg.mxu0
        %3355 = vmatpush.bf16.msra.mxu0 0
        %3356 = vmatpush.bf16.msra.mxu0 0
        %3357 = vmatpush.bf16.msra.mxu0 0
        %3358 = vmatpush.bf16.msra.mxu0 0
        %3359 = vmatpush.bf16.msra.mxu0 0
        %3360 = vmatpush.bf16.msra.mxu0 0
        %3361 = vmatpush.bf16.msra.mxu0 %v3301
        %3362 = vmatpush.bf16.msra.mxu0 %v3299
        %3363 = vmatmul.bf16.gmra.mxu0 %v3324
        %v3364 = vpop.f32.mrf.mxu0
        %v3365 = vadd.f32 %v3342, %v3364
        %v3366 = vpop.f32.mrf.mxu0
        %v3367 = vadd.f32 %v3344, %v3366
        %3368 = vmatmul.bf16.gmra.mxu0 %v3327
        %v3369 = vpop.f32.mrf.mxu0
        %v3370 = vadd.f32 %v3347, %v3369
        %v3371 = vpop.f32.mrf.mxu0
        %v3372 = vadd.f32 %v3349, %v3371
        %3373 = vmatmul.bf16.gmra.mxu0 %v3330
        %v3374 = vpop.f32.mrf.mxu0
        %v3375 = vadd.f32 %v3352, %v3374
        %v3376 = vpop.f32.mrf.mxu0
        %3377 = vdwg.mxu0
        %3378 = vmatpush.bf16.msra.mxu0 %v3298
        %3379 = vmatpush.bf16.msra.mxu0 %v3296
        %3380 = vmatpush.bf16.msra.mxu0 %v3294
        %3381 = vmatpush.bf16.msra.mxu0 %v3292
        %3382 = vmatpush.bf16.msra.mxu0 %v3290
        %3383 = vmatpush.bf16.msra.mxu0 %v3288
        %3384 = vmatpush.bf16.msra.mxu0 %v3286
        %3385 = vmatpush.bf16.msra.mxu0 %v3284
        %3386 = vmatmul.bf16.gmra.mxu0 %v3197
        %v3387 = vpop.f32.mrf.mxu0
        %v3388 = vadd.f32 0.0, %v3387
        %v3389 = vpop.f32.mrf.mxu0
        %v3390 = vadd.f32 0.0, %v3389
        %3391 = vmatmul.bf16.gmra.mxu0 %v3199
        %v3392 = vpop.f32.mrf.mxu0
        %v3393 = vadd.f32 0.0, %v3392
        %v3394 = vpop.f32.mrf.mxu0
        %v3395 = vadd.f32 0.0, %v3394
        %3396 = vmatmul.bf16.gmra.mxu0 %v3201
        %v3397 = vpop.f32.mrf.mxu0
        %v3398 = vadd.f32 0.0, %v3397
        %v3399 = vpop.f32.mrf.mxu0
        %3400 = vdwg.mxu0
        %3401 = vmatpush.bf16.msra.mxu0 0
        %3402 = vmatpush.bf16.msra.mxu0 0
        %3403 = vmatpush.bf16.msra.mxu0 0
        %3404 = vmatpush.bf16.msra.mxu0 0
        %3405 = vmatpush.bf16.msra.mxu0 0
        %3406 = vmatpush.bf16.msra.mxu0 0
        %3407 = vmatpush.bf16.msra.mxu0 %v3302
        %3408 = vmatpush.bf16.msra.mxu0 %v3300
        %3409 = vmatmul.bf16.gmra.mxu0 %v3324
        %v3410 = vpop.f32.mrf.mxu0
        %v3411 = vadd.f32 %v3388, %v3410
        %v3412 = vpop.f32.mrf.mxu0
        %v3413 = vadd.f32 %v3390, %v3412
        %3414 = vmatmul.bf16.gmra.mxu0 %v3327
        %v3415 = vpop.f32.mrf.mxu0
        %v3416 = vadd.f32 %v3393, %v3415
        %v3417 = vpop.f32.mrf.mxu0
        %v3418 = vadd.f32 %v3395, %v3417
        %3419 = vmatmul.bf16.gmra.mxu0 %v3330
        %v3420 = vpop.f32.mrf.mxu0
        %v3421 = vadd.f32 %v3398, %v3420
        %v3422 = vpop.f32.mrf.mxu0
        %3423 = vdwg.mxu0
        %v3425 = vperm.slane %v3091, 0
        %v3426 = vperm.slane %v3091, 1
        %v3429 = vadd.f32 %v3425, %v3365
        %v3430 = vadd.f32 %v3426, %v3411
        %v3431 = vadd.f32 %v3425, %v3367
        %v3432 = vadd.f32 %v3426, %v3413
        %v3433 = vadd.f32 %v3425, %v3370
        %v3434 = vadd.f32 %v3426, %v3416
        %v3435 = vadd.f32 %v3425, %v3372
        %v3436 = vadd.f32 %v3426, %v3418
        %v3437 = vadd.f32 %v3425, %v3375
        %v3438 = vadd.f32 %v3426, %v3421
        %v3439 = vld [vmem:[#allocation3] sm:$0x7e]
        %v3440 = vld [vmem:[#allocation3 + $0x8] sm:$0x7e]
        %v3441 = vld [vmem:[#allocation3 + $0x20] sm:$0x7e]
        %v3442 = vld [vmem:[#allocation3 + $0x28] sm:$0x7e]
        %v3443 = vld [vmem:[#allocation3 + $0x40] sm:$0x7e]
        %v3444 = vld [vmem:[#allocation3 + $0x48] sm:$0x7e]
        %v3445 = vld [vmem:[#allocation3 + $0x60] sm:$0x7e]
        %v3446 = vld [vmem:[#allocation3 + $0x68] sm:$0x7e]
        %v3447 = vld [vmem:[#allocation3 + $0x80] sm:$0x7e]
        %v3448 = vld [vmem:[#allocation3 + $0x88] sm:$0x7e]
        %v3449 = vld [vmem:[#allocation3 + $0xa0] sm:$0x7e]
        %v3450 = vld [vmem:[#allocation3 + $0xa8] sm:$0x7e]
        %v3463 = vrot.slane %v3440, 6
        %v3464 = vrot.slane %v3442, 6
        %v3465 = vrot.slane %v3444, 6
        %v3466 = vrot.slane %v3446, 6
        %v3467 = vrot.slane %v3448, 6
        %v3468 = vrot.slane %v3450, 6
        %v3469 = vsel %vm2952, %v3439, %v3463
        %v3470 = vsel %vm2954, %v3439, %v3463
        %v3471 = vrot.slane %v3470, 2
        %v3472 = vsel %vm2957, %v3439, %v3463
        %v3473 = vrot.slane %v3472, 4
        %v3474 = vsel %vm2960, %v3463, %v3439
        %v3475 = vrot.slane %v3474, 6
        %v3476 = vsel %vm2952, %v3441, %v3464
        %v3477 = vsel %vm2954, %v3441, %v3464
        %v3478 = vrot.slane %v3477, 2
        %v3479 = vsel %vm2957, %v3441, %v3464
        %v3480 = vrot.slane %v3479, 4
        %v3481 = vsel %vm2960, %v3464, %v3441
        %v3482 = vrot.slane %v3481, 6
        %v3483 = vsel %vm2952, %v3443, %v3465
        %v3484 = vsel %vm2954, %v3443, %v3465
        %v3485 = vrot.slane %v3484, 2
        %v3486 = vsel %vm2957, %v3443, %v3465
        %v3487 = vrot.slane %v3486, 4
        %v3488 = vsel %vm2960, %v3465, %v3443
        %v3489 = vrot.slane %v3488, 6
        %v3490 = vsel %vm2952, %v3445, %v3466
        %v3491 = vsel %vm2954, %v3445, %v3466
        %v3492 = vrot.slane %v3491, 2
        %v3493 = vsel %vm2957, %v3445, %v3466
        %v3494 = vrot.slane %v3493, 4
        %v3495 = vsel %vm2960, %v3466, %v3445
        %v3496 = vrot.slane %v3495, 6
        %v3497 = vsel %vm2952, %v3447, %v3467
        %v3498 = vsel %vm2954, %v3447, %v3467
        %v3499 = vrot.slane %v3498, 2
        %v3500 = vsel %vm2957, %v3447, %v3467
        %v3501 = vrot.slane %v3500, 4
        %v3502 = vsel %vm2960, %v3467, %v3447
        %v3503 = vrot.slane %v3502, 6
        %v3504 = vsel %vm2952, %v3449, %v3468
        %v3505 = vsel %vm2954, %v3449, %v3468
        %v3506 = vrot.slane %v3505, 2
        %v3507 = vsel %vm2957, %v3449, %v3468
        %v3508 = vrot.slane %v3507, 4
        %v3509 = vsel %vm2960, %v3468, %v3449
        %v3510 = vrot.slane %v3509, 6
        %vm3511 = vcmask 1042434
        %vm3512 = vmor %vm3031, %vm3511
        %vm3513 = vcmask 1044484
        %vm3514 = vmor %vm3512, %vm3513
        %vm3515 = vcmask 1046534
        %vm3516 = vmor %vm3514, %vm3515
        %v3517 = vrot.slane %v3469, 7
        %v3518 = vrot.slane %v3517, 2
        %v3519 = vrot.slane %v3471, 7
        %v3520 = vsel %vm3516, %v3518, %v3519
        %v3521 = vrot.slane %v3519, 2
        %v3522 = vrot.slane %v3473, 7
        %v3523 = vsel %vm3516, %v3521, %v3522
        %v3524 = vrot.slane %v3522, 2
        %v3525 = vrot.slane %v3475, 7
        %v3526 = vsel %vm3516, %v3524, %v3525
        %v3527 = vrot.slane %v3476, 7
        %v3528 = vrot.slane %v3527, 2
        %v3529 = vrot.slane %v3478, 7
        %v3530 = vsel %vm3516, %v3528, %v3529
        %v3531 = vrot.slane %v3529, 2
        %v3532 = vrot.slane %v3480, 7
        %v3533 = vsel %vm3516, %v3531, %v3532
        %v3534 = vrot.slane %v3532, 2
        %v3535 = vrot.slane %v3482, 7
        %v3536 = vsel %vm3516, %v3534, %v3535
        %v3537 = vrot.slane %v3483, 7
        %v3538 = vrot.slane %v3537, 2
        %v3539 = vrot.slane %v3485, 7
        %v3540 = vsel %vm3516, %v3538, %v3539
        %v3541 = vrot.slane %v3539, 2
        %v3542 = vrot.slane %v3487, 7
        %v3543 = vsel %vm3516, %v3541, %v3542
        %v3544 = vrot.slane %v3542, 2
        %v3545 = vrot.slane %v3489, 7
        %v3546 = vsel %vm3516, %v3544, %v3545
        %v3547 = vrot.slane %v3490, 7
        %v3548 = vrot.slane %v3547, 2
        %v3549 = vrot.slane %v3492, 7
        %v3550 = vsel %vm3516, %v3548, %v3549
        %v3551 = vrot.slane %v3549, 2
        %v3552 = vrot.slane %v3494, 7
        %v3553 = vsel %vm3516, %v3551, %v3552
        %v3554 = vrot.slane %v3552, 2
        %v3555 = vrot.slane %v3496, 7
        %v3556 = vsel %vm3516, %v3554, %v3555
        %v3557 = vrot.slane %v3497, 7
        %v3558 = vrot.slane %v3557, 2
        %v3559 = vrot.slane %v3499, 7
        %v3560 = vsel %vm3516, %v3558, %v3559
        %v3561 = vrot.slane %v3559, 2
        %v3562 = vrot.slane %v3501, 7
        %v3563 = vsel %vm3516, %v3561, %v3562
        %v3564 = vrot.slane %v3562, 2
        %v3565 = vrot.slane %v3503, 7
        %v3566 = vsel %vm3516, %v3564, %v3565
        %v3567 = vrot.slane %v3504, 7
        %v3568 = vrot.slane %v3567, 2
        %v3569 = vrot.slane %v3506, 7
        %v3570 = vsel %vm3516, %v3568, %v3569
        %v3571 = vrot.slane %v3569, 2
        %v3572 = vrot.slane %v3508, 7
        %v3573 = vsel %vm3516, %v3571, %v3572
        %v3574 = vrot.slane %v3572, 2
        %v3575 = vrot.slane %v3510, 7
        %v3576 = vsel %vm3516, %v3574, %v3575
        %3577 = vst [vmem:[#allocation1] ss:$4 sm:$0xff] %v3520
        %s3578 = scalar_lea.vmem [#allocation1], 1
        %3579 = vst [vmem:[%s3578] ss:$4 sm:$0xff] %v3523
        %s3580 = scalar_lea.vmem [#allocation1], 2
        %3581 = vst [vmem:[%s3580] ss:$4 sm:$0xff] %v3526
        %s3582 = scalar_lea.vmem [#allocation1], 3
        %3583 = vst [vmem:[%s3582] ss:$4 sm:$0xff] %v3530
        %s3584 = scalar_lea.vmem [#allocation1], 32
        %3585 = vst [vmem:[%s3584] ss:$4 sm:$0xff] %v3533
        %s3586 = scalar_lea.vmem [#allocation1], 33
        %3587 = vst [vmem:[%s3586] ss:$4 sm:$0xff] %v3536
        %s3588 = scalar_lea.vmem [#allocation1], 34
        %3589 = vst [vmem:[%s3588] ss:$4 sm:$0xff] %v3540
        %s3590 = scalar_lea.vmem [#allocation1], 35
        %3591 = vst [vmem:[%s3590] ss:$4 sm:$0xff] %v3543
        %v3592 = vld.sshfl [vmem:[#allocation1] sm:$0xff pattern:$0x73625140]
        %v3593 = vld.sshfl [vmem:[#allocation1 + $0x8] sm:$0xff pattern:$0x73625140]
        %v3594 = vld.sshfl [vmem:[#allocation1 + $0x20] sm:$0xff pattern:$0x73625140]
        %v3595 = vld.sshfl [vmem:[#allocation1 + $0x28] sm:$0xff pattern:$0x73625140]
        %3596 = vst [vmem:[#allocation1] ss:$4 sm:$0xff] %v3546
        %3597 = vst [vmem:[%s3578] ss:$4 sm:$0xff] %v3550
        %3598 = vst [vmem:[%s3580] ss:$4 sm:$0xff] %v3553
        %3599 = vst [vmem:[%s3582] ss:$4 sm:$0xff] %v3556
        %3600 = vst [vmem:[%s3584] ss:$4 sm:$0xff] %v3560
        %3601 = vst [vmem:[%s3586] ss:$4 sm:$0xff] %v3563
        %3602 = vst [vmem:[%s3588] ss:$4 sm:$0xff] %v3566
        %3603 = vst [vmem:[%s3590] ss:$4 sm:$0xff] %v3570
        %v3604 = vld.sshfl [vmem:[#allocation1] sm:$0xff pattern:$0x73625140]
        %v3605 = vld.sshfl [vmem:[#allocation1 + $0x8] sm:$0xff pattern:$0x73625140]
        %v3606 = vld.sshfl [vmem:[#allocation1 + $0x20] sm:$0xff pattern:$0x73625140]
        %v3607 = vld.sshfl [vmem:[#allocation1 + $0x28] sm:$0xff pattern:$0x73625140]
        %3608 = vst [vmem:[#allocation1] ss:$4 sm:$0xff] %v3573
        %3609 = vst [vmem:[%s3578] ss:$4 sm:$0xff] %v3576
        %v3610 = vld.sshfl [vmem:[#allocation1] sm:$0xff pattern:$0x73625140]
        %v3611 = vld.sshfl [vmem:[#allocation1 + $0x8] sm:$0xff pattern:$0x73625140]
        %v3622 = vpack.c.bf16 %v3594, %v3592
        %v3623 = vpack.c.bf16 %v3595, %v3593
        %v3624 = vpack.c.bf16 %v3606, %v3604
        %v3625 = vpack.c.bf16 %v3607, %v3605
        %v3626 = vpack.c.bf16 %v3610, %v3610
        %v3627 = vpack.c.bf16 %v3611, %v3611
        %s3628 = scalar_lea.vmem %s5, 160
        %v3629 = vld [vmem:[%s3628] sm:$0xff]
        %v3630 = vld [vmem:[%s3628 + $0x8] sm:$0xff]
        %v3631 = vld [vmem:[%s3628 + $0x10] sm:$0xff]
        %v3632 = vld [vmem:[%s3628 + $0x18] sm:$0xff]
        %v3633 = vld [vmem:[%s3628 + $0x20] sm:$0xff]
        %v3634 = vld [vmem:[%s3628 + $0x28] sm:$0xff]
        %v3635 = vld [vmem:[%s3628 + $0x30] sm:$0xff]
        %v3636 = vld [vmem:[%s3628 + $0x38] sm:$0xff]
        %v3637 = vld [vmem:[%s3628 + $0x40] sm:$0xff]
        %v3638 = vld [vmem:[%s3628 + $0x48] sm:$0xff]
        %v3639 = vld [vmem:[%s3628 + $0x50] sm:$0xff]
        %v3640 = vld [vmem:[%s3628 + $0x58] sm:$0xff]
        %v3641 = vld [vmem:[%s3628 + $0x60] sm:$0xff]
        %v3642 = vld [vmem:[%s3628 + $0x68] sm:$0xff]
        %v3643 = vld [vmem:[%s3628 + $0x70] sm:$0xff]
        %v3644 = vld [vmem:[%s3628 + $0x78] sm:$0xff]
        %v3645 = vld [vmem:[%s3628 + $0x80] sm:$0xff]
        %v3646 = vld [vmem:[%s3628 + $0x88] sm:$0xff]
        %v3647 = vld [vmem:[%s3628 + $0x90] sm:$0xff]
        %v3648 = vld [vmem:[%s3628 + $0x98] sm:$0xff]
        %v3669 = vunpack.c.l.b16 %v3629
        %v3670 = vunpack.c.h.b16 %v3629
        %v3671 = vunpack.c.l.b16 %v3630
        %v3672 = vunpack.c.h.b16 %v3630
        %v3673 = vunpack.c.l.b16 %v3631
        %v3674 = vunpack.c.h.b16 %v3631
        %v3675 = vunpack.c.l.b16 %v3632
        %v3676 = vunpack.c.h.b16 %v3632
        %v3677 = vunpack.c.l.b16 %v3633
        %v3678 = vunpack.c.h.b16 %v3633
        %v3679 = vunpack.c.l.b16 %v3634
        %v3680 = vunpack.c.h.b16 %v3634
        %v3681 = vunpack.c.l.b16 %v3635
        %v3682 = vunpack.c.h.b16 %v3635
        %v3683 = vunpack.c.l.b16 %v3636
        %v3684 = vunpack.c.h.b16 %v3636
        %v3685 = vunpack.c.l.b16 %v3637
        %v3686 = vunpack.c.h.b16 %v3637
        %v3687 = vunpack.c.l.b16 %v3638
        %v3688 = vunpack.c.h.b16 %v3638
        %v3689 = vunpack.c.l.b16 %v3639
        %v3690 = vunpack.c.h.b16 %v3639
        %v3691 = vunpack.c.l.b16 %v3640
        %v3692 = vunpack.c.h.b16 %v3640
        %v3693 = vunpack.c.l.b16 %v3641
        %v3694 = vunpack.c.h.b16 %v3641
        %v3695 = vunpack.c.l.b16 %v3642
        %v3696 = vunpack.c.h.b16 %v3642
        %v3697 = vunpack.c.l.b16 %v3643
        %v3698 = vunpack.c.h.b16 %v3643
        %v3699 = vunpack.c.l.b16 %v3644
        %v3700 = vunpack.c.h.b16 %v3644
        %v3701 = vunpack.c.l.b16 %v3645
        %v3702 = vunpack.c.h.b16 %v3645
        %v3703 = vunpack.c.l.b16 %v3646
        %v3704 = vunpack.c.h.b16 %v3646
        %v3705 = vunpack.c.l.b16 %v3647
        %v3706 = vunpack.c.h.b16 %v3647
        %v3707 = vunpack.c.l.b16 %v3648
        %v3708 = vunpack.c.h.b16 %v3648
        %v3709 = vpack.c.b16 %v3671, %v3669
        %v3710 = vpack.c.b16 %v3672, %v3670
        %v3711 = vpack.c.b16 %v3675, %v3673
        %v3712 = vpack.c.b16 %v3676, %v3674
        %v3713 = vpack.c.b16 %v3679, %v3677
        %v3714 = vpack.c.b16 %v3680, %v3678
        %v3715 = vpack.c.b16 %v3683, %v3681
        %v3716 = vpack.c.b16 %v3684, %v3682
        %v3717 = vpack.c.b16 %v3687, %v3685
        %v3718 = vpack.c.b16 %v3688, %v3686
        %v3719 = vpack.c.b16 %v3691, %v3689
        %v3720 = vpack.c.b16 %v3692, %v3690
        %v3721 = vpack.c.b16 %v3695, %v3693
        %v3722 = vpack.c.b16 %v3696, %v3694
        %v3723 = vpack.c.b16 %v3699, %v3697
        %v3724 = vpack.c.b16 %v3700, %v3698
        %v3725 = vpack.c.b16 %v3703, %v3701
        %v3726 = vpack.c.b16 %v3704, %v3702
        %v3727 = vpack.c.b16 %v3707, %v3705
        %v3728 = vpack.c.b16 %v3708, %v3706
        %v3750 = vsel %vm2912, %v3623, 0
        %v3753 = vsel %vm2912, %v3625, 0
        %v3756 = vsel %vm2912, %v3627, 0
        %3758 = vmatpush.bf16.msra.mxu0 %v3723
        %3759 = vmatpush.bf16.msra.mxu0 %v3721
        %3760 = vmatpush.bf16.msra.mxu0 %v3719
        %3761 = vmatpush.bf16.msra.mxu0 %v3717
        %3762 = vmatpush.bf16.msra.mxu0 %v3715
        %3763 = vmatpush.bf16.msra.mxu0 %v3713
        %3764 = vmatpush.bf16.msra.mxu0 %v3711
        %3765 = vmatpush.bf16.msra.mxu0 %v3709
        %3766 = vmatmul.bf16.gmra.mxu0 %v3622
        %v3767 = vpop.f32.mrf.mxu0
        %v3768 = vadd.f32 0.0, %v3767
        %v3769 = vpop.f32.mrf.mxu0
        %v3770 = vadd.f32 0.0, %v3769
        %3771 = vmatmul.bf16.gmra.mxu0 %v3624
        %v3772 = vpop.f32.mrf.mxu0
        %v3773 = vadd.f32 0.0, %v3772
        %v3774 = vpop.f32.mrf.mxu0
        %v3775 = vadd.f32 0.0, %v3774
        %3776 = vmatmul.bf16.gmra.mxu0 %v3626
        %v3777 = vpop.f32.mrf.mxu0
        %v3778 = vadd.f32 0.0, %v3777
        %v3779 = vpop.f32.mrf.mxu0
        %3780 = vdwg.mxu0
        %3781 = vmatpush.bf16.msra.mxu0 0
        %3782 = vmatpush.bf16.msra.mxu0 0
        %3783 = vmatpush.bf16.msra.mxu0 0
        %3784 = vmatpush.bf16.msra.mxu0 0
        %3785 = vmatpush.bf16.msra.mxu0 0
        %3786 = vmatpush.bf16.msra.mxu0 0
        %3787 = vmatpush.bf16.msra.mxu0 %v3727
        %3788 = vmatpush.bf16.msra.mxu0 %v3725
        %3789 = vmatmul.bf16.gmra.mxu0 %v3750
        %v3790 = vpop.f32.mrf.mxu0
        %v3791 = vadd.f32 %v3768, %v3790
        %v3792 = vpop.f32.mrf.mxu0
        %v3793 = vadd.f32 %v3770, %v3792
        %3794 = vmatmul.bf16.gmra.mxu0 %v3753
        %v3795 = vpop.f32.mrf.mxu0
        %v3796 = vadd.f32 %v3773, %v3795
        %v3797 = vpop.f32.mrf.mxu0
        %v3798 = vadd.f32 %v3775, %v3797
        %3799 = vmatmul.bf16.gmra.mxu0 %v3756
        %v3800 = vpop.f32.mrf.mxu0
        %v3801 = vadd.f32 %v3778, %v3800
        %v3802 = vpop.f32.mrf.mxu0
        %3803 = vdwg.mxu0
        %3804 = vmatpush.bf16.msra.mxu0 %v3724
        %3805 = vmatpush.bf16.msra.mxu0 %v3722
        %3806 = vmatpush.bf16.msra.mxu0 %v3720
        %3807 = vmatpush.bf16.msra.mxu0 %v3718
        %3808 = vmatpush.bf16.msra.mxu0 %v3716
        %3809 = vmatpush.bf16.msra.mxu0 %v3714
        %3810 = vmatpush.bf16.msra.mxu0 %v3712
        %3811 = vmatpush.bf16.msra.mxu0 %v3710
        %3812 = vmatmul.bf16.gmra.mxu0 %v3622
        %v3813 = vpop.f32.mrf.mxu0
        %v3814 = vadd.f32 0.0, %v3813
        %v3815 = vpop.f32.mrf.mxu0
        %v3816 = vadd.f32 0.0, %v3815
        %3817 = vmatmul.bf16.gmra.mxu0 %v3624
        %v3818 = vpop.f32.mrf.mxu0
        %v3819 = vadd.f32 0.0, %v3818
        %v3820 = vpop.f32.mrf.mxu0
        %v3821 = vadd.f32 0.0, %v3820
        %3822 = vmatmul.bf16.gmra.mxu0 %v3626
        %v3823 = vpop.f32.mrf.mxu0
        %v3824 = vadd.f32 0.0, %v3823
        %v3825 = vpop.f32.mrf.mxu0
        %3826 = vdwg.mxu0
        %3827 = vmatpush.bf16.msra.mxu0 0
        %3828 = vmatpush.bf16.msra.mxu0 0
        %3829 = vmatpush.bf16.msra.mxu0 0
        %3830 = vmatpush.bf16.msra.mxu0 0
        %3831 = vmatpush.bf16.msra.mxu0 0
        %3832 = vmatpush.bf16.msra.mxu0 0
        %3833 = vmatpush.bf16.msra.mxu0 %v3728
        %3834 = vmatpush.bf16.msra.mxu0 %v3726
        %3835 = vmatmul.bf16.gmra.mxu0 %v3750
        %v3836 = vpop.f32.mrf.mxu0
        %v3837 = vadd.f32 %v3814, %v3836
        %v3838 = vpop.f32.mrf.mxu0
        %v3839 = vadd.f32 %v3816, %v3838
        %3840 = vmatmul.bf16.gmra.mxu0 %v3753
        %v3841 = vpop.f32.mrf.mxu0
        %v3842 = vadd.f32 %v3819, %v3841
        %v3843 = vpop.f32.mrf.mxu0
        %v3844 = vadd.f32 %v3821, %v3843
        %3845 = vmatmul.bf16.gmra.mxu0 %v3756
        %v3846 = vpop.f32.mrf.mxu0
        %v3847 = vadd.f32 %v3824, %v3846
        %v3848 = vpop.f32.mrf.mxu0
        %3849 = vdwg.mxu0
        %v3850 = vadd.f32 %v3429, %v3791
        %v3851 = vadd.f32 %v3430, %v3837
        %v3852 = vadd.f32 %v3431, %v3793
        %v3853 = vadd.f32 %v3432, %v3839
        %v3854 = vadd.f32 %v3433, %v3796
        %v3855 = vadd.f32 %v3434, %v3842
        %v3856 = vadd.f32 %v3435, %v3798
        %v3857 = vadd.f32 %v3436, %v3844
        %v3858 = vadd.f32 %v3437, %v3801
        %v3859 = vadd.f32 %v3438, %v3847
        %v3860 = vld [vmem:[#allocation3] sm:$0xfc]
        %v3861 = vld [vmem:[#allocation3 + $0x8] sm:$0xfc]
        %v3862 = vld [vmem:[#allocation3 + $0x20] sm:$0xfc]
        %v3863 = vld [vmem:[#allocation3 + $0x28] sm:$0xfc]
        %v3864 = vld [vmem:[#allocation3 + $0x40] sm:$0xfc]
        %v3865 = vld [vmem:[#allocation3 + $0x48] sm:$0xfc]
        %v3866 = vld [vmem:[#allocation3 + $0x60] sm:$0xfc]
        %v3867 = vld [vmem:[#allocation3 + $0x68] sm:$0xfc]
        %v3868 = vld [vmem:[#allocation3 + $0x80] sm:$0xfc]
        %v3869 = vld [vmem:[#allocation3 + $0x88] sm:$0xfc]
        %v3870 = vld [vmem:[#allocation3 + $0xa0] sm:$0xfc]
        %v3871 = vld [vmem:[#allocation3 + $0xa8] sm:$0xfc]
        %3884 = vst.sshfl [vmem:[#allocation1] sm:$0xff pattern:$0x73625140] %v3860
        %3885 = vst.sshfl [vmem:[#allocation1 + $0x8] sm:$0xff pattern:$0x73625140] %v3861
        %s3886 = scalar_lea.vmem [#allocation1], 1
        %v3887 = vld [vmem:[%s3886] ss:$4 sm:$0xff]
        %s3888 = scalar_lea.vmem [#allocation1], 2
        %v3889 = vld [vmem:[%s3888] ss:$4 sm:$0xff]
        %s3890 = scalar_lea.vmem [#allocation1], 3
        %v3891 = vld [vmem:[%s3890] ss:$4 sm:$0xff]
        %3892 = vst.sshfl [vmem:[#allocation1 + $0x20] sm:$0xff pattern:$0x73625140] %v3862
        %3893 = vst.sshfl [vmem:[#allocation1 + $0x28] sm:$0xff pattern:$0x73625140] %v3863
        %s3894 = scalar_lea.vmem [#allocation1], 33
        %v3895 = vld [vmem:[%s3894] ss:$4 sm:$0xff]
        %s3896 = scalar_lea.vmem [#allocation1], 34
        %v3897 = vld [vmem:[%s3896] ss:$4 sm:$0xff]
        %s3898 = scalar_lea.vmem [#allocation1], 35
        %v3899 = vld [vmem:[%s3898] ss:$4 sm:$0xff]
        %3900 = vst.sshfl [vmem:[#allocation1] sm:$0xff pattern:$0x73625140] %v3864
        %3901 = vst.sshfl [vmem:[#allocation1 + $0x8] sm:$0xff pattern:$0x73625140] %v3865
        %v3902 = vld [vmem:[%s3886] ss:$4 sm:$0xff]
        %v3903 = vld [vmem:[%s3888] ss:$4 sm:$0xff]
        %v3904 = vld [vmem:[%s3890] ss:$4 sm:$0xff]
        %3905 = vst.sshfl [vmem:[#allocation1 + $0x20] sm:$0xff pattern:$0x73625140] %v3866
        %3906 = vst.sshfl [vmem:[#allocation1 + $0x28] sm:$0xff pattern:$0x73625140] %v3867
        %v3907 = vld [vmem:[%s3894] ss:$4 sm:$0xff]
        %v3908 = vld [vmem:[%s3896] ss:$4 sm:$0xff]
        %v3909 = vld [vmem:[%s3898] ss:$4 sm:$0xff]
        %3910 = vst.sshfl [vmem:[#allocation1] sm:$0xff pattern:$0x73625140] %v3868
        %3911 = vst.sshfl [vmem:[#allocation1 + $0x8] sm:$0xff pattern:$0x73625140] %v3869
        %v3912 = vld [vmem:[%s3886] ss:$4 sm:$0xff]
        %v3913 = vld [vmem:[%s3888] ss:$4 sm:$0xff]
        %v3914 = vld [vmem:[%s3890] ss:$4 sm:$0xff]
        %3915 = vst.sshfl [vmem:[#allocation1 + $0x20] sm:$0xff pattern:$0x73625140] %v3870
        %3916 = vst.sshfl [vmem:[#allocation1 + $0x28] sm:$0xff pattern:$0x73625140] %v3871
        %v3917 = vld [vmem:[%s3894] ss:$4 sm:$0xff]
        %v3918 = vld [vmem:[%s3896] ss:$4 sm:$0xff]
        %v3919 = vld [vmem:[%s3898] ss:$4 sm:$0xff]
        %3920 = vst [vmem:[#allocation1] ss:$4 sm:$0xff] %v3887
        %s3921 = scalar_lea.vmem [#allocation1], 1
        %3922 = vst [vmem:[%s3921] ss:$4 sm:$0xff] %v3889
        %s3923 = scalar_lea.vmem [#allocation1], 2
        %3924 = vst [vmem:[%s3923] ss:$4 sm:$0xff] %v3891
        %s3925 = scalar_lea.vmem [#allocation1], 3
        %3926 = vst [vmem:[%s3925] ss:$4 sm:$0xff] %v3895
        %s3927 = scalar_lea.vmem [#allocation1], 32
        %3928 = vst [vmem:[%s3927] ss:$4 sm:$0xff] %v3897
        %s3929 = scalar_lea.vmem [#allocation1], 33
        %3930 = vst [vmem:[%s3929] ss:$4 sm:$0xff] %v3899
        %s3931 = scalar_lea.vmem [#allocation1], 34
        %3932 = vst [vmem:[%s3931] ss:$4 sm:$0xff] %v3902
        %s3933 = scalar_lea.vmem [#allocation1], 35
        %3934 = vst [vmem:[%s3933] ss:$4 sm:$0xff] %v3903
        %v3935 = vld.sshfl [vmem:[#allocation1] sm:$0xff pattern:$0x73625140]
        %v3936 = vld.sshfl [vmem:[#allocation1 + $0x8] sm:$0xff pattern:$0x73625140]
        %v3937 = vld.sshfl [vmem:[#allocation1 + $0x20] sm:$0xff pattern:$0x73625140]
        %v3938 = vld.sshfl [vmem:[#allocation1 + $0x28] sm:$0xff pattern:$0x73625140]
        %3939 = vst [vmem:[#allocation1] ss:$4 sm:$0xff] %v3904
        %3940 = vst [vmem:[%s3921] ss:$4 sm:$0xff] %v3907
        %3941 = vst [vmem:[%s3923] ss:$4 sm:$0xff] %v3908
        %3942 = vst [vmem:[%s3925] ss:$4 sm:$0xff] %v3909
        %3943 = vst [vmem:[%s3927] ss:$4 sm:$0xff] %v3912
        %3944 = vst [vmem:[%s3929] ss:$4 sm:$0xff] %v3913
        %3945 = vst [vmem:[%s3931] ss:$4 sm:$0xff] %v3914
        %3946 = vst [vmem:[%s3933] ss:$4 sm:$0xff] %v3917
        %v3947 = vld.sshfl [vmem:[#allocation1] sm:$0xff pattern:$0x73625140]
        %v3948 = vld.sshfl [vmem:[#allocation1 + $0x8] sm:$0xff pattern:$0x73625140]
        %v3949 = vld.sshfl [vmem:[#allocation1 + $0x20] sm:$0xff pattern:$0x73625140]
        %v3950 = vld.sshfl [vmem:[#allocation1 + $0x28] sm:$0xff pattern:$0x73625140]
        %3951 = vst [vmem:[#allocation1] ss:$4 sm:$0xff] %v3918
        %3952 = vst [vmem:[%s3921] ss:$4 sm:$0xff] %v3919
        %v3953 = vld.sshfl [vmem:[#allocation1] sm:$0xff pattern:$0x73625140]
        %v3954 = vld.sshfl [vmem:[#allocation1 + $0x8] sm:$0xff pattern:$0x73625140]
        %v3965 = vpack.c.bf16 %v3937, %v3935
        %v3966 = vpack.c.bf16 %v3938, %v3936
        %v3967 = vpack.c.bf16 %v3949, %v3947
        %v3968 = vpack.c.bf16 %v3950, %v3948
        %v3969 = vpack.c.bf16 %v3953, %v3953
        %v3970 = vpack.c.bf16 %v3954, %v3954
        %s3971 = scalar_lea.vmem %s5, 320
        %v3972 = vld [vmem:[%s3971] sm:$0xff]
        %v3973 = vld [vmem:[%s3971 + $0x8] sm:$0xff]
        %v3974 = vld [vmem:[%s3971 + $0x10] sm:$0xff]
        %v3975 = vld [vmem:[%s3971 + $0x18] sm:$0xff]
        %v3976 = vld [vmem:[%s3971 + $0x20] sm:$0xff]
        %v3977 = vld [vmem:[%s3971 + $0x28] sm:$0xff]
        %v3978 = vld [vmem:[%s3971 + $0x30] sm:$0xff]
        %v3979 = vld [vmem:[%s3971 + $0x38] sm:$0xff]
        %v3980 = vld [vmem:[%s3971 + $0x40] sm:$0xff]
        %v3981 = vld [vmem:[%s3971 + $0x48] sm:$0xff]
        %v3982 = vld [vmem:[%s3971 + $0x50] sm:$0xff]
        %v3983 = vld [vmem:[%s3971 + $0x58] sm:$0xff]
        %v3984 = vld [vmem:[%s3971 + $0x60] sm:$0xff]
        %v3985 = vld [vmem:[%s3971 + $0x68] sm:$0xff]
        %v3986 = vld [vmem:[%s3971 + $0x70] sm:$0xff]
        %v3987 = vld [vmem:[%s3971 + $0x78] sm:$0xff]
        %v3988 = vld [vmem:[%s3971 + $0x80] sm:$0xff]
        %v3989 = vld [vmem:[%s3971 + $0x88] sm:$0xff]
        %v3990 = vld [vmem:[%s3971 + $0x90] sm:$0xff]
        %v3991 = vld [vmem:[%s3971 + $0x98] sm:$0xff]
        %v4012 = vunpack.c.l.b16 %v3972
        %v4013 = vunpack.c.h.b16 %v3972
        %v4014 = vunpack.c.l.b16 %v3973
        %v4015 = vunpack.c.h.b16 %v3973
        %v4016 = vunpack.c.l.b16 %v3974
        %v4017 = vunpack.c.h.b16 %v3974
        %v4018 = vunpack.c.l.b16 %v3975
        %v4019 = vunpack.c.h.b16 %v3975
        %v4020 = vunpack.c.l.b16 %v3976
        %v4021 = vunpack.c.h.b16 %v3976
        %v4022 = vunpack.c.l.b16 %v3977
        %v4023 = vunpack.c.h.b16 %v3977
        %v4024 = vunpack.c.l.b16 %v3978
        %v4025 = vunpack.c.h.b16 %v3978
        %v4026 = vunpack.c.l.b16 %v3979
        %v4027 = vunpack.c.h.b16 %v3979
        %v4028 = vunpack.c.l.b16 %v3980
        %v4029 = vunpack.c.h.b16 %v3980
        %v4030 = vunpack.c.l.b16 %v3981
        %v4031 = vunpack.c.h.b16 %v3981
        %v4032 = vunpack.c.l.b16 %v3982
        %v4033 = vunpack.c.h.b16 %v3982
        %v4034 = vunpack.c.l.b16 %v3983
        %v4035 = vunpack.c.h.b16 %v3983
        %v4036 = vunpack.c.l.b16 %v3984
        %v4037 = vunpack.c.h.b16 %v3984
        %v4038 = vunpack.c.l.b16 %v3985
        %v4039 = vunpack.c.h.b16 %v3985
        %v4040 = vunpack.c.l.b16 %v3986
        %v4041 = vunpack.c.h.b16 %v3986
        %v4042 = vunpack.c.l.b16 %v3987
        %v4043 = vunpack.c.h.b16 %v3987
        %v4044 = vunpack.c.l.b16 %v3988
        %v4045 = vunpack.c.h.b16 %v3988
        %v4046 = vunpack.c.l.b16 %v3989
        %v4047 = vunpack.c.h.b16 %v3989
        %v4048 = vunpack.c.l.b16 %v3990
        %v4049 = vunpack.c.h.b16 %v3990
        %v4050 = vunpack.c.l.b16 %v3991
        %v4051 = vunpack.c.h.b16 %v3991
        %v4052 = vpack.c.b16 %v4014, %v4012
        %v4053 = vpack.c.b16 %v4015, %v4013
        %v4054 = vpack.c.b16 %v4018, %v4016
        %v4055 = vpack.c.b16 %v4019, %v4017
        %v4056 = vpack.c.b16 %v4022, %v4020
        %v4057 = vpack.c.b16 %v4023, %v4021
        %v4058 = vpack.c.b16 %v4026, %v4024
        %v4059 = vpack.c.b16 %v4027, %v4025
        %v4060 = vpack.c.b16 %v4030, %v4028
        %v4061 = vpack.c.b16 %v4031, %v4029
        %v4062 = vpack.c.b16 %v4034, %v4032
        %v4063 = vpack.c.b16 %v4035, %v4033
        %v4064 = vpack.c.b16 %v4038, %v4036
        %v4065 = vpack.c.b16 %v4039, %v4037
        %v4066 = vpack.c.b16 %v4042, %v4040
        %v4067 = vpack.c.b16 %v4043, %v4041
        %v4068 = vpack.c.b16 %v4046, %v4044
        %v4069 = vpack.c.b16 %v4047, %v4045
        %v4070 = vpack.c.b16 %v4050, %v4048
        %v4071 = vpack.c.b16 %v4051, %v4049
        %v4093 = vsel %vm2912, %v3966, 0
        %v4096 = vsel %vm2912, %v3968, 0
        %v4099 = vsel %vm2912, %v3970, 0
        %4101 = vmatpush.bf16.msra.mxu0 %v4066
        %4102 = vmatpush.bf16.msra.mxu0 %v4064
        %4103 = vmatpush.bf16.msra.mxu0 %v4062
        %4104 = vmatpush.bf16.msra.mxu0 %v4060
        %4105 = vmatpush.bf16.msra.mxu0 %v4058
        %4106 = vmatpush.bf16.msra.mxu0 %v4056
        %4107 = vmatpush.bf16.msra.mxu0 %v4054
        %4108 = vmatpush.bf16.msra.mxu0 %v4052
        %4109 = vmatmul.bf16.gmra.mxu0 %v3965
        %v4110 = vpop.f32.mrf.mxu0
        %v4111 = vadd.f32 0.0, %v4110
        %v4112 = vpop.f32.mrf.mxu0
        %v4113 = vadd.f32 0.0, %v4112
        %4114 = vmatmul.bf16.gmra.mxu0 %v3967
        %v4115 = vpop.f32.mrf.mxu0
        %v4116 = vadd.f32 0.0, %v4115
        %v4117 = vpop.f32.mrf.mxu0
        %v4118 = vadd.f32 0.0, %v4117
        %4119 = vmatmul.bf16.gmra.mxu0 %v3969
        %v4120 = vpop.f32.mrf.mxu0
        %v4121 = vadd.f32 0.0, %v4120
        %v4122 = vpop.f32.mrf.mxu0
        %4123 = vdwg.mxu0
        %4124 = vmatpush.bf16.msra.mxu0 0
        %4125 = vmatpush.bf16.msra.mxu0 0
        %4126 = vmatpush.bf16.msra.mxu0 0
        %4127 = vmatpush.bf16.msra.mxu0 0
        %4128 = vmatpush.bf16.msra.mxu0 0
        %4129 = vmatpush.bf16.msra.mxu0 0
        %4130 = vmatpush.bf16.msra.mxu0 %v4070
        %4131 = vmatpush.bf16.msra.mxu0 %v4068
        %4132 = vmatmul.bf16.gmra.mxu0 %v4093
        %v4133 = vpop.f32.mrf.mxu0
        %v4134 = vadd.f32 %v4111, %v4133
        %v4135 = vpop.f32.mrf.mxu0
        %v4136 = vadd.f32 %v4113, %v4135
        %4137 = vmatmul.bf16.gmra.mxu0 %v4096
        %v4138 = vpop.f32.mrf.mxu0
        %v4139 = vadd.f32 %v4116, %v4138
        %v4140 = vpop.f32.mrf.mxu0
        %v4141 = vadd.f32 %v4118, %v4140
        %4142 = vmatmul.bf16.gmra.mxu0 %v4099
        %v4143 = vpop.f32.mrf.mxu0
        %v4144 = vadd.f32 %v4121, %v4143
        %v4145 = vpop.f32.mrf.mxu0
        %4146 = vdwg.mxu0
        %4147 = vmatpush.bf16.msra.mxu0 %v4067
        %4148 = vmatpush.bf16.msra.mxu0 %v4065
        %4149 = vmatpush.bf16.msra.mxu0 %v4063
        %4150 = vmatpush.bf16.msra.mxu0 %v4061
        %4151 = vmatpush.bf16.msra.mxu0 %v4059
        %4152 = vmatpush.bf16.msra.mxu0 %v4057
        %4153 = vmatpush.bf16.msra.mxu0 %v4055
        %4154 = vmatpush.bf16.msra.mxu0 %v4053
        %4155 = vmatmul.bf16.gmra.mxu0 %v3965
        %v4156 = vpop.f32.mrf.mxu0
        %v4157 = vadd.f32 0.0, %v4156
        %v4158 = vpop.f32.mrf.mxu0
        %v4159 = vadd.f32 0.0, %v4158
        %4160 = vmatmul.bf16.gmra.mxu0 %v3967
        %v4161 = vpop.f32.mrf.mxu0
        %v4162 = vadd.f32 0.0, %v4161
        %v4163 = vpop.f32.mrf.mxu0
        %v4164 = vadd.f32 0.0, %v4163
        %4165 = vmatmul.bf16.gmra.mxu0 %v3969
        %v4166 = vpop.f32.mrf.mxu0
        %v4167 = vadd.f32 0.0, %v4166
        %v4168 = vpop.f32.mrf.mxu0
        %4169 = vdwg.mxu0
        %4170 = vmatpush.bf16.msra.mxu0 0
        %4171 = vmatpush.bf16.msra.mxu0 0
        %4172 = vmatpush.bf16.msra.mxu0 0
        %4173 = vmatpush.bf16.msra.mxu0 0
        %4174 = vmatpush.bf16.msra.mxu0 0
        %4175 = vmatpush.bf16.msra.mxu0 0
        %4176 = vmatpush.bf16.msra.mxu0 %v4071
        %4177 = vmatpush.bf16.msra.mxu0 %v4069
        %4178 = vmatmul.bf16.gmra.mxu0 %v4093
        %v4179 = vpop.f32.mrf.mxu0
        %v4180 = vadd.f32 %v4157, %v4179
        %v4181 = vpop.f32.mrf.mxu0
        %v4182 = vadd.f32 %v4159, %v4181
        %4183 = vmatmul.bf16.gmra.mxu0 %v4096
        %v4184 = vpop.f32.mrf.mxu0
        %v4185 = vadd.f32 %v4162, %v4184
        %v4186 = vpop.f32.mrf.mxu0
        %v4187 = vadd.f32 %v4164, %v4186
        %4188 = vmatmul.bf16.gmra.mxu0 %v4099
        %v4189 = vpop.f32.mrf.mxu0
        %v4190 = vadd.f32 %v4167, %v4189
        %v4191 = vpop.f32.mrf.mxu0
        %4192 = vdwg.mxu0
        %v4193 = vadd.f32 %v3850, %v4134
        %v4194 = vadd.f32 %v3851, %v4180
        %v4195 = vadd.f32 %v3852, %v4136
        %v4196 = vadd.f32 %v3853, %v4182
        %v4197 = vadd.f32 %v3854, %v4139
        %v4198 = vadd.f32 %v3855, %v4185
        %v4199 = vadd.f32 %v3856, %v4141
        %v4200 = vadd.f32 %v3857, %v4187
        %v4201 = vadd.f32 %v3858, %v4144
        %v4202 = vadd.f32 %v3859, %v4190
        %v4203 = vld [vmem:[#allocation3] sm:$0xf8]
        %v4204 = vld [vmem:[#allocation3 + $0x8] sm:$0xf8]
        %v4205 = vld [vmem:[#allocation3 + $0x10] sm:$0x1]
        %v4206 = vld [vmem:[#allocation3 + $0x18] sm:$0x1]
        %v4207 = vld [vmem:[#allocation3 + $0x20] sm:$0xf8]
        %v4208 = vld [vmem:[#allocation3 + $0x28] sm:$0xf8]
        %v4209 = vld [vmem:[#allocation3 + $0x30] sm:$0x1]
        %v4210 = vld [vmem:[#allocation3 + $0x38] sm:$0x1]
        %v4211 = vld [vmem:[#allocation3 + $0x40] sm:$0xf8]
        %v4212 = vld [vmem:[#allocation3 + $0x48] sm:$0xf8]
        %v4213 = vld [vmem:[#allocation3 + $0x50] sm:$0x1]
        %v4214 = vld [vmem:[#allocation3 + $0x58] sm:$0x1]
        %v4215 = vld [vmem:[#allocation3 + $0x60] sm:$0xf8]
        %v4216 = vld [vmem:[#allocation3 + $0x68] sm:$0xf8]
        %v4217 = vld [vmem:[#allocation3 + $0x70] sm:$0x1]
        %v4218 = vld [vmem:[#allocation3 + $0x78] sm:$0x1]
        %v4219 = vld [vmem:[#allocation3 + $0x80] sm:$0xf8]
        %v4220 = vld [vmem:[#allocation3 + $0x88] sm:$0xf8]
        %v4221 = vld [vmem:[#allocation3 + $0x90] sm:$0x1]
        %v4222 = vld [vmem:[#allocation3 + $0x98] sm:$0x1]
        %v4223 = vld [vmem:[#allocation3 + $0xa0] sm:$0xf8]
        %v4224 = vld [vmem:[#allocation3 + $0xa8] sm:$0xf8]
        %v4225 = vld [vmem:[#allocation3 + $0xb0] sm:$0x1]
        %v4226 = vld [vmem:[#allocation3 + $0xb8] sm:$0x1]
        %4251 = vst.sshfl [vmem:[#allocation1] sm:$0xff pattern:$0x73625140] %v4203
        %4252 = vst.sshfl [vmem:[#allocation1 + $0x8] sm:$0xff pattern:$0x73625140] %v4204
        %4253 = vst.sshfl [vmem:[#allocation1 + $0x20] sm:$0xff pattern:$0x73625140] %v4205
        %4254 = vst.sshfl [vmem:[#allocation1 + $0x28] sm:$0xff pattern:$0x73625140] %v4206
        %s4255 = scalar_lea.vmem [#allocation1], 1
        %v4256 = vld [vmem:[%s4255] ss:$4 sm:$0xff]
        %s4257 = scalar_lea.vmem [#allocation1], 2
        %v4258 = vld [vmem:[%s4257] ss:$4 sm:$0xff]
        %s4259 = scalar_lea.vmem [#allocation1], 3
        %v4260 = vld [vmem:[%s4259] ss:$4 sm:$0xff]
        %s4261 = scalar_lea.vmem [#allocation1], 32
        %v4262 = vld [vmem:[%s4261] ss:$4 sm:$0xff]
        %4263 = vst.sshfl [vmem:[#allocation1] sm:$0xff pattern:$0x73625140] %v4207
        %4264 = vst.sshfl [vmem:[#allocation1 + $0x8] sm:$0xff pattern:$0x73625140] %v4208
        %4265 = vst.sshfl [vmem:[#allocation1 + $0x20] sm:$0xff pattern:$0x73625140] %v4209
        %4266 = vst.sshfl [vmem:[#allocation1 + $0x28] sm:$0xff pattern:$0x73625140] %v4210
        %v4267 = vld [vmem:[%s4255] ss:$4 sm:$0xff]
        %v4268 = vld [vmem:[%s4257] ss:$4 sm:$0xff]
        %v4269 = vld [vmem:[%s4259] ss:$4 sm:$0xff]
        %v4270 = vld [vmem:[%s4261] ss:$4 sm:$0xff]
        %4271 = vst.sshfl [vmem:[#allocation1] sm:$0xff pattern:$0x73625140] %v4211
        %4272 = vst.sshfl [vmem:[#allocation1 + $0x8] sm:$0xff pattern:$0x73625140] %v4212
        %4273 = vst.sshfl [vmem:[#allocation1 + $0x20] sm:$0xff pattern:$0x73625140] %v4213
        %4274 = vst.sshfl [vmem:[#allocation1 + $0x28] sm:$0xff pattern:$0x73625140] %v4214
        %v4275 = vld [vmem:[%s4255] ss:$4 sm:$0xff]
        %v4276 = vld [vmem:[%s4257] ss:$4 sm:$0xff]
        %v4277 = vld [vmem:[%s4259] ss:$4 sm:$0xff]
        %v4278 = vld [vmem:[%s4261] ss:$4 sm:$0xff]
        %4279 = vst.sshfl [vmem:[#allocation1] sm:$0xff pattern:$0x73625140] %v4215
        %4280 = vst.sshfl [vmem:[#allocation1 + $0x8] sm:$0xff pattern:$0x73625140] %v4216
        %4281 = vst.sshfl [vmem:[#allocation1 + $0x20] sm:$0xff pattern:$0x73625140] %v4217
        %4282 = vst.sshfl [vmem:[#allocation1 + $0x28] sm:$0xff pattern:$0x73625140] %v4218
        %v4283 = vld [vmem:[%s4255] ss:$4 sm:$0xff]
        %v4284 = vld [vmem:[%s4257] ss:$4 sm:$0xff]
        %v4285 = vld [vmem:[%s4259] ss:$4 sm:$0xff]
        %v4286 = vld [vmem:[%s4261] ss:$4 sm:$0xff]
        %4287 = vst.sshfl [vmem:[#allocation1] sm:$0xff pattern:$0x73625140] %v4219
        %4288 = vst.sshfl [vmem:[#allocation1 + $0x8] sm:$0xff pattern:$0x73625140] %v4220
        %4289 = vst.sshfl [vmem:[#allocation1 + $0x20] sm:$0xff pattern:$0x73625140] %v4221
        %4290 = vst.sshfl [vmem:[#allocation1 + $0x28] sm:$0xff pattern:$0x73625140] %v4222
        %v4291 = vld [vmem:[%s4255] ss:$4 sm:$0xff]
        %v4292 = vld [vmem:[%s4257] ss:$4 sm:$0xff]
        %v4293 = vld [vmem:[%s4259] ss:$4 sm:$0xff]
        %v4294 = vld [vmem:[%s4261] ss:$4 sm:$0xff]
        %4295 = vst.sshfl [vmem:[#allocation1] sm:$0xff pattern:$0x73625140] %v4223
        %4296 = vst.sshfl [vmem:[#allocation1 + $0x8] sm:$0xff pattern:$0x73625140] %v4224
        %4297 = vst.sshfl [vmem:[#allocation1 + $0x20] sm:$0xff pattern:$0x73625140] %v4225
        %4298 = vst.sshfl [vmem:[#allocation1 + $0x28] sm:$0xff pattern:$0x73625140] %v4226
        %v4299 = vld [vmem:[%s4255] ss:$4 sm:$0xff]
        %v4300 = vld [vmem:[%s4257] ss:$4 sm:$0xff]
        %v4301 = vld [vmem:[%s4259] ss:$4 sm:$0xff]
        %v4302 = vld [vmem:[%s4261] ss:$4 sm:$0xff]
        %v4303 = vrot.slane %v4256, 7
        %v4304 = vrot.slane %v4303, 2
        %v4305 = vrot.slane %v4258, 7
        %v4306 = vsel %vm3516, %v4304, %v4305
        %v4307 = vrot.slane %v4305, 2
        %v4308 = vrot.slane %v4260, 7
        %v4309 = vsel %vm3516, %v4307, %v4308
        %v4310 = vrot.slane %v4308, 2
        %v4311 = vrot.slane %v4262, 7
        %v4312 = vsel %vm3516, %v4310, %v4311
        %v4313 = vrot.slane %v4267, 7
        %v4314 = vrot.slane %v4313, 2
        %v4315 = vrot.slane %v4268, 7
        %v4316 = vsel %vm3516, %v4314, %v4315
        %v4317 = vrot.slane %v4315, 2
        %v4318 = vrot.slane %v4269, 7
        %v4319 = vsel %vm3516, %v4317, %v4318
        %v4320 = vrot.slane %v4318, 2
        %v4321 = vrot.slane %v4270, 7
        %v4322 = vsel %vm3516, %v4320, %v4321
        %v4323 = vrot.slane %v4275, 7
        %v4324 = vrot.slane %v4323, 2
        %v4325 = vrot.slane %v4276, 7
        %v4326 = vsel %vm3516, %v4324, %v4325
        %v4327 = vrot.slane %v4325, 2
        %v4328 = vrot.slane %v4277, 7
        %v4329 = vsel %vm3516, %v4327, %v4328
        %v4330 = vrot.slane %v4328, 2
        %v4331 = vrot.slane %v4278, 7
        %v4332 = vsel %vm3516, %v4330, %v4331
        %v4333 = vrot.slane %v4283, 7
        %v4334 = vrot.slane %v4333, 2
        %v4335 = vrot.slane %v4284, 7
        %v4336 = vsel %vm3516, %v4334, %v4335
        %v4337 = vrot.slane %v4335, 2
        %v4338 = vrot.slane %v4285, 7
        %v4339 = vsel %vm3516, %v4337, %v4338
        %v4340 = vrot.slane %v4338, 2
        %v4341 = vrot.slane %v4286, 7
        %v4342 = vsel %vm3516, %v4340, %v4341
        %v4343 = vrot.slane %v4291, 7
        %v4344 = vrot.slane %v4343, 2
        %v4345 = vrot.slane %v4292, 7
        %v4346 = vsel %vm3516, %v4344, %v4345
        %v4347 = vrot.slane %v4345, 2
        %v4348 = vrot.slane %v4293, 7
        %v4349 = vsel %vm3516, %v4347, %v4348
        %v4350 = vrot.slane %v4348, 2
        %v4351 = vrot.slane %v4294, 7
        %v4352 = vsel %vm3516, %v4350, %v4351
        %v4353 = vrot.slane %v4299, 7
        %v4354 = vrot.slane %v4353, 2
        %v4355 = vrot.slane %v4300, 7
        %v4356 = vsel %vm3516, %v4354, %v4355
        %v4357 = vrot.slane %v4355, 2
        %v4358 = vrot.slane %v4301, 7
        %v4359 = vsel %vm3516, %v4357, %v4358
        %v4360 = vrot.slane %v4358, 2
        %v4361 = vrot.slane %v4302, 7
        %v4362 = vsel %vm3516, %v4360, %v4361
        %4363 = vst [vmem:[#allocation1] ss:$4 sm:$0xff] %v4306
        %s4364 = scalar_lea.vmem [#allocation1], 1
        %4365 = vst [vmem:[%s4364] ss:$4 sm:$0xff] %v4309
        %s4366 = scalar_lea.vmem [#allocation1], 2
        %4367 = vst [vmem:[%s4366] ss:$4 sm:$0xff] %v4312
        %s4368 = scalar_lea.vmem [#allocation1], 3
        %4369 = vst [vmem:[%s4368] ss:$4 sm:$0xff] %v4316
        %s4370 = scalar_lea.vmem [#allocation1], 32
        %4371 = vst [vmem:[%s4370] ss:$4 sm:$0xff] %v4319
        %s4372 = scalar_lea.vmem [#allocation1], 33
        %4373 = vst [vmem:[%s4372] ss:$4 sm:$0xff] %v4322
        %s4374 = scalar_lea.vmem [#allocation1], 34
        %4375 = vst [vmem:[%s4374] ss:$4 sm:$0xff] %v4326
        %s4376 = scalar_lea.vmem [#allocation1], 35
        %4377 = vst [vmem:[%s4376] ss:$4 sm:$0xff] %v4329
        %v4378 = vld.sshfl [vmem:[#allocation1] sm:$0xff pattern:$0x73625140]
        %v4379 = vld.sshfl [vmem:[#allocation1 + $0x8] sm:$0xff pattern:$0x73625140]
        %v4380 = vld.sshfl [vmem:[#allocation1 + $0x20] sm:$0xff pattern:$0x73625140]
        %v4381 = vld.sshfl [vmem:[#allocation1 + $0x28] sm:$0xff pattern:$0x73625140]
        %4382 = vst [vmem:[#allocation1] ss:$4 sm:$0xff] %v4332
        %4383 = vst [vmem:[%s4364] ss:$4 sm:$0xff] %v4336
        %4384 = vst [vmem:[%s4366] ss:$4 sm:$0xff] %v4339
        %4385 = vst [vmem:[%s4368] ss:$4 sm:$0xff] %v4342
        %4386 = vst [vmem:[%s4370] ss:$4 sm:$0xff] %v4346
        %4387 = vst [vmem:[%s4372] ss:$4 sm:$0xff] %v4349
        %4388 = vst [vmem:[%s4374] ss:$4 sm:$0xff] %v4352
        %4389 = vst [vmem:[%s4376] ss:$4 sm:$0xff] %v4356
        %v4390 = vld.sshfl [vmem:[#allocation1] sm:$0xff pattern:$0x73625140]
        %v4391 = vld.sshfl [vmem:[#allocation1 + $0x8] sm:$0xff pattern:$0x73625140]
        %v4392 = vld.sshfl [vmem:[#allocation1 + $0x20] sm:$0xff pattern:$0x73625140]
        %v4393 = vld.sshfl [vmem:[#allocation1 + $0x28] sm:$0xff pattern:$0x73625140]
        %4394 = vst [vmem:[#allocation1] ss:$4 sm:$0xff] %v4359
        %4395 = vst [vmem:[%s4364] ss:$4 sm:$0xff] %v4362
        %v4396 = vld.sshfl [vmem:[#allocation1] sm:$0xff pattern:$0x73625140]
        %v4397 = vld.sshfl [vmem:[#allocation1 + $0x8] sm:$0xff pattern:$0x73625140]
        %v4408 = vpack.c.bf16 %v4380, %v4378
        %v4409 = vpack.c.bf16 %v4381, %v4379
        %v4410 = vpack.c.bf16 %v4392, %v4390
        %v4411 = vpack.c.bf16 %v4393, %v4391
        %v4412 = vpack.c.bf16 %v4396, %v4396
        %v4413 = vpack.c.bf16 %v4397, %v4397
        %s4414 = scalar_lea.vmem %s5, 480
        %v4415 = vld [vmem:[%s4414] sm:$0xff]
        %v4416 = vld [vmem:[%s4414 + $0x8] sm:$0xff]
        %v4417 = vld [vmem:[%s4414 + $0x10] sm:$0xff]
        %v4418 = vld [vmem:[%s4414 + $0x18] sm:$0xff]
        %v4419 = vld [vmem:[%s4414 + $0x20] sm:$0xff]
        %v4420 = vld [vmem:[%s4414 + $0x28] sm:$0xff]
        %v4421 = vld [vmem:[%s4414 + $0x30] sm:$0xff]
        %v4422 = vld [vmem:[%s4414 + $0x38] sm:$0xff]
        %v4423 = vld [vmem:[%s4414 + $0x40] sm:$0xff]
        %v4424 = vld [vmem:[%s4414 + $0x48] sm:$0xff]
        %v4425 = vld [vmem:[%s4414 + $0x50] sm:$0xff]
        %v4426 = vld [vmem:[%s4414 + $0x58] sm:$0xff]
        %v4427 = vld [vmem:[%s4414 + $0x60] sm:$0xff]
        %v4428 = vld [vmem:[%s4414 + $0x68] sm:$0xff]
        %v4429 = vld [vmem:[%s4414 + $0x70] sm:$0xff]
        %v4430 = vld [vmem:[%s4414 + $0x78] sm:$0xff]
        %v4431 = vld [vmem:[%s4414 + $0x80] sm:$0xff]
        %v4432 = vld [vmem:[%s4414 + $0x88] sm:$0xff]
        %v4433 = vld [vmem:[%s4414 + $0x90] sm:$0xff]
        %v4434 = vld [vmem:[%s4414 + $0x98] sm:$0xff]
        %v4455 = vunpack.c.l.b16 %v4415
        %v4456 = vunpack.c.h.b16 %v4415
        %v4457 = vunpack.c.l.b16 %v4416
        %v4458 = vunpack.c.h.b16 %v4416
        %v4459 = vunpack.c.l.b16 %v4417
        %v4460 = vunpack.c.h.b16 %v4417
        %v4461 = vunpack.c.l.b16 %v4418
        %v4462 = vunpack.c.h.b16 %v4418
        %v4463 = vunpack.c.l.b16 %v4419
        %v4464 = vunpack.c.h.b16 %v4419
        %v4465 = vunpack.c.l.b16 %v4420
        %v4466 = vunpack.c.h.b16 %v4420
        %v4467 = vunpack.c.l.b16 %v4421
        %v4468 = vunpack.c.h.b16 %v4421
        %v4469 = vunpack.c.l.b16 %v4422
        %v4470 = vunpack.c.h.b16 %v4422
        %v4471 = vunpack.c.l.b16 %v4423
        %v4472 = vunpack.c.h.b16 %v4423
        %v4473 = vunpack.c.l.b16 %v4424
        %v4474 = vunpack.c.h.b16 %v4424
        %v4475 = vunpack.c.l.b16 %v4425
        %v4476 = vunpack.c.h.b16 %v4425
        %v4477 = vunpack.c.l.b16 %v4426
        %v4478 = vunpack.c.h.b16 %v4426
        %v4479 = vunpack.c.l.b16 %v4427
        %v4480 = vunpack.c.h.b16 %v4427
        %v4481 = vunpack.c.l.b16 %v4428
        %v4482 = vunpack.c.h.b16 %v4428
        %v4483 = vunpack.c.l.b16 %v4429
        %v4484 = vunpack.c.h.b16 %v4429
        %v4485 = vunpack.c.l.b16 %v4430
        %v4486 = vunpack.c.h.b16 %v4430
        %v4487 = vunpack.c.l.b16 %v4431
        %v4488 = vunpack.c.h.b16 %v4431
        %v4489 = vunpack.c.l.b16 %v4432
        %v4490 = vunpack.c.h.b16 %v4432
        %v4491 = vunpack.c.l.b16 %v4433
        %v4492 = vunpack.c.h.b16 %v4433
        %v4493 = vunpack.c.l.b16 %v4434
        %v4494 = vunpack.c.h.b16 %v4434
        %v4495 = vpack.c.b16 %v4457, %v4455
        %v4496 = vpack.c.b16 %v4458, %v4456
        %v4497 = vpack.c.b16 %v4461, %v4459
        %v4498 = vpack.c.b16 %v4462, %v4460
        %v4499 = vpack.c.b16 %v4465, %v4463
        %v4500 = vpack.c.b16 %v4466, %v4464
        %v4501 = vpack.c.b16 %v4469, %v4467
        %v4502 = vpack.c.b16 %v4470, %v4468
        %v4503 = vpack.c.b16 %v4473, %v4471
        %v4504 = vpack.c.b16 %v4474, %v4472
        %v4505 = vpack.c.b16 %v4477, %v4475
        %v4506 = vpack.c.b16 %v4478, %v4476
        %v4507 = vpack.c.b16 %v4481, %v4479
        %v4508 = vpack.c.b16 %v4482, %v4480
        %v4509 = vpack.c.b16 %v4485, %v4483
        %v4510 = vpack.c.b16 %v4486, %v4484
        %v4511 = vpack.c.b16 %v4489, %v4487
        %v4512 = vpack.c.b16 %v4490, %v4488
        %v4513 = vpack.c.b16 %v4493, %v4491
        %v4514 = vpack.c.b16 %v4494, %v4492
        %v4536 = vsel %vm2912, %v4409, 0
        %v4539 = vsel %vm2912, %v4411, 0
        %v4542 = vsel %vm2912, %v4413, 0
        %4544 = vmatpush.bf16.msra.mxu0 %v4509
        %4545 = vmatpush.bf16.msra.mxu0 %v4507
        %4546 = vmatpush.bf16.msra.mxu0 %v4505
        %4547 = vmatpush.bf16.msra.mxu0 %v4503
        %4548 = vmatpush.bf16.msra.mxu0 %v4501
        %4549 = vmatpush.bf16.msra.mxu0 %v4499
        %4550 = vmatpush.bf16.msra.mxu0 %v4497
        %4551 = vmatpush.bf16.msra.mxu0 %v4495
        %4552 = vmatmul.bf16.gmra.mxu0 %v4408
        %v4553 = vpop.f32.mrf.mxu0
        %v4554 = vadd.f32 0.0, %v4553
        %v4555 = vpop.f32.mrf.mxu0
        %v4556 = vadd.f32 0.0, %v4555
        %4557 = vmatmul.bf16.gmra.mxu0 %v4410
        %v4558 = vpop.f32.mrf.mxu0
        %v4559 = vadd.f32 0.0, %v4558
        %v4560 = vpop.f32.mrf.mxu0
        %v4561 = vadd.f32 0.0, %v4560
        %4562 = vmatmul.bf16.gmra.mxu0 %v4412
        %v4563 = vpop.f32.mrf.mxu0
        %v4564 = vadd.f32 0.0, %v4563
        %v4565 = vpop.f32.mrf.mxu0
        %4566 = vdwg.mxu0
        %4567 = vmatpush.bf16.msra.mxu0 0
        %4568 = vmatpush.bf16.msra.mxu0 0
        %4569 = vmatpush.bf16.msra.mxu0 0
        %4570 = vmatpush.bf16.msra.mxu0 0
        %4571 = vmatpush.bf16.msra.mxu0 0
        %4572 = vmatpush.bf16.msra.mxu0 0
        %4573 = vmatpush.bf16.msra.mxu0 %v4513
        %4574 = vmatpush.bf16.msra.mxu0 %v4511
        %4575 = vmatmul.bf16.gmra.mxu0 %v4536
        %v4576 = vpop.f32.mrf.mxu0
        %v4577 = vadd.f32 %v4554, %v4576
        %v4578 = vpop.f32.mrf.mxu0
        %v4579 = vadd.f32 %v4556, %v4578
        %4580 = vmatmul.bf16.gmra.mxu0 %v4539
        %v4581 = vpop.f32.mrf.mxu0
        %v4582 = vadd.f32 %v4559, %v4581
        %v4583 = vpop.f32.mrf.mxu0
        %v4584 = vadd.f32 %v4561, %v4583
        %4585 = vmatmul.bf16.gmra.mxu0 %v4542
        %v4586 = vpop.f32.mrf.mxu0
        %v4587 = vadd.f32 %v4564, %v4586
        %v4588 = vpop.f32.mrf.mxu0
        %4589 = vdwg.mxu0
        %4590 = vmatpush.bf16.msra.mxu0 %v4510
        %4591 = vmatpush.bf16.msra.mxu0 %v4508
        %4592 = vmatpush.bf16.msra.mxu0 %v4506
        %4593 = vmatpush.bf16.msra.mxu0 %v4504
        %4594 = vmatpush.bf16.msra.mxu0 %v4502
        %4595 = vmatpush.bf16.msra.mxu0 %v4500
        %4596 = vmatpush.bf16.msra.mxu0 %v4498
        %4597 = vmatpush.bf16.msra.mxu0 %v4496
        %4598 = vmatmul.bf16.gmra.mxu0 %v4408
        %v4599 = vpop.f32.mrf.mxu0
        %v4600 = vadd.f32 0.0, %v4599
        %v4601 = vpop.f32.mrf.mxu0
        %v4602 = vadd.f32 0.0, %v4601
        %4603 = vmatmul.bf16.gmra.mxu0 %v4410
        %v4604 = vpop.f32.mrf.mxu0
        %v4605 = vadd.f32 0.0, %v4604
        %v4606 = vpop.f32.mrf.mxu0
        %v4607 = vadd.f32 0.0, %v4606
        %4608 = vmatmul.bf16.gmra.mxu0 %v4412
        %v4609 = vpop.f32.mrf.mxu0
        %v4610 = vadd.f32 0.0, %v4609
        %v4611 = vpop.f32.mrf.mxu0
        %4612 = vdwg.mxu0
        %4613 = vmatpush.bf16.msra.mxu0 0
        %4614 = vmatpush.bf16.msra.mxu0 0
        %4615 = vmatpush.bf16.msra.mxu0 0
        %4616 = vmatpush.bf16.msra.mxu0 0
        %4617 = vmatpush.bf16.msra.mxu0 0
        %4618 = vmatpush.bf16.msra.mxu0 0
        %4619 = vmatpush.bf16.msra.mxu0 %v4514
        %4620 = vmatpush.bf16.msra.mxu0 %v4512
        %4621 = vmatmul.bf16.gmra.mxu0 %v4536
        %v4622 = vpop.f32.mrf.mxu0
        %v4623 = vadd.f32 %v4600, %v4622
        %v4624 = vpop.f32.mrf.mxu0
        %v4625 = vadd.f32 %v4602, %v4624
        %4626 = vmatmul.bf16.gmra.mxu0 %v4539
        %v4627 = vpop.f32.mrf.mxu0
        %v4628 = vadd.f32 %v4605, %v4627
        %v4629 = vpop.f32.mrf.mxu0
        %v4630 = vadd.f32 %v4607, %v4629
        %4631 = vmatmul.bf16.gmra.mxu0 %v4542
        %v4632 = vpop.f32.mrf.mxu0
        %v4633 = vadd.f32 %v4610, %v4632
        %v4634 = vpop.f32.mrf.mxu0
        %4635 = vdwg.mxu0
        %v4636 = vadd.f32 %v4193, %v4577
        %v4637 = vadd.f32 %v4194, %v4623
        %v4638 = vadd.f32 %v4195, %v4579
        %v4639 = vadd.f32 %v4196, %v4625
        %v4640 = vadd.f32 %v4197, %v4582
        %v4641 = vadd.f32 %v4198, %v4628
        %v4642 = vadd.f32 %v4199, %v4584
        %v4643 = vadd.f32 %v4200, %v4630
        %v4644 = vadd.f32 %v4201, %v4587
        %v4645 = vadd.f32 %v4202, %v4633
        %v4646 = vld [vmem:[#allocation3] sm:$0xf0]
        %v4647 = vld [vmem:[#allocation3 + $0x8] sm:$0xf0]
        %v4648 = vld [vmem:[#allocation3 + $0x10] sm:$0x3]
        %v4649 = vld [vmem:[#allocation3 + $0x18] sm:$0x3]
        %v4650 = vld [vmem:[#allocation3 + $0x20] sm:$0xf0]
        %v4651 = vld [vmem:[#allocation3 + $0x28] sm:$0xf0]
        %v4652 = vld [vmem:[#allocation3 + $0x30] sm:$0x3]
        %v4653 = vld [vmem:[#allocation3 + $0x38] sm:$0x3]
        %v4654 = vld [vmem:[#allocation3 + $0x40] sm:$0xf0]
        %v4655 = vld [vmem:[#allocation3 + $0x48] sm:$0xf0]
        %v4656 = vld [vmem:[#allocation3 + $0x50] sm:$0x3]
        %v4657 = vld [vmem:[#allocation3 + $0x58] sm:$0x3]
        %v4658 = vld [vmem:[#allocation3 + $0x60] sm:$0xf0]
        %v4659 = vld [vmem:[#allocation3 + $0x68] sm:$0xf0]
        %v4660 = vld [vmem:[#allocation3 + $0x70] sm:$0x3]
        %v4661 = vld [vmem:[#allocation3 + $0x78] sm:$0x3]
        %v4662 = vld [vmem:[#allocation3 + $0x80] sm:$0xf0]
        %v4663 = vld [vmem:[#allocation3 + $0x88] sm:$0xf0]
        %v4664 = vld [vmem:[#allocation3 + $0x90] sm:$0x3]
        %v4665 = vld [vmem:[#allocation3 + $0x98] sm:$0x3]
        %v4666 = vld [vmem:[#allocation3 + $0xa0] sm:$0xf0]
        %v4667 = vld [vmem:[#allocation3 + $0xa8] sm:$0xf0]
        %v4668 = vld [vmem:[#allocation3 + $0xb0] sm:$0x3]
        %v4669 = vld [vmem:[#allocation3 + $0xb8] sm:$0x3]
        %4694 = vst.sshfl [vmem:[#allocation1] sm:$0xff pattern:$0x73625140] %v4646
        %4695 = vst.sshfl [vmem:[#allocation1 + $0x8] sm:$0xff pattern:$0x73625140] %v4647
        %4696 = vst.sshfl [vmem:[#allocation1 + $0x20] sm:$0xff pattern:$0x73625140] %v4648
        %4697 = vst.sshfl [vmem:[#allocation1 + $0x28] sm:$0xff pattern:$0x73625140] %v4649
        %s4698 = scalar_lea.vmem [#allocation1], 2
        %v4699 = vld [vmem:[%s4698] ss:$4 sm:$0xff]
        %s4700 = scalar_lea.vmem [#allocation1], 3
        %v4701 = vld [vmem:[%s4700] ss:$4 sm:$0xff]
        %s4702 = scalar_lea.vmem [#allocation1], 32
        %v4703 = vld [vmem:[%s4702] ss:$4 sm:$0xff]
        %4704 = vst.sshfl [vmem:[#allocation1] sm:$0xff pattern:$0x73625140] %v4650
        %4705 = vst.sshfl [vmem:[#allocation1 + $0x8] sm:$0xff pattern:$0x73625140] %v4651
        %4706 = vst.sshfl [vmem:[#allocation1 + $0x20] sm:$0xff pattern:$0x73625140] %v4652
        %4707 = vst.sshfl [vmem:[#allocation1 + $0x28] sm:$0xff pattern:$0x73625140] %v4653
        %v4708 = vld [vmem:[%s4698] ss:$4 sm:$0xff]
        %v4709 = vld [vmem:[%s4700] ss:$4 sm:$0xff]
        %v4710 = vld [vmem:[%s4702] ss:$4 sm:$0xff]
        %4711 = vst.sshfl [vmem:[#allocation1] sm:$0xff pattern:$0x73625140] %v4654
        %4712 = vst.sshfl [vmem:[#allocation1 + $0x8] sm:$0xff pattern:$0x73625140] %v4655
        %4713 = vst.sshfl [vmem:[#allocation1 + $0x20] sm:$0xff pattern:$0x73625140] %v4656
        %4714 = vst.sshfl [vmem:[#allocation1 + $0x28] sm:$0xff pattern:$0x73625140] %v4657
        %v4715 = vld [vmem:[%s4698] ss:$4 sm:$0xff]
        %v4716 = vld [vmem:[%s4700] ss:$4 sm:$0xff]
        %v4717 = vld [vmem:[%s4702] ss:$4 sm:$0xff]
        %4718 = vst.sshfl [vmem:[#allocation1] sm:$0xff pattern:$0x73625140] %v4658
        %4719 = vst.sshfl [vmem:[#allocation1 + $0x8] sm:$0xff pattern:$0x73625140] %v4659
        %4720 = vst.sshfl [vmem:[#allocation1 + $0x20] sm:$0xff pattern:$0x73625140] %v4660
        %4721 = vst.sshfl [vmem:[#allocation1 + $0x28] sm:$0xff pattern:$0x73625140] %v4661
        %v4722 = vld [vmem:[%s4698] ss:$4 sm:$0xff]
        %v4723 = vld [vmem:[%s4700] ss:$4 sm:$0xff]
        %v4724 = vld [vmem:[%s4702] ss:$4 sm:$0xff]
        %4725 = vst.sshfl [vmem:[#allocation1] sm:$0xff pattern:$0x73625140] %v4662
        %4726 = vst.sshfl [vmem:[#allocation1 + $0x8] sm:$0xff pattern:$0x73625140] %v4663
        %4727 = vst.sshfl [vmem:[#allocation1 + $0x20] sm:$0xff pattern:$0x73625140] %v4664
        %4728 = vst.sshfl [vmem:[#allocation1 + $0x28] sm:$0xff pattern:$0x73625140] %v4665
        %v4729 = vld [vmem:[%s4698] ss:$4 sm:$0xff]
        %v4730 = vld [vmem:[%s4700] ss:$4 sm:$0xff]
        %v4731 = vld [vmem:[%s4702] ss:$4 sm:$0xff]
        %4732 = vst.sshfl [vmem:[#allocation1] sm:$0xff pattern:$0x73625140] %v4666
        %4733 = vst.sshfl [vmem:[#allocation1 + $0x8] sm:$0xff pattern:$0x73625140] %v4667
        %4734 = vst.sshfl [vmem:[#allocation1 + $0x20] sm:$0xff pattern:$0x73625140] %v4668
        %4735 = vst.sshfl [vmem:[#allocation1 + $0x28] sm:$0xff pattern:$0x73625140] %v4669
        %v4736 = vld [vmem:[%s4698] ss:$4 sm:$0xff]
        %v4737 = vld [vmem:[%s4700] ss:$4 sm:$0xff]
        %v4738 = vld [vmem:[%s4702] ss:$4 sm:$0xff]
        %4739 = vst [vmem:[#allocation1] ss:$4 sm:$0xff] %v4699
        %s4740 = scalar_lea.vmem [#allocation1], 1
        %4741 = vst [vmem:[%s4740] ss:$4 sm:$0xff] %v4701
        %s4742 = scalar_lea.vmem [#allocation1], 2
        %4743 = vst [vmem:[%s4742] ss:$4 sm:$0xff] %v4703
        %s4744 = scalar_lea.vmem [#allocation1], 3
        %4745 = vst [vmem:[%s4744] ss:$4 sm:$0xff] %v4708
        %s4746 = scalar_lea.vmem [#allocation1], 32
        %4747 = vst [vmem:[%s4746] ss:$4 sm:$0xff] %v4709
        %s4748 = scalar_lea.vmem [#allocation1], 33
        %4749 = vst [vmem:[%s4748] ss:$4 sm:$0xff] %v4710
        %s4750 = scalar_lea.vmem [#allocation1], 34
        %4751 = vst [vmem:[%s4750] ss:$4 sm:$0xff] %v4715
        %s4752 = scalar_lea.vmem [#allocation1], 35
        %4753 = vst [vmem:[%s4752] ss:$4 sm:$0xff] %v4716
        %v4754 = vld.sshfl [vmem:[#allocation1] sm:$0xff pattern:$0x73625140]
        %v4755 = vld.sshfl [vmem:[#allocation1 + $0x8] sm:$0xff pattern:$0x73625140]
        %v4756 = vld.sshfl [vmem:[#allocation1 + $0x20] sm:$0xff pattern:$0x73625140]
        %v4757 = vld.sshfl [vmem:[#allocation1 + $0x28] sm:$0xff pattern:$0x73625140]
        %4758 = vst [vmem:[#allocation1] ss:$4 sm:$0xff] %v4717
        %4759 = vst [vmem:[%s4740] ss:$4 sm:$0xff] %v4722
        %4760 = vst [vmem:[%s4742] ss:$4 sm:$0xff] %v4723
        %4761 = vst [vmem:[%s4744] ss:$4 sm:$0xff] %v4724
        %4762 = vst [vmem:[%s4746] ss:$4 sm:$0xff] %v4729
        %4763 = vst [vmem:[%s4748] ss:$4 sm:$0xff] %v4730
        %4764 = vst [vmem:[%s4750] ss:$4 sm:$0xff] %v4731
        %4765 = vst [vmem:[%s4752] ss:$4 sm:$0xff] %v4736
        %v4766 = vld.sshfl [vmem:[#allocation1] sm:$0xff pattern:$0x73625140]
        %v4767 = vld.sshfl [vmem:[#allocation1 + $0x8] sm:$0xff pattern:$0x73625140]
        %v4768 = vld.sshfl [vmem:[#allocation1 + $0x20] sm:$0xff pattern:$0x73625140]
        %v4769 = vld.sshfl [vmem:[#allocation1 + $0x28] sm:$0xff pattern:$0x73625140]
        %4770 = vst [vmem:[#allocation1] ss:$4 sm:$0xff] %v4737
        %4771 = vst [vmem:[%s4740] ss:$4 sm:$0xff] %v4738
        %v4772 = vld.sshfl [vmem:[#allocation1] sm:$0xff pattern:$0x73625140]
        %v4773 = vld.sshfl [vmem:[#allocation1 + $0x8] sm:$0xff pattern:$0x73625140]
        %v4784 = vpack.c.bf16 %v4756, %v4754
        %v4785 = vpack.c.bf16 %v4757, %v4755
        %v4786 = vpack.c.bf16 %v4768, %v4766
        %v4787 = vpack.c.bf16 %v4769, %v4767
        %v4788 = vpack.c.bf16 %v4772, %v4772
        %v4789 = vpack.c.bf16 %v4773, %v4773
        %s4790 = scalar_lea.vmem %s5, 640
        %v4791 = vld [vmem:[%s4790] sm:$0xff]
        %v4792 = vld [vmem:[%s4790 + $0x8] sm:$0xff]
        %v4793 = vld [vmem:[%s4790 + $0x10] sm:$0xff]
        %v4794 = vld [vmem:[%s4790 + $0x18] sm:$0xff]
        %v4795 = vld [vmem:[%s4790 + $0x20] sm:$0xff]
        %v4796 = vld [vmem:[%s4790 + $0x28] sm:$0xff]
        %v4797 = vld [vmem:[%s4790 + $0x30] sm:$0xff]
        %v4798 = vld [vmem:[%s4790 + $0x38] sm:$0xff]
        %v4799 = vld [vmem:[%s4790 + $0x40] sm:$0xff]
        %v4800 = vld [vmem:[%s4790 + $0x48] sm:$0xff]
        %v4801 = vld [vmem:[%s4790 + $0x50] sm:$0xff]
        %v4802 = vld [vmem:[%s4790 + $0x58] sm:$0xff]
        %v4803 = vld [vmem:[%s4790 + $0x60] sm:$0xff]
        %v4804 = vld [vmem:[%s4790 + $0x68] sm:$0xff]
        %v4805 = vld [vmem:[%s4790 + $0x70] sm:$0xff]
        %v4806 = vld [vmem:[%s4790 + $0x78] sm:$0xff]
        %v4807 = vld [vmem:[%s4790 + $0x80] sm:$0xff]
        %v4808 = vld [vmem:[%s4790 + $0x88] sm:$0xff]
        %v4809 = vld [vmem:[%s4790 + $0x90] sm:$0xff]
        %v4810 = vld [vmem:[%s4790 + $0x98] sm:$0xff]
        %v4831 = vunpack.c.l.b16 %v4791
        %v4832 = vunpack.c.h.b16 %v4791
        %v4833 = vunpack.c.l.b16 %v4792
        %v4834 = vunpack.c.h.b16 %v4792
        %v4835 = vunpack.c.l.b16 %v4793
        %v4836 = vunpack.c.h.b16 %v4793
        %v4837 = vunpack.c.l.b16 %v4794
        %v4838 = vunpack.c.h.b16 %v4794
        %v4839 = vunpack.c.l.b16 %v4795
        %v4840 = vunpack.c.h.b16 %v4795
        %v4841 = vunpack.c.l.b16 %v4796
        %v4842 = vunpack.c.h.b16 %v4796
        %v4843 = vunpack.c.l.b16 %v4797
        %v4844 = vunpack.c.h.b16 %v4797
        %v4845 = vunpack.c.l.b16 %v4798
        %v4846 = vunpack.c.h.b16 %v4798
        %v4847 = vunpack.c.l.b16 %v4799
        %v4848 = vunpack.c.h.b16 %v4799
        %v4849 = vunpack.c.l.b16 %v4800
        %v4850 = vunpack.c.h.b16 %v4800
        %v4851 = vunpack.c.l.b16 %v4801
        %v4852 = vunpack.c.h.b16 %v4801
        %v4853 = vunpack.c.l.b16 %v4802
        %v4854 = vunpack.c.h.b16 %v4802
        %v4855 = vunpack.c.l.b16 %v4803
        %v4856 = vunpack.c.h.b16 %v4803
        %v4857 = vunpack.c.l.b16 %v4804
        %v4858 = vunpack.c.h.b16 %v4804
        %v4859 = vunpack.c.l.b16 %v4805
        %v4860 = vunpack.c.h.b16 %v4805
        %v4861 = vunpack.c.l.b16 %v4806
        %v4862 = vunpack.c.h.b16 %v4806
        %v4863 = vunpack.c.l.b16 %v4807
        %v4864 = vunpack.c.h.b16 %v4807
        %v4865 = vunpack.c.l.b16 %v4808
        %v4866 = vunpack.c.h.b16 %v4808
        %v4867 = vunpack.c.l.b16 %v4809
        %v4868 = vunpack.c.h.b16 %v4809
        %v4869 = vunpack.c.l.b16 %v4810
        %v4870 = vunpack.c.h.b16 %v4810
        %v4871 = vpack.c.b16 %v4833, %v4831
        %v4872 = vpack.c.b16 %v4834, %v4832
        %v4873 = vpack.c.b16 %v4837, %v4835
        %v4874 = vpack.c.b16 %v4838, %v4836
        %v4875 = vpack.c.b16 %v4841, %v4839
        %v4876 = vpack.c.b16 %v4842, %v4840
        %v4877 = vpack.c.b16 %v4845, %v4843
        %v4878 = vpack.c.b16 %v4846, %v4844
        %v4879 = vpack.c.b16 %v4849, %v4847
        %v4880 = vpack.c.b16 %v4850, %v4848
        %v4881 = vpack.c.b16 %v4853, %v4851
        %v4882 = vpack.c.b16 %v4854, %v4852
        %v4883 = vpack.c.b16 %v4857, %v4855
        %v4884 = vpack.c.b16 %v4858, %v4856
        %v4885 = vpack.c.b16 %v4861, %v4859
        %v4886 = vpack.c.b16 %v4862, %v4860
        %v4887 = vpack.c.b16 %v4865, %v4863
        %v4888 = vpack.c.b16 %v4866, %v4864
        %v4889 = vpack.c.b16 %v4869, %v4867
        %v4890 = vpack.c.b16 %v4870, %v4868
        %v4912 = vsel %vm2912, %v4785, 0
        %v4915 = vsel %vm2912, %v4787, 0
        %v4918 = vsel %vm2912, %v4789, 0
        %4920 = vmatpush.bf16.msra.mxu0 %v4885
        %4921 = vmatpush.bf16.msra.mxu0 %v4883
        %4922 = vmatpush.bf16.msra.mxu0 %v4881
        %4923 = vmatpush.bf16.msra.mxu0 %v4879
        %4924 = vmatpush.bf16.msra.mxu0 %v4877
        %4925 = vmatpush.bf16.msra.mxu0 %v4875
        %4926 = vmatpush.bf16.msra.mxu0 %v4873
        %4927 = vmatpush.bf16.msra.mxu0 %v4871
        %4928 = vmatmul.bf16.gmra.mxu0 %v4784
        %v4929 = vpop.f32.mrf.mxu0
        %v4930 = vadd.f32 0.0, %v4929
        %v4931 = vpop.f32.mrf.mxu0
        %v4932 = vadd.f32 0.0, %v4931
        %4933 = vmatmul.bf16.gmra.mxu0 %v4786
        %v4934 = vpop.f32.mrf.mxu0
        %v4935 = vadd.f32 0.0, %v4934
        %v4936 = vpop.f32.mrf.mxu0
        %v4937 = vadd.f32 0.0, %v4936
        %4938 = vmatmul.bf16.gmra.mxu0 %v4788
        %v4939 = vpop.f32.mrf.mxu0
        %v4940 = vadd.f32 0.0, %v4939
        %v4941 = vpop.f32.mrf.mxu0
        %4942 = vdwg.mxu0
        %4943 = vmatpush.bf16.msra.mxu0 0
        %4944 = vmatpush.bf16.msra.mxu0 0
        %4945 = vmatpush.bf16.msra.mxu0 0
        %4946 = vmatpush.bf16.msra.mxu0 0
        %4947 = vmatpush.bf16.msra.mxu0 0
        %4948 = vmatpush.bf16.msra.mxu0 0
        %4949 = vmatpush.bf16.msra.mxu0 %v4889
        %4950 = vmatpush.bf16.msra.mxu0 %v4887
        %4951 = vmatmul.bf16.gmra.mxu0 %v4912
        %v4952 = vpop.f32.mrf.mxu0
        %v4953 = vadd.f32 %v4930, %v4952
        %v4954 = vpop.f32.mrf.mxu0
        %v4955 = vadd.f32 %v4932, %v4954
        %4956 = vmatmul.bf16.gmra.mxu0 %v4915
        %v4957 = vpop.f32.mrf.mxu0
        %v4958 = vadd.f32 %v4935, %v4957
        %v4959 = vpop.f32.mrf.mxu0
        %v4960 = vadd.f32 %v4937, %v4959
        %4961 = vmatmul.bf16.gmra.mxu0 %v4918
        %v4962 = vpop.f32.mrf.mxu0
        %v4963 = vadd.f32 %v4940, %v4962
        %v4964 = vpop.f32.mrf.mxu0
        %4965 = vdwg.mxu0
        %4966 = vmatpush.bf16.msra.mxu0 %v4886
        %4967 = vmatpush.bf16.msra.mxu0 %v4884
        %4968 = vmatpush.bf16.msra.mxu0 %v4882
        %4969 = vmatpush.bf16.msra.mxu0 %v4880
        %4970 = vmatpush.bf16.msra.mxu0 %v4878
        %4971 = vmatpush.bf16.msra.mxu0 %v4876
        %4972 = vmatpush.bf16.msra.mxu0 %v4874
        %4973 = vmatpush.bf16.msra.mxu0 %v4872
        %4974 = vmatmul.bf16.gmra.mxu0 %v4784
        %v4975 = vpop.f32.mrf.mxu0
        %v4976 = vadd.f32 0.0, %v4975
        %v4977 = vpop.f32.mrf.mxu0
        %v4978 = vadd.f32 0.0, %v4977
        %4979 = vmatmul.bf16.gmra.mxu0 %v4786
        %v4980 = vpop.f32.mrf.mxu0
        %v4981 = vadd.f32 0.0, %v4980
        %v4982 = vpop.f32.mrf.mxu0
        %v4983 = vadd.f32 0.0, %v4982
        %4984 = vmatmul.bf16.gmra.mxu0 %v4788
        %v4985 = vpop.f32.mrf.mxu0
        %v4986 = vadd.f32 0.0, %v4985
        %v4987 = vpop.f32.mrf.mxu0
        %4988 = vdwg.mxu0
        %4989 = vmatpush.bf16.msra.mxu0 0
        %4990 = vmatpush.bf16.msra.mxu0 0
        %4991 = vmatpush.bf16.msra.mxu0 0
        %4992 = vmatpush.bf16.msra.mxu0 0
        %4993 = vmatpush.bf16.msra.mxu0 0
        %4994 = vmatpush.bf16.msra.mxu0 0
        %4995 = vmatpush.bf16.msra.mxu0 %v4890
        %4996 = vmatpush.bf16.msra.mxu0 %v4888
        %4997 = vmatmul.bf16.gmra.mxu0 %v4912
        %v4998 = vpop.f32.mrf.mxu0
        %v4999 = vadd.f32 %v4976, %v4998
        %v5000 = vpop.f32.mrf.mxu0
        %v5001 = vadd.f32 %v4978, %v5000
        %5002 = vmatmul.bf16.gmra.mxu0 %v4915
        %v5003 = vpop.f32.mrf.mxu0
        %v5004 = vadd.f32 %v4981, %v5003
        %v5005 = vpop.f32.mrf.mxu0
        %v5006 = vadd.f32 %v4983, %v5005
        %5007 = vmatmul.bf16.gmra.mxu0 %v4918
        %v5008 = vpop.f32.mrf.mxu0
        %v5009 = vadd.f32 %v4986, %v5008
        %v5010 = vpop.f32.mrf.mxu0
        %5011 = vdwg.mxu0
        %v5012 = vadd.f32 %v4636, %v4953
        %v5013 = vadd.f32 %v4637, %v4999
        %v5014 = vadd.f32 %v4638, %v4955
        %v5015 = vadd.f32 %v4639, %v5001
        %v5016 = vadd.f32 %v4640, %v4958
        %v5017 = vadd.f32 %v4641, %v5004
        %v5018 = vadd.f32 %v4642, %v4960
        %v5019 = vadd.f32 %v4643, %v5006
        %v5020 = vadd.f32 %v4644, %v4963
        %v5021 = vadd.f32 %v4645, %v5009
        %v5022 = vld [vmem:[#allocation3] sm:$0xe0]
        %v5023 = vld [vmem:[#allocation3 + $0x8] sm:$0xe0]
        %v5024 = vld [vmem:[#allocation3 + $0x10] sm:$0x7]
        %v5025 = vld [vmem:[#allocation3 + $0x18] sm:$0x7]
        %v5026 = vld [vmem:[#allocation3 + $0x20] sm:$0xe0]
        %v5027 = vld [vmem:[#allocation3 + $0x28] sm:$0xe0]
        %v5028 = vld [vmem:[#allocation3 + $0x30] sm:$0x7]
        %v5029 = vld [vmem:[#allocation3 + $0x38] sm:$0x7]
        %v5030 = vld [vmem:[#allocation3 + $0x40] sm:$0xe0]
        %v5031 = vld [vmem:[#allocation3 + $0x48] sm:$0xe0]
        %v5032 = vld [vmem:[#allocation3 + $0x50] sm:$0x7]
        %v5033 = vld [vmem:[#allocation3 + $0x58] sm:$0x7]
        %v5034 = vld [vmem:[#allocation3 + $0x60] sm:$0xe0]
        %v5035 = vld [vmem:[#allocation3 + $0x68] sm:$0xe0]
        %v5036 = vld [vmem:[#allocation3 + $0x70] sm:$0x7]
        %v5037 = vld [vmem:[#allocation3 + $0x78] sm:$0x7]
        %v5038 = vld [vmem:[#allocation3 + $0x80] sm:$0xe0]
        %v5039 = vld [vmem:[#allocation3 + $0x88] sm:$0xe0]
        %v5040 = vld [vmem:[#allocation3 + $0x90] sm:$0x7]
        %v5041 = vld [vmem:[#allocation3 + $0x98] sm:$0x7]
        %v5042 = vld [vmem:[#allocation3 + $0xa0] sm:$0xe0]
        %v5043 = vld [vmem:[#allocation3 + $0xa8] sm:$0xe0]
        %v5044 = vld [vmem:[#allocation3 + $0xb0] sm:$0x7]
        %v5045 = vld [vmem:[#allocation3 + $0xb8] sm:$0x7]
        %5070 = vst.sshfl [vmem:[#allocation1] sm:$0xff pattern:$0x73625140] %v5022
        %5071 = vst.sshfl [vmem:[#allocation1 + $0x8] sm:$0xff pattern:$0x73625140] %v5023
        %5072 = vst.sshfl [vmem:[#allocation1 + $0x20] sm:$0xff pattern:$0x73625140] %v5024
        %5073 = vst.sshfl [vmem:[#allocation1 + $0x28] sm:$0xff pattern:$0x73625140] %v5025
        %s5074 = scalar_lea.vmem [#allocation1], 2
        %v5075 = vld [vmem:[%s5074] ss:$4 sm:$0xff]
        %s5076 = scalar_lea.vmem [#allocation1], 3
        %v5077 = vld [vmem:[%s5076] ss:$4 sm:$0xff]
        %s5078 = scalar_lea.vmem [#allocation1], 32
        %v5079 = vld [vmem:[%s5078] ss:$4 sm:$0xff]
        %s5080 = scalar_lea.vmem [#allocation1], 33
        %v5081 = vld [vmem:[%s5080] ss:$4 sm:$0xff]
        %5082 = vst.sshfl [vmem:[#allocation1] sm:$0xff pattern:$0x73625140] %v5026
        %5083 = vst.sshfl [vmem:[#allocation1 + $0x8] sm:$0xff pattern:$0x73625140] %v5027
        %5084 = vst.sshfl [vmem:[#allocation1 + $0x20] sm:$0xff pattern:$0x73625140] %v5028
        %5085 = vst.sshfl [vmem:[#allocation1 + $0x28] sm:$0xff pattern:$0x73625140] %v5029
        %v5086 = vld [vmem:[%s5074] ss:$4 sm:$0xff]
        %v5087 = vld [vmem:[%s5076] ss:$4 sm:$0xff]
        %v5088 = vld [vmem:[%s5078] ss:$4 sm:$0xff]
        %v5089 = vld [vmem:[%s5080] ss:$4 sm:$0xff]
        %5090 = vst.sshfl [vmem:[#allocation1] sm:$0xff pattern:$0x73625140] %v5030
        %5091 = vst.sshfl [vmem:[#allocation1 + $0x8] sm:$0xff pattern:$0x73625140] %v5031
        %5092 = vst.sshfl [vmem:[#allocation1 + $0x20] sm:$0xff pattern:$0x73625140] %v5032
        %5093 = vst.sshfl [vmem:[#allocation1 + $0x28] sm:$0xff pattern:$0x73625140] %v5033
        %v5094 = vld [vmem:[%s5074] ss:$4 sm:$0xff]
        %v5095 = vld [vmem:[%s5076] ss:$4 sm:$0xff]
        %v5096 = vld [vmem:[%s5078] ss:$4 sm:$0xff]
        %v5097 = vld [vmem:[%s5080] ss:$4 sm:$0xff]
        %5098 = vst.sshfl [vmem:[#allocation1] sm:$0xff pattern:$0x73625140] %v5034
        %5099 = vst.sshfl [vmem:[#allocation1 + $0x8] sm:$0xff pattern:$0x73625140] %v5035
        %5100 = vst.sshfl [vmem:[#allocation1 + $0x20] sm:$0xff pattern:$0x73625140] %v5036
        %5101 = vst.sshfl [vmem:[#allocation1 + $0x28] sm:$0xff pattern:$0x73625140] %v5037
        %v5102 = vld [vmem:[%s5074] ss:$4 sm:$0xff]
        %v5103 = vld [vmem:[%s5076] ss:$4 sm:$0xff]
        %v5104 = vld [vmem:[%s5078] ss:$4 sm:$0xff]
        %v5105 = vld [vmem:[%s5080] ss:$4 sm:$0xff]
        %5106 = vst.sshfl [vmem:[#allocation1] sm:$0xff pattern:$0x73625140] %v5038
        %5107 = vst.sshfl [vmem:[#allocation1 + $0x8] sm:$0xff pattern:$0x73625140] %v5039
        %5108 = vst.sshfl [vmem:[#allocation1 + $0x20] sm:$0xff pattern:$0x73625140] %v5040
        %5109 = vst.sshfl [vmem:[#allocation1 + $0x28] sm:$0xff pattern:$0x73625140] %v5041
        %v5110 = vld [vmem:[%s5074] ss:$4 sm:$0xff]
        %v5111 = vld [vmem:[%s5076] ss:$4 sm:$0xff]
        %v5112 = vld [vmem:[%s5078] ss:$4 sm:$0xff]
        %v5113 = vld [vmem:[%s5080] ss:$4 sm:$0xff]
        %5114 = vst.sshfl [vmem:[#allocation1] sm:$0xff pattern:$0x73625140] %v5042
        %5115 = vst.sshfl [vmem:[#allocation1 + $0x8] sm:$0xff pattern:$0x73625140] %v5043
        %5116 = vst.sshfl [vmem:[#allocation1 + $0x20] sm:$0xff pattern:$0x73625140] %v5044
        %5117 = vst.sshfl [vmem:[#allocation1 + $0x28] sm:$0xff pattern:$0x73625140] %v5045
        %v5118 = vld [vmem:[%s5074] ss:$4 sm:$0xff]
        %v5119 = vld [vmem:[%s5076] ss:$4 sm:$0xff]
        %v5120 = vld [vmem:[%s5078] ss:$4 sm:$0xff]
        %v5121 = vld [vmem:[%s5080] ss:$4 sm:$0xff]
        %v5122 = vrot.slane %v5075, 7
        %v5123 = vrot.slane %v5122, 2
        %v5124 = vrot.slane %v5077, 7
        %v5125 = vsel %vm3516, %v5123, %v5124
        %v5126 = vrot.slane %v5124, 2
        %v5127 = vrot.slane %v5079, 7
        %v5128 = vsel %vm3516, %v5126, %v5127
        %v5129 = vrot.slane %v5127, 2
        %v5130 = vrot.slane %v5081, 7
        %v5131 = vsel %vm3516, %v5129, %v5130
        %v5132 = vrot.slane %v5086, 7
        %v5133 = vrot.slane %v5132, 2
        %v5134 = vrot.slane %v5087, 7
        %v5135 = vsel %vm3516, %v5133, %v5134
        %v5136 = vrot.slane %v5134, 2
        %v5137 = vrot.slane %v5088, 7
        %v5138 = vsel %vm3516, %v5136, %v5137
        %v5139 = vrot.slane %v5137, 2
        %v5140 = vrot.slane %v5089, 7
        %v5141 = vsel %vm3516, %v5139, %v5140
        %v5142 = vrot.slane %v5094, 7
        %v5143 = vrot.slane %v5142, 2
        %v5144 = vrot.slane %v5095, 7
        %v5145 = vsel %vm3516, %v5143, %v5144
        %v5146 = vrot.slane %v5144, 2
        %v5147 = vrot.slane %v5096, 7
        %v5148 = vsel %vm3516, %v5146, %v5147
        %v5149 = vrot.slane %v5147, 2
        %v5150 = vrot.slane %v5097, 7
        %v5151 = vsel %vm3516, %v5149, %v5150
        %v5152 = vrot.slane %v5102, 7
        %v5153 = vrot.slane %v5152, 2
        %v5154 = vrot.slane %v5103, 7
        %v5155 = vsel %vm3516, %v5153, %v5154
        %v5156 = vrot.slane %v5154, 2
        %v5157 = vrot.slane %v5104, 7
        %v5158 = vsel %vm3516, %v5156, %v5157
        %v5159 = vrot.slane %v5157, 2
        %v5160 = vrot.slane %v5105, 7
        %v5161 = vsel %vm3516, %v5159, %v5160
        %v5162 = vrot.slane %v5110, 7
        %v5163 = vrot.slane %v5162, 2
        %v5164 = vrot.slane %v5111, 7
        %v5165 = vsel %vm3516, %v5163, %v5164
        %v5166 = vrot.slane %v5164, 2
        %v5167 = vrot.slane %v5112, 7
        %v5168 = vsel %vm3516, %v5166, %v5167
        %v5169 = vrot.slane %v5167, 2
        %v5170 = vrot.slane %v5113, 7
        %v5171 = vsel %vm3516, %v5169, %v5170
        %v5172 = vrot.slane %v5118, 7
        %v5173 = vrot.slane %v5172, 2
        %v5174 = vrot.slane %v5119, 7
        %v5175 = vsel %vm3516, %v5173, %v5174
        %v5176 = vrot.slane %v5174, 2
        %v5177 = vrot.slane %v5120, 7
        %v5178 = vsel %vm3516, %v5176, %v5177
        %v5179 = vrot.slane %v5177, 2
        %v5180 = vrot.slane %v5121, 7
        %v5181 = vsel %vm3516, %v5179, %v5180
        %5182 = vst [vmem:[#allocation1] ss:$4 sm:$0xff] %v5125
        %s5183 = scalar_lea.vmem [#allocation1], 1
        %5184 = vst [vmem:[%s5183] ss:$4 sm:$0xff] %v5128
        %s5185 = scalar_lea.vmem [#allocation1], 2
        %5186 = vst [vmem:[%s5185] ss:$4 sm:$0xff] %v5131
        %s5187 = scalar_lea.vmem [#allocation1], 3
        %5188 = vst [vmem:[%s5187] ss:$4 sm:$0xff] %v5135
        %s5189 = scalar_lea.vmem [#allocation1], 32
        %5190 = vst [vmem:[%s5189] ss:$4 sm:$0xff] %v5138
        %s5191 = scalar_lea.vmem [#allocation1], 33
        %5192 = vst [vmem:[%s5191] ss:$4 sm:$0xff] %v5141
        %s5193 = scalar_lea.vmem [#allocation1], 34
        %5194 = vst [vmem:[%s5193] ss:$4 sm:$0xff] %v5145
        %s5195 = scalar_lea.vmem [#allocation1], 35
        %5196 = vst [vmem:[%s5195] ss:$4 sm:$0xff] %v5148
        %v5197 = vld.sshfl [vmem:[#allocation1] sm:$0xff pattern:$0x73625140]
        %v5198 = vld.sshfl [vmem:[#allocation1 + $0x8] sm:$0xff pattern:$0x73625140]
        %v5199 = vld.sshfl [vmem:[#allocation1 + $0x20] sm:$0xff pattern:$0x73625140]
        %v5200 = vld.sshfl [vmem:[#allocation1 + $0x28] sm:$0xff pattern:$0x73625140]
        %5201 = vst [vmem:[#allocation1] ss:$4 sm:$0xff] %v5151
        %5202 = vst [vmem:[%s5183] ss:$4 sm:$0xff] %v5155
        %5203 = vst [vmem:[%s5185] ss:$4 sm:$0xff] %v5158
        %5204 = vst [vmem:[%s5187] ss:$4 sm:$0xff] %v5161
        %5205 = vst [vmem:[%s5189] ss:$4 sm:$0xff] %v5165
        %5206 = vst [vmem:[%s5191] ss:$4 sm:$0xff] %v5168
        %5207 = vst [vmem:[%s5193] ss:$4 sm:$0xff] %v5171
        %5208 = vst [vmem:[%s5195] ss:$4 sm:$0xff] %v5175
        %v5209 = vld.sshfl [vmem:[#allocation1] sm:$0xff pattern:$0x73625140]
        %v5210 = vld.sshfl [vmem:[#allocation1 + $0x8] sm:$0xff pattern:$0x73625140]
        %v5211 = vld.sshfl [vmem:[#allocation1 + $0x20] sm:$0xff pattern:$0x73625140]
        %v5212 = vld.sshfl [vmem:[#allocation1 + $0x28] sm:$0xff pattern:$0x73625140]
        %5213 = vst [vmem:[#allocation1] ss:$4 sm:$0xff] %v5178
        %5214 = vst [vmem:[%s5183] ss:$4 sm:$0xff] %v5181
        %v5215 = vld.sshfl [vmem:[#allocation1] sm:$0xff pattern:$0x73625140]
        %v5216 = vld.sshfl [vmem:[#allocation1 + $0x8] sm:$0xff pattern:$0x73625140]
        %v5227 = vpack.c.bf16 %v5199, %v5197
        %v5228 = vpack.c.bf16 %v5200, %v5198
        %v5229 = vpack.c.bf16 %v5211, %v5209
        %v5230 = vpack.c.bf16 %v5212, %v5210
        %v5231 = vpack.c.bf16 %v5215, %v5215
        %v5232 = vpack.c.bf16 %v5216, %v5216
        %s5233 = scalar_lea.vmem %s5, 800
        %v5234 = vld [vmem:[%s5233] sm:$0xff]
        %v5235 = vld [vmem:[%s5233 + $0x8] sm:$0xff]
        %v5236 = vld [vmem:[%s5233 + $0x10] sm:$0xff]
        %v5237 = vld [vmem:[%s5233 + $0x18] sm:$0xff]
        %v5238 = vld [vmem:[%s5233 + $0x20] sm:$0xff]
        %v5239 = vld [vmem:[%s5233 + $0x28] sm:$0xff]
        %v5240 = vld [vmem:[%s5233 + $0x30] sm:$0xff]
        %v5241 = vld [vmem:[%s5233 + $0x38] sm:$0xff]
        %v5242 = vld [vmem:[%s5233 + $0x40] sm:$0xff]
        %v5243 = vld [vmem:[%s5233 + $0x48] sm:$0xff]
        %v5244 = vld [vmem:[%s5233 + $0x50] sm:$0xff]
        %v5245 = vld [vmem:[%s5233 + $0x58] sm:$0xff]
        %v5246 = vld [vmem:[%s5233 + $0x60] sm:$0xff]
        %v5247 = vld [vmem:[%s5233 + $0x68] sm:$0xff]
        %v5248 = vld [vmem:[%s5233 + $0x70] sm:$0xff]
        %v5249 = vld [vmem:[%s5233 + $0x78] sm:$0xff]
        %v5250 = vld [vmem:[%s5233 + $0x80] sm:$0xff]
        %v5251 = vld [vmem:[%s5233 + $0x88] sm:$0xff]
        %v5252 = vld [vmem:[%s5233 + $0x90] sm:$0xff]
        %v5253 = vld [vmem:[%s5233 + $0x98] sm:$0xff]
        %v5274 = vunpack.c.l.b16 %v5234
        %v5275 = vunpack.c.h.b16 %v5234
        %v5276 = vunpack.c.l.b16 %v5235
        %v5277 = vunpack.c.h.b16 %v5235
        %v5278 = vunpack.c.l.b16 %v5236
        %v5279 = vunpack.c.h.b16 %v5236
        %v5280 = vunpack.c.l.b16 %v5237
        %v5281 = vunpack.c.h.b16 %v5237
        %v5282 = vunpack.c.l.b16 %v5238
        %v5283 = vunpack.c.h.b16 %v5238
        %v5284 = vunpack.c.l.b16 %v5239
        %v5285 = vunpack.c.h.b16 %v5239
        %v5286 = vunpack.c.l.b16 %v5240
        %v5287 = vunpack.c.h.b16 %v5240
        %v5288 = vunpack.c.l.b16 %v5241
        %v5289 = vunpack.c.h.b16 %v5241
        %v5290 = vunpack.c.l.b16 %v5242
        %v5291 = vunpack.c.h.b16 %v5242
        %v5292 = vunpack.c.l.b16 %v5243
        %v5293 = vunpack.c.h.b16 %v5243
        %v5294 = vunpack.c.l.b16 %v5244
        %v5295 = vunpack.c.h.b16 %v5244
        %v5296 = vunpack.c.l.b16 %v5245
        %v5297 = vunpack.c.h.b16 %v5245
        %v5298 = vunpack.c.l.b16 %v5246
        %v5299 = vunpack.c.h.b16 %v5246
        %v5300 = vunpack.c.l.b16 %v5247
        %v5301 = vunpack.c.h.b16 %v5247
        %v5302 = vunpack.c.l.b16 %v5248
        %v5303 = vunpack.c.h.b16 %v5248
        %v5304 = vunpack.c.l.b16 %v5249
        %v5305 = vunpack.c.h.b16 %v5249
        %v5306 = vunpack.c.l.b16 %v5250
        %v5307 = vunpack.c.h.b16 %v5250
        %v5308 = vunpack.c.l.b16 %v5251
        %v5309 = vunpack.c.h.b16 %v5251
        %v5310 = vunpack.c.l.b16 %v5252
        %v5311 = vunpack.c.h.b16 %v5252
        %v5312 = vunpack.c.l.b16 %v5253
        %v5313 = vunpack.c.h.b16 %v5253
        %v5314 = vpack.c.b16 %v5276, %v5274
        %v5315 = vpack.c.b16 %v5277, %v5275
        %v5316 = vpack.c.b16 %v5280, %v5278
        %v5317 = vpack.c.b16 %v5281, %v5279
        %v5318 = vpack.c.b16 %v5284, %v5282
        %v5319 = vpack.c.b16 %v5285, %v5283
        %v5320 = vpack.c.b16 %v5288, %v5286
        %v5321 = vpack.c.b16 %v5289, %v5287
        %v5322 = vpack.c.b16 %v5292, %v5290
        %v5323 = vpack.c.b16 %v5293, %v5291
        %v5324 = vpack.c.b16 %v5296, %v5294
        %v5325 = vpack.c.b16 %v5297, %v5295
        %v5326 = vpack.c.b16 %v5300, %v5298
        %v5327 = vpack.c.b16 %v5301, %v5299
        %v5328 = vpack.c.b16 %v5304, %v5302
        %v5329 = vpack.c.b16 %v5305, %v5303
        %v5330 = vpack.c.b16 %v5308, %v5306
        %v5331 = vpack.c.b16 %v5309, %v5307
        %v5332 = vpack.c.b16 %v5312, %v5310
        %v5333 = vpack.c.b16 %v5313, %v5311
        %v5355 = vsel %vm2912, %v5228, 0
        %v5358 = vsel %vm2912, %v5230, 0
        %v5361 = vsel %vm2912, %v5232, 0
        %5363 = vmatpush.bf16.msra.mxu0 %v5328
        %5364 = vmatpush.bf16.msra.mxu0 %v5326
        %5365 = vmatpush.bf16.msra.mxu0 %v5324
        %5366 = vmatpush.bf16.msra.mxu0 %v5322
        %5367 = vmatpush.bf16.msra.mxu0 %v5320
        %5368 = vmatpush.bf16.msra.mxu0 %v5318
        %5369 = vmatpush.bf16.msra.mxu0 %v5316
        %5370 = vmatpush.bf16.msra.mxu0 %v5314
        %5371 = vmatmul.bf16.gmra.mxu0 %v5227
        %v5372 = vpop.f32.mrf.mxu0
        %v5373 = vadd.f32 0.0, %v5372
        %v5374 = vpop.f32.mrf.mxu0
        %v5375 = vadd.f32 0.0, %v5374
        %5376 = vmatmul.bf16.gmra.mxu0 %v5229
        %v5377 = vpop.f32.mrf.mxu0
        %v5378 = vadd.f32 0.0, %v5377
        %v5379 = vpop.f32.mrf.mxu0
        %v5380 = vadd.f32 0.0, %v5379
        %5381 = vmatmul.bf16.gmra.mxu0 %v5231
        %v5382 = vpop.f32.mrf.mxu0
        %v5383 = vadd.f32 0.0, %v5382
        %v5384 = vpop.f32.mrf.mxu0
        %5385 = vdwg.mxu0
        %5386 = vmatpush.bf16.msra.mxu0 0
        %5387 = vmatpush.bf16.msra.mxu0 0
        %5388 = vmatpush.bf16.msra.mxu0 0
        %5389 = vmatpush.bf16.msra.mxu0 0
        %5390 = vmatpush.bf16.msra.mxu0 0
        %5391 = vmatpush.bf16.msra.mxu0 0
        %5392 = vmatpush.bf16.msra.mxu0 %v5332
        %5393 = vmatpush.bf16.msra.mxu0 %v5330
        %5394 = vmatmul.bf16.gmra.mxu0 %v5355
        %v5395 = vpop.f32.mrf.mxu0
        %v5396 = vadd.f32 %v5373, %v5395
        %v5397 = vpop.f32.mrf.mxu0
        %v5398 = vadd.f32 %v5375, %v5397
        %5399 = vmatmul.bf16.gmra.mxu0 %v5358
        %v5400 = vpop.f32.mrf.mxu0
        %v5401 = vadd.f32 %v5378, %v5400
        %v5402 = vpop.f32.mrf.mxu0
        %v5403 = vadd.f32 %v5380, %v5402
        %5404 = vmatmul.bf16.gmra.mxu0 %v5361
        %v5405 = vpop.f32.mrf.mxu0
        %v5406 = vadd.f32 %v5383, %v5405
        %v5407 = vpop.f32.mrf.mxu0
        %5408 = vdwg.mxu0
        %5409 = vmatpush.bf16.msra.mxu0 %v5329
        %5410 = vmatpush.bf16.msra.mxu0 %v5327
        %5411 = vmatpush.bf16.msra.mxu0 %v5325
        %5412 = vmatpush.bf16.msra.mxu0 %v5323
        %5413 = vmatpush.bf16.msra.mxu0 %v5321
        %5414 = vmatpush.bf16.msra.mxu0 %v5319
        %5415 = vmatpush.bf16.msra.mxu0 %v5317
        %5416 = vmatpush.bf16.msra.mxu0 %v5315
        %5417 = vmatmul.bf16.gmra.mxu0 %v5227
        %v5418 = vpop.f32.mrf.mxu0
        %v5419 = vadd.f32 0.0, %v5418
        %v5420 = vpop.f32.mrf.mxu0
        %v5421 = vadd.f32 0.0, %v5420
        %5422 = vmatmul.bf16.gmra.mxu0 %v5229
        %v5423 = vpop.f32.mrf.mxu0
        %v5424 = vadd.f32 0.0, %v5423
        %v5425 = vpop.f32.mrf.mxu0
        %v5426 = vadd.f32 0.0, %v5425
        %5427 = vmatmul.bf16.gmra.mxu0 %v5231
        %v5428 = vpop.f32.mrf.mxu0
        %v5429 = vadd.f32 0.0, %v5428
        %v5430 = vpop.f32.mrf.mxu0
        %5431 = vdwg.mxu0
        %5432 = vmatpush.bf16.msra.mxu0 0
        %5433 = vmatpush.bf16.msra.mxu0 0
        %5434 = vmatpush.bf16.msra.mxu0 0
        %5435 = vmatpush.bf16.msra.mxu0 0
        %5436 = vmatpush.bf16.msra.mxu0 0
        %5437 = vmatpush.bf16.msra.mxu0 0
        %5438 = vmatpush.bf16.msra.mxu0 %v5333
        %5439 = vmatpush.bf16.msra.mxu0 %v5331
        %5440 = vmatmul.bf16.gmra.mxu0 %v5355
        %v5441 = vpop.f32.mrf.mxu0
        %v5442 = vadd.f32 %v5419, %v5441
        %v5443 = vpop.f32.mrf.mxu0
        %v5444 = vadd.f32 %v5421, %v5443
        %5445 = vmatmul.bf16.gmra.mxu0 %v5358
        %v5446 = vpop.f32.mrf.mxu0
        %v5447 = vadd.f32 %v5424, %v5446
        %v5448 = vpop.f32.mrf.mxu0
        %v5449 = vadd.f32 %v5426, %v5448
        %5450 = vmatmul.bf16.gmra.mxu0 %v5361
        %v5451 = vpop.f32.mrf.mxu0
        %v5452 = vadd.f32 %v5429, %v5451
        %v5453 = vpop.f32.mrf.mxu0
        %5454 = vdwg.mxu0
        %v5455 = vadd.f32 %v5012, %v5396
        %v5456 = vadd.f32 %v5013, %v5442
        %v5457 = vadd.f32 %v5014, %v5398
        %v5458 = vadd.f32 %v5015, %v5444
        %v5459 = vadd.f32 %v5016, %v5401
        %v5460 = vadd.f32 %v5017, %v5447
        %v5461 = vadd.f32 %v5018, %v5403
        %v5462 = vadd.f32 %v5019, %v5449
        %v5463 = vadd.f32 %v5020, %v5406
        %v5464 = vadd.f32 %v5021, %v5452
        %v5465 = vld [vmem:[#allocation3] sm:$0xc0]
        %v5466 = vld [vmem:[#allocation3 + $0x8] sm:$0xc0]
        %v5467 = vld [vmem:[#allocation3 + $0x10] sm:$0xf]
        %v5468 = vld [vmem:[#allocation3 + $0x18] sm:$0xf]
        %v5469 = vld [vmem:[#allocation3 + $0x20] sm:$0xc0]
        %v5470 = vld [vmem:[#allocation3 + $0x28] sm:$0xc0]
        %v5471 = vld [vmem:[#allocation3 + $0x30] sm:$0xf]
        %v5472 = vld [vmem:[#allocation3 + $0x38] sm:$0xf]
        %v5473 = vld [vmem:[#allocation3 + $0x40] sm:$0xc0]
        %v5474 = vld [vmem:[#allocation3 + $0x48] sm:$0xc0]
        %v5475 = vld [vmem:[#allocation3 + $0x50] sm:$0xf]
        %v5476 = vld [vmem:[#allocation3 + $0x58] sm:$0xf]
        %v5477 = vld [vmem:[#allocation3 + $0x60] sm:$0xc0]
        %v5478 = vld [vmem:[#allocation3 + $0x68] sm:$0xc0]
        %v5479 = vld [vmem:[#allocation3 + $0x70] sm:$0xf]
        %v5480 = vld [vmem:[#allocation3 + $0x78] sm:$0xf]
        %v5481 = vld [vmem:[#allocation3 + $0x80] sm:$0xc0]
        %v5482 = vld [vmem:[#allocation3 + $0x88] sm:$0xc0]
        %v5483 = vld [vmem:[#allocation3 + $0x90] sm:$0xf]
        %v5484 = vld [vmem:[#allocation3 + $0x98] sm:$0xf]
        %v5485 = vld [vmem:[#allocation3 + $0xa0] sm:$0xc0]
        %v5486 = vld [vmem:[#allocation3 + $0xa8] sm:$0xc0]
        %v5487 = vld [vmem:[#allocation3 + $0xb0] sm:$0xf]
        %v5488 = vld [vmem:[#allocation3 + $0xb8] sm:$0xf]
        %5513 = vst.sshfl [vmem:[#allocation1] sm:$0xff pattern:$0x73625140] %v5465
        %5514 = vst.sshfl [vmem:[#allocation1 + $0x8] sm:$0xff pattern:$0x73625140] %v5466
        %5515 = vst.sshfl [vmem:[#allocation1 + $0x20] sm:$0xff pattern:$0x73625140] %v5467
        %5516 = vst.sshfl [vmem:[#allocation1 + $0x28] sm:$0xff pattern:$0x73625140] %v5468
        %s5517 = scalar_lea.vmem [#allocation1], 3
        %v5518 = vld [vmem:[%s5517] ss:$4 sm:$0xff]
        %s5519 = scalar_lea.vmem [#allocation1], 32
        %v5520 = vld [vmem:[%s5519] ss:$4 sm:$0xff]
        %s5521 = scalar_lea.vmem [#allocation1], 33
        %v5522 = vld [vmem:[%s5521] ss:$4 sm:$0xff]
        %5523 = vst.sshfl [vmem:[#allocation1] sm:$0xff pattern:$0x73625140] %v5469
        %5524 = vst.sshfl [vmem:[#allocation1 + $0x8] sm:$0xff pattern:$0x73625140] %v5470
        %5525 = vst.sshfl [vmem:[#allocation1 + $0x20] sm:$0xff pattern:$0x73625140] %v5471
        %5526 = vst.sshfl [vmem:[#allocation1 + $0x28] sm:$0xff pattern:$0x73625140] %v5472
        %v5527 = vld [vmem:[%s5517] ss:$4 sm:$0xff]
        %v5528 = vld [vmem:[%s5519] ss:$4 sm:$0xff]
        %v5529 = vld [vmem:[%s5521] ss:$4 sm:$0xff]
        %5530 = vst.sshfl [vmem:[#allocation1] sm:$0xff pattern:$0x73625140] %v5473
        %5531 = vst.sshfl [vmem:[#allocation1 + $0x8] sm:$0xff pattern:$0x73625140] %v5474
        %5532 = vst.sshfl [vmem:[#allocation1 + $0x20] sm:$0xff pattern:$0x73625140] %v5475
        %5533 = vst.sshfl [vmem:[#allocation1 + $0x28] sm:$0xff pattern:$0x73625140] %v5476
        %v5534 = vld [vmem:[%s5517] ss:$4 sm:$0xff]
        %v5535 = vld [vmem:[%s5519] ss:$4 sm:$0xff]
        %v5536 = vld [vmem:[%s5521] ss:$4 sm:$0xff]
        %5537 = vst.sshfl [vmem:[#allocation1] sm:$0xff pattern:$0x73625140] %v5477
        %5538 = vst.sshfl [vmem:[#allocation1 + $0x8] sm:$0xff pattern:$0x73625140] %v5478
        %5539 = vst.sshfl [vmem:[#allocation1 + $0x20] sm:$0xff pattern:$0x73625140] %v5479
        %5540 = vst.sshfl [vmem:[#allocation1 + $0x28] sm:$0xff pattern:$0x73625140] %v5480
        %v5541 = vld [vmem:[%s5517] ss:$4 sm:$0xff]
        %v5542 = vld [vmem:[%s5519] ss:$4 sm:$0xff]
        %v5543 = vld [vmem:[%s5521] ss:$4 sm:$0xff]
        %5544 = vst.sshfl [vmem:[#allocation1] sm:$0xff pattern:$0x73625140] %v5481
        %5545 = vst.sshfl [vmem:[#allocation1 + $0x8] sm:$0xff pattern:$0x73625140] %v5482
        %5546 = vst.sshfl [vmem:[#allocation1 + $0x20] sm:$0xff pattern:$0x73625140] %v5483
        %5547 = vst.sshfl [vmem:[#allocation1 + $0x28] sm:$0xff pattern:$0x73625140] %v5484
        %v5548 = vld [vmem:[%s5517] ss:$4 sm:$0xff]
        %v5549 = vld [vmem:[%s5519] ss:$4 sm:$0xff]
        %v5550 = vld [vmem:[%s5521] ss:$4 sm:$0xff]
        %5551 = vst.sshfl [vmem:[#allocation1] sm:$0xff pattern:$0x73625140] %v5485
        %5552 = vst.sshfl [vmem:[#allocation1 + $0x8] sm:$0xff pattern:$0x73625140] %v5486
        %5553 = vst.sshfl [vmem:[#allocation1 + $0x20] sm:$0xff pattern:$0x73625140] %v5487
        %5554 = vst.sshfl [vmem:[#allocation1 + $0x28] sm:$0xff pattern:$0x73625140] %v5488
        %v5555 = vld [vmem:[%s5517] ss:$4 sm:$0xff]
        %v5556 = vld [vmem:[%s5519] ss:$4 sm:$0xff]
        %v5557 = vld [vmem:[%s5521] ss:$4 sm:$0xff]
        %5558 = vst [vmem:[#allocation1] ss:$4 sm:$0xff] %v5518
        %s5559 = scalar_lea.vmem [#allocation1], 1
        %5560 = vst [vmem:[%s5559] ss:$4 sm:$0xff] %v5520
        %s5561 = scalar_lea.vmem [#allocation1], 2
        %5562 = vst [vmem:[%s5561] ss:$4 sm:$0xff] %v5522
        %s5563 = scalar_lea.vmem [#allocation1], 3
        %5564 = vst [vmem:[%s5563] ss:$4 sm:$0xff] %v5527
        %s5565 = scalar_lea.vmem [#allocation1], 32
        %5566 = vst [vmem:[%s5565] ss:$4 sm:$0xff] %v5528
        %s5567 = scalar_lea.vmem [#allocation1], 33
        %5568 = vst [vmem:[%s5567] ss:$4 sm:$0xff] %v5529
        %s5569 = scalar_lea.vmem [#allocation1], 34
        %5570 = vst [vmem:[%s5569] ss:$4 sm:$0xff] %v5534
        %s5571 = scalar_lea.vmem [#allocation1], 35
        %5572 = vst [vmem:[%s5571] ss:$4 sm:$0xff] %v5535
        %v5573 = vld.sshfl [vmem:[#allocation1] sm:$0xff pattern:$0x73625140]
        %v5574 = vld.sshfl [vmem:[#allocation1 + $0x8] sm:$0xff pattern:$0x73625140]
        %v5575 = vld.sshfl [vmem:[#allocation1 + $0x20] sm:$0xff pattern:$0x73625140]
        %v5576 = vld.sshfl [vmem:[#allocation1 + $0x28] sm:$0xff pattern:$0x73625140]
        %5577 = vst [vmem:[#allocation1] ss:$4 sm:$0xff] %v5536
        %5578 = vst [vmem:[%s5559] ss:$4 sm:$0xff] %v5541
        %5579 = vst [vmem:[%s5561] ss:$4 sm:$0xff] %v5542
        %5580 = vst [vmem:[%s5563] ss:$4 sm:$0xff] %v5543
        %5581 = vst [vmem:[%s5565] ss:$4 sm:$0xff] %v5548
        %5582 = vst [vmem:[%s5567] ss:$4 sm:$0xff] %v5549
        %5583 = vst [vmem:[%s5569] ss:$4 sm:$0xff] %v5550
        %5584 = vst [vmem:[%s5571] ss:$4 sm:$0xff] %v5555
        %v5585 = vld.sshfl [vmem:[#allocation1] sm:$0xff pattern:$0x73625140]
        %v5586 = vld.sshfl [vmem:[#allocation1 + $0x8] sm:$0xff pattern:$0x73625140]
        %v5587 = vld.sshfl [vmem:[#allocation1 + $0x20] sm:$0xff pattern:$0x73625140]
        %v5588 = vld.sshfl [vmem:[#allocation1 + $0x28] sm:$0xff pattern:$0x73625140]
        %5589 = vst [vmem:[#allocation1] ss:$4 sm:$0xff] %v5556
        %5590 = vst [vmem:[%s5559] ss:$4 sm:$0xff] %v5557
        %v5591 = vld.sshfl [vmem:[#allocation1] sm:$0xff pattern:$0x73625140]
        %v5592 = vld.sshfl [vmem:[#allocation1 + $0x8] sm:$0xff pattern:$0x73625140]
        %v5603 = vpack.c.bf16 %v5575, %v5573
        %v5604 = vpack.c.bf16 %v5576, %v5574
        %v5605 = vpack.c.bf16 %v5587, %v5585
        %v5606 = vpack.c.bf16 %v5588, %v5586
        %v5607 = vpack.c.bf16 %v5591, %v5591
        %v5608 = vpack.c.bf16 %v5592, %v5592
        %s5609 = scalar_lea.vmem %s5, 960
        %v5610 = vld [vmem:[%s5609] sm:$0xff]
        %v5611 = vld [vmem:[%s5609 + $0x8] sm:$0xff]
        %v5612 = vld [vmem:[%s5609 + $0x10] sm:$0xff]
        %v5613 = vld [vmem:[%s5609 + $0x18] sm:$0xff]
        %v5614 = vld [vmem:[%s5609 + $0x20] sm:$0xff]
        %v5615 = vld [vmem:[%s5609 + $0x28] sm:$0xff]
        %v5616 = vld [vmem:[%s5609 + $0x30] sm:$0xff]
        %v5617 = vld [vmem:[%s5609 + $0x38] sm:$0xff]
        %v5618 = vld [vmem:[%s5609 + $0x40] sm:$0xff]
        %v5619 = vld [vmem:[%s5609 + $0x48] sm:$0xff]
        %v5620 = vld [vmem:[%s5609 + $0x50] sm:$0xff]
        %v5621 = vld [vmem:[%s5609 + $0x58] sm:$0xff]
        %v5622 = vld [vmem:[%s5609 + $0x60] sm:$0xff]
        %v5623 = vld [vmem:[%s5609 + $0x68] sm:$0xff]
        %v5624 = vld [vmem:[%s5609 + $0x70] sm:$0xff]
        %v5625 = vld [vmem:[%s5609 + $0x78] sm:$0xff]
        %v5626 = vld [vmem:[%s5609 + $0x80] sm:$0xff]
        %v5627 = vld [vmem:[%s5609 + $0x88] sm:$0xff]
        %v5628 = vld [vmem:[%s5609 + $0x90] sm:$0xff]
        %v5629 = vld [vmem:[%s5609 + $0x98] sm:$0xff]
        %v5650 = vunpack.c.l.b16 %v5610
        %v5651 = vunpack.c.h.b16 %v5610
        %v5652 = vunpack.c.l.b16 %v5611
        %v5653 = vunpack.c.h.b16 %v5611
        %v5654 = vunpack.c.l.b16 %v5612
        %v5655 = vunpack.c.h.b16 %v5612
        %v5656 = vunpack.c.l.b16 %v5613
        %v5657 = vunpack.c.h.b16 %v5613
        %v5658 = vunpack.c.l.b16 %v5614
        %v5659 = vunpack.c.h.b16 %v5614
        %v5660 = vunpack.c.l.b16 %v5615
        %v5661 = vunpack.c.h.b16 %v5615
        %v5662 = vunpack.c.l.b16 %v5616
        %v5663 = vunpack.c.h.b16 %v5616
        %v5664 = vunpack.c.l.b16 %v5617
        %v5665 = vunpack.c.h.b16 %v5617
        %v5666 = vunpack.c.l.b16 %v5618
        %v5667 = vunpack.c.h.b16 %v5618
        %v5668 = vunpack.c.l.b16 %v5619
        %v5669 = vunpack.c.h.b16 %v5619
        %v5670 = vunpack.c.l.b16 %v5620
        %v5671 = vunpack.c.h.b16 %v5620
        %v5672 = vunpack.c.l.b16 %v5621
        %v5673 = vunpack.c.h.b16 %v5621
        %v5674 = vunpack.c.l.b16 %v5622
        %v5675 = vunpack.c.h.b16 %v5622
        %v5676 = vunpack.c.l.b16 %v5623
        %v5677 = vunpack.c.h.b16 %v5623
        %v5678 = vunpack.c.l.b16 %v5624
        %v5679 = vunpack.c.h.b16 %v5624
        %v5680 = vunpack.c.l.b16 %v5625
        %v5681 = vunpack.c.h.b16 %v5625
        %v5682 = vunpack.c.l.b16 %v5626
        %v5683 = vunpack.c.h.b16 %v5626
        %v5684 = vunpack.c.l.b16 %v5627
        %v5685 = vunpack.c.h.b16 %v5627
        %v5686 = vunpack.c.l.b16 %v5628
        %v5687 = vunpack.c.h.b16 %v5628
        %v5688 = vunpack.c.l.b16 %v5629
        %v5689 = vunpack.c.h.b16 %v5629
        %v5690 = vpack.c.b16 %v5652, %v5650
        %v5691 = vpack.c.b16 %v5653, %v5651
        %v5692 = vpack.c.b16 %v5656, %v5654
        %v5693 = vpack.c.b16 %v5657, %v5655
        %v5694 = vpack.c.b16 %v5660, %v5658
        %v5695 = vpack.c.b16 %v5661, %v5659
        %v5696 = vpack.c.b16 %v5664, %v5662
        %v5697 = vpack.c.b16 %v5665, %v5663
        %v5698 = vpack.c.b16 %v5668, %v5666
        %v5699 = vpack.c.b16 %v5669, %v5667
        %v5700 = vpack.c.b16 %v5672, %v5670
        %v5701 = vpack.c.b16 %v5673, %v5671
        %v5702 = vpack.c.b16 %v5676, %v5674
        %v5703 = vpack.c.b16 %v5677, %v5675
        %v5704 = vpack.c.b16 %v5680, %v5678
        %v5705 = vpack.c.b16 %v5681, %v5679
        %v5706 = vpack.c.b16 %v5684, %v5682
        %v5707 = vpack.c.b16 %v5685, %v5683
        %v5708 = vpack.c.b16 %v5688, %v5686
        %v5709 = vpack.c.b16 %v5689, %v5687
        %v5731 = vsel %vm2912, %v5604, 0
        %v5734 = vsel %vm2912, %v5606, 0
        %v5737 = vsel %vm2912, %v5608, 0
        %5739 = vmatpush.bf16.msra.mxu0 %v5704
        %5740 = vmatpush.bf16.msra.mxu0 %v5702
        %5741 = vmatpush.bf16.msra.mxu0 %v5700
        %5742 = vmatpush.bf16.msra.mxu0 %v5698
        %5743 = vmatpush.bf16.msra.mxu0 %v5696
        %5744 = vmatpush.bf16.msra.mxu0 %v5694
        %5745 = vmatpush.bf16.msra.mxu0 %v5692
        %5746 = vmatpush.bf16.msra.mxu0 %v5690
        %5747 = vmatmul.bf16.gmra.mxu0 %v5603
        %v5748 = vpop.f32.mrf.mxu0
        %v5749 = vadd.f32 0.0, %v5748
        %v5750 = vpop.f32.mrf.mxu0
        %v5751 = vadd.f32 0.0, %v5750
        %5752 = vmatmul.bf16.gmra.mxu0 %v5605
        %v5753 = vpop.f32.mrf.mxu0
        %v5754 = vadd.f32 0.0, %v5753
        %v5755 = vpop.f32.mrf.mxu0
        %v5756 = vadd.f32 0.0, %v5755
        %5757 = vmatmul.bf16.gmra.mxu0 %v5607
        %v5758 = vpop.f32.mrf.mxu0
        %v5759 = vadd.f32 0.0, %v5758
        %v5760 = vpop.f32.mrf.mxu0
        %5761 = vdwg.mxu0
        %5762 = vmatpush.bf16.msra.mxu0 0
        %5763 = vmatpush.bf16.msra.mxu0 0
        %5764 = vmatpush.bf16.msra.mxu0 0
        %5765 = vmatpush.bf16.msra.mxu0 0
        %5766 = vmatpush.bf16.msra.mxu0 0
        %5767 = vmatpush.bf16.msra.mxu0 0
        %5768 = vmatpush.bf16.msra.mxu0 %v5708
        %5769 = vmatpush.bf16.msra.mxu0 %v5706
        %5770 = vmatmul.bf16.gmra.mxu0 %v5731
        %v5771 = vpop.f32.mrf.mxu0
        %v5772 = vadd.f32 %v5749, %v5771
        %v5773 = vpop.f32.mrf.mxu0
        %v5774 = vadd.f32 %v5751, %v5773
        %5775 = vmatmul.bf16.gmra.mxu0 %v5734
        %v5776 = vpop.f32.mrf.mxu0
        %v5777 = vadd.f32 %v5754, %v5776
        %v5778 = vpop.f32.mrf.mxu0
        %v5779 = vadd.f32 %v5756, %v5778
        %5780 = vmatmul.bf16.gmra.mxu0 %v5737
        %v5781 = vpop.f32.mrf.mxu0
        %v5782 = vadd.f32 %v5759, %v5781
        %v5783 = vpop.f32.mrf.mxu0
        %5784 = vdwg.mxu0
        %5785 = vmatpush.bf16.msra.mxu0 %v5705
        %5786 = vmatpush.bf16.msra.mxu0 %v5703
        %5787 = vmatpush.bf16.msra.mxu0 %v5701
        %5788 = vmatpush.bf16.msra.mxu0 %v5699
        %5789 = vmatpush.bf16.msra.mxu0 %v5697
        %5790 = vmatpush.bf16.msra.mxu0 %v5695
        %5791 = vmatpush.bf16.msra.mxu0 %v5693
        %5792 = vmatpush.bf16.msra.mxu0 %v5691
        %5793 = vmatmul.bf16.gmra.mxu0 %v5603
        %v5794 = vpop.f32.mrf.mxu0
        %v5795 = vadd.f32 0.0, %v5794
        %v5796 = vpop.f32.mrf.mxu0
        %v5797 = vadd.f32 0.0, %v5796
        %5798 = vmatmul.bf16.gmra.mxu0 %v5605
        %v5799 = vpop.f32.mrf.mxu0
        %v5800 = vadd.f32 0.0, %v5799
        %v5801 = vpop.f32.mrf.mxu0
        %v5802 = vadd.f32 0.0, %v5801
        %5803 = vmatmul.bf16.gmra.mxu0 %v5607
        %v5804 = vpop.f32.mrf.mxu0
        %v5805 = vadd.f32 0.0, %v5804
        %v5806 = vpop.f32.mrf.mxu0
        %5807 = vdwg.mxu0
        %5808 = vmatpush.bf16.msra.mxu0 0
        %5809 = vmatpush.bf16.msra.mxu0 0
        %5810 = vmatpush.bf16.msra.mxu0 0
        %5811 = vmatpush.bf16.msra.mxu0 0
        %5812 = vmatpush.bf16.msra.mxu0 0
        %5813 = vmatpush.bf16.msra.mxu0 0
        %5814 = vmatpush.bf16.msra.mxu0 %v5709
        %5815 = vmatpush.bf16.msra.mxu0 %v5707
        %5816 = vmatmul.bf16.gmra.mxu0 %v5731
        %v5817 = vpop.f32.mrf.mxu0
        %v5818 = vadd.f32 %v5795, %v5817
        %v5819 = vpop.f32.mrf.mxu0
        %v5820 = vadd.f32 %v5797, %v5819
        %5821 = vmatmul.bf16.gmra.mxu0 %v5734
        %v5822 = vpop.f32.mrf.mxu0
        %v5823 = vadd.f32 %v5800, %v5822
        %v5824 = vpop.f32.mrf.mxu0
        %v5825 = vadd.f32 %v5802, %v5824
        %5826 = vmatmul.bf16.gmra.mxu0 %v5737
        %v5827 = vpop.f32.mrf.mxu0
        %v5828 = vadd.f32 %v5805, %v5827
        %v5829 = vpop.f32.mrf.mxu0
        %5830 = vdwg.mxu0
        %v5831 = vadd.f32 %v5455, %v5772
        %v5832 = vadd.f32 %v5456, %v5818
        %v5833 = vadd.f32 %v5457, %v5774
        %v5834 = vadd.f32 %v5458, %v5820
        %v5835 = vadd.f32 %v5459, %v5777
        %v5836 = vadd.f32 %v5460, %v5823
        %v5837 = vadd.f32 %v5461, %v5779
        %v5838 = vadd.f32 %v5462, %v5825
        %v5839 = vadd.f32 %v5463, %v5782
        %v5840 = vadd.f32 %v5464, %v5828
        %v5841 = vld [vmem:[#allocation8] sm:$0xff]
        %v5842 = vld [vmem:[#allocation8 + $0x8] sm:$0xff]
        %v5843 = vld [vmem:[#allocation8 + $0x10] sm:$0xff]
        %v5844 = vld [vmem:[#allocation8 + $0x18] sm:$0xff]
        %v5845 = vld [vmem:[#allocation8 + $0x20] sm:$0xff]
        %v5846 = vld [vmem:[#allocation8 + $0x28] sm:$0xff]
        %v5847 = vld [vmem:[#allocation8 + $0x30] sm:$0xff]
        %v5848 = vld [vmem:[#allocation8 + $0x38] sm:$0xff]
        %v5849 = vld [vmem:[#allocation8 + $0x40] sm:$0xff]
        %v5850 = vld [vmem:[#allocation8 + $0x48] sm:$0xff]
        %v5851 = vld [vmem:[#allocation8 + $0x50] sm:$0xff]
        %v5852 = vld [vmem:[#allocation8 + $0x58] sm:$0xff]
        %v5853 = vld [vmem:[#allocation8 + $0x60] sm:$0xff]
        %v5854 = vld [vmem:[#allocation8 + $0x68] sm:$0xff]
        %v5855 = vld [vmem:[#allocation8 + $0x70] sm:$0xff]
        %v5856 = vld [vmem:[#allocation8 + $0x78] sm:$0xff]
        %v5857 = vld [vmem:[#allocation8 + $0x80] sm:$0xff]
        %v5858 = vld [vmem:[#allocation8 + $0x88] sm:$0xff]
        %v5859 = vld [vmem:[#allocation8 + $0x90] sm:$0xff]
        %v5860 = vld [vmem:[#allocation8 + $0x98] sm:$0xff]
        %v5861 = vld [vmem:[#allocation8 + $0xa0] sm:$0xff]
        %v5862 = vld [vmem:[#allocation8 + $0xa8] sm:$0xff]
        %v5863 = vld [vmem:[#allocation8 + $0xb0] sm:$0xff]
        %v5864 = vld [vmem:[#allocation8 + $0xb8] sm:$0xff]
        %v5865 = vld [vmem:[#allocation8 + $0xc0] sm:$0xff]
        %v5866 = vld [vmem:[#allocation8 + $0xc8] sm:$0xff]
        %v5867 = vld [vmem:[#allocation8 + $0xd0] sm:$0xff]
        %v5868 = vld [vmem:[#allocation8 + $0xd8] sm:$0xff]
        %v5869 = vld [vmem:[#allocation8 + $0xe0] sm:$0xff]
        %v5870 = vld [vmem:[#allocation8 + $0xe8] sm:$0xff]
        %v5871 = vld [vmem:[#allocation8 + $0xf0] sm:$0xff]
        %v5872 = vld [vmem:[#allocation8 + $0xf8] sm:$0xff]
        %v5873 = vld [vmem:[#allocation8 + $0x100] sm:$0xff]
        %v5874 = vld [vmem:[#allocation8 + $0x108] sm:$0xff]
        %v5875 = vld [vmem:[#allocation8 + $0x110] sm:$0xff]
        %v5876 = vld [vmem:[#allocation8 + $0x118] sm:$0xff]
        %v5877 = vld [vmem:[#allocation8 + $0x120] sm:$0xff]
        %v5878 = vld [vmem:[#allocation8 + $0x128] sm:$0xff]
        %v5879 = vld [vmem:[#allocation8 + $0x130] sm:$0xff]
        %v5880 = vld [vmem:[#allocation8 + $0x138] sm:$0xff]
        %v5881 = vld [vmem:[#allocation8 + $0x140] sm:$0xff]
        %v5882 = vld [vmem:[#allocation8 + $0x148] sm:$0xff]
        %v5883 = vld [vmem:[#allocation8 + $0x150] sm:$0xff]
        %v5884 = vld [vmem:[#allocation8 + $0x158] sm:$0xff]
        %v5885 = vld [vmem:[#allocation8 + $0x160] sm:$0xff]
        %v5886 = vld [vmem:[#allocation8 + $0x168] sm:$0xff]
        %v5887 = vld [vmem:[#allocation8 + $0x170] sm:$0xff]
        %v5888 = vld [vmem:[#allocation8 + $0x178] sm:$0xff]
        %v5889 = vld [vmem:[#allocation8 + $0x180] sm:$0xff]
        %v5890 = vld [vmem:[#allocation8 + $0x188] sm:$0xff]
        %v5891 = vld [vmem:[#allocation8 + $0x190] sm:$0xff]
        %v5892 = vld [vmem:[#allocation8 + $0x198] sm:$0xff]
        %v5893 = vld [vmem:[#allocation8 + $0x1a0] sm:$0xff]
        %v5894 = vld [vmem:[#allocation8 + $0x1a8] sm:$0xff]
        %v5895 = vld [vmem:[#allocation8 + $0x1b0] sm:$0xff]
        %v5896 = vld [vmem:[#allocation8 + $0x1b8] sm:$0xff]
        %v5897 = vld [vmem:[#allocation8 + $0x1c0] sm:$0xff]
        %v5898 = vld [vmem:[#allocation8 + $0x1c8] sm:$0xff]
        %v5899 = vld [vmem:[#allocation8 + $0x1d0] sm:$0xff]
        %v5900 = vld [vmem:[#allocation8 + $0x1d8] sm:$0xff]
        %v5901 = vld [vmem:[#allocation8 + $0x1e0] sm:$0xff]
        %v5902 = vld [vmem:[#allocation8 + $0x1e8] sm:$0xff]
        %v5903 = vld [vmem:[#allocation8 + $0x1f0] sm:$0xff]
        %v5904 = vld [vmem:[#allocation8 + $0x1f8] sm:$0xff]
        %v5905 = vld [vmem:[#allocation8 + $0x200] sm:$0xff]
        %v5906 = vld [vmem:[#allocation8 + $0x208] sm:$0xff]
        %v5907 = vld [vmem:[#allocation8 + $0x210] sm:$0xff]
        %v5908 = vld [vmem:[#allocation8 + $0x218] sm:$0xff]
        %v5909 = vld [vmem:[#allocation8 + $0x220] sm:$0xff]
        %v5910 = vld [vmem:[#allocation8 + $0x228] sm:$0xff]
        %v5911 = vld [vmem:[#allocation8 + $0x230] sm:$0xff]
        %v5912 = vld [vmem:[#allocation8 + $0x238] sm:$0xff]
        %v5913 = vld [vmem:[#allocation8 + $0x240] sm:$0xff]
        %v5914 = vld [vmem:[#allocation8 + $0x248] sm:$0xff]
        %v5915 = vld [vmem:[#allocation8 + $0x250] sm:$0xff]
        %v5916 = vld [vmem:[#allocation8 + $0x258] sm:$0xff]
        %v5917 = vld [vmem:[#allocation8 + $0x260] sm:$0xff]
        %v5918 = vld [vmem:[#allocation8 + $0x268] sm:$0xff]
        %v5919 = vld [vmem:[#allocation8 + $0x270] sm:$0xff]
        %v5920 = vld [vmem:[#allocation8 + $0x278] sm:$0xff]
        %v5921 = vld [vmem:[#allocation8 + $0x280] sm:$0xff]
        %v5922 = vld [vmem:[#allocation8 + $0x288] sm:$0xff]
        %v5923 = vld [vmem:[#allocation8 + $0x290] sm:$0xff]
        %v5924 = vld [vmem:[#allocation8 + $0x298] sm:$0xff]
        %v5925 = vld [vmem:[#allocation8 + $0x2a0] sm:$0xff]
        %v5926 = vld [vmem:[#allocation8 + $0x2a8] sm:$0xff]
        %v5927 = vld [vmem:[#allocation8 + $0x2b0] sm:$0xff]
        %v5928 = vld [vmem:[#allocation8 + $0x2b8] sm:$0xff]
        %v5929 = vld [vmem:[#allocation8 + $0x2c0] sm:$0xff]
        %v5930 = vld [vmem:[#allocation8 + $0x2c8] sm:$0xff]
        %v5931 = vld [vmem:[#allocation8 + $0x2d0] sm:$0xff]
        %v5932 = vld [vmem:[#allocation8 + $0x2d8] sm:$0xff]
        %v5933 = vld [vmem:[#allocation8 + $0x2e0] sm:$0xff]
        %v5934 = vld [vmem:[#allocation8 + $0x2e8] sm:$0xff]
        %v5935 = vld [vmem:[#allocation8 + $0x2f0] sm:$0xff]
        %v5936 = vld [vmem:[#allocation8 + $0x2f8] sm:$0xff]
        %v5937 = vld [vmem:[#allocation8 + $0x300] sm:$0xff]
        %v5938 = vld [vmem:[#allocation8 + $0x308] sm:$0xff]
        %v5939 = vld [vmem:[#allocation8 + $0x310] sm:$0xff]
        %v5940 = vld [vmem:[#allocation8 + $0x318] sm:$0xff]
        %v5941 = vld [vmem:[#allocation8 + $0x320] sm:$0xff]
        %v5942 = vld [vmem:[#allocation8 + $0x328] sm:$0xff]
        %v5943 = vld [vmem:[#allocation8 + $0x330] sm:$0xff]
        %v5944 = vld [vmem:[#allocation8 + $0x338] sm:$0xff]
        %v5945 = vld [vmem:[#allocation8 + $0x340] sm:$0xff]
        %v5946 = vld [vmem:[#allocation8 + $0x348] sm:$0xff]
        %v5947 = vld [vmem:[#allocation8 + $0x350] sm:$0xff]
        %v5948 = vld [vmem:[#allocation8 + $0x358] sm:$0xff]
        %v5949 = vld [vmem:[#allocation8 + $0x360] sm:$0xff]
        %v5950 = vld [vmem:[#allocation8 + $0x368] sm:$0xff]
        %v5951 = vld [vmem:[#allocation8 + $0x370] sm:$0xff]
        %v5952 = vld [vmem:[#allocation8 + $0x378] sm:$0xff]
        %v5953 = vld [vmem:[#allocation8 + $0x380] sm:$0xff]
        %v5954 = vld [vmem:[#allocation8 + $0x388] sm:$0xff]
        %v5955 = vld [vmem:[#allocation8 + $0x390] sm:$0xff]
        %v5956 = vld [vmem:[#allocation8 + $0x398] sm:$0xff]
        %v5957 = vld [vmem:[#allocation8 + $0x3a0] sm:$0xff]
        %v5958 = vld [vmem:[#allocation8 + $0x3a8] sm:$0xff]
        %v5959 = vld [vmem:[#allocation8 + $0x3b0] sm:$0xff]
        %v5960 = vld [vmem:[#allocation8 + $0x3b8] sm:$0xff]
        %v5961 = vld [vmem:[#allocation8 + $0x3c0] sm:$0xff]
        %v5962 = vld [vmem:[#allocation8 + $0x3c8] sm:$0xff]
        %v5963 = vld [vmem:[#allocation8 + $0x3d0] sm:$0xff]
        %v5964 = vld [vmem:[#allocation8 + $0x3d8] sm:$0xff]
        %v5965 = vld [vmem:[#allocation8 + $0x3e0] sm:$0xff]
        %v5966 = vld [vmem:[#allocation8 + $0x3e8] sm:$0xff]
        %v5967 = vld [vmem:[#allocation8 + $0x3f0] sm:$0xff]
        %v5968 = vld [vmem:[#allocation8 + $0x3f8] sm:$0xff]
        %v5969 = vld [vmem:[%s8] sm:$0x3]
        %v5971 = vperm.slane %v5969, 0
        %v5972 = vperm.slane %v5969, 1
        %v6103 = vunpack.c.l.b16 %v5841
        %v6104 = vunpack.c.h.b16 %v5841
        %v6105 = vunpack.c.l.b16 %v5842
        %v6106 = vunpack.c.h.b16 %v5842
        %v6107 = vunpack.c.l.b16 %v5843
        %v6108 = vunpack.c.h.b16 %v5843
        %v6109 = vunpack.c.l.b16 %v5844
        %v6110 = vunpack.c.h.b16 %v5844
        %v6111 = vunpack.c.l.b16 %v5845
        %v6112 = vunpack.c.h.b16 %v5845
        %v6113 = vunpack.c.l.b16 %v5846
        %v6114 = vunpack.c.h.b16 %v5846
        %v6115 = vunpack.c.l.b16 %v5847
        %v6116 = vunpack.c.h.b16 %v5847
        %v6117 = vunpack.c.l.b16 %v5848
        %v6118 = vunpack.c.h.b16 %v5848
        %v6119 = vunpack.c.l.b16 %v5849
        %v6120 = vunpack.c.h.b16 %v5849
        %v6121 = vunpack.c.l.b16 %v5850
        %v6122 = vunpack.c.h.b16 %v5850
        %v6123 = vunpack.c.l.b16 %v5851
        %v6124 = vunpack.c.h.b16 %v5851
        %v6125 = vunpack.c.l.b16 %v5852
        %v6126 = vunpack.c.h.b16 %v5852
        %v6127 = vunpack.c.l.b16 %v5853
        %v6128 = vunpack.c.h.b16 %v5853
        %v6129 = vunpack.c.l.b16 %v5854
        %v6130 = vunpack.c.h.b16 %v5854
        %v6131 = vunpack.c.l.b16 %v5855
        %v6132 = vunpack.c.h.b16 %v5855
        %v6133 = vunpack.c.l.b16 %v5856
        %v6134 = vunpack.c.h.b16 %v5856
        %v6135 = vunpack.c.l.b16 %v5857
        %v6136 = vunpack.c.h.b16 %v5857
        %v6137 = vunpack.c.l.b16 %v5858
        %v6138 = vunpack.c.h.b16 %v5858
        %v6139 = vunpack.c.l.b16 %v5859
        %v6140 = vunpack.c.h.b16 %v5859
        %v6141 = vunpack.c.l.b16 %v5860
        %v6142 = vunpack.c.h.b16 %v5860
        %v6143 = vunpack.c.l.b16 %v5861
        %v6144 = vunpack.c.h.b16 %v5861
        %v6145 = vunpack.c.l.b16 %v5862
        %v6146 = vunpack.c.h.b16 %v5862
        %v6147 = vunpack.c.l.b16 %v5863
        %v6148 = vunpack.c.h.b16 %v5863
        %v6149 = vunpack.c.l.b16 %v5864
        %v6150 = vunpack.c.h.b16 %v5864
        %v6151 = vunpack.c.l.b16 %v5865
        %v6152 = vunpack.c.h.b16 %v5865
        %v6153 = vunpack.c.l.b16 %v5866
        %v6154 = vunpack.c.h.b16 %v5866
        %v6155 = vunpack.c.l.b16 %v5867
        %v6156 = vunpack.c.h.b16 %v5867
        %v6157 = vunpack.c.l.b16 %v5868
        %v6158 = vunpack.c.h.b16 %v5868
        %v6159 = vunpack.c.l.b16 %v5869
        %v6160 = vunpack.c.h.b16 %v5869
        %v6161 = vunpack.c.l.b16 %v5870
        %v6162 = vunpack.c.h.b16 %v5870
        %v6163 = vunpack.c.l.b16 %v5871
        %v6164 = vunpack.c.h.b16 %v5871
        %v6165 = vunpack.c.l.b16 %v5872
        %v6166 = vunpack.c.h.b16 %v5872
        %v6167 = vunpack.c.l.b16 %v5873
        %v6168 = vunpack.c.h.b16 %v5873
        %v6169 = vunpack.c.l.b16 %v5874
        %v6170 = vunpack.c.h.b16 %v5874
        %v6171 = vunpack.c.l.b16 %v5875
        %v6172 = vunpack.c.h.b16 %v5875
        %v6173 = vunpack.c.l.b16 %v5876
        %v6174 = vunpack.c.h.b16 %v5876
        %v6175 = vunpack.c.l.b16 %v5877
        %v6176 = vunpack.c.h.b16 %v5877
        %v6177 = vunpack.c.l.b16 %v5878
        %v6178 = vunpack.c.h.b16 %v5878
        %v6179 = vunpack.c.l.b16 %v5879
        %v6180 = vunpack.c.h.b16 %v5879
        %v6181 = vunpack.c.l.b16 %v5880
        %v6182 = vunpack.c.h.b16 %v5880
        %v6183 = vunpack.c.l.b16 %v5881
        %v6184 = vunpack.c.h.b16 %v5881
        %v6185 = vunpack.c.l.b16 %v5882
        %v6186 = vunpack.c.h.b16 %v5882
        %v6187 = vunpack.c.l.b16 %v5883
        %v6188 = vunpack.c.h.b16 %v5883
        %v6189 = vunpack.c.l.b16 %v5884
        %v6190 = vunpack.c.h.b16 %v5884
        %v6191 = vunpack.c.l.b16 %v5885
        %v6192 = vunpack.c.h.b16 %v5885
        %v6193 = vunpack.c.l.b16 %v5886
        %v6194 = vunpack.c.h.b16 %v5886
        %v6195 = vunpack.c.l.b16 %v5887
        %v6196 = vunpack.c.h.b16 %v5887
        %v6197 = vunpack.c.l.b16 %v5888
        %v6198 = vunpack.c.h.b16 %v5888
        %v6199 = vunpack.c.l.b16 %v5889
        %v6200 = vunpack.c.h.b16 %v5889
        %v6201 = vunpack.c.l.b16 %v5890
        %v6202 = vunpack.c.h.b16 %v5890
        %v6203 = vunpack.c.l.b16 %v5891
        %v6204 = vunpack.c.h.b16 %v5891
        %v6205 = vunpack.c.l.b16 %v5892
        %v6206 = vunpack.c.h.b16 %v5892
        %v6207 = vunpack.c.l.b16 %v5893
        %v6208 = vunpack.c.h.b16 %v5893
        %v6209 = vunpack.c.l.b16 %v5894
        %v6210 = vunpack.c.h.b16 %v5894
        %v6211 = vunpack.c.l.b16 %v5895
        %v6212 = vunpack.c.h.b16 %v5895
        %v6213 = vunpack.c.l.b16 %v5896
        %v6214 = vunpack.c.h.b16 %v5896
        %v6215 = vunpack.c.l.b16 %v5897
        %v6216 = vunpack.c.h.b16 %v5897
        %v6217 = vunpack.c.l.b16 %v5898
        %v6218 = vunpack.c.h.b16 %v5898
        %v6219 = vunpack.c.l.b16 %v5899
        %v6220 = vunpack.c.h.b16 %v5899
        %v6221 = vunpack.c.l.b16 %v5900
        %v6222 = vunpack.c.h.b16 %v5900
        %v6223 = vunpack.c.l.b16 %v5901
        %v6224 = vunpack.c.h.b16 %v5901
        %v6225 = vunpack.c.l.b16 %v5902
        %v6226 = vunpack.c.h.b16 %v5902
        %v6227 = vunpack.c.l.b16 %v5903
        %v6228 = vunpack.c.h.b16 %v5903
        %v6229 = vunpack.c.l.b16 %v5904
        %v6230 = vunpack.c.h.b16 %v5904
        %v6231 = vunpack.c.l.b16 %v5905
        %v6232 = vunpack.c.h.b16 %v5905
        %v6233 = vunpack.c.l.b16 %v5906
        %v6234 = vunpack.c.h.b16 %v5906
        %v6235 = vunpack.c.l.b16 %v5907
        %v6236 = vunpack.c.h.b16 %v5907
        %v6237 = vunpack.c.l.b16 %v5908
        %v6238 = vunpack.c.h.b16 %v5908
        %v6239 = vunpack.c.l.b16 %v5909
        %v6240 = vunpack.c.h.b16 %v5909
        %v6241 = vunpack.c.l.b16 %v5910
        %v6242 = vunpack.c.h.b16 %v5910
        %v6243 = vunpack.c.l.b16 %v5911
        %v6244 = vunpack.c.h.b16 %v5911
        %v6245 = vunpack.c.l.b16 %v5912
        %v6246 = vunpack.c.h.b16 %v5912
        %v6247 = vunpack.c.l.b16 %v5913
        %v6248 = vunpack.c.h.b16 %v5913
        %v6249 = vunpack.c.l.b16 %v5914
        %v6250 = vunpack.c.h.b16 %v5914
        %v6251 = vunpack.c.l.b16 %v5915
        %v6252 = vunpack.c.h.b16 %v5915
        %v6253 = vunpack.c.l.b16 %v5916
        %v6254 = vunpack.c.h.b16 %v5916
        %v6255 = vunpack.c.l.b16 %v5917
        %v6256 = vunpack.c.h.b16 %v5917
        %v6257 = vunpack.c.l.b16 %v5918
        %v6258 = vunpack.c.h.b16 %v5918
        %v6259 = vunpack.c.l.b16 %v5919
        %v6260 = vunpack.c.h.b16 %v5919
        %v6261 = vunpack.c.l.b16 %v5920
        %v6262 = vunpack.c.h.b16 %v5920
        %v6263 = vunpack.c.l.b16 %v5921
        %v6264 = vunpack.c.h.b16 %v5921
        %v6265 = vunpack.c.l.b16 %v5922
        %v6266 = vunpack.c.h.b16 %v5922
        %v6267 = vunpack.c.l.b16 %v5923
        %v6268 = vunpack.c.h.b16 %v5923
        %v6269 = vunpack.c.l.b16 %v5924
        %v6270 = vunpack.c.h.b16 %v5924
        %v6271 = vunpack.c.l.b16 %v5925
        %v6272 = vunpack.c.h.b16 %v5925
        %v6273 = vunpack.c.l.b16 %v5926
        %v6274 = vunpack.c.h.b16 %v5926
        %v6275 = vunpack.c.l.b16 %v5927
        %v6276 = vunpack.c.h.b16 %v5927
        %v6277 = vunpack.c.l.b16 %v5928
        %v6278 = vunpack.c.h.b16 %v5928
        %v6279 = vunpack.c.l.b16 %v5929
        %v6280 = vunpack.c.h.b16 %v5929
        %v6281 = vunpack.c.l.b16 %v5930
        %v6282 = vunpack.c.h.b16 %v5930
        %v6283 = vunpack.c.l.b16 %v5931
        %v6284 = vunpack.c.h.b16 %v5931
        %v6285 = vunpack.c.l.b16 %v5932
        %v6286 = vunpack.c.h.b16 %v5932
        %v6287 = vunpack.c.l.b16 %v5933
        %v6288 = vunpack.c.h.b16 %v5933
        %v6289 = vunpack.c.l.b16 %v5934
        %v6290 = vunpack.c.h.b16 %v5934
        %v6291 = vunpack.c.l.b16 %v5935
        %v6292 = vunpack.c.h.b16 %v5935
        %v6293 = vunpack.c.l.b16 %v5936
        %v6294 = vunpack.c.h.b16 %v5936
        %v6295 = vunpack.c.l.b16 %v5937
        %v6296 = vunpack.c.h.b16 %v5937
        %v6297 = vunpack.c.l.b16 %v5938
        %v6298 = vunpack.c.h.b16 %v5938
        %v6299 = vunpack.c.l.b16 %v5939
        %v6300 = vunpack.c.h.b16 %v5939
        %v6301 = vunpack.c.l.b16 %v5940
        %v6302 = vunpack.c.h.b16 %v5940
        %v6303 = vunpack.c.l.b16 %v5941
        %v6304 = vunpack.c.h.b16 %v5941
        %v6305 = vunpack.c.l.b16 %v5942
        %v6306 = vunpack.c.h.b16 %v5942
        %v6307 = vunpack.c.l.b16 %v5943
        %v6308 = vunpack.c.h.b16 %v5943
        %v6309 = vunpack.c.l.b16 %v5944
        %v6310 = vunpack.c.h.b16 %v5944
        %v6311 = vunpack.c.l.b16 %v5945
        %v6312 = vunpack.c.h.b16 %v5945
        %v6313 = vunpack.c.l.b16 %v5946
        %v6314 = vunpack.c.h.b16 %v5946
        %v6315 = vunpack.c.l.b16 %v5947
        %v6316 = vunpack.c.h.b16 %v5947
        %v6317 = vunpack.c.l.b16 %v5948
        %v6318 = vunpack.c.h.b16 %v5948
        %v6319 = vunpack.c.l.b16 %v5949
        %v6320 = vunpack.c.h.b16 %v5949
        %v6321 = vunpack.c.l.b16 %v5950
        %v6322 = vunpack.c.h.b16 %v5950
        %v6323 = vunpack.c.l.b16 %v5951
        %v6324 = vunpack.c.h.b16 %v5951
        %v6325 = vunpack.c.l.b16 %v5952
        %v6326 = vunpack.c.h.b16 %v5952
        %v6327 = vunpack.c.l.b16 %v5953
        %v6328 = vunpack.c.h.b16 %v5953
        %v6329 = vunpack.c.l.b16 %v5954
        %v6330 = vunpack.c.h.b16 %v5954
        %v6331 = vunpack.c.l.b16 %v5955
        %v6332 = vunpack.c.h.b16 %v5955
        %v6333 = vunpack.c.l.b16 %v5956
        %v6334 = vunpack.c.h.b16 %v5956
        %v6335 = vunpack.c.l.b16 %v5957
        %v6336 = vunpack.c.h.b16 %v5957
        %v6337 = vunpack.c.l.b16 %v5958
        %v6338 = vunpack.c.h.b16 %v5958
        %v6339 = vunpack.c.l.b16 %v5959
        %v6340 = vunpack.c.h.b16 %v5959
        %v6341 = vunpack.c.l.b16 %v5960
        %v6342 = vunpack.c.h.b16 %v5960
        %v6343 = vunpack.c.l.b16 %v5961
        %v6344 = vunpack.c.h.b16 %v5961
        %v6345 = vunpack.c.l.b16 %v5962
        %v6346 = vunpack.c.h.b16 %v5962
        %v6347 = vunpack.c.l.b16 %v5963
        %v6348 = vunpack.c.h.b16 %v5963
        %v6349 = vunpack.c.l.b16 %v5964
        %v6350 = vunpack.c.h.b16 %v5964
        %v6351 = vunpack.c.l.b16 %v5965
        %v6352 = vunpack.c.h.b16 %v5965
        %v6353 = vunpack.c.l.b16 %v5966
        %v6354 = vunpack.c.h.b16 %v5966
        %v6355 = vunpack.c.l.b16 %v5967
        %v6356 = vunpack.c.h.b16 %v5967
        %v6357 = vunpack.c.l.b16 %v5968
        %v6358 = vunpack.c.h.b16 %v5968
        %v6359 = vpack.c.b16 %v6105, %v6103
        %v6360 = vpack.c.b16 %v6106, %v6104
        %v6361 = vpack.c.b16 %v6109, %v6107
        %v6362 = vpack.c.b16 %v6110, %v6108
        %v6363 = vpack.c.b16 %v6113, %v6111
        %v6364 = vpack.c.b16 %v6114, %v6112
        %v6365 = vpack.c.b16 %v6117, %v6115
        %v6366 = vpack.c.b16 %v6118, %v6116
        %v6367 = vpack.c.b16 %v6121, %v6119
        %v6368 = vpack.c.b16 %v6122, %v6120
        %v6369 = vpack.c.b16 %v6125, %v6123
        %v6370 = vpack.c.b16 %v6126, %v6124
        %v6371 = vpack.c.b16 %v6129, %v6127
        %v6372 = vpack.c.b16 %v6130, %v6128
        %v6373 = vpack.c.b16 %v6133, %v6131
        %v6374 = vpack.c.b16 %v6134, %v6132
        %v6375 = vpack.c.b16 %v6137, %v6135
        %v6376 = vpack.c.b16 %v6138, %v6136
        %v6377 = vpack.c.b16 %v6141, %v6139
        %v6378 = vpack.c.b16 %v6142, %v6140
        %v6379 = vpack.c.b16 %v6145, %v6143
        %v6380 = vpack.c.b16 %v6146, %v6144
        %v6381 = vpack.c.b16 %v6149, %v6147
        %v6382 = vpack.c.b16 %v6150, %v6148
        %v6383 = vpack.c.b16 %v6153, %v6151
        %v6384 = vpack.c.b16 %v6154, %v6152
        %v6385 = vpack.c.b16 %v6157, %v6155
        %v6386 = vpack.c.b16 %v6158, %v6156
        %v6387 = vpack.c.b16 %v6161, %v6159
        %v6388 = vpack.c.b16 %v6162, %v6160
        %v6389 = vpack.c.b16 %v6165, %v6163
        %v6390 = vpack.c.b16 %v6166, %v6164
        %v6391 = vpack.c.b16 %v6169, %v6167
        %v6392 = vpack.c.b16 %v6170, %v6168
        %v6393 = vpack.c.b16 %v6173, %v6171
        %v6394 = vpack.c.b16 %v6174, %v6172
        %v6395 = vpack.c.b16 %v6177, %v6175
        %v6396 = vpack.c.b16 %v6178, %v6176
        %v6397 = vpack.c.b16 %v6181, %v6179
        %v6398 = vpack.c.b16 %v6182, %v6180
        %v6399 = vpack.c.b16 %v6185, %v6183
        %v6400 = vpack.c.b16 %v6186, %v6184
        %v6401 = vpack.c.b16 %v6189, %v6187
        %v6402 = vpack.c.b16 %v6190, %v6188
        %v6403 = vpack.c.b16 %v6193, %v6191
        %v6404 = vpack.c.b16 %v6194, %v6192
        %v6405 = vpack.c.b16 %v6197, %v6195
        %v6406 = vpack.c.b16 %v6198, %v6196
        %v6407 = vpack.c.b16 %v6201, %v6199
        %v6408 = vpack.c.b16 %v6202, %v6200
        %v6409 = vpack.c.b16 %v6205, %v6203
        %v6410 = vpack.c.b16 %v6206, %v6204
        %v6411 = vpack.c.b16 %v6209, %v6207
        %v6412 = vpack.c.b16 %v6210, %v6208
        %v6413 = vpack.c.b16 %v6213, %v6211
        %v6414 = vpack.c.b16 %v6214, %v6212
        %v6415 = vpack.c.b16 %v6217, %v6215
        %v6416 = vpack.c.b16 %v6218, %v6216
        %v6417 = vpack.c.b16 %v6221, %v6219
        %v6418 = vpack.c.b16 %v6222, %v6220
        %v6419 = vpack.c.b16 %v6225, %v6223
        %v6420 = vpack.c.b16 %v6226, %v6224
        %v6421 = vpack.c.b16 %v6229, %v6227
        %v6422 = vpack.c.b16 %v6230, %v6228
        %v6423 = vpack.c.b16 %v6233, %v6231
        %v6424 = vpack.c.b16 %v6234, %v6232
        %v6425 = vpack.c.b16 %v6237, %v6235
        %v6426 = vpack.c.b16 %v6238, %v6236
        %v6427 = vpack.c.b16 %v6241, %v6239
        %v6428 = vpack.c.b16 %v6242, %v6240
        %v6429 = vpack.c.b16 %v6245, %v6243
        %v6430 = vpack.c.b16 %v6246, %v6244
        %v6431 = vpack.c.b16 %v6249, %v6247
        %v6432 = vpack.c.b16 %v6250, %v6248
        %v6433 = vpack.c.b16 %v6253, %v6251
        %v6434 = vpack.c.b16 %v6254, %v6252
        %v6435 = vpack.c.b16 %v6257, %v6255
        %v6436 = vpack.c.b16 %v6258, %v6256
        %v6437 = vpack.c.b16 %v6261, %v6259
        %v6438 = vpack.c.b16 %v6262, %v6260
        %v6439 = vpack.c.b16 %v6265, %v6263
        %v6440 = vpack.c.b16 %v6266, %v6264
        %v6441 = vpack.c.b16 %v6269, %v6267
        %v6442 = vpack.c.b16 %v6270, %v6268
        %v6443 = vpack.c.b16 %v6273, %v6271
        %v6444 = vpack.c.b16 %v6274, %v6272
        %v6445 = vpack.c.b16 %v6277, %v6275
        %v6446 = vpack.c.b16 %v6278, %v6276
        %v6447 = vpack.c.b16 %v6281, %v6279
        %v6448 = vpack.c.b16 %v6282, %v6280
        %v6449 = vpack.c.b16 %v6285, %v6283
        %v6450 = vpack.c.b16 %v6286, %v6284
        %v6451 = vpack.c.b16 %v6289, %v6287
        %v6452 = vpack.c.b16 %v6290, %v6288
        %v6453 = vpack.c.b16 %v6293, %v6291
        %v6454 = vpack.c.b16 %v6294, %v6292
        %v6455 = vpack.c.b16 %v6297, %v6295
        %v6456 = vpack.c.b16 %v6298, %v6296
        %v6457 = vpack.c.b16 %v6301, %v6299
        %v6458 = vpack.c.b16 %v6302, %v6300
        %v6459 = vpack.c.b16 %v6305, %v6303
        %v6460 = vpack.c.b16 %v6306, %v6304
        %v6461 = vpack.c.b16 %v6309, %v6307
        %v6462 = vpack.c.b16 %v6310, %v6308
        %v6463 = vpack.c.b16 %v6313, %v6311
        %v6464 = vpack.c.b16 %v6314, %v6312
        %v6465 = vpack.c.b16 %v6317, %v6315
        %v6466 = vpack.c.b16 %v6318, %v6316
        %v6467 = vpack.c.b16 %v6321, %v6319
        %v6468 = vpack.c.b16 %v6322, %v6320
        %v6469 = vpack.c.b16 %v6325, %v6323
        %v6470 = vpack.c.b16 %v6326, %v6324
        %v6471 = vpack.c.b16 %v6329, %v6327
        %v6472 = vpack.c.b16 %v6330, %v6328
        %v6473 = vpack.c.b16 %v6333, %v6331
        %v6474 = vpack.c.b16 %v6334, %v6332
        %v6475 = vpack.c.b16 %v6337, %v6335
        %v6476 = vpack.c.b16 %v6338, %v6336
        %v6477 = vpack.c.b16 %v6341, %v6339
        %v6478 = vpack.c.b16 %v6342, %v6340
        %v6479 = vpack.c.b16 %v6345, %v6343
        %v6480 = vpack.c.b16 %v6346, %v6344
        %v6481 = vpack.c.b16 %v6349, %v6347
        %v6482 = vpack.c.b16 %v6350, %v6348
        %v6483 = vpack.c.b16 %v6353, %v6351
        %v6484 = vpack.c.b16 %v6354, %v6352
        %v6485 = vpack.c.b16 %v6357, %v6355
        %v6486 = vpack.c.b16 %v6358, %v6356
        %6615 = vmatpush.bf16.msra.mxu0 %v6373
        %6616 = vmatpush.bf16.msra.mxu0 %v6371
        %6617 = vmatpush.bf16.msra.mxu0 %v6369
        %6618 = vmatpush.bf16.msra.mxu0 %v6367
        %6619 = vmatpush.bf16.msra.mxu0 %v6365
        %6620 = vmatpush.bf16.msra.mxu0 %v6363
        %6621 = vmatpush.bf16.msra.mxu0 %v6361
        %6622 = vmatpush.bf16.msra.mxu0 %v6359
        %6623 = vmatmul.bf16.gmra.mxu0 %v538
        %v6624 = vpop.f32.mrf.mxu0
        %v6625 = vadd.f32 %v5971, %v6624
        %v6626 = vpop.f32.mrf.mxu0
        %v6627 = vadd.f32 %v5971, %v6626
        %6628 = vmatmul.bf16.gmra.mxu0 %v546
        %v6629 = vpop.f32.mrf.mxu0
        %v6630 = vadd.f32 %v5971, %v6629
        %v6631 = vpop.f32.mrf.mxu0
        %v6632 = vadd.f32 %v5971, %v6631
        %6633 = vmatmul.bf16.gmra.mxu0 %v554
        %v6634 = vpop.f32.mrf.mxu0
        %v6635 = vadd.f32 %v5971, %v6634
        %v6636 = vpop.f32.mrf.mxu0
        %6637 = vdwg.mxu0
        %6638 = vmatpush.bf16.msra.mxu0 %v6389
        %6639 = vmatpush.bf16.msra.mxu0 %v6387
        %6640 = vmatpush.bf16.msra.mxu0 %v6385
        %6641 = vmatpush.bf16.msra.mxu0 %v6383
        %6642 = vmatpush.bf16.msra.mxu0 %v6381
        %6643 = vmatpush.bf16.msra.mxu0 %v6379
        %6644 = vmatpush.bf16.msra.mxu0 %v6377
        %6645 = vmatpush.bf16.msra.mxu0 %v6375
        %6646 = vmatmul.bf16.gmra.mxu0 %v539
        %v6647 = vpop.f32.mrf.mxu0
        %v6648 = vadd.f32 %v6625, %v6647
        %v6649 = vpop.f32.mrf.mxu0
        %v6650 = vadd.f32 %v6627, %v6649
        %6651 = vmatmul.bf16.gmra.mxu0 %v547
        %v6652 = vpop.f32.mrf.mxu0
        %v6653 = vadd.f32 %v6630, %v6652
        %v6654 = vpop.f32.mrf.mxu0
        %v6655 = vadd.f32 %v6632, %v6654
        %6656 = vmatmul.bf16.gmra.mxu0 %v555
        %v6657 = vpop.f32.mrf.mxu0
        %v6658 = vadd.f32 %v6635, %v6657
        %v6659 = vpop.f32.mrf.mxu0
        %6660 = vdwg.mxu0
        %6661 = vmatpush.bf16.msra.mxu0 %v6405
        %6662 = vmatpush.bf16.msra.mxu0 %v6403
        %6663 = vmatpush.bf16.msra.mxu0 %v6401
        %6664 = vmatpush.bf16.msra.mxu0 %v6399
        %6665 = vmatpush.bf16.msra.mxu0 %v6397
        %6666 = vmatpush.bf16.msra.mxu0 %v6395
        %6667 = vmatpush.bf16.msra.mxu0 %v6393
        %6668 = vmatpush.bf16.msra.mxu0 %v6391
        %6669 = vmatmul.bf16.gmra.mxu0 %v540
        %v6670 = vpop.f32.mrf.mxu0
        %v6671 = vadd.f32 %v6648, %v6670
        %v6672 = vpop.f32.mrf.mxu0
        %v6673 = vadd.f32 %v6650, %v6672
        %6674 = vmatmul.bf16.gmra.mxu0 %v548
        %v6675 = vpop.f32.mrf.mxu0
        %v6676 = vadd.f32 %v6653, %v6675
        %v6677 = vpop.f32.mrf.mxu0
        %v6678 = vadd.f32 %v6655, %v6677
        %6679 = vmatmul.bf16.gmra.mxu0 %v556
        %v6680 = vpop.f32.mrf.mxu0
        %v6681 = vadd.f32 %v6658, %v6680
        %v6682 = vpop.f32.mrf.mxu0
        %6683 = vdwg.mxu0
        %6684 = vmatpush.bf16.msra.mxu0 %v6421
        %6685 = vmatpush.bf16.msra.mxu0 %v6419
        %6686 = vmatpush.bf16.msra.mxu0 %v6417
        %6687 = vmatpush.bf16.msra.mxu0 %v6415
        %6688 = vmatpush.bf16.msra.mxu0 %v6413
        %6689 = vmatpush.bf16.msra.mxu0 %v6411
        %6690 = vmatpush.bf16.msra.mxu0 %v6409
        %6691 = vmatpush.bf16.msra.mxu0 %v6407
        %6692 = vmatmul.bf16.gmra.mxu0 %v541
        %v6693 = vpop.f32.mrf.mxu0
        %v6694 = vadd.f32 %v6671, %v6693
        %v6695 = vpop.f32.mrf.mxu0
        %v6696 = vadd.f32 %v6673, %v6695
        %6697 = vmatmul.bf16.gmra.mxu0 %v549
        %v6698 = vpop.f32.mrf.mxu0
        %v6699 = vadd.f32 %v6676, %v6698
        %v6700 = vpop.f32.mrf.mxu0
        %v6701 = vadd.f32 %v6678, %v6700
        %6702 = vmatmul.bf16.gmra.mxu0 %v557
        %v6703 = vpop.f32.mrf.mxu0
        %v6704 = vadd.f32 %v6681, %v6703
        %v6705 = vpop.f32.mrf.mxu0
        %6706 = vdwg.mxu0
        %6707 = vmatpush.bf16.msra.mxu0 %v6437
        %6708 = vmatpush.bf16.msra.mxu0 %v6435
        %6709 = vmatpush.bf16.msra.mxu0 %v6433
        %6710 = vmatpush.bf16.msra.mxu0 %v6431
        %6711 = vmatpush.bf16.msra.mxu0 %v6429
        %6712 = vmatpush.bf16.msra.mxu0 %v6427
        %6713 = vmatpush.bf16.msra.mxu0 %v6425
        %6714 = vmatpush.bf16.msra.mxu0 %v6423
        %6715 = vmatmul.bf16.gmra.mxu0 %v542
        %v6716 = vpop.f32.mrf.mxu0
        %v6717 = vadd.f32 %v6694, %v6716
        %v6718 = vpop.f32.mrf.mxu0
        %v6719 = vadd.f32 %v6696, %v6718
        %6720 = vmatmul.bf16.gmra.mxu0 %v550
        %v6721 = vpop.f32.mrf.mxu0
        %v6722 = vadd.f32 %v6699, %v6721
        %v6723 = vpop.f32.mrf.mxu0
        %v6724 = vadd.f32 %v6701, %v6723
        %6725 = vmatmul.bf16.gmra.mxu0 %v558
        %v6726 = vpop.f32.mrf.mxu0
        %v6727 = vadd.f32 %v6704, %v6726
        %v6728 = vpop.f32.mrf.mxu0
        %6729 = vdwg.mxu0
        %6730 = vmatpush.bf16.msra.mxu0 %v6453
        %6731 = vmatpush.bf16.msra.mxu0 %v6451
        %6732 = vmatpush.bf16.msra.mxu0 %v6449
        %6733 = vmatpush.bf16.msra.mxu0 %v6447
        %6734 = vmatpush.bf16.msra.mxu0 %v6445
        %6735 = vmatpush.bf16.msra.mxu0 %v6443
        %6736 = vmatpush.bf16.msra.mxu0 %v6441
        %6737 = vmatpush.bf16.msra.mxu0 %v6439
        %6738 = vmatmul.bf16.gmra.mxu0 %v543
        %v6739 = vpop.f32.mrf.mxu0
        %v6740 = vadd.f32 %v6717, %v6739
        %v6741 = vpop.f32.mrf.mxu0
        %v6742 = vadd.f32 %v6719, %v6741
        %6743 = vmatmul.bf16.gmra.mxu0 %v551
        %v6744 = vpop.f32.mrf.mxu0
        %v6745 = vadd.f32 %v6722, %v6744
        %v6746 = vpop.f32.mrf.mxu0
        %v6747 = vadd.f32 %v6724, %v6746
        %6748 = vmatmul.bf16.gmra.mxu0 %v559
        %v6749 = vpop.f32.mrf.mxu0
        %v6750 = vadd.f32 %v6727, %v6749
        %v6751 = vpop.f32.mrf.mxu0
        %6752 = vdwg.mxu0
        %6753 = vmatpush.bf16.msra.mxu0 %v6469
        %6754 = vmatpush.bf16.msra.mxu0 %v6467
        %6755 = vmatpush.bf16.msra.mxu0 %v6465
        %6756 = vmatpush.bf16.msra.mxu0 %v6463
        %6757 = vmatpush.bf16.msra.mxu0 %v6461
        %6758 = vmatpush.bf16.msra.mxu0 %v6459
        %6759 = vmatpush.bf16.msra.mxu0 %v6457
        %6760 = vmatpush.bf16.msra.mxu0 %v6455
        %6761 = vmatmul.bf16.gmra.mxu0 %v544
        %v6762 = vpop.f32.mrf.mxu0
        %v6763 = vadd.f32 %v6740, %v6762
        %v6764 = vpop.f32.mrf.mxu0
        %v6765 = vadd.f32 %v6742, %v6764
        %6766 = vmatmul.bf16.gmra.mxu0 %v552
        %v6767 = vpop.f32.mrf.mxu0
        %v6768 = vadd.f32 %v6745, %v6767
        %v6769 = vpop.f32.mrf.mxu0
        %v6770 = vadd.f32 %v6747, %v6769
        %6771 = vmatmul.bf16.gmra.mxu0 %v560
        %v6772 = vpop.f32.mrf.mxu0
        %v6773 = vadd.f32 %v6750, %v6772
        %v6774 = vpop.f32.mrf.mxu0
        %6775 = vdwg.mxu0
        %6776 = vmatpush.bf16.msra.mxu0 %v6485
        %6777 = vmatpush.bf16.msra.mxu0 %v6483
        %6778 = vmatpush.bf16.msra.mxu0 %v6481
        %6779 = vmatpush.bf16.msra.mxu0 %v6479
        %6780 = vmatpush.bf16.msra.mxu0 %v6477
        %6781 = vmatpush.bf16.msra.mxu0 %v6475
        %6782 = vmatpush.bf16.msra.mxu0 %v6473
        %6783 = vmatpush.bf16.msra.mxu0 %v6471
        %6784 = vmatmul.bf16.gmra.mxu0 %v545
        %v6785 = vpop.f32.mrf.mxu0
        %v6786 = vadd.f32 %v6763, %v6785
        %v6787 = vpop.f32.mrf.mxu0
        %v6788 = vadd.f32 %v6765, %v6787
        %6789 = vmatmul.bf16.gmra.mxu0 %v553
        %v6790 = vpop.f32.mrf.mxu0
        %v6791 = vadd.f32 %v6768, %v6790
        %v6792 = vpop.f32.mrf.mxu0
        %v6793 = vadd.f32 %v6770, %v6792
        %6794 = vmatmul.bf16.gmra.mxu0 %v561
        %v6795 = vpop.f32.mrf.mxu0
        %v6796 = vadd.f32 %v6773, %v6795
        %v6797 = vpop.f32.mrf.mxu0
        %6798 = vdwg.mxu0
        %6799 = vmatpush.bf16.msra.mxu0 %v6374
        %6800 = vmatpush.bf16.msra.mxu0 %v6372
        %6801 = vmatpush.bf16.msra.mxu0 %v6370
        %6802 = vmatpush.bf16.msra.mxu0 %v6368
        %6803 = vmatpush.bf16.msra.mxu0 %v6366
        %6804 = vmatpush.bf16.msra.mxu0 %v6364
        %6805 = vmatpush.bf16.msra.mxu0 %v6362
        %6806 = vmatpush.bf16.msra.mxu0 %v6360
        %6807 = vmatmul.bf16.gmra.mxu0 %v538
        %v6808 = vpop.f32.mrf.mxu0
        %v6809 = vadd.f32 %v5972, %v6808
        %v6810 = vpop.f32.mrf.mxu0
        %v6811 = vadd.f32 %v5972, %v6810
        %6812 = vmatmul.bf16.gmra.mxu0 %v546
        %v6813 = vpop.f32.mrf.mxu0
        %v6814 = vadd.f32 %v5972, %v6813
        %v6815 = vpop.f32.mrf.mxu0
        %v6816 = vadd.f32 %v5972, %v6815
        %6817 = vmatmul.bf16.gmra.mxu0 %v554
        %v6818 = vpop.f32.mrf.mxu0
        %v6819 = vadd.f32 %v5972, %v6818
        %v6820 = vpop.f32.mrf.mxu0
        %6821 = vdwg.mxu0
        %6822 = vmatpush.bf16.msra.mxu0 %v6390
        %6823 = vmatpush.bf16.msra.mxu0 %v6388
        %6824 = vmatpush.bf16.msra.mxu0 %v6386
        %6825 = vmatpush.bf16.msra.mxu0 %v6384
        %6826 = vmatpush.bf16.msra.mxu0 %v6382
        %6827 = vmatpush.bf16.msra.mxu0 %v6380
        %6828 = vmatpush.bf16.msra.mxu0 %v6378
        %6829 = vmatpush.bf16.msra.mxu0 %v6376
        %6830 = vmatmul.bf16.gmra.mxu0 %v539
        %v6831 = vpop.f32.mrf.mxu0
        %v6832 = vadd.f32 %v6809, %v6831
        %v6833 = vpop.f32.mrf.mxu0
        %v6834 = vadd.f32 %v6811, %v6833
        %6835 = vmatmul.bf16.gmra.mxu0 %v547
        %v6836 = vpop.f32.mrf.mxu0
        %v6837 = vadd.f32 %v6814, %v6836
        %v6838 = vpop.f32.mrf.mxu0
        %v6839 = vadd.f32 %v6816, %v6838
        %6840 = vmatmul.bf16.gmra.mxu0 %v555
        %v6841 = vpop.f32.mrf.mxu0
        %v6842 = vadd.f32 %v6819, %v6841
        %v6843 = vpop.f32.mrf.mxu0
        %6844 = vdwg.mxu0
        %6845 = vmatpush.bf16.msra.mxu0 %v6406
        %6846 = vmatpush.bf16.msra.mxu0 %v6404
        %6847 = vmatpush.bf16.msra.mxu0 %v6402
        %6848 = vmatpush.bf16.msra.mxu0 %v6400
        %6849 = vmatpush.bf16.msra.mxu0 %v6398
        %6850 = vmatpush.bf16.msra.mxu0 %v6396
        %6851 = vmatpush.bf16.msra.mxu0 %v6394
        %6852 = vmatpush.bf16.msra.mxu0 %v6392
        %6853 = vmatmul.bf16.gmra.mxu0 %v540
        %v6854 = vpop.f32.mrf.mxu0
        %v6855 = vadd.f32 %v6832, %v6854
        %v6856 = vpop.f32.mrf.mxu0
        %v6857 = vadd.f32 %v6834, %v6856
        %6858 = vmatmul.bf16.gmra.mxu0 %v548
        %v6859 = vpop.f32.mrf.mxu0
        %v6860 = vadd.f32 %v6837, %v6859
        %v6861 = vpop.f32.mrf.mxu0
        %v6862 = vadd.f32 %v6839, %v6861
        %6863 = vmatmul.bf16.gmra.mxu0 %v556
        %v6864 = vpop.f32.mrf.mxu0
        %v6865 = vadd.f32 %v6842, %v6864
        %v6866 = vpop.f32.mrf.mxu0
        %6867 = vdwg.mxu0
        %6868 = vmatpush.bf16.msra.mxu0 %v6422
        %6869 = vmatpush.bf16.msra.mxu0 %v6420
        %6870 = vmatpush.bf16.msra.mxu0 %v6418
        %6871 = vmatpush.bf16.msra.mxu0 %v6416
        %6872 = vmatpush.bf16.msra.mxu0 %v6414
        %6873 = vmatpush.bf16.msra.mxu0 %v6412
        %6874 = vmatpush.bf16.msra.mxu0 %v6410
        %6875 = vmatpush.bf16.msra.mxu0 %v6408
        %6876 = vmatmul.bf16.gmra.mxu0 %v541
        %v6877 = vpop.f32.mrf.mxu0
        %v6878 = vadd.f32 %v6855, %v6877
        %v6879 = vpop.f32.mrf.mxu0
        %v6880 = vadd.f32 %v6857, %v6879
        %6881 = vmatmul.bf16.gmra.mxu0 %v549
        %v6882 = vpop.f32.mrf.mxu0
        %v6883 = vadd.f32 %v6860, %v6882
        %v6884 = vpop.f32.mrf.mxu0
        %v6885 = vadd.f32 %v6862, %v6884
        %6886 = vmatmul.bf16.gmra.mxu0 %v557
        %v6887 = vpop.f32.mrf.mxu0
        %v6888 = vadd.f32 %v6865, %v6887
        %v6889 = vpop.f32.mrf.mxu0
        %6890 = vdwg.mxu0
        %6891 = vmatpush.bf16.msra.mxu0 %v6438
        %6892 = vmatpush.bf16.msra.mxu0 %v6436
        %6893 = vmatpush.bf16.msra.mxu0 %v6434
        %6894 = vmatpush.bf16.msra.mxu0 %v6432
        %6895 = vmatpush.bf16.msra.mxu0 %v6430
        %6896 = vmatpush.bf16.msra.mxu0 %v6428
        %6897 = vmatpush.bf16.msra.mxu0 %v6426
        %6898 = vmatpush.bf16.msra.mxu0 %v6424
        %6899 = vmatmul.bf16.gmra.mxu0 %v542
        %v6900 = vpop.f32.mrf.mxu0
        %v6901 = vadd.f32 %v6878, %v6900
        %v6902 = vpop.f32.mrf.mxu0
        %v6903 = vadd.f32 %v6880, %v6902
        %6904 = vmatmul.bf16.gmra.mxu0 %v550
        %v6905 = vpop.f32.mrf.mxu0
        %v6906 = vadd.f32 %v6883, %v6905
        %v6907 = vpop.f32.mrf.mxu0
        %v6908 = vadd.f32 %v6885, %v6907
        %6909 = vmatmul.bf16.gmra.mxu0 %v558
        %v6910 = vpop.f32.mrf.mxu0
        %v6911 = vadd.f32 %v6888, %v6910
        %v6912 = vpop.f32.mrf.mxu0
        %6913 = vdwg.mxu0
        %6914 = vmatpush.bf16.msra.mxu0 %v6454
        %6915 = vmatpush.bf16.msra.mxu0 %v6452
        %6916 = vmatpush.bf16.msra.mxu0 %v6450
        %6917 = vmatpush.bf16.msra.mxu0 %v6448
        %6918 = vmatpush.bf16.msra.mxu0 %v6446
        %6919 = vmatpush.bf16.msra.mxu0 %v6444
        %6920 = vmatpush.bf16.msra.mxu0 %v6442
        %6921 = vmatpush.bf16.msra.mxu0 %v6440
        %6922 = vmatmul.bf16.gmra.mxu0 %v543
        %v6923 = vpop.f32.mrf.mxu0
        %v6924 = vadd.f32 %v6901, %v6923
        %v6925 = vpop.f32.mrf.mxu0
        %v6926 = vadd.f32 %v6903, %v6925
        %6927 = vmatmul.bf16.gmra.mxu0 %v551
        %v6928 = vpop.f32.mrf.mxu0
        %v6929 = vadd.f32 %v6906, %v6928
        %v6930 = vpop.f32.mrf.mxu0
        %v6931 = vadd.f32 %v6908, %v6930
        %6932 = vmatmul.bf16.gmra.mxu0 %v559
        %v6933 = vpop.f32.mrf.mxu0
        %v6934 = vadd.f32 %v6911, %v6933
        %v6935 = vpop.f32.mrf.mxu0
        %6936 = vdwg.mxu0
        %6937 = vmatpush.bf16.msra.mxu0 %v6470
        %6938 = vmatpush.bf16.msra.mxu0 %v6468
        %6939 = vmatpush.bf16.msra.mxu0 %v6466
        %6940 = vmatpush.bf16.msra.mxu0 %v6464
        %6941 = vmatpush.bf16.msra.mxu0 %v6462
        %6942 = vmatpush.bf16.msra.mxu0 %v6460
        %6943 = vmatpush.bf16.msra.mxu0 %v6458
        %6944 = vmatpush.bf16.msra.mxu0 %v6456
        %6945 = vmatmul.bf16.gmra.mxu0 %v544
        %v6946 = vpop.f32.mrf.mxu0
        %v6947 = vadd.f32 %v6924, %v6946
        %v6948 = vpop.f32.mrf.mxu0
        %v6949 = vadd.f32 %v6926, %v6948
        %6950 = vmatmul.bf16.gmra.mxu0 %v552
        %v6951 = vpop.f32.mrf.mxu0
        %v6952 = vadd.f32 %v6929, %v6951
        %v6953 = vpop.f32.mrf.mxu0
        %v6954 = vadd.f32 %v6931, %v6953
        %6955 = vmatmul.bf16.gmra.mxu0 %v560
        %v6956 = vpop.f32.mrf.mxu0
        %v6957 = vadd.f32 %v6934, %v6956
        %v6958 = vpop.f32.mrf.mxu0
        %6959 = vdwg.mxu0
        %6960 = vmatpush.bf16.msra.mxu0 %v6486
        %6961 = vmatpush.bf16.msra.mxu0 %v6484
        %6962 = vmatpush.bf16.msra.mxu0 %v6482
        %6963 = vmatpush.bf16.msra.mxu0 %v6480
        %6964 = vmatpush.bf16.msra.mxu0 %v6478
        %6965 = vmatpush.bf16.msra.mxu0 %v6476
        %6966 = vmatpush.bf16.msra.mxu0 %v6474
        %6967 = vmatpush.bf16.msra.mxu0 %v6472
        %6968 = vmatmul.bf16.gmra.mxu0 %v545
        %v6969 = vpop.f32.mrf.mxu0
        %v6970 = vadd.f32 %v6947, %v6969
        %v6971 = vpop.f32.mrf.mxu0
        %v6972 = vadd.f32 %v6949, %v6971
        %6973 = vmatmul.bf16.gmra.mxu0 %v553
        %v6974 = vpop.f32.mrf.mxu0
        %v6975 = vadd.f32 %v6952, %v6974
        %v6976 = vpop.f32.mrf.mxu0
        %v6977 = vadd.f32 %v6954, %v6976
        %6978 = vmatmul.bf16.gmra.mxu0 %v561
        %v6979 = vpop.f32.mrf.mxu0
        %v6980 = vadd.f32 %v6957, %v6979
        %v6981 = vpop.f32.mrf.mxu0
        %6982 = vdwg.mxu0
        %v6983 = vpack.c.bf16 %v5833, %v5831
        %v6984 = vpack.c.bf16 %v5834, %v5832
        %v6985 = vpack.c.bf16 %v5837, %v5835
        %v6986 = vpack.c.bf16 %v5838, %v5836
        %v6987 = vpack.c.bf16 %v5839, %v5839
        %v6988 = vpack.c.bf16 %v5840, %v5840
        %v6989 = vld [vmem:[#allocation9] sm:$0xff]
        %v6990 = vld [vmem:[#allocation9 + $0x8] sm:$0xff]
        %v6991 = vld [vmem:[#allocation9 + $0x10] sm:$0xff]
        %v6992 = vld [vmem:[#allocation9 + $0x18] sm:$0xff]
        %v6993 = vld [vmem:[#allocation9 + $0x20] sm:$0xff]
        %v6994 = vld [vmem:[#allocation9 + $0x28] sm:$0xff]
        %v6995 = vld [vmem:[#allocation9 + $0x30] sm:$0xff]
        %v6996 = vld [vmem:[#allocation9 + $0x38] sm:$0xff]
        %v6997 = vld [vmem:[#allocation9 + $0x40] sm:$0xff]
        %v6998 = vld [vmem:[#allocation9 + $0x48] sm:$0xff]
        %v6999 = vld [vmem:[#allocation9 + $0x50] sm:$0xff]
        %v7000 = vld [vmem:[#allocation9 + $0x58] sm:$0xff]
        %v7001 = vld [vmem:[#allocation9 + $0x60] sm:$0xff]
        %v7002 = vld [vmem:[#allocation9 + $0x68] sm:$0xff]
        %v7003 = vld [vmem:[#allocation9 + $0x70] sm:$0xff]
        %v7004 = vld [vmem:[#allocation9 + $0x78] sm:$0xff]
        %v7005 = vld [vmem:[#allocation9 + $0x80] sm:$0xff]
        %v7006 = vld [vmem:[#allocation9 + $0x88] sm:$0xff]
        %v7007 = vld [vmem:[#allocation9 + $0x90] sm:$0xff]
        %v7008 = vld [vmem:[#allocation9 + $0x98] sm:$0xff]
        %v7009 = vld [vmem:[#allocation9 + $0xa0] sm:$0xff]
        %v7010 = vld [vmem:[#allocation9 + $0xa8] sm:$0xff]
        %v7011 = vld [vmem:[#allocation9 + $0xb0] sm:$0xff]
        %v7012 = vld [vmem:[#allocation9 + $0xb8] sm:$0xff]
        %v7013 = vld [vmem:[#allocation9 + $0xc0] sm:$0xff]
        %v7014 = vld [vmem:[#allocation9 + $0xc8] sm:$0xff]
        %v7015 = vld [vmem:[#allocation9 + $0xd0] sm:$0xff]
        %v7016 = vld [vmem:[#allocation9 + $0xd8] sm:$0xff]
        %v7017 = vld [vmem:[#allocation9 + $0xe0] sm:$0xff]
        %v7018 = vld [vmem:[#allocation9 + $0xe8] sm:$0xff]
        %v7019 = vld [vmem:[#allocation9 + $0xf0] sm:$0xff]
        %v7020 = vld [vmem:[#allocation9 + $0xf8] sm:$0xff]
        %v7021 = vld [vmem:[#allocation9 + $0x100] sm:$0xff]
        %v7022 = vld [vmem:[#allocation9 + $0x108] sm:$0xff]
        %v7023 = vld [vmem:[#allocation9 + $0x110] sm:$0xff]
        %v7024 = vld [vmem:[#allocation9 + $0x118] sm:$0xff]
        %v7025 = vld [vmem:[#allocation9 + $0x120] sm:$0xff]
        %v7026 = vld [vmem:[#allocation9 + $0x128] sm:$0xff]
        %v7027 = vld [vmem:[#allocation9 + $0x130] sm:$0xff]
        %v7028 = vld [vmem:[#allocation9 + $0x138] sm:$0xff]
        %v7029 = vld [vmem:[#allocation9 + $0x140] sm:$0xff]
        %v7030 = vld [vmem:[#allocation9 + $0x148] sm:$0xff]
        %v7031 = vld [vmem:[#allocation9 + $0x150] sm:$0xff]
        %v7032 = vld [vmem:[#allocation9 + $0x158] sm:$0xff]
        %v7033 = vld [vmem:[#allocation9 + $0x160] sm:$0xff]
        %v7034 = vld [vmem:[#allocation9 + $0x168] sm:$0xff]
        %v7035 = vld [vmem:[#allocation9 + $0x170] sm:$0xff]
        %v7036 = vld [vmem:[#allocation9 + $0x178] sm:$0xff]
        %v7037 = vld [vmem:[#allocation9 + $0x180] sm:$0xff]
        %v7038 = vld [vmem:[#allocation9 + $0x188] sm:$0xff]
        %v7039 = vld [vmem:[#allocation9 + $0x190] sm:$0xff]
        %v7040 = vld [vmem:[#allocation9 + $0x198] sm:$0xff]
        %v7041 = vld [vmem:[#allocation9 + $0x1a0] sm:$0xff]
        %v7042 = vld [vmem:[#allocation9 + $0x1a8] sm:$0xff]
        %v7043 = vld [vmem:[#allocation9 + $0x1b0] sm:$0xff]
        %v7044 = vld [vmem:[#allocation9 + $0x1b8] sm:$0xff]
        %v7045 = vld [vmem:[#allocation9 + $0x1c0] sm:$0xff]
        %v7046 = vld [vmem:[#allocation9 + $0x1c8] sm:$0xff]
        %v7047 = vld [vmem:[#allocation9 + $0x1d0] sm:$0xff]
        %v7048 = vld [vmem:[#allocation9 + $0x1d8] sm:$0xff]
        %v7049 = vld [vmem:[#allocation9 + $0x1e0] sm:$0xff]
        %v7050 = vld [vmem:[#allocation9 + $0x1e8] sm:$0xff]
        %v7051 = vld [vmem:[#allocation9 + $0x1f0] sm:$0xff]
        %v7052 = vld [vmem:[#allocation9 + $0x1f8] sm:$0xff]
        %v7053 = vld [vmem:[#allocation9 + $0x200] sm:$0xff]
        %v7054 = vld [vmem:[#allocation9 + $0x208] sm:$0xff]
        %v7055 = vld [vmem:[#allocation9 + $0x210] sm:$0xff]
        %v7056 = vld [vmem:[#allocation9 + $0x218] sm:$0xff]
        %v7057 = vld [vmem:[#allocation9 + $0x220] sm:$0xff]
        %v7058 = vld [vmem:[#allocation9 + $0x228] sm:$0xff]
        %v7059 = vld [vmem:[#allocation9 + $0x230] sm:$0xff]
        %v7060 = vld [vmem:[#allocation9 + $0x238] sm:$0xff]
        %v7061 = vld [vmem:[#allocation9 + $0x240] sm:$0xff]
        %v7062 = vld [vmem:[#allocation9 + $0x248] sm:$0xff]
        %v7063 = vld [vmem:[#allocation9 + $0x250] sm:$0xff]
        %v7064 = vld [vmem:[#allocation9 + $0x258] sm:$0xff]
        %v7065 = vld [vmem:[#allocation9 + $0x260] sm:$0xff]
        %v7066 = vld [vmem:[#allocation9 + $0x268] sm:$0xff]
        %v7067 = vld [vmem:[#allocation9 + $0x270] sm:$0xff]
        %v7068 = vld [vmem:[#allocation9 + $0x278] sm:$0xff]
        %v7069 = vld [vmem:[#allocation9 + $0x280] sm:$0xff]
        %v7070 = vld [vmem:[#allocation9 + $0x288] sm:$0xff]
        %v7071 = vld [vmem:[#allocation9 + $0x290] sm:$0xff]
        %v7072 = vld [vmem:[#allocation9 + $0x298] sm:$0xff]
        %v7073 = vld [vmem:[#allocation9 + $0x2a0] sm:$0xff]
        %v7074 = vld [vmem:[#allocation9 + $0x2a8] sm:$0xff]
        %v7075 = vld [vmem:[#allocation9 + $0x2b0] sm:$0xff]
        %v7076 = vld [vmem:[#allocation9 + $0x2b8] sm:$0xff]
        %v7077 = vld [vmem:[#allocation9 + $0x2c0] sm:$0xff]
        %v7078 = vld [vmem:[#allocation9 + $0x2c8] sm:$0xff]
        %v7079 = vld [vmem:[#allocation9 + $0x2d0] sm:$0xff]
        %v7080 = vld [vmem:[#allocation9 + $0x2d8] sm:$0xff]
        %v7081 = vld [vmem:[#allocation9 + $0x2e0] sm:$0xff]
        %v7082 = vld [vmem:[#allocation9 + $0x2e8] sm:$0xff]
        %v7083 = vld [vmem:[#allocation9 + $0x2f0] sm:$0xff]
        %v7084 = vld [vmem:[#allocation9 + $0x2f8] sm:$0xff]
        %v7085 = vpack.c.bf16 %v6788, %v6786
        %v7086 = vpack.c.bf16 %v6972, %v6970
        %v7087 = vpack.c.bf16 %v6793, %v6791
        %v7088 = vpack.c.bf16 %v6977, %v6975
        %v7089 = vpack.c.bf16 %v6796, %v6796
        %v7090 = vpack.c.bf16 %v6980, %v6980
        %v7091 = vld [vmem:[#allocation11] sm:$0xff]
        %v7092 = vld [vmem:[#allocation11 + $0x8] sm:$0xff]
        %v7093 = vld [vmem:[#allocation11 + $0x10] sm:$0xff]
        %v7094 = vld [vmem:[#allocation11 + $0x18] sm:$0xff]
        %v7095 = vld [vmem:[#allocation11 + $0x20] sm:$0xff]
        %v7096 = vld [vmem:[#allocation11 + $0x28] sm:$0xff]
        %v7097 = vld [vmem:[#allocation11 + $0x30] sm:$0xff]
        %v7098 = vld [vmem:[#allocation11 + $0x38] sm:$0xff]
        %v7099 = vld [vmem:[#allocation11 + $0x40] sm:$0xff]
        %v7100 = vld [vmem:[#allocation11 + $0x48] sm:$0xff]
        %v7101 = vld [vmem:[#allocation11 + $0x50] sm:$0xff]
        %v7102 = vld [vmem:[#allocation11 + $0x58] sm:$0xff]
        %v7103 = vld [vmem:[#allocation11 + $0x60] sm:$0xff]
        %v7104 = vld [vmem:[#allocation11 + $0x68] sm:$0xff]
        %v7105 = vld [vmem:[#allocation11 + $0x70] sm:$0xff]
        %v7106 = vld [vmem:[#allocation11 + $0x78] sm:$0xff]
        %v7107 = vld [vmem:[#allocation11 + $0x80] sm:$0xff]
        %v7108 = vld [vmem:[#allocation11 + $0x88] sm:$0xff]
        %v7109 = vld [vmem:[#allocation11 + $0x90] sm:$0xff]
        %v7110 = vld [vmem:[#allocation11 + $0x98] sm:$0xff]
        %v7111 = vld [vmem:[#allocation11 + $0xa0] sm:$0xff]
        %v7112 = vld [vmem:[#allocation11 + $0xa8] sm:$0xff]
        %v7113 = vld [vmem:[#allocation11 + $0xb0] sm:$0xff]
        %v7114 = vld [vmem:[#allocation11 + $0xb8] sm:$0xff]
        %v7115 = vld [vmem:[#allocation11 + $0xc0] sm:$0xff]
        %v7116 = vld [vmem:[#allocation11 + $0xc8] sm:$0xff]
        %v7117 = vld [vmem:[#allocation11 + $0xd0] sm:$0xff]
        %v7118 = vld [vmem:[#allocation11 + $0xd8] sm:$0xff]
        %v7119 = vld [vmem:[#allocation11 + $0xe0] sm:$0xff]
        %v7120 = vld [vmem:[#allocation11 + $0xe8] sm:$0xff]
        %v7121 = vld [vmem:[#allocation11 + $0xf0] sm:$0xff]
        %v7122 = vld [vmem:[#allocation11 + $0xf8] sm:$0xff]
        %v7123 = vld [vmem:[#allocation11 + $0x100] sm:$0xff]
        %v7124 = vld [vmem:[#allocation11 + $0x108] sm:$0xff]
        %v7125 = vld [vmem:[#allocation11 + $0x110] sm:$0xff]
        %v7126 = vld [vmem:[#allocation11 + $0x118] sm:$0xff]
        %v7127 = vld [vmem:[#allocation11 + $0x120] sm:$0xff]
        %v7128 = vld [vmem:[#allocation11 + $0x128] sm:$0xff]
        %v7129 = vld [vmem:[#allocation11 + $0x130] sm:$0xff]
        %v7130 = vld [vmem:[#allocation11 + $0x138] sm:$0xff]
        %v7131 = vld [vmem:[#allocation11 + $0x140] sm:$0xff]
        %v7132 = vld [vmem:[#allocation11 + $0x148] sm:$0xff]
        %v7133 = vld [vmem:[#allocation11 + $0x150] sm:$0xff]
        %v7134 = vld [vmem:[#allocation11 + $0x158] sm:$0xff]
        %v7135 = vld [vmem:[#allocation11 + $0x160] sm:$0xff]
        %v7136 = vld [vmem:[#allocation11 + $0x168] sm:$0xff]
        %v7137 = vld [vmem:[#allocation11 + $0x170] sm:$0xff]
        %v7138 = vld [vmem:[#allocation11 + $0x178] sm:$0xff]
        %v7139 = vld [vmem:[#allocation11 + $0x180] sm:$0xff]
        %v7140 = vld [vmem:[#allocation11 + $0x188] sm:$0xff]
        %v7141 = vld [vmem:[#allocation11 + $0x190] sm:$0xff]
        %v7142 = vld [vmem:[#allocation11 + $0x198] sm:$0xff]
        %v7143 = vld [vmem:[#allocation11 + $0x1a0] sm:$0xff]
        %v7144 = vld [vmem:[#allocation11 + $0x1a8] sm:$0xff]
        %v7145 = vld [vmem:[#allocation11 + $0x1b0] sm:$0xff]
        %v7146 = vld [vmem:[#allocation11 + $0x1b8] sm:$0xff]
        %v7147 = vld [vmem:[#allocation11 + $0x1c0] sm:$0xff]
        %v7148 = vld [vmem:[#allocation11 + $0x1c8] sm:$0xff]
        %v7149 = vld [vmem:[#allocation11 + $0x1d0] sm:$0xff]
        %v7150 = vld [vmem:[#allocation11 + $0x1d8] sm:$0xff]
        %v7151 = vld [vmem:[#allocation11 + $0x1e0] sm:$0xff]
        %v7152 = vld [vmem:[#allocation11 + $0x1e8] sm:$0xff]
        %v7153 = vld [vmem:[#allocation11 + $0x1f0] sm:$0xff]
        %v7154 = vld [vmem:[#allocation11 + $0x1f8] sm:$0xff]
        %v7155 = vld [vmem:[#allocation11 + $0x200] sm:$0xff]
        %v7156 = vld [vmem:[#allocation11 + $0x208] sm:$0xff]
        %v7157 = vld [vmem:[#allocation11 + $0x210] sm:$0xff]
        %v7158 = vld [vmem:[#allocation11 + $0x218] sm:$0xff]
        %v7159 = vld [vmem:[#allocation11 + $0x220] sm:$0xff]
        %v7160 = vld [vmem:[#allocation11 + $0x228] sm:$0xff]
        %v7161 = vld [vmem:[#allocation11 + $0x230] sm:$0xff]
        %v7162 = vld [vmem:[#allocation11 + $0x238] sm:$0xff]
        %v7163 = vld [vmem:[#allocation11 + $0x240] sm:$0xff]
        %v7164 = vld [vmem:[#allocation11 + $0x248] sm:$0xff]
        %v7165 = vld [vmem:[#allocation11 + $0x250] sm:$0xff]
        %v7166 = vld [vmem:[#allocation11 + $0x258] sm:$0xff]
        %v7167 = vld [vmem:[#allocation11 + $0x260] sm:$0xff]
        %v7168 = vld [vmem:[#allocation11 + $0x268] sm:$0xff]
        %v7169 = vld [vmem:[#allocation11 + $0x270] sm:$0xff]
        %v7170 = vld [vmem:[#allocation11 + $0x278] sm:$0xff]
        %v7171 = vld [vmem:[#allocation11 + $0x280] sm:$0xff]
        %v7172 = vld [vmem:[#allocation11 + $0x288] sm:$0xff]
        %v7173 = vld [vmem:[#allocation11 + $0x290] sm:$0xff]
        %v7174 = vld [vmem:[#allocation11 + $0x298] sm:$0xff]
        %v7175 = vld [vmem:[#allocation11 + $0x2a0] sm:$0xff]
        %v7176 = vld [vmem:[#allocation11 + $0x2a8] sm:$0xff]
        %v7177 = vld [vmem:[#allocation11 + $0x2b0] sm:$0xff]
        %v7178 = vld [vmem:[#allocation11 + $0x2b8] sm:$0xff]
        %v7179 = vld [vmem:[#allocation11 + $0x2c0] sm:$0xff]
        %v7180 = vld [vmem:[#allocation11 + $0x2c8] sm:$0xff]
        %v7181 = vld [vmem:[#allocation11 + $0x2d0] sm:$0xff]
        %v7182 = vld [vmem:[#allocation11 + $0x2d8] sm:$0xff]
        %v7183 = vld [vmem:[#allocation11 + $0x2e0] sm:$0xff]
        %v7184 = vld [vmem:[#allocation11 + $0x2e8] sm:$0xff]
        %v7185 = vld [vmem:[#allocation11 + $0x2f0] sm:$0xff]
        %v7186 = vld [vmem:[#allocation11 + $0x2f8] sm:$0xff]
        %v7283 = vunpack.c.l.b16 %v7091
        %v7284 = vunpack.c.h.b16 %v7091
        %v7285 = vunpack.c.l.b16 %v7092
        %v7286 = vunpack.c.h.b16 %v7092
        %v7287 = vunpack.c.l.b16 %v7093
        %v7288 = vunpack.c.h.b16 %v7093
        %v7289 = vunpack.c.l.b16 %v7094
        %v7290 = vunpack.c.h.b16 %v7094
        %v7291 = vunpack.c.l.b16 %v7095
        %v7292 = vunpack.c.h.b16 %v7095
        %v7293 = vunpack.c.l.b16 %v7096
        %v7294 = vunpack.c.h.b16 %v7096
        %v7295 = vunpack.c.l.b16 %v7097
        %v7296 = vunpack.c.h.b16 %v7097
        %v7297 = vunpack.c.l.b16 %v7098
        %v7298 = vunpack.c.h.b16 %v7098
        %v7299 = vunpack.c.l.b16 %v7099
        %v7300 = vunpack.c.h.b16 %v7099
        %v7301 = vunpack.c.l.b16 %v7100
        %v7302 = vunpack.c.h.b16 %v7100
        %v7303 = vunpack.c.l.b16 %v7101
        %v7304 = vunpack.c.h.b16 %v7101
        %v7305 = vunpack.c.l.b16 %v7102
        %v7306 = vunpack.c.h.b16 %v7102
        %v7307 = vunpack.c.l.b16 %v7103
        %v7308 = vunpack.c.h.b16 %v7103
        %v7309 = vunpack.c.l.b16 %v7104
        %v7310 = vunpack.c.h.b16 %v7104
        %v7311 = vunpack.c.l.b16 %v7105
        %v7312 = vunpack.c.h.b16 %v7105
        %v7313 = vunpack.c.l.b16 %v7106
        %v7314 = vunpack.c.h.b16 %v7106
        %v7315 = vunpack.c.l.b16 %v7107
        %v7316 = vunpack.c.h.b16 %v7107
        %v7317 = vunpack.c.l.b16 %v7108
        %v7318 = vunpack.c.h.b16 %v7108
        %v7319 = vunpack.c.l.b16 %v7109
        %v7320 = vunpack.c.h.b16 %v7109
        %v7321 = vunpack.c.l.b16 %v7110
        %v7322 = vunpack.c.h.b16 %v7110
        %v7323 = vunpack.c.l.b16 %v7111
        %v7324 = vunpack.c.h.b16 %v7111
        %v7325 = vunpack.c.l.b16 %v7112
        %v7326 = vunpack.c.h.b16 %v7112
        %v7327 = vunpack.c.l.b16 %v7113
        %v7328 = vunpack.c.h.b16 %v7113
        %v7329 = vunpack.c.l.b16 %v7114
        %v7330 = vunpack.c.h.b16 %v7114
        %v7331 = vunpack.c.l.b16 %v7115
        %v7332 = vunpack.c.h.b16 %v7115
        %v7333 = vunpack.c.l.b16 %v7116
        %v7334 = vunpack.c.h.b16 %v7116
        %v7335 = vunpack.c.l.b16 %v7117
        %v7336 = vunpack.c.h.b16 %v7117
        %v7337 = vunpack.c.l.b16 %v7118
        %v7338 = vunpack.c.h.b16 %v7118
        %v7339 = vunpack.c.l.b16 %v7119
        %v7340 = vunpack.c.h.b16 %v7119
        %v7341 = vunpack.c.l.b16 %v7120
        %v7342 = vunpack.c.h.b16 %v7120
        %v7343 = vunpack.c.l.b16 %v7121
        %v7344 = vunpack.c.h.b16 %v7121
        %v7345 = vunpack.c.l.b16 %v7122
        %v7346 = vunpack.c.h.b16 %v7122
        %v7347 = vunpack.c.l.b16 %v7123
        %v7348 = vunpack.c.h.b16 %v7123
        %v7349 = vunpack.c.l.b16 %v7124
        %v7350 = vunpack.c.h.b16 %v7124
        %v7351 = vunpack.c.l.b16 %v7125
        %v7352 = vunpack.c.h.b16 %v7125
        %v7353 = vunpack.c.l.b16 %v7126
        %v7354 = vunpack.c.h.b16 %v7126
        %v7355 = vunpack.c.l.b16 %v7127
        %v7356 = vunpack.c.h.b16 %v7127
        %v7357 = vunpack.c.l.b16 %v7128
        %v7358 = vunpack.c.h.b16 %v7128
        %v7359 = vunpack.c.l.b16 %v7129
        %v7360 = vunpack.c.h.b16 %v7129
        %v7361 = vunpack.c.l.b16 %v7130
        %v7362 = vunpack.c.h.b16 %v7130
        %v7363 = vunpack.c.l.b16 %v7131
        %v7364 = vunpack.c.h.b16 %v7131
        %v7365 = vunpack.c.l.b16 %v7132
        %v7366 = vunpack.c.h.b16 %v7132
        %v7367 = vunpack.c.l.b16 %v7133
        %v7368 = vunpack.c.h.b16 %v7133
        %v7369 = vunpack.c.l.b16 %v7134
        %v7370 = vunpack.c.h.b16 %v7134
        %v7371 = vunpack.c.l.b16 %v7135
        %v7372 = vunpack.c.h.b16 %v7135
        %v7373 = vunpack.c.l.b16 %v7136
        %v7374 = vunpack.c.h.b16 %v7136
        %v7375 = vunpack.c.l.b16 %v7137
        %v7376 = vunpack.c.h.b16 %v7137
        %v7377 = vunpack.c.l.b16 %v7138
        %v7378 = vunpack.c.h.b16 %v7138
        %v7379 = vunpack.c.l.b16 %v7139
        %v7380 = vunpack.c.h.b16 %v7139
        %v7381 = vunpack.c.l.b16 %v7140
        %v7382 = vunpack.c.h.b16 %v7140
        %v7383 = vunpack.c.l.b16 %v7141
        %v7384 = vunpack.c.h.b16 %v7141
        %v7385 = vunpack.c.l.b16 %v7142
        %v7386 = vunpack.c.h.b16 %v7142
        %v7387 = vunpack.c.l.b16 %v7143
        %v7388 = vunpack.c.h.b16 %v7143
        %v7389 = vunpack.c.l.b16 %v7144
        %v7390 = vunpack.c.h.b16 %v7144
        %v7391 = vunpack.c.l.b16 %v7145
        %v7392 = vunpack.c.h.b16 %v7145
        %v7393 = vunpack.c.l.b16 %v7146
        %v7394 = vunpack.c.h.b16 %v7146
        %v7395 = vunpack.c.l.b16 %v7147
        %v7396 = vunpack.c.h.b16 %v7147
        %v7397 = vunpack.c.l.b16 %v7148
        %v7398 = vunpack.c.h.b16 %v7148
        %v7399 = vunpack.c.l.b16 %v7149
        %v7400 = vunpack.c.h.b16 %v7149
        %v7401 = vunpack.c.l.b16 %v7150
        %v7402 = vunpack.c.h.b16 %v7150
        %v7403 = vunpack.c.l.b16 %v7151
        %v7404 = vunpack.c.h.b16 %v7151
        %v7405 = vunpack.c.l.b16 %v7152
        %v7406 = vunpack.c.h.b16 %v7152
        %v7407 = vunpack.c.l.b16 %v7153
        %v7408 = vunpack.c.h.b16 %v7153
        %v7409 = vunpack.c.l.b16 %v7154
        %v7410 = vunpack.c.h.b16 %v7154
        %v7411 = vunpack.c.l.b16 %v7155
        %v7412 = vunpack.c.h.b16 %v7155
        %v7413 = vunpack.c.l.b16 %v7156
        %v7414 = vunpack.c.h.b16 %v7156
        %v7415 = vunpack.c.l.b16 %v7157
        %v7416 = vunpack.c.h.b16 %v7157
        %v7417 = vunpack.c.l.b16 %v7158
        %v7418 = vunpack.c.h.b16 %v7158
        %v7419 = vunpack.c.l.b16 %v7159
        %v7420 = vunpack.c.h.b16 %v7159
        %v7421 = vunpack.c.l.b16 %v7160
        %v7422 = vunpack.c.h.b16 %v7160
        %v7423 = vunpack.c.l.b16 %v7161
        %v7424 = vunpack.c.h.b16 %v7161
        %v7425 = vunpack.c.l.b16 %v7162
        %v7426 = vunpack.c.h.b16 %v7162
        %v7427 = vunpack.c.l.b16 %v7163
        %v7428 = vunpack.c.h.b16 %v7163
        %v7429 = vunpack.c.l.b16 %v7164
        %v7430 = vunpack.c.h.b16 %v7164
        %v7431 = vunpack.c.l.b16 %v7165
        %v7432 = vunpack.c.h.b16 %v7165
        %v7433 = vunpack.c.l.b16 %v7166
        %v7434 = vunpack.c.h.b16 %v7166
        %v7435 = vunpack.c.l.b16 %v7167
        %v7436 = vunpack.c.h.b16 %v7167
        %v7437 = vunpack.c.l.b16 %v7168
        %v7438 = vunpack.c.h.b16 %v7168
        %v7439 = vunpack.c.l.b16 %v7169
        %v7440 = vunpack.c.h.b16 %v7169
        %v7441 = vunpack.c.l.b16 %v7170
        %v7442 = vunpack.c.h.b16 %v7170
        %v7443 = vunpack.c.l.b16 %v7171
        %v7444 = vunpack.c.h.b16 %v7171
        %v7445 = vunpack.c.l.b16 %v7172
        %v7446 = vunpack.c.h.b16 %v7172
        %v7447 = vunpack.c.l.b16 %v7173
        %v7448 = vunpack.c.h.b16 %v7173
        %v7449 = vunpack.c.l.b16 %v7174
        %v7450 = vunpack.c.h.b16 %v7174
        %v7451 = vunpack.c.l.b16 %v7175
        %v7452 = vunpack.c.h.b16 %v7175
        %v7453 = vunpack.c.l.b16 %v7176
        %v7454 = vunpack.c.h.b16 %v7176
        %v7455 = vunpack.c.l.b16 %v7177
        %v7456 = vunpack.c.h.b16 %v7177
        %v7457 = vunpack.c.l.b16 %v7178
        %v7458 = vunpack.c.h.b16 %v7178
        %v7459 = vunpack.c.l.b16 %v7179
        %v7460 = vunpack.c.h.b16 %v7179
        %v7461 = vunpack.c.l.b16 %v7180
        %v7462 = vunpack.c.h.b16 %v7180
        %v7463 = vunpack.c.l.b16 %v7181
        %v7464 = vunpack.c.h.b16 %v7181
        %v7465 = vunpack.c.l.b16 %v7182
        %v7466 = vunpack.c.h.b16 %v7182
        %v7467 = vunpack.c.l.b16 %v7183
        %v7468 = vunpack.c.h.b16 %v7183
        %v7469 = vunpack.c.l.b16 %v7184
        %v7470 = vunpack.c.h.b16 %v7184
        %v7471 = vunpack.c.l.b16 %v7185
        %v7472 = vunpack.c.h.b16 %v7185
        %v7473 = vunpack.c.l.b16 %v7186
        %v7474 = vunpack.c.h.b16 %v7186
        %v7475 = vpack.c.b16 %v7291, %v7283
        %v7476 = vpack.c.b16 %v7292, %v7284
        %v7477 = vpack.c.b16 %v7293, %v7285
        %v7478 = vpack.c.b16 %v7294, %v7286
        %v7479 = vpack.c.b16 %v7295, %v7287
        %v7480 = vpack.c.b16 %v7296, %v7288
        %v7481 = vpack.c.b16 %v7297, %v7289
        %v7482 = vpack.c.b16 %v7298, %v7290
        %v7483 = vpack.c.b16 %v7307, %v7299
        %v7484 = vpack.c.b16 %v7308, %v7300
        %v7485 = vpack.c.b16 %v7309, %v7301
        %v7486 = vpack.c.b16 %v7310, %v7302
        %v7487 = vpack.c.b16 %v7311, %v7303
        %v7488 = vpack.c.b16 %v7312, %v7304
        %v7489 = vpack.c.b16 %v7313, %v7305
        %v7490 = vpack.c.b16 %v7314, %v7306
        %v7491 = vpack.c.b16 %v7323, %v7315
        %v7492 = vpack.c.b16 %v7324, %v7316
        %v7493 = vpack.c.b16 %v7325, %v7317
        %v7494 = vpack.c.b16 %v7326, %v7318
        %v7495 = vpack.c.b16 %v7327, %v7319
        %v7496 = vpack.c.b16 %v7328, %v7320
        %v7497 = vpack.c.b16 %v7329, %v7321
        %v7498 = vpack.c.b16 %v7330, %v7322
        %v7499 = vpack.c.b16 %v7339, %v7331
        %v7500 = vpack.c.b16 %v7340, %v7332
        %v7501 = vpack.c.b16 %v7341, %v7333
        %v7502 = vpack.c.b16 %v7342, %v7334
        %v7503 = vpack.c.b16 %v7343, %v7335
        %v7504 = vpack.c.b16 %v7344, %v7336
        %v7505 = vpack.c.b16 %v7345, %v7337
        %v7506 = vpack.c.b16 %v7346, %v7338
        %v7507 = vpack.c.b16 %v7355, %v7347
        %v7508 = vpack.c.b16 %v7356, %v7348
        %v7509 = vpack.c.b16 %v7357, %v7349
        %v7510 = vpack.c.b16 %v7358, %v7350
        %v7511 = vpack.c.b16 %v7359, %v7351
        %v7512 = vpack.c.b16 %v7360, %v7352
        %v7513 = vpack.c.b16 %v7361, %v7353
        %v7514 = vpack.c.b16 %v7362, %v7354
        %v7515 = vpack.c.b16 %v7371, %v7363
        %v7516 = vpack.c.b16 %v7372, %v7364
        %v7517 = vpack.c.b16 %v7373, %v7365
        %v7518 = vpack.c.b16 %v7374, %v7366
        %v7519 = vpack.c.b16 %v7375, %v7367
        %v7520 = vpack.c.b16 %v7376, %v7368
        %v7521 = vpack.c.b16 %v7377, %v7369
        %v7522 = vpack.c.b16 %v7378, %v7370
        %v7523 = vpack.c.b16 %v7387, %v7379
        %v7524 = vpack.c.b16 %v7388, %v7380
        %v7525 = vpack.c.b16 %v7389, %v7381
        %v7526 = vpack.c.b16 %v7390, %v7382
        %v7527 = vpack.c.b16 %v7391, %v7383
        %v7528 = vpack.c.b16 %v7392, %v7384
        %v7529 = vpack.c.b16 %v7393, %v7385
        %v7530 = vpack.c.b16 %v7394, %v7386
        %v7531 = vpack.c.b16 %v7403, %v7395
        %v7532 = vpack.c.b16 %v7404, %v7396
        %v7533 = vpack.c.b16 %v7405, %v7397
        %v7534 = vpack.c.b16 %v7406, %v7398
        %v7535 = vpack.c.b16 %v7407, %v7399
        %v7536 = vpack.c.b16 %v7408, %v7400
        %v7537 = vpack.c.b16 %v7409, %v7401
        %v7538 = vpack.c.b16 %v7410, %v7402
        %v7539 = vpack.c.b16 %v7419, %v7411
        %v7540 = vpack.c.b16 %v7420, %v7412
        %v7541 = vpack.c.b16 %v7421, %v7413
        %v7542 = vpack.c.b16 %v7422, %v7414
        %v7543 = vpack.c.b16 %v7423, %v7415
        %v7544 = vpack.c.b16 %v7424, %v7416
        %v7545 = vpack.c.b16 %v7425, %v7417
        %v7546 = vpack.c.b16 %v7426, %v7418
        %v7547 = vpack.c.b16 %v7435, %v7427
        %v7548 = vpack.c.b16 %v7436, %v7428
        %v7549 = vpack.c.b16 %v7437, %v7429
        %v7550 = vpack.c.b16 %v7438, %v7430
        %v7551 = vpack.c.b16 %v7439, %v7431
        %v7552 = vpack.c.b16 %v7440, %v7432
        %v7553 = vpack.c.b16 %v7441, %v7433
        %v7554 = vpack.c.b16 %v7442, %v7434
        %v7555 = vpack.c.b16 %v7451, %v7443
        %v7556 = vpack.c.b16 %v7452, %v7444
        %v7557 = vpack.c.b16 %v7453, %v7445
        %v7558 = vpack.c.b16 %v7454, %v7446
        %v7559 = vpack.c.b16 %v7455, %v7447
        %v7560 = vpack.c.b16 %v7456, %v7448
        %v7561 = vpack.c.b16 %v7457, %v7449
        %v7562 = vpack.c.b16 %v7458, %v7450
        %v7563 = vpack.c.b16 %v7467, %v7459
        %v7564 = vpack.c.b16 %v7468, %v7460
        %v7565 = vpack.c.b16 %v7469, %v7461
        %v7566 = vpack.c.b16 %v7470, %v7462
        %v7567 = vpack.c.b16 %v7471, %v7463
        %v7568 = vpack.c.b16 %v7472, %v7464
        %v7569 = vpack.c.b16 %v7473, %v7465
        %v7570 = vpack.c.b16 %v7474, %v7466
        %vm7667 = vcmask 523264
        %v7669 = vsel %vm7667, %v7086, 0
        %v7672 = vsel %vm7667, %v7088, 0
        %v7675 = vsel %vm7667, %v7090, 0
        %7677 = vmatpush.bf16.msra.mxu0 %v7531
        %7678 = vmatpush.bf16.msra.mxu0 %v7523
        %7679 = vmatpush.bf16.msra.mxu0 %v7515
        %7680 = vmatpush.bf16.msra.mxu0 %v7507
        %7681 = vmatpush.bf16.msra.mxu0 %v7499
        %7682 = vmatpush.bf16.msra.mxu0 %v7491
        %7683 = vmatpush.bf16.msra.mxu0 %v7483
        %7684 = vmatpush.bf16.msra.mxu0 %v7475
        %7685 = vmatmul.bf16.gmra.mxu0 %v7085
        %v7686 = vpop.f32.mrf.mxu0
        %v7687 = vadd.f32 0.0, %v7686
        %v7688 = vpop.f32.mrf.mxu0
        %v7689 = vadd.f32 0.0, %v7688
        %7690 = vmatmul.bf16.gmra.mxu0 %v7087
        %v7691 = vpop.f32.mrf.mxu0
        %v7692 = vadd.f32 0.0, %v7691
        %v7693 = vpop.f32.mrf.mxu0
        %v7694 = vadd.f32 0.0, %v7693
        %7695 = vmatmul.bf16.gmra.mxu0 %v7089
        %v7696 = vpop.f32.mrf.mxu0
        %v7697 = vadd.f32 0.0, %v7696
        %v7698 = vpop.f32.mrf.mxu0
        %7699 = vdwg.mxu0
        %7700 = vmatpush.bf16.msra.mxu0 0
        %7701 = vmatpush.bf16.msra.mxu0 0
        %7702 = vmatpush.bf16.msra.mxu0 0
        %7703 = vmatpush.bf16.msra.mxu0 0
        %7704 = vmatpush.bf16.msra.mxu0 %v7563
        %7705 = vmatpush.bf16.msra.mxu0 %v7555
        %7706 = vmatpush.bf16.msra.mxu0 %v7547
        %7707 = vmatpush.bf16.msra.mxu0 %v7539
        %7708 = vmatmul.bf16.gmra.mxu0 %v7669
        %v7709 = vpop.f32.mrf.mxu0
        %v7710 = vadd.f32 %v7687, %v7709
        %v7711 = vpop.f32.mrf.mxu0
        %v7712 = vadd.f32 %v7689, %v7711
        %7713 = vmatmul.bf16.gmra.mxu0 %v7672
        %v7714 = vpop.f32.mrf.mxu0
        %v7715 = vadd.f32 %v7692, %v7714
        %v7716 = vpop.f32.mrf.mxu0
        %v7717 = vadd.f32 %v7694, %v7716
        %7718 = vmatmul.bf16.gmra.mxu0 %v7675
        %v7719 = vpop.f32.mrf.mxu0
        %v7720 = vadd.f32 %v7697, %v7719
        %v7721 = vpop.f32.mrf.mxu0
        %7722 = vdwg.mxu0
        %7723 = vmatpush.bf16.msra.mxu0 %v7532
        %7724 = vmatpush.bf16.msra.mxu0 %v7524
        %7725 = vmatpush.bf16.msra.mxu0 %v7516
        %7726 = vmatpush.bf16.msra.mxu0 %v7508
        %7727 = vmatpush.bf16.msra.mxu0 %v7500
        %7728 = vmatpush.bf16.msra.mxu0 %v7492
        %7729 = vmatpush.bf16.msra.mxu0 %v7484
        %7730 = vmatpush.bf16.msra.mxu0 %v7476
        %7731 = vmatmul.bf16.gmra.mxu0 %v7085
        %v7732 = vpop.f32.mrf.mxu0
        %v7733 = vadd.f32 0.0, %v7732
        %v7734 = vpop.f32.mrf.mxu0
        %v7735 = vadd.f32 0.0, %v7734
        %7736 = vmatmul.bf16.gmra.mxu0 %v7087
        %v7737 = vpop.f32.mrf.mxu0
        %v7738 = vadd.f32 0.0, %v7737
        %v7739 = vpop.f32.mrf.mxu0
        %v7740 = vadd.f32 0.0, %v7739
        %7741 = vmatmul.bf16.gmra.mxu0 %v7089
        %v7742 = vpop.f32.mrf.mxu0
        %v7743 = vadd.f32 0.0, %v7742
        %v7744 = vpop.f32.mrf.mxu0
        %7745 = vdwg.mxu0
        %7746 = vmatpush.bf16.msra.mxu0 0
        %7747 = vmatpush.bf16.msra.mxu0 0
        %7748 = vmatpush.bf16.msra.mxu0 0
        %7749 = vmatpush.bf16.msra.mxu0 0
        %7750 = vmatpush.bf16.msra.mxu0 %v7564
        %7751 = vmatpush.bf16.msra.mxu0 %v7556
        %7752 = vmatpush.bf16.msra.mxu0 %v7548
        %7753 = vmatpush.bf16.msra.mxu0 %v7540
        %7754 = vmatmul.bf16.gmra.mxu0 %v7669
        %v7755 = vpop.f32.mrf.mxu0
        %v7756 = vadd.f32 %v7733, %v7755
        %v7757 = vpop.f32.mrf.mxu0
        %v7758 = vadd.f32 %v7735, %v7757
        %7759 = vmatmul.bf16.gmra.mxu0 %v7672
        %v7760 = vpop.f32.mrf.mxu0
        %v7761 = vadd.f32 %v7738, %v7760
        %v7762 = vpop.f32.mrf.mxu0
        %v7763 = vadd.f32 %v7740, %v7762
        %7764 = vmatmul.bf16.gmra.mxu0 %v7675
        %v7765 = vpop.f32.mrf.mxu0
        %v7766 = vadd.f32 %v7743, %v7765
        %v7767 = vpop.f32.mrf.mxu0
        %7768 = vdwg.mxu0
        %7769 = vmatpush.bf16.msra.mxu0 %v7533
        %7770 = vmatpush.bf16.msra.mxu0 %v7525
        %7771 = vmatpush.bf16.msra.mxu0 %v7517
        %7772 = vmatpush.bf16.msra.mxu0 %v7509
        %7773 = vmatpush.bf16.msra.mxu0 %v7501
        %7774 = vmatpush.bf16.msra.mxu0 %v7493
        %7775 = vmatpush.bf16.msra.mxu0 %v7485
        %7776 = vmatpush.bf16.msra.mxu0 %v7477
        %7777 = vmatmul.bf16.gmra.mxu0 %v7085
        %v7778 = vpop.f32.mrf.mxu0
        %v7779 = vadd.f32 0.0, %v7778
        %v7780 = vpop.f32.mrf.mxu0
        %v7781 = vadd.f32 0.0, %v7780
        %7782 = vmatmul.bf16.gmra.mxu0 %v7087
        %v7783 = vpop.f32.mrf.mxu0
        %v7784 = vadd.f32 0.0, %v7783
        %v7785 = vpop.f32.mrf.mxu0
        %v7786 = vadd.f32 0.0, %v7785
        %7787 = vmatmul.bf16.gmra.mxu0 %v7089
        %v7788 = vpop.f32.mrf.mxu0
        %v7789 = vadd.f32 0.0, %v7788
        %v7790 = vpop.f32.mrf.mxu0
        %7791 = vdwg.mxu0
        %7792 = vmatpush.bf16.msra.mxu0 0
        %7793 = vmatpush.bf16.msra.mxu0 0
        %7794 = vmatpush.bf16.msra.mxu0 0
        %7795 = vmatpush.bf16.msra.mxu0 0
        %7796 = vmatpush.bf16.msra.mxu0 %v7565
        %7797 = vmatpush.bf16.msra.mxu0 %v7557
        %7798 = vmatpush.bf16.msra.mxu0 %v7549
        %7799 = vmatpush.bf16.msra.mxu0 %v7541
        %7800 = vmatmul.bf16.gmra.mxu0 %v7669
        %v7801 = vpop.f32.mrf.mxu0
        %v7802 = vadd.f32 %v7779, %v7801
        %v7803 = vpop.f32.mrf.mxu0
        %v7804 = vadd.f32 %v7781, %v7803
        %7805 = vmatmul.bf16.gmra.mxu0 %v7672
        %v7806 = vpop.f32.mrf.mxu0
        %v7807 = vadd.f32 %v7784, %v7806
        %v7808 = vpop.f32.mrf.mxu0
        %v7809 = vadd.f32 %v7786, %v7808
        %7810 = vmatmul.bf16.gmra.mxu0 %v7675
        %v7811 = vpop.f32.mrf.mxu0
        %v7812 = vadd.f32 %v7789, %v7811
        %v7813 = vpop.f32.mrf.mxu0
        %7814 = vdwg.mxu0
        %7815 = vmatpush.bf16.msra.mxu0 %v7534
        %7816 = vmatpush.bf16.msra.mxu0 %v7526
        %7817 = vmatpush.bf16.msra.mxu0 %v7518
        %7818 = vmatpush.bf16.msra.mxu0 %v7510
        %7819 = vmatpush.bf16.msra.mxu0 %v7502
        %7820 = vmatpush.bf16.msra.mxu0 %v7494
        %7821 = vmatpush.bf16.msra.mxu0 %v7486
        %7822 = vmatpush.bf16.msra.mxu0 %v7478
        %7823 = vmatmul.bf16.gmra.mxu0 %v7085
        %v7824 = vpop.f32.mrf.mxu0
        %v7825 = vadd.f32 0.0, %v7824
        %v7826 = vpop.f32.mrf.mxu0
        %v7827 = vadd.f32 0.0, %v7826
        %7828 = vmatmul.bf16.gmra.mxu0 %v7087
        %v7829 = vpop.f32.mrf.mxu0
        %v7830 = vadd.f32 0.0, %v7829
        %v7831 = vpop.f32.mrf.mxu0
        %v7832 = vadd.f32 0.0, %v7831
        %7833 = vmatmul.bf16.gmra.mxu0 %v7089
        %v7834 = vpop.f32.mrf.mxu0
        %v7835 = vadd.f32 0.0, %v7834
        %v7836 = vpop.f32.mrf.mxu0
        %7837 = vdwg.mxu0
        %7838 = vmatpush.bf16.msra.mxu0 0
        %7839 = vmatpush.bf16.msra.mxu0 0
        %7840 = vmatpush.bf16.msra.mxu0 0
        %7841 = vmatpush.bf16.msra.mxu0 0
        %7842 = vmatpush.bf16.msra.mxu0 %v7566
        %7843 = vmatpush.bf16.msra.mxu0 %v7558
        %7844 = vmatpush.bf16.msra.mxu0 %v7550
        %7845 = vmatpush.bf16.msra.mxu0 %v7542
        %7846 = vmatmul.bf16.gmra.mxu0 %v7669
        %v7847 = vpop.f32.mrf.mxu0
        %v7848 = vadd.f32 %v7825, %v7847
        %v7849 = vpop.f32.mrf.mxu0
        %v7850 = vadd.f32 %v7827, %v7849
        %7851 = vmatmul.bf16.gmra.mxu0 %v7672
        %v7852 = vpop.f32.mrf.mxu0
        %v7853 = vadd.f32 %v7830, %v7852
        %v7854 = vpop.f32.mrf.mxu0
        %v7855 = vadd.f32 %v7832, %v7854
        %7856 = vmatmul.bf16.gmra.mxu0 %v7675
        %v7857 = vpop.f32.mrf.mxu0
        %v7858 = vadd.f32 %v7835, %v7857
        %v7859 = vpop.f32.mrf.mxu0
        %7860 = vdwg.mxu0
        %7861 = vmatpush.bf16.msra.mxu0 %v7535
        %7862 = vmatpush.bf16.msra.mxu0 %v7527
        %7863 = vmatpush.bf16.msra.mxu0 %v7519
        %7864 = vmatpush.bf16.msra.mxu0 %v7511
        %7865 = vmatpush.bf16.msra.mxu0 %v7503
        %7866 = vmatpush.bf16.msra.mxu0 %v7495
        %7867 = vmatpush.bf16.msra.mxu0 %v7487
        %7868 = vmatpush.bf16.msra.mxu0 %v7479
        %7869 = vmatmul.bf16.gmra.mxu0 %v7085
        %v7870 = vpop.f32.mrf.mxu0
        %v7871 = vadd.f32 0.0, %v7870
        %v7872 = vpop.f32.mrf.mxu0
        %v7873 = vadd.f32 0.0, %v7872
        %7874 = vmatmul.bf16.gmra.mxu0 %v7087
        %v7875 = vpop.f32.mrf.mxu0
        %v7876 = vadd.f32 0.0, %v7875
        %v7877 = vpop.f32.mrf.mxu0
        %v7878 = vadd.f32 0.0, %v7877
        %7879 = vmatmul.bf16.gmra.mxu0 %v7089
        %v7880 = vpop.f32.mrf.mxu0
        %v7881 = vadd.f32 0.0, %v7880
        %v7882 = vpop.f32.mrf.mxu0
        %7883 = vdwg.mxu0
        %7884 = vmatpush.bf16.msra.mxu0 0
        %7885 = vmatpush.bf16.msra.mxu0 0
        %7886 = vmatpush.bf16.msra.mxu0 0
        %7887 = vmatpush.bf16.msra.mxu0 0
        %7888 = vmatpush.bf16.msra.mxu0 %v7567
        %7889 = vmatpush.bf16.msra.mxu0 %v7559
        %7890 = vmatpush.bf16.msra.mxu0 %v7551
        %7891 = vmatpush.bf16.msra.mxu0 %v7543
        %7892 = vmatmul.bf16.gmra.mxu0 %v7669
        %v7893 = vpop.f32.mrf.mxu0
        %v7894 = vadd.f32 %v7871, %v7893
        %v7895 = vpop.f32.mrf.mxu0
        %v7896 = vadd.f32 %v7873, %v7895
        %7897 = vmatmul.bf16.gmra.mxu0 %v7672
        %v7898 = vpop.f32.mrf.mxu0
        %v7899 = vadd.f32 %v7876, %v7898
        %v7900 = vpop.f32.mrf.mxu0
        %v7901 = vadd.f32 %v7878, %v7900
        %7902 = vmatmul.bf16.gmra.mxu0 %v7675
        %v7903 = vpop.f32.mrf.mxu0
        %v7904 = vadd.f32 %v7881, %v7903
        %v7905 = vpop.f32.mrf.mxu0
        %7906 = vdwg.mxu0
        %7907 = vmatpush.bf16.msra.mxu0 %v7536
        %7908 = vmatpush.bf16.msra.mxu0 %v7528
        %7909 = vmatpush.bf16.msra.mxu0 %v7520
        %7910 = vmatpush.bf16.msra.mxu0 %v7512
        %7911 = vmatpush.bf16.msra.mxu0 %v7504
        %7912 = vmatpush.bf16.msra.mxu0 %v7496
        %7913 = vmatpush.bf16.msra.mxu0 %v7488
        %7914 = vmatpush.bf16.msra.mxu0 %v7480
        %7915 = vmatmul.bf16.gmra.mxu0 %v7085
        %v7916 = vpop.f32.mrf.mxu0
        %v7917 = vadd.f32 0.0, %v7916
        %v7918 = vpop.f32.mrf.mxu0
        %v7919 = vadd.f32 0.0, %v7918
        %7920 = vmatmul.bf16.gmra.mxu0 %v7087
        %v7921 = vpop.f32.mrf.mxu0
        %v7922 = vadd.f32 0.0, %v7921
        %v7923 = vpop.f32.mrf.mxu0
        %v7924 = vadd.f32 0.0, %v7923
        %7925 = vmatmul.bf16.gmra.mxu0 %v7089
        %v7926 = vpop.f32.mrf.mxu0
        %v7927 = vadd.f32 0.0, %v7926
        %v7928 = vpop.f32.mrf.mxu0
        %7929 = vdwg.mxu0
        %7930 = vmatpush.bf16.msra.mxu0 0
        %7931 = vmatpush.bf16.msra.mxu0 0
        %7932 = vmatpush.bf16.msra.mxu0 0
        %7933 = vmatpush.bf16.msra.mxu0 0
        %7934 = vmatpush.bf16.msra.mxu0 %v7568
        %7935 = vmatpush.bf16.msra.mxu0 %v7560
        %7936 = vmatpush.bf16.msra.mxu0 %v7552
        %7937 = vmatpush.bf16.msra.mxu0 %v7544
        %7938 = vmatmul.bf16.gmra.mxu0 %v7669
        %v7939 = vpop.f32.mrf.mxu0
        %v7940 = vadd.f32 %v7917, %v7939
        %v7941 = vpop.f32.mrf.mxu0
        %v7942 = vadd.f32 %v7919, %v7941
        %7943 = vmatmul.bf16.gmra.mxu0 %v7672
        %v7944 = vpop.f32.mrf.mxu0
        %v7945 = vadd.f32 %v7922, %v7944
        %v7946 = vpop.f32.mrf.mxu0
        %v7947 = vadd.f32 %v7924, %v7946
        %7948 = vmatmul.bf16.gmra.mxu0 %v7675
        %v7949 = vpop.f32.mrf.mxu0
        %v7950 = vadd.f32 %v7927, %v7949
        %v7951 = vpop.f32.mrf.mxu0
        %7952 = vdwg.mxu0
        %7953 = vmatpush.bf16.msra.mxu0 %v7537
        %7954 = vmatpush.bf16.msra.mxu0 %v7529
        %7955 = vmatpush.bf16.msra.mxu0 %v7521
        %7956 = vmatpush.bf16.msra.mxu0 %v7513
        %7957 = vmatpush.bf16.msra.mxu0 %v7505
        %7958 = vmatpush.bf16.msra.mxu0 %v7497
        %7959 = vmatpush.bf16.msra.mxu0 %v7489
        %7960 = vmatpush.bf16.msra.mxu0 %v7481
        %7961 = vmatmul.bf16.gmra.mxu0 %v7085
        %v7962 = vpop.f32.mrf.mxu0
        %v7963 = vadd.f32 0.0, %v7962
        %v7964 = vpop.f32.mrf.mxu0
        %v7965 = vadd.f32 0.0, %v7964
        %7966 = vmatmul.bf16.gmra.mxu0 %v7087
        %v7967 = vpop.f32.mrf.mxu0
        %v7968 = vadd.f32 0.0, %v7967
        %v7969 = vpop.f32.mrf.mxu0
        %v7970 = vadd.f32 0.0, %v7969
        %7971 = vmatmul.bf16.gmra.mxu0 %v7089
        %v7972 = vpop.f32.mrf.mxu0
        %v7973 = vadd.f32 0.0, %v7972
        %v7974 = vpop.f32.mrf.mxu0
        %7975 = vdwg.mxu0
        %7976 = vmatpush.bf16.msra.mxu0 0
        %7977 = vmatpush.bf16.msra.mxu0 0
        %7978 = vmatpush.bf16.msra.mxu0 0
        %7979 = vmatpush.bf16.msra.mxu0 0
        %7980 = vmatpush.bf16.msra.mxu0 %v7569
        %7981 = vmatpush.bf16.msra.mxu0 %v7561
        %7982 = vmatpush.bf16.msra.mxu0 %v7553
        %7983 = vmatpush.bf16.msra.mxu0 %v7545
        %7984 = vmatmul.bf16.gmra.mxu0 %v7669
        %v7985 = vpop.f32.mrf.mxu0
        %v7986 = vadd.f32 %v7963, %v7985
        %v7987 = vpop.f32.mrf.mxu0
        %v7988 = vadd.f32 %v7965, %v7987
        %7989 = vmatmul.bf16.gmra.mxu0 %v7672
        %v7990 = vpop.f32.mrf.mxu0
        %v7991 = vadd.f32 %v7968, %v7990
        %v7992 = vpop.f32.mrf.mxu0
        %v7993 = vadd.f32 %v7970, %v7992
        %7994 = vmatmul.bf16.gmra.mxu0 %v7675
        %v7995 = vpop.f32.mrf.mxu0
        %v7996 = vadd.f32 %v7973, %v7995
        %v7997 = vpop.f32.mrf.mxu0
        %7998 = vdwg.mxu0
        %7999 = vmatpush.bf16.msra.mxu0 %v7538
        %8000 = vmatpush.bf16.msra.mxu0 %v7530
        %8001 = vmatpush.bf16.msra.mxu0 %v7522
        %8002 = vmatpush.bf16.msra.mxu0 %v7514
        %8003 = vmatpush.bf16.msra.mxu0 %v7506
        %8004 = vmatpush.bf16.msra.mxu0 %v7498
        %8005 = vmatpush.bf16.msra.mxu0 %v7490
        %8006 = vmatpush.bf16.msra.mxu0 %v7482
        %8007 = vmatmul.bf16.gmra.mxu0 %v7085
        %v8008 = vpop.f32.mrf.mxu0
        %v8009 = vadd.f32 0.0, %v8008
        %v8010 = vpop.f32.mrf.mxu0
        %v8011 = vadd.f32 0.0, %v8010
        %8012 = vmatmul.bf16.gmra.mxu0 %v7087
        %v8013 = vpop.f32.mrf.mxu0
        %v8014 = vadd.f32 0.0, %v8013
        %v8015 = vpop.f32.mrf.mxu0
        %v8016 = vadd.f32 0.0, %v8015
        %8017 = vmatmul.bf16.gmra.mxu0 %v7089
        %v8018 = vpop.f32.mrf.mxu0
        %v8019 = vadd.f32 0.0, %v8018
        %v8020 = vpop.f32.mrf.mxu0
        %8021 = vdwg.mxu0
        %8022 = vmatpush.bf16.msra.mxu0 0
        %8023 = vmatpush.bf16.msra.mxu0 0
        %8024 = vmatpush.bf16.msra.mxu0 0
        %8025 = vmatpush.bf16.msra.mxu0 0
        %8026 = vmatpush.bf16.msra.mxu0 %v7570
        %8027 = vmatpush.bf16.msra.mxu0 %v7562
        %8028 = vmatpush.bf16.msra.mxu0 %v7554
        %8029 = vmatpush.bf16.msra.mxu0 %v7546
        %8030 = vmatmul.bf16.gmra.mxu0 %v7669
        %v8031 = vpop.f32.mrf.mxu0
        %v8032 = vadd.f32 %v8009, %v8031
        %v8033 = vpop.f32.mrf.mxu0
        %v8034 = vadd.f32 %v8011, %v8033
        %8035 = vmatmul.bf16.gmra.mxu0 %v7672
        %v8036 = vpop.f32.mrf.mxu0
        %v8037 = vadd.f32 %v8014, %v8036
        %v8038 = vpop.f32.mrf.mxu0
        %v8039 = vadd.f32 %v8016, %v8038
        %8040 = vmatmul.bf16.gmra.mxu0 %v7675
        %v8041 = vpop.f32.mrf.mxu0
        %v8042 = vadd.f32 %v8019, %v8041
        %v8043 = vpop.f32.mrf.mxu0
        %8044 = vdwg.mxu0
        %v8141 = vunpack.c.l.b16 %v6989
        %v8142 = vunpack.c.h.b16 %v6989
        %v8143 = vunpack.c.l.b16 %v6990
        %v8144 = vunpack.c.h.b16 %v6990
        %v8145 = vunpack.c.l.b16 %v6991
        %v8146 = vunpack.c.h.b16 %v6991
        %v8147 = vunpack.c.l.b16 %v6992
        %v8148 = vunpack.c.h.b16 %v6992
        %v8149 = vunpack.c.l.b16 %v6993
        %v8150 = vunpack.c.h.b16 %v6993
        %v8151 = vunpack.c.l.b16 %v6994
        %v8152 = vunpack.c.h.b16 %v6994
        %v8153 = vunpack.c.l.b16 %v6995
        %v8154 = vunpack.c.h.b16 %v6995
        %v8155 = vunpack.c.l.b16 %v6996
        %v8156 = vunpack.c.h.b16 %v6996
        %v8157 = vunpack.c.l.b16 %v6997
        %v8158 = vunpack.c.h.b16 %v6997
        %v8159 = vunpack.c.l.b16 %v6998
        %v8160 = vunpack.c.h.b16 %v6998
        %v8161 = vunpack.c.l.b16 %v6999
        %v8162 = vunpack.c.h.b16 %v6999
        %v8163 = vunpack.c.l.b16 %v7000
        %v8164 = vunpack.c.h.b16 %v7000
        %v8165 = vunpack.c.l.b16 %v7001
        %v8166 = vunpack.c.h.b16 %v7001
        %v8167 = vunpack.c.l.b16 %v7002
        %v8168 = vunpack.c.h.b16 %v7002
        %v8169 = vunpack.c.l.b16 %v7003
        %v8170 = vunpack.c.h.b16 %v7003
        %v8171 = vunpack.c.l.b16 %v7004
        %v8172 = vunpack.c.h.b16 %v7004
        %v8173 = vunpack.c.l.b16 %v7005
        %v8174 = vunpack.c.h.b16 %v7005
        %v8175 = vunpack.c.l.b16 %v7006
        %v8176 = vunpack.c.h.b16 %v7006
        %v8177 = vunpack.c.l.b16 %v7007
        %v8178 = vunpack.c.h.b16 %v7007
        %v8179 = vunpack.c.l.b16 %v7008
        %v8180 = vunpack.c.h.b16 %v7008
        %v8181 = vunpack.c.l.b16 %v7009
        %v8182 = vunpack.c.h.b16 %v7009
        %v8183 = vunpack.c.l.b16 %v7010
        %v8184 = vunpack.c.h.b16 %v7010
        %v8185 = vunpack.c.l.b16 %v7011
        %v8186 = vunpack.c.h.b16 %v7011
        %v8187 = vunpack.c.l.b16 %v7012
        %v8188 = vunpack.c.h.b16 %v7012
        %v8189 = vunpack.c.l.b16 %v7013
        %v8190 = vunpack.c.h.b16 %v7013
        %v8191 = vunpack.c.l.b16 %v7014
        %v8192 = vunpack.c.h.b16 %v7014
        %v8193 = vunpack.c.l.b16 %v7015
        %v8194 = vunpack.c.h.b16 %v7015
        %v8195 = vunpack.c.l.b16 %v7016
        %v8196 = vunpack.c.h.b16 %v7016
        %v8197 = vunpack.c.l.b16 %v7017
        %v8198 = vunpack.c.h.b16 %v7017
        %v8199 = vunpack.c.l.b16 %v7018
        %v8200 = vunpack.c.h.b16 %v7018
        %v8201 = vunpack.c.l.b16 %v7019
        %v8202 = vunpack.c.h.b16 %v7019
        %v8203 = vunpack.c.l.b16 %v7020
        %v8204 = vunpack.c.h.b16 %v7020
        %v8205 = vunpack.c.l.b16 %v7021
        %v8206 = vunpack.c.h.b16 %v7021
        %v8207 = vunpack.c.l.b16 %v7022
        %v8208 = vunpack.c.h.b16 %v7022
        %v8209 = vunpack.c.l.b16 %v7023
        %v8210 = vunpack.c.h.b16 %v7023
        %v8211 = vunpack.c.l.b16 %v7024
        %v8212 = vunpack.c.h.b16 %v7024
        %v8213 = vunpack.c.l.b16 %v7025
        %v8214 = vunpack.c.h.b16 %v7025
        %v8215 = vunpack.c.l.b16 %v7026
        %v8216 = vunpack.c.h.b16 %v7026
        %v8217 = vunpack.c.l.b16 %v7027
        %v8218 = vunpack.c.h.b16 %v7027
        %v8219 = vunpack.c.l.b16 %v7028
        %v8220 = vunpack.c.h.b16 %v7028
        %v8221 = vunpack.c.l.b16 %v7029
        %v8222 = vunpack.c.h.b16 %v7029
        %v8223 = vunpack.c.l.b16 %v7030
        %v8224 = vunpack.c.h.b16 %v7030
        %v8225 = vunpack.c.l.b16 %v7031
        %v8226 = vunpack.c.h.b16 %v7031
        %v8227 = vunpack.c.l.b16 %v7032
        %v8228 = vunpack.c.h.b16 %v7032
        %v8229 = vunpack.c.l.b16 %v7033
        %v8230 = vunpack.c.h.b16 %v7033
        %v8231 = vunpack.c.l.b16 %v7034
        %v8232 = vunpack.c.h.b16 %v7034
        %v8233 = vunpack.c.l.b16 %v7035
        %v8234 = vunpack.c.h.b16 %v7035
        %v8235 = vunpack.c.l.b16 %v7036
        %v8236 = vunpack.c.h.b16 %v7036
        %v8237 = vunpack.c.l.b16 %v7037
        %v8238 = vunpack.c.h.b16 %v7037
        %v8239 = vunpack.c.l.b16 %v7038
        %v8240 = vunpack.c.h.b16 %v7038
        %v8241 = vunpack.c.l.b16 %v7039
        %v8242 = vunpack.c.h.b16 %v7039
        %v8243 = vunpack.c.l.b16 %v7040
        %v8244 = vunpack.c.h.b16 %v7040
        %v8245 = vunpack.c.l.b16 %v7041
        %v8246 = vunpack.c.h.b16 %v7041
        %v8247 = vunpack.c.l.b16 %v7042
        %v8248 = vunpack.c.h.b16 %v7042
        %v8249 = vunpack.c.l.b16 %v7043
        %v8250 = vunpack.c.h.b16 %v7043
        %v8251 = vunpack.c.l.b16 %v7044
        %v8252 = vunpack.c.h.b16 %v7044
        %v8253 = vunpack.c.l.b16 %v7045
        %v8254 = vunpack.c.h.b16 %v7045
        %v8255 = vunpack.c.l.b16 %v7046
        %v8256 = vunpack.c.h.b16 %v7046
        %v8257 = vunpack.c.l.b16 %v7047
        %v8258 = vunpack.c.h.b16 %v7047
        %v8259 = vunpack.c.l.b16 %v7048
        %v8260 = vunpack.c.h.b16 %v7048
        %v8261 = vunpack.c.l.b16 %v7049
        %v8262 = vunpack.c.h.b16 %v7049
        %v8263 = vunpack.c.l.b16 %v7050
        %v8264 = vunpack.c.h.b16 %v7050
        %v8265 = vunpack.c.l.b16 %v7051
        %v8266 = vunpack.c.h.b16 %v7051
        %v8267 = vunpack.c.l.b16 %v7052
        %v8268 = vunpack.c.h.b16 %v7052
        %v8269 = vunpack.c.l.b16 %v7053
        %v8270 = vunpack.c.h.b16 %v7053
        %v8271 = vunpack.c.l.b16 %v7054
        %v8272 = vunpack.c.h.b16 %v7054
        %v8273 = vunpack.c.l.b16 %v7055
        %v8274 = vunpack.c.h.b16 %v7055
        %v8275 = vunpack.c.l.b16 %v7056
        %v8276 = vunpack.c.h.b16 %v7056
        %v8277 = vunpack.c.l.b16 %v7057
        %v8278 = vunpack.c.h.b16 %v7057
        %v8279 = vunpack.c.l.b16 %v7058
        %v8280 = vunpack.c.h.b16 %v7058
        %v8281 = vunpack.c.l.b16 %v7059
        %v8282 = vunpack.c.h.b16 %v7059
        %v8283 = vunpack.c.l.b16 %v7060
        %v8284 = vunpack.c.h.b16 %v7060
        %v8285 = vunpack.c.l.b16 %v7061
        %v8286 = vunpack.c.h.b16 %v7061
        %v8287 = vunpack.c.l.b16 %v7062
        %v8288 = vunpack.c.h.b16 %v7062
        %v8289 = vunpack.c.l.b16 %v7063
        %v8290 = vunpack.c.h.b16 %v7063
        %v8291 = vunpack.c.l.b16 %v7064
        %v8292 = vunpack.c.h.b16 %v7064
        %v8293 = vunpack.c.l.b16 %v7065
        %v8294 = vunpack.c.h.b16 %v7065
        %v8295 = vunpack.c.l.b16 %v7066
        %v8296 = vunpack.c.h.b16 %v7066
        %v8297 = vunpack.c.l.b16 %v7067
        %v8298 = vunpack.c.h.b16 %v7067
        %v8299 = vunpack.c.l.b16 %v7068
        %v8300 = vunpack.c.h.b16 %v7068
        %v8301 = vunpack.c.l.b16 %v7069
        %v8302 = vunpack.c.h.b16 %v7069
        %v8303 = vunpack.c.l.b16 %v7070
        %v8304 = vunpack.c.h.b16 %v7070
        %v8305 = vunpack.c.l.b16 %v7071
        %v8306 = vunpack.c.h.b16 %v7071
        %v8307 = vunpack.c.l.b16 %v7072
        %v8308 = vunpack.c.h.b16 %v7072
        %v8309 = vunpack.c.l.b16 %v7073
        %v8310 = vunpack.c.h.b16 %v7073
        %v8311 = vunpack.c.l.b16 %v7074
        %v8312 = vunpack.c.h.b16 %v7074
        %v8313 = vunpack.c.l.b16 %v7075
        %v8314 = vunpack.c.h.b16 %v7075
        %v8315 = vunpack.c.l.b16 %v7076
        %v8316 = vunpack.c.h.b16 %v7076
        %v8317 = vunpack.c.l.b16 %v7077
        %v8318 = vunpack.c.h.b16 %v7077
        %v8319 = vunpack.c.l.b16 %v7078
        %v8320 = vunpack.c.h.b16 %v7078
        %v8321 = vunpack.c.l.b16 %v7079
        %v8322 = vunpack.c.h.b16 %v7079
        %v8323 = vunpack.c.l.b16 %v7080
        %v8324 = vunpack.c.h.b16 %v7080
        %v8325 = vunpack.c.l.b16 %v7081
        %v8326 = vunpack.c.h.b16 %v7081
        %v8327 = vunpack.c.l.b16 %v7082
        %v8328 = vunpack.c.h.b16 %v7082
        %v8329 = vunpack.c.l.b16 %v7083
        %v8330 = vunpack.c.h.b16 %v7083
        %v8331 = vunpack.c.l.b16 %v7084
        %v8332 = vunpack.c.h.b16 %v7084
        %v8333 = vpack.c.b16 %v8149, %v8141
        %v8334 = vpack.c.b16 %v8150, %v8142
        %v8335 = vpack.c.b16 %v8151, %v8143
        %v8336 = vpack.c.b16 %v8152, %v8144
        %v8337 = vpack.c.b16 %v8153, %v8145
        %v8338 = vpack.c.b16 %v8154, %v8146
        %v8339 = vpack.c.b16 %v8155, %v8147
        %v8340 = vpack.c.b16 %v8156, %v8148
        %v8341 = vpack.c.b16 %v8165, %v8157
        %v8342 = vpack.c.b16 %v8166, %v8158
        %v8343 = vpack.c.b16 %v8167, %v8159
        %v8344 = vpack.c.b16 %v8168, %v8160
        %v8345 = vpack.c.b16 %v8169, %v8161
        %v8346 = vpack.c.b16 %v8170, %v8162
        %v8347 = vpack.c.b16 %v8171, %v8163
        %v8348 = vpack.c.b16 %v8172, %v8164
        %v8349 = vpack.c.b16 %v8181, %v8173
        %v8350 = vpack.c.b16 %v8182, %v8174
        %v8351 = vpack.c.b16 %v8183, %v8175
        %v8352 = vpack.c.b16 %v8184, %v8176
        %v8353 = vpack.c.b16 %v8185, %v8177
        %v8354 = vpack.c.b16 %v8186, %v8178
        %v8355 = vpack.c.b16 %v8187, %v8179
        %v8356 = vpack.c.b16 %v8188, %v8180
        %v8357 = vpack.c.b16 %v8197, %v8189
        %v8358 = vpack.c.b16 %v8198, %v8190
        %v8359 = vpack.c.b16 %v8199, %v8191
        %v8360 = vpack.c.b16 %v8200, %v8192
        %v8361 = vpack.c.b16 %v8201, %v8193
        %v8362 = vpack.c.b16 %v8202, %v8194
        %v8363 = vpack.c.b16 %v8203, %v8195
        %v8364 = vpack.c.b16 %v8204, %v8196
        %v8365 = vpack.c.b16 %v8213, %v8205
        %v8366 = vpack.c.b16 %v8214, %v8206
        %v8367 = vpack.c.b16 %v8215, %v8207
        %v8368 = vpack.c.b16 %v8216, %v8208
        %v8369 = vpack.c.b16 %v8217, %v8209
        %v8370 = vpack.c.b16 %v8218, %v8210
        %v8371 = vpack.c.b16 %v8219, %v8211
        %v8372 = vpack.c.b16 %v8220, %v8212
        %v8373 = vpack.c.b16 %v8229, %v8221
        %v8374 = vpack.c.b16 %v8230, %v8222
        %v8375 = vpack.c.b16 %v8231, %v8223
        %v8376 = vpack.c.b16 %v8232, %v8224
        %v8377 = vpack.c.b16 %v8233, %v8225
        %v8378 = vpack.c.b16 %v8234, %v8226
        %v8379 = vpack.c.b16 %v8235, %v8227
        %v8380 = vpack.c.b16 %v8236, %v8228
        %v8381 = vpack.c.b16 %v8245, %v8237
        %v8382 = vpack.c.b16 %v8246, %v8238
        %v8383 = vpack.c.b16 %v8247, %v8239
        %v8384 = vpack.c.b16 %v8248, %v8240
        %v8385 = vpack.c.b16 %v8249, %v8241
        %v8386 = vpack.c.b16 %v8250, %v8242
        %v8387 = vpack.c.b16 %v8251, %v8243
        %v8388 = vpack.c.b16 %v8252, %v8244
        %v8389 = vpack.c.b16 %v8261, %v8253
        %v8390 = vpack.c.b16 %v8262, %v8254
        %v8391 = vpack.c.b16 %v8263, %v8255
        %v8392 = vpack.c.b16 %v8264, %v8256
        %v8393 = vpack.c.b16 %v8265, %v8257
        %v8394 = vpack.c.b16 %v8266, %v8258
        %v8395 = vpack.c.b16 %v8267, %v8259
        %v8396 = vpack.c.b16 %v8268, %v8260
        %v8397 = vpack.c.b16 %v8277, %v8269
        %v8398 = vpack.c.b16 %v8278, %v8270
        %v8399 = vpack.c.b16 %v8279, %v8271
        %v8400 = vpack.c.b16 %v8280, %v8272
        %v8401 = vpack.c.b16 %v8281, %v8273
        %v8402 = vpack.c.b16 %v8282, %v8274
        %v8403 = vpack.c.b16 %v8283, %v8275
        %v8404 = vpack.c.b16 %v8284, %v8276
        %v8405 = vpack.c.b16 %v8293, %v8285
        %v8406 = vpack.c.b16 %v8294, %v8286
        %v8407 = vpack.c.b16 %v8295, %v8287
        %v8408 = vpack.c.b16 %v8296, %v8288
        %v8409 = vpack.c.b16 %v8297, %v8289
        %v8410 = vpack.c.b16 %v8298, %v8290
        %v8411 = vpack.c.b16 %v8299, %v8291
        %v8412 = vpack.c.b16 %v8300, %v8292
        %v8413 = vpack.c.b16 %v8309, %v8301
        %v8414 = vpack.c.b16 %v8310, %v8302
        %v8415 = vpack.c.b16 %v8311, %v8303
        %v8416 = vpack.c.b16 %v8312, %v8304
        %v8417 = vpack.c.b16 %v8313, %v8305
        %v8418 = vpack.c.b16 %v8314, %v8306
        %v8419 = vpack.c.b16 %v8315, %v8307
        %v8420 = vpack.c.b16 %v8316, %v8308
        %v8421 = vpack.c.b16 %v8325, %v8317
        %v8422 = vpack.c.b16 %v8326, %v8318
        %v8423 = vpack.c.b16 %v8327, %v8319
        %v8424 = vpack.c.b16 %v8328, %v8320
        %v8425 = vpack.c.b16 %v8329, %v8321
        %v8426 = vpack.c.b16 %v8330, %v8322
        %v8427 = vpack.c.b16 %v8331, %v8323
        %v8428 = vpack.c.b16 %v8332, %v8324
        %v8526 = vsel %vm7667, %v6984, 0
        %v8529 = vsel %vm7667, %v6986, 0
        %v8532 = vsel %vm7667, %v6988, 0
        %8534 = vmatpush.bf16.msra.mxu0 %v8389
        %8535 = vmatpush.bf16.msra.mxu0 %v8381
        %8536 = vmatpush.bf16.msra.mxu0 %v8373
        %8537 = vmatpush.bf16.msra.mxu0 %v8365
        %8538 = vmatpush.bf16.msra.mxu0 %v8357
        %8539 = vmatpush.bf16.msra.mxu0 %v8349
        %8540 = vmatpush.bf16.msra.mxu0 %v8341
        %8541 = vmatpush.bf16.msra.mxu0 %v8333
        %8542 = vmatmul.bf16.gmra.mxu0 %v6983
        %v8543 = vpop.f32.mrf.mxu0
        %v8544 = vadd.f32 %v7710, %v8543
        %v8545 = vpop.f32.mrf.mxu0
        %v8546 = vadd.f32 %v7712, %v8545
        %8547 = vmatmul.bf16.gmra.mxu0 %v6985
        %v8548 = vpop.f32.mrf.mxu0
        %v8549 = vadd.f32 %v7715, %v8548
        %v8550 = vpop.f32.mrf.mxu0
        %v8551 = vadd.f32 %v7717, %v8550
        %8552 = vmatmul.bf16.gmra.mxu0 %v6987
        %v8553 = vpop.f32.mrf.mxu0
        %v8554 = vadd.f32 %v7720, %v8553
        %v8555 = vpop.f32.mrf.mxu0
        %8556 = vdwg.mxu0
        %8557 = vmatpush.bf16.msra.mxu0 0
        %8558 = vmatpush.bf16.msra.mxu0 0
        %8559 = vmatpush.bf16.msra.mxu0 0
        %8560 = vmatpush.bf16.msra.mxu0 0
        %8561 = vmatpush.bf16.msra.mxu0 %v8421
        %8562 = vmatpush.bf16.msra.mxu0 %v8413
        %8563 = vmatpush.bf16.msra.mxu0 %v8405
        %8564 = vmatpush.bf16.msra.mxu0 %v8397
        %8565 = vmatmul.bf16.gmra.mxu0 %v8526
        %v8566 = vpop.f32.mrf.mxu0
        %v8567 = vadd.f32 %v8544, %v8566
        %v8568 = vpop.f32.mrf.mxu0
        %v8569 = vadd.f32 %v8546, %v8568
        %8570 = vmatmul.bf16.gmra.mxu0 %v8529
        %v8571 = vpop.f32.mrf.mxu0
        %v8572 = vadd.f32 %v8549, %v8571
        %v8573 = vpop.f32.mrf.mxu0
        %v8574 = vadd.f32 %v8551, %v8573
        %8575 = vmatmul.bf16.gmra.mxu0 %v8532
        %v8576 = vpop.f32.mrf.mxu0
        %v8577 = vadd.f32 %v8554, %v8576
        %v8578 = vpop.f32.mrf.mxu0
        %8579 = vdwg.mxu0
        %8580 = vmatpush.bf16.msra.mxu0 %v8390
        %8581 = vmatpush.bf16.msra.mxu0 %v8382
        %8582 = vmatpush.bf16.msra.mxu0 %v8374
        %8583 = vmatpush.bf16.msra.mxu0 %v8366
        %8584 = vmatpush.bf16.msra.mxu0 %v8358
        %8585 = vmatpush.bf16.msra.mxu0 %v8350
        %8586 = vmatpush.bf16.msra.mxu0 %v8342
        %8587 = vmatpush.bf16.msra.mxu0 %v8334
        %8588 = vmatmul.bf16.gmra.mxu0 %v6983
        %v8589 = vpop.f32.mrf.mxu0
        %v8590 = vadd.f32 %v7756, %v8589
        %v8591 = vpop.f32.mrf.mxu0
        %v8592 = vadd.f32 %v7758, %v8591
        %8593 = vmatmul.bf16.gmra.mxu0 %v6985
        %v8594 = vpop.f32.mrf.mxu0
        %v8595 = vadd.f32 %v7761, %v8594
        %v8596 = vpop.f32.mrf.mxu0
        %v8597 = vadd.f32 %v7763, %v8596
        %8598 = vmatmul.bf16.gmra.mxu0 %v6987
        %v8599 = vpop.f32.mrf.mxu0
        %v8600 = vadd.f32 %v7766, %v8599
        %v8601 = vpop.f32.mrf.mxu0
        %8602 = vdwg.mxu0
        %8603 = vmatpush.bf16.msra.mxu0 0
        %8604 = vmatpush.bf16.msra.mxu0 0
        %8605 = vmatpush.bf16.msra.mxu0 0
        %8606 = vmatpush.bf16.msra.mxu0 0
        %8607 = vmatpush.bf16.msra.mxu0 %v8422
        %8608 = vmatpush.bf16.msra.mxu0 %v8414
        %8609 = vmatpush.bf16.msra.mxu0 %v8406
        %8610 = vmatpush.bf16.msra.mxu0 %v8398
        %8611 = vmatmul.bf16.gmra.mxu0 %v8526
        %v8612 = vpop.f32.mrf.mxu0
        %v8613 = vadd.f32 %v8590, %v8612
        %v8614 = vpop.f32.mrf.mxu0
        %v8615 = vadd.f32 %v8592, %v8614
        %8616 = vmatmul.bf16.gmra.mxu0 %v8529
        %v8617 = vpop.f32.mrf.mxu0
        %v8618 = vadd.f32 %v8595, %v8617
        %v8619 = vpop.f32.mrf.mxu0
        %v8620 = vadd.f32 %v8597, %v8619
        %8621 = vmatmul.bf16.gmra.mxu0 %v8532
        %v8622 = vpop.f32.mrf.mxu0
        %v8623 = vadd.f32 %v8600, %v8622
        %v8624 = vpop.f32.mrf.mxu0
        %8625 = vdwg.mxu0
        %8626 = vmatpush.bf16.msra.mxu0 %v8391
        %8627 = vmatpush.bf16.msra.mxu0 %v8383
        %8628 = vmatpush.bf16.msra.mxu0 %v8375
        %8629 = vmatpush.bf16.msra.mxu0 %v8367
        %8630 = vmatpush.bf16.msra.mxu0 %v8359
        %8631 = vmatpush.bf16.msra.mxu0 %v8351
        %8632 = vmatpush.bf16.msra.mxu0 %v8343
        %8633 = vmatpush.bf16.msra.mxu0 %v8335
        %8634 = vmatmul.bf16.gmra.mxu0 %v6983
        %v8635 = vpop.f32.mrf.mxu0
        %v8636 = vadd.f32 %v7802, %v8635
        %v8637 = vpop.f32.mrf.mxu0
        %v8638 = vadd.f32 %v7804, %v8637
        %8639 = vmatmul.bf16.gmra.mxu0 %v6985
        %v8640 = vpop.f32.mrf.mxu0
        %v8641 = vadd.f32 %v7807, %v8640
        %v8642 = vpop.f32.mrf.mxu0
        %v8643 = vadd.f32 %v7809, %v8642
        %8644 = vmatmul.bf16.gmra.mxu0 %v6987
        %v8645 = vpop.f32.mrf.mxu0
        %v8646 = vadd.f32 %v7812, %v8645
        %v8647 = vpop.f32.mrf.mxu0
        %8648 = vdwg.mxu0
        %8649 = vmatpush.bf16.msra.mxu0 0
        %8650 = vmatpush.bf16.msra.mxu0 0
        %8651 = vmatpush.bf16.msra.mxu0 0
        %8652 = vmatpush.bf16.msra.mxu0 0
        %8653 = vmatpush.bf16.msra.mxu0 %v8423
        %8654 = vmatpush.bf16.msra.mxu0 %v8415
        %8655 = vmatpush.bf16.msra.mxu0 %v8407
        %8656 = vmatpush.bf16.msra.mxu0 %v8399
        %8657 = vmatmul.bf16.gmra.mxu0 %v8526
        %v8658 = vpop.f32.mrf.mxu0
        %v8659 = vadd.f32 %v8636, %v8658
        %v8660 = vpop.f32.mrf.mxu0
        %v8661 = vadd.f32 %v8638, %v8660
        %8662 = vmatmul.bf16.gmra.mxu0 %v8529
        %v8663 = vpop.f32.mrf.mxu0
        %v8664 = vadd.f32 %v8641, %v8663
        %v8665 = vpop.f32.mrf.mxu0
        %v8666 = vadd.f32 %v8643, %v8665
        %8667 = vmatmul.bf16.gmra.mxu0 %v8532
        %v8668 = vpop.f32.mrf.mxu0
        %v8669 = vadd.f32 %v8646, %v8668
        %v8670 = vpop.f32.mrf.mxu0
        %8671 = vdwg.mxu0
        %8672 = vmatpush.bf16.msra.mxu0 %v8392
        %8673 = vmatpush.bf16.msra.mxu0 %v8384
        %8674 = vmatpush.bf16.msra.mxu0 %v8376
        %8675 = vmatpush.bf16.msra.mxu0 %v8368
        %8676 = vmatpush.bf16.msra.mxu0 %v8360
        %8677 = vmatpush.bf16.msra.mxu0 %v8352
        %8678 = vmatpush.bf16.msra.mxu0 %v8344
        %8679 = vmatpush.bf16.msra.mxu0 %v8336
        %8680 = vmatmul.bf16.gmra.mxu0 %v6983
        %v8681 = vpop.f32.mrf.mxu0
        %v8682 = vadd.f32 %v7848, %v8681
        %v8683 = vpop.f32.mrf.mxu0
        %v8684 = vadd.f32 %v7850, %v8683
        %8685 = vmatmul.bf16.gmra.mxu0 %v6985
        %v8686 = vpop.f32.mrf.mxu0
        %v8687 = vadd.f32 %v7853, %v8686
        %v8688 = vpop.f32.mrf.mxu0
        %v8689 = vadd.f32 %v7855, %v8688
        %8690 = vmatmul.bf16.gmra.mxu0 %v6987
        %v8691 = vpop.f32.mrf.mxu0
        %v8692 = vadd.f32 %v7858, %v8691
        %v8693 = vpop.f32.mrf.mxu0
        %8694 = vdwg.mxu0
        %8695 = vmatpush.bf16.msra.mxu0 0
        %8696 = vmatpush.bf16.msra.mxu0 0
        %8697 = vmatpush.bf16.msra.mxu0 0
        %8698 = vmatpush.bf16.msra.mxu0 0
        %8699 = vmatpush.bf16.msra.mxu0 %v8424
        %8700 = vmatpush.bf16.msra.mxu0 %v8416
        %8701 = vmatpush.bf16.msra.mxu0 %v8408
        %8702 = vmatpush.bf16.msra.mxu0 %v8400
        %8703 = vmatmul.bf16.gmra.mxu0 %v8526
        %v8704 = vpop.f32.mrf.mxu0
        %v8705 = vadd.f32 %v8682, %v8704
        %v8706 = vpop.f32.mrf.mxu0
        %v8707 = vadd.f32 %v8684, %v8706
        %8708 = vmatmul.bf16.gmra.mxu0 %v8529
        %v8709 = vpop.f32.mrf.mxu0
        %v8710 = vadd.f32 %v8687, %v8709
        %v8711 = vpop.f32.mrf.mxu0
        %v8712 = vadd.f32 %v8689, %v8711
        %8713 = vmatmul.bf16.gmra.mxu0 %v8532
        %v8714 = vpop.f32.mrf.mxu0
        %v8715 = vadd.f32 %v8692, %v8714
        %v8716 = vpop.f32.mrf.mxu0
        %8717 = vdwg.mxu0
        %8718 = vmatpush.bf16.msra.mxu0 %v8393
        %8719 = vmatpush.bf16.msra.mxu0 %v8385
        %8720 = vmatpush.bf16.msra.mxu0 %v8377
        %8721 = vmatpush.bf16.msra.mxu0 %v8369
        %8722 = vmatpush.bf16.msra.mxu0 %v8361
        %8723 = vmatpush.bf16.msra.mxu0 %v8353
        %8724 = vmatpush.bf16.msra.mxu0 %v8345
        %8725 = vmatpush.bf16.msra.mxu0 %v8337
        %8726 = vmatmul.bf16.gmra.mxu0 %v6983
        %v8727 = vpop.f32.mrf.mxu0
        %v8728 = vadd.f32 %v7894, %v8727
        %v8729 = vpop.f32.mrf.mxu0
        %v8730 = vadd.f32 %v7896, %v8729
        %8731 = vmatmul.bf16.gmra.mxu0 %v6985
        %v8732 = vpop.f32.mrf.mxu0
        %v8733 = vadd.f32 %v7899, %v8732
        %v8734 = vpop.f32.mrf.mxu0
        %v8735 = vadd.f32 %v7901, %v8734
        %8736 = vmatmul.bf16.gmra.mxu0 %v6987
        %v8737 = vpop.f32.mrf.mxu0
        %v8738 = vadd.f32 %v7904, %v8737
        %v8739 = vpop.f32.mrf.mxu0
        %8740 = vdwg.mxu0
        %8741 = vmatpush.bf16.msra.mxu0 0
        %8742 = vmatpush.bf16.msra.mxu0 0
        %8743 = vmatpush.bf16.msra.mxu0 0
        %8744 = vmatpush.bf16.msra.mxu0 0
        %8745 = vmatpush.bf16.msra.mxu0 %v8425
        %8746 = vmatpush.bf16.msra.mxu0 %v8417
        %8747 = vmatpush.bf16.msra.mxu0 %v8409
        %8748 = vmatpush.bf16.msra.mxu0 %v8401
        %8749 = vmatmul.bf16.gmra.mxu0 %v8526
        %v8750 = vpop.f32.mrf.mxu0
        %v8751 = vadd.f32 %v8728, %v8750
        %v8752 = vpop.f32.mrf.mxu0
        %v8753 = vadd.f32 %v8730, %v8752
        %8754 = vmatmul.bf16.gmra.mxu0 %v8529
        %v8755 = vpop.f32.mrf.mxu0
        %v8756 = vadd.f32 %v8733, %v8755
        %v8757 = vpop.f32.mrf.mxu0
        %v8758 = vadd.f32 %v8735, %v8757
        %8759 = vmatmul.bf16.gmra.mxu0 %v8532
        %v8760 = vpop.f32.mrf.mxu0
        %v8761 = vadd.f32 %v8738, %v8760
        %v8762 = vpop.f32.mrf.mxu0
        %8763 = vdwg.mxu0
        %8764 = vmatpush.bf16.msra.mxu0 %v8394
        %8765 = vmatpush.bf16.msra.mxu0 %v8386
        %8766 = vmatpush.bf16.msra.mxu0 %v8378
        %8767 = vmatpush.bf16.msra.mxu0 %v8370
        %8768 = vmatpush.bf16.msra.mxu0 %v8362
        %8769 = vmatpush.bf16.msra.mxu0 %v8354
        %8770 = vmatpush.bf16.msra.mxu0 %v8346
        %8771 = vmatpush.bf16.msra.mxu0 %v8338
        %8772 = vmatmul.bf16.gmra.mxu0 %v6983
        %v8773 = vpop.f32.mrf.mxu0
        %v8774 = vadd.f32 %v7940, %v8773
        %v8775 = vpop.f32.mrf.mxu0
        %v8776 = vadd.f32 %v7942, %v8775
        %8777 = vmatmul.bf16.gmra.mxu0 %v6985
        %v8778 = vpop.f32.mrf.mxu0
        %v8779 = vadd.f32 %v7945, %v8778
        %v8780 = vpop.f32.mrf.mxu0
        %v8781 = vadd.f32 %v7947, %v8780
        %8782 = vmatmul.bf16.gmra.mxu0 %v6987
        %v8783 = vpop.f32.mrf.mxu0
        %v8784 = vadd.f32 %v7950, %v8783
        %v8785 = vpop.f32.mrf.mxu0
        %8786 = vdwg.mxu0
        %8787 = vmatpush.bf16.msra.mxu0 0
        %8788 = vmatpush.bf16.msra.mxu0 0
        %8789 = vmatpush.bf16.msra.mxu0 0
        %8790 = vmatpush.bf16.msra.mxu0 0
        %8791 = vmatpush.bf16.msra.mxu0 %v8426
        %8792 = vmatpush.bf16.msra.mxu0 %v8418
        %8793 = vmatpush.bf16.msra.mxu0 %v8410
        %8794 = vmatpush.bf16.msra.mxu0 %v8402
        %8795 = vmatmul.bf16.gmra.mxu0 %v8526
        %v8796 = vpop.f32.mrf.mxu0
        %v8797 = vadd.f32 %v8774, %v8796
        %v8798 = vpop.f32.mrf.mxu0
        %v8799 = vadd.f32 %v8776, %v8798
        %8800 = vmatmul.bf16.gmra.mxu0 %v8529
        %v8801 = vpop.f32.mrf.mxu0
        %v8802 = vadd.f32 %v8779, %v8801
        %v8803 = vpop.f32.mrf.mxu0
        %v8804 = vadd.f32 %v8781, %v8803
        %8805 = vmatmul.bf16.gmra.mxu0 %v8532
        %v8806 = vpop.f32.mrf.mxu0
        %v8807 = vadd.f32 %v8784, %v8806
        %v8808 = vpop.f32.mrf.mxu0
        %8809 = vdwg.mxu0
        %8810 = vmatpush.bf16.msra.mxu0 %v8395
        %8811 = vmatpush.bf16.msra.mxu0 %v8387
        %8812 = vmatpush.bf16.msra.mxu0 %v8379
        %8813 = vmatpush.bf16.msra.mxu0 %v8371
        %8814 = vmatpush.bf16.msra.mxu0 %v8363
        %8815 = vmatpush.bf16.msra.mxu0 %v8355
        %8816 = vmatpush.bf16.msra.mxu0 %v8347
        %8817 = vmatpush.bf16.msra.mxu0 %v8339
        %8818 = vmatmul.bf16.gmra.mxu0 %v6983
        %v8819 = vpop.f32.mrf.mxu0
        %v8820 = vadd.f32 %v7986, %v8819
        %v8821 = vpop.f32.mrf.mxu0
        %v8822 = vadd.f32 %v7988, %v8821
        %8823 = vmatmul.bf16.gmra.mxu0 %v6985
        %v8824 = vpop.f32.mrf.mxu0
        %v8825 = vadd.f32 %v7991, %v8824
        %v8826 = vpop.f32.mrf.mxu0
        %v8827 = vadd.f32 %v7993, %v8826
        %8828 = vmatmul.bf16.gmra.mxu0 %v6987
        %v8829 = vpop.f32.mrf.mxu0
        %v8830 = vadd.f32 %v7996, %v8829
        %v8831 = vpop.f32.mrf.mxu0
        %8832 = vdwg.mxu0
        %8833 = vmatpush.bf16.msra.mxu0 0
        %8834 = vmatpush.bf16.msra.mxu0 0
        %8835 = vmatpush.bf16.msra.mxu0 0
        %8836 = vmatpush.bf16.msra.mxu0 0
        %8837 = vmatpush.bf16.msra.mxu0 %v8427
        %8838 = vmatpush.bf16.msra.mxu0 %v8419
        %8839 = vmatpush.bf16.msra.mxu0 %v8411
        %8840 = vmatpush.bf16.msra.mxu0 %v8403
        %8841 = vmatmul.bf16.gmra.mxu0 %v8526
        %v8842 = vpop.f32.mrf.mxu0
        %v8843 = vadd.f32 %v8820, %v8842
        %v8844 = vpop.f32.mrf.mxu0
        %v8845 = vadd.f32 %v8822, %v8844
        %8846 = vmatmul.bf16.gmra.mxu0 %v8529
        %v8847 = vpop.f32.mrf.mxu0
        %v8848 = vadd.f32 %v8825, %v8847
        %v8849 = vpop.f32.mrf.mxu0
        %v8850 = vadd.f32 %v8827, %v8849
        %8851 = vmatmul.bf16.gmra.mxu0 %v8532
        %v8852 = vpop.f32.mrf.mxu0
        %v8853 = vadd.f32 %v8830, %v8852
        %v8854 = vpop.f32.mrf.mxu0
        %8855 = vdwg.mxu0
        %8856 = vmatpush.bf16.msra.mxu0 %v8396
        %8857 = vmatpush.bf16.msra.mxu0 %v8388
        %8858 = vmatpush.bf16.msra.mxu0 %v8380
        %8859 = vmatpush.bf16.msra.mxu0 %v8372
        %8860 = vmatpush.bf16.msra.mxu0 %v8364
        %8861 = vmatpush.bf16.msra.mxu0 %v8356
        %8862 = vmatpush.bf16.msra.mxu0 %v8348
        %8863 = vmatpush.bf16.msra.mxu0 %v8340
        %8864 = vmatmul.bf16.gmra.mxu0 %v6983
        %v8865 = vpop.f32.mrf.mxu0
        %v8866 = vadd.f32 %v8032, %v8865
        %v8867 = vpop.f32.mrf.mxu0
        %v8868 = vadd.f32 %v8034, %v8867
        %8869 = vmatmul.bf16.gmra.mxu0 %v6985
        %v8870 = vpop.f32.mrf.mxu0
        %v8871 = vadd.f32 %v8037, %v8870
        %v8872 = vpop.f32.mrf.mxu0
        %v8873 = vadd.f32 %v8039, %v8872
        %8874 = vmatmul.bf16.gmra.mxu0 %v6987
        %v8875 = vpop.f32.mrf.mxu0
        %v8876 = vadd.f32 %v8042, %v8875
        %v8877 = vpop.f32.mrf.mxu0
        %8878 = vdwg.mxu0
        %8879 = vmatpush.bf16.msra.mxu0 0
        %8880 = vmatpush.bf16.msra.mxu0 0
        %8881 = vmatpush.bf16.msra.mxu0 0
        %8882 = vmatpush.bf16.msra.mxu0 0
        %8883 = vmatpush.bf16.msra.mxu0 %v8428
        %8884 = vmatpush.bf16.msra.mxu0 %v8420
        %8885 = vmatpush.bf16.msra.mxu0 %v8412
        %8886 = vmatpush.bf16.msra.mxu0 %v8404
        %8887 = vmatmul.bf16.gmra.mxu0 %v8526
        %v8888 = vpop.f32.mrf.mxu0
        %v8889 = vadd.f32 %v8866, %v8888
        %v8890 = vpop.f32.mrf.mxu0
        %v8891 = vadd.f32 %v8868, %v8890
        %8892 = vmatmul.bf16.gmra.mxu0 %v8529
        %v8893 = vpop.f32.mrf.mxu0
        %v8894 = vadd.f32 %v8871, %v8893
        %v8895 = vpop.f32.mrf.mxu0
        %v8896 = vadd.f32 %v8873, %v8895
        %8897 = vmatmul.bf16.gmra.mxu0 %v8532
        %v8898 = vpop.f32.mrf.mxu0
        %v8899 = vadd.f32 %v8876, %v8898
        %v8900 = vpop.f32.mrf.mxu0
        %8901 = vdwg.mxu0
        %v8902 = vld [vmem:[%s11] sm:$0xff]
        %v8904 = vperm.slane %v8902, 0
        %v8905 = vperm.slane %v8902, 1
        %v8906 = vperm.slane %v8902, 2
        %v8907 = vperm.slane %v8902, 3
        %v8908 = vperm.slane %v8902, 4
        %v8909 = vperm.slane %v8902, 5
        %v8910 = vperm.slane %v8902, 6
        %v8911 = vperm.slane %v8902, 7
        %v8920 = vadd.f32 %v8567, %v8904
        %v8921 = vadd.f32 %v8613, %v8905
        %v8922 = vadd.f32 %v8659, %v8906
        %v8923 = vadd.f32 %v8705, %v8907
        %v8924 = vadd.f32 %v8751, %v8908
        %v8925 = vadd.f32 %v8797, %v8909
        %v8926 = vadd.f32 %v8843, %v8910
        %v8927 = vadd.f32 %v8889, %v8911
        %v8928 = vadd.f32 %v8569, %v8904
        %v8929 = vadd.f32 %v8615, %v8905
        %v8930 = vadd.f32 %v8661, %v8906
        %v8931 = vadd.f32 %v8707, %v8907
        %v8932 = vadd.f32 %v8753, %v8908
        %v8933 = vadd.f32 %v8799, %v8909
        %v8934 = vadd.f32 %v8845, %v8910
        %v8935 = vadd.f32 %v8891, %v8911
        %v8936 = vadd.f32 %v8572, %v8904
        %v8937 = vadd.f32 %v8618, %v8905
        %v8938 = vadd.f32 %v8664, %v8906
        %v8939 = vadd.f32 %v8710, %v8907
        %v8940 = vadd.f32 %v8756, %v8908
        %v8941 = vadd.f32 %v8802, %v8909
        %v8942 = vadd.f32 %v8848, %v8910
        %v8943 = vadd.f32 %v8894, %v8911
        %v8944 = vadd.f32 %v8574, %v8904
        %v8945 = vadd.f32 %v8620, %v8905
        %v8946 = vadd.f32 %v8666, %v8906
        %v8947 = vadd.f32 %v8712, %v8907
        %v8948 = vadd.f32 %v8758, %v8908
        %v8949 = vadd.f32 %v8804, %v8909
        %v8950 = vadd.f32 %v8850, %v8910
        %v8951 = vadd.f32 %v8896, %v8911
        %v8952 = vadd.f32 %v8577, %v8904
        %v8953 = vadd.f32 %v8623, %v8905
        %v8954 = vadd.f32 %v8669, %v8906
        %v8955 = vadd.f32 %v8715, %v8907
        %v8956 = vadd.f32 %v8761, %v8908
        %v8957 = vadd.f32 %v8807, %v8909
        %v8958 = vadd.f32 %v8853, %v8910
        %v8959 = vadd.f32 %v8899, %v8911
        %v8960 = vadd.f32 %v8920, %v498
        %v8961 = vadd.f32 %v8921, %v499
        %v8962 = vadd.f32 %v8922, %v500
        %v8963 = vadd.f32 %v8923, %v501
        %v8964 = vadd.f32 %v8924, %v502
        %v8965 = vadd.f32 %v8925, %v503
        %v8966 = vadd.f32 %v8926, %v504
        %v8967 = vadd.f32 %v8927, %v505
        %v8968 = vadd.f32 %v8928, %v506
        %v8969 = vadd.f32 %v8929, %v507
        %v8970 = vadd.f32 %v8930, %v508
        %v8971 = vadd.f32 %v8931, %v509
        %v8972 = vadd.f32 %v8932, %v510
        %v8973 = vadd.f32 %v8933, %v511
        %v8974 = vadd.f32 %v8934, %v512
        %v8975 = vadd.f32 %v8935, %v513
        %v8976 = vadd.f32 %v8936, %v514
        %v8977 = vadd.f32 %v8937, %v515
        %v8978 = vadd.f32 %v8938, %v516
        %v8979 = vadd.f32 %v8939, %v517
        %v8980 = vadd.f32 %v8940, %v518
        %v8981 = vadd.f32 %v8941, %v519
        %v8982 = vadd.f32 %v8942, %v520
        %v8983 = vadd.f32 %v8943, %v521
        %v8984 = vadd.f32 %v8944, %v522
        %v8985 = vadd.f32 %v8945, %v523
        %v8986 = vadd.f32 %v8946, %v524
        %v8987 = vadd.f32 %v8947, %v525
        %v8988 = vadd.f32 %v8948, %v526
        %v8989 = vadd.f32 %v8949, %v527
        %v8990 = vadd.f32 %v8950, %v528
        %v8991 = vadd.f32 %v8951, %v529
        %v8992 = vadd.f32 %v8952, %v530
        %v8993 = vadd.f32 %v8953, %v531
        %v8994 = vadd.f32 %v8954, %v532
        %v8995 = vadd.f32 %v8955, %v533
        %v8996 = vadd.f32 %v8956, %v534
        %v8997 = vadd.f32 %v8957, %v535
        %v8998 = vadd.f32 %v8958, %v536
        %v8999 = vadd.f32 %v8959, %v537
        %v9000 = vmax.f32 %v8960, 0.0
        %v9001 = vmax.f32 %v8961, 0.0
        %v9002 = vmax.f32 %v8962, 0.0
        %v9003 = vmax.f32 %v8963, 0.0
        %v9004 = vmax.f32 %v8964, 0.0
        %v9005 = vmax.f32 %v8965, 0.0
        %v9006 = vmax.f32 %v8966, 0.0
        %v9007 = vmax.f32 %v8967, 0.0
        %v9008 = vmax.f32 %v8968, 0.0
        %v9009 = vmax.f32 %v8969, 0.0
        %v9010 = vmax.f32 %v8970, 0.0
        %v9011 = vmax.f32 %v8971, 0.0
        %v9012 = vmax.f32 %v8972, 0.0
        %v9013 = vmax.f32 %v8973, 0.0
        %v9014 = vmax.f32 %v8974, 0.0
        %v9015 = vmax.f32 %v8975, 0.0
        %v9016 = vmax.f32 %v8976, 0.0
        %v9017 = vmax.f32 %v8977, 0.0
        %v9018 = vmax.f32 %v8978, 0.0
        %v9019 = vmax.f32 %v8979, 0.0
        %v9020 = vmax.f32 %v8980, 0.0
        %v9021 = vmax.f32 %v8981, 0.0
        %v9022 = vmax.f32 %v8982, 0.0
        %v9023 = vmax.f32 %v8983, 0.0
        %v9024 = vmax.f32 %v8984, 0.0
        %v9025 = vmax.f32 %v8985, 0.0
        %v9026 = vmax.f32 %v8986, 0.0
        %v9027 = vmax.f32 %v8987, 0.0
        %v9028 = vmax.f32 %v8988, 0.0
        %v9029 = vmax.f32 %v8989, 0.0
        %v9030 = vmax.f32 %v8990, 0.0
        %v9031 = vmax.f32 %v8991, 0.0
        %v9032 = vmax.f32 %v8992, 0.0
        %v9033 = vmax.f32 %v8993, 0.0
        %v9034 = vmax.f32 %v8994, 0.0
        %v9035 = vmax.f32 %v8995, 0.0
        %v9036 = vmax.f32 %v8996, 0.0
        %v9037 = vmax.f32 %v8997, 0.0
        %v9038 = vmax.f32 %v8998, 0.0
        %v9039 = vmax.f32 %v8999, 0.0
        %9040 = vst [vmem:[%s496] sm:$0xff] %v9000
        %9041 = vst [vmem:[%s496 + $0x8] sm:$0xff] %v9001
        %9042 = vst [vmem:[%s496 + $0x10] sm:$0xff] %v9002
        %9043 = vst [vmem:[%s496 + $0x18] sm:$0xff] %v9003
        %9044 = vst [vmem:[%s496 + $0x20] sm:$0xff] %v9004
        %9045 = vst [vmem:[%s496 + $0x28] sm:$0xff] %v9005
        %9046 = vst [vmem:[%s496 + $0x30] sm:$0xff] %v9006
        %9047 = vst [vmem:[%s496 + $0x38] sm:$0xff] %v9007
        %9048 = vst [vmem:[%s496 + $0x40] sm:$0xff] %v9008
        %9049 = vst [vmem:[%s496 + $0x48] sm:$0xff] %v9009
        %9050 = vst [vmem:[%s496 + $0x50] sm:$0xff] %v9010
        %9051 = vst [vmem:[%s496 + $0x58] sm:$0xff] %v9011
        %9052 = vst [vmem:[%s496 + $0x60] sm:$0xff] %v9012
        %9053 = vst [vmem:[%s496 + $0x68] sm:$0xff] %v9013
        %9054 = vst [vmem:[%s496 + $0x70] sm:$0xff] %v9014
        %9055 = vst [vmem:[%s496 + $0x78] sm:$0xff] %v9015
        %9056 = vst [vmem:[%s496 + $0x80] sm:$0xff] %v9016
        %9057 = vst [vmem:[%s496 + $0x88] sm:$0xff] %v9017
        %9058 = vst [vmem:[%s496 + $0x90] sm:$0xff] %v9018
        %9059 = vst [vmem:[%s496 + $0x98] sm:$0xff] %v9019
        %9060 = vst [vmem:[%s496 + $0xa0] sm:$0xff] %v9020
        %9061 = vst [vmem:[%s496 + $0xa8] sm:$0xff] %v9021
        %9062 = vst [vmem:[%s496 + $0xb0] sm:$0xff] %v9022
        %9063 = vst [vmem:[%s496 + $0xb8] sm:$0xff] %v9023
        %9064 = vst [vmem:[%s496 + $0xc0] sm:$0xff] %v9024
        %9065 = vst [vmem:[%s496 + $0xc8] sm:$0xff] %v9025
        %9066 = vst [vmem:[%s496 + $0xd0] sm:$0xff] %v9026
        %9067 = vst [vmem:[%s496 + $0xd8] sm:$0xff] %v9027
        %9068 = vst [vmem:[%s496 + $0xe0] sm:$0xff] %v9028
        %9069 = vst [vmem:[%s496 + $0xe8] sm:$0xff] %v9029
        %9070 = vst [vmem:[%s496 + $0xf0] sm:$0xff] %v9030
        %9071 = vst [vmem:[%s496 + $0xf8] sm:$0xff] %v9031
        %9072 = vst [vmem:[%s496 + $0x100] sm:$0xf] %v9032
        %9073 = vst [vmem:[%s496 + $0x108] sm:$0xf] %v9033
        %9074 = vst [vmem:[%s496 + $0x110] sm:$0xf] %v9034
        %9075 = vst [vmem:[%s496 + $0x118] sm:$0xf] %v9035
        %9076 = vst [vmem:[%s496 + $0x120] sm:$0xf] %v9036
        %9077 = vst [vmem:[%s496 + $0x128] sm:$0xf] %v9037
        %9078 = vst [vmem:[%s496 + $0x130] sm:$0xf] %v9038
        %9079 = vst [vmem:[%s496 + $0x138] sm:$0xf] %v9039
        %p9080 = scmp.lt.s32.totalorder %s26, 1
        %s9081 = scalar_select %p9080, %s26, 1
        %s9082 = smul.addr %s9081, 40
        %s9083 = smul.addr %s9082, 8
        %s9084 = scalar_lea.vmem %s12, %s9083
        // Predicated region
        $region89: #{inception_resnet_b_forward.1} parent=67 // pred_check
          %p9085 = pneg %p301
        $region90: #{inception_resnet_b_forward.1} parent=67 // pred_check_branch
          %9087 = sbr.rel (%p9085) target = $region92
        $region91: #{inception_resnet_b_forward.1} parent=67 // pred_region
          _
        $region92: #{inception_resnet_b_forward.1} parent=67 // pred_fallthru
          _
      $region68: #{inception_resnet_b_forward.1} parent=5 // pred_fallthru
        _
      %p9088 = scmp.le.s32.totalorder 2, %s21
      // Predicated region
      $region93: #{inception_resnet_b_forward.1} parent=5 // pred_check
        %p9089 = pneg %p9088
      $region94: #{inception_resnet_b_forward.1} parent=5 // pred_check_branch
        %9091 = sbr.rel (%p9089) target = $region96
      $region95: #{inception_resnet_b_forward.1} parent=5 // pred_region
        %s9092 = ssub.s32 %s21, 2
        // Predicated region
        $region97: #{inception_resnet_b_forward.1} parent=95 // pred_check
          %p9093 = pneg %p307
        $region98: #{inception_resnet_b_forward.1} parent=95 // pred_check_branch
          %9095 = sbr.rel (%p9093) target = $region100
        $region99: #{inception_resnet_b_forward.1} parent=95 // pred_region
          %p9096 = scmp.lt.s32.totalorder %s27, 1
          %s9097 = scalar_select %p9096, %s27, 1
          %s9098 = smul.addr %s9097, 40
          %s9099 = smul.addr %s9098, 8
          %s9100 = scalar_lea.vmem %s12, %s9099
        $region100: #{inception_resnet_b_forward.1} parent=95 // pred_fallthru
          _
      $region96: #{inception_resnet_b_forward.1} parent=5 // pred_fallthru
        _
    $region6: #{inception_resnet_b_forward.1} parent=1 // loop_footer
      %s25 = sadd.s32 1, %s21
    $region7: #{inception_resnet_b_forward.1} parent=1 // loop_footer_branch
      %20 = sbr.rel target = $region3
    $region8: #{inception_resnet_b_forward.1} parent=1 // loop_exit
      _
    %9101 = vsyncpa [#allocation5], 1
    %s9102 = scalar_lea.sflag [#allocation5], 1
    %9103 = vsyncpa %s9102, 1
    %9104 = vsyncpa [#allocation7], 1
    %9105 = vsyncpa [#allocation10], 1

</llo_original>
